<compile_context>
chip_gen: v5e
topology: v5e:2x2
jax: 0.10.0
libtpu: 0.0.40
codegen_flags: <defaults>
</compile_context>

<pallas_src>
import functools

import jax
import jax.numpy as jnp
from jax import lax
from jax.experimental import pallas as pl
from jax.experimental.pallas import tpu as pltpu


# ----------------------------- static geometry ----------------------------- #

def _round_up(x, m):
    return ((x + m - 1) // m) * m


def make_encoder_geometry(*, batch, in_channels, hidden, kernel, stride, hw,
                          tile_m=256):
    """Precompute all static geometry used by the fused kernel."""
    H, W = hw
    kh, kw = kernel
    M = batch * H * W                      # full-resolution flat row count
    layers = []
    d = 1                                  # cumulative stride => shift dilation
    h, w = H, W
    cin = in_channels
    for li, cout in enumerate(hidden):
        s = stride[li]
        shifts = tuple(d * (i * W + j) for i in range(kh) for j in range(kw))
        layers.append(dict(cin=cin, cout=cout, shifts=shifts,
                           shift_max=shifts[-1]))
        h = (h - kh) // s + 1
        w = (w - kw) // s + 1
        d *= s
        cin = cout
    pad_total = sum(l["shift_max"] for l in layers)
    cap = _round_up(M + pad_total, tile_m) + _round_up(
        max(l["shift_max"] for l in layers), tile_m)
    # rows each layer must produce so every later layer's reads stay valid
    tail = 0
    rows_out_rev = []
    for l in reversed(layers):
        rows_out_rev.append(M + tail)
        tail += l["shift_max"]
    for l, r in zip(layers, reversed(rows_out_rev)):
        l["n_tiles"] = pl.cdiv(r, tile_m)
    return dict(batch=batch, H=H, W=W, M=M, cap=cap, tile_m=tile_m,
                layers=layers, D=d, ho=h, wo=w, c_last=hidden[-1],
                R=h * w, conv_out=hidden[-1] * h * w)


# ----------------------------- fused conv kernel --------------------------- #

def _fused_conv_kernel(*refs, geom):
    layers = geom["layers"]
    nl = len(layers)
    TM = geom["tile_m"]
    x_ref = refs[0]
    w_refs = [refs[1 + 2 * i] for i in range(nl)]
    b_refs = [refs[2 + 2 * i] for i in range(nl)]
    feat_ref = refs[1 + 2 * nl]
    scr = list(refs[2 + 2 * nl:])

    in_ref = x_ref
    for li, layer in enumerate(layers):
        out_ref = scr[li]
        w_all = w_refs[li][...]            # (kh*kw, cin, cout) f32 (tiny)
        bias = b_refs[li][...]             # (1, cout) f32
        cin, cout = layer["cin"], layer["cout"]
        shifts = layer["shifts"]

        def tile_body(it, carry, in_ref=in_ref, out_ref=out_ref,
                      w_all=w_all, bias=bias, cin=cin, cout=cout,
                      shifts=shifts):
            row0 = pl.multiple_of(it * TM, TM)
            acc = jnp.zeros((TM, cout), jnp.float32)
            for t, sh in enumerate(shifts):
                a = in_ref[pl.ds(row0 + sh, TM), :]          # (TM, cin)
                w_t = w_all[t]                               # (cin, cout)
                if cin == 1:
                    # K=1 contraction -> broadcasted multiply-add on the VPU.
                    acc = acc + a * w_t
                else:
                    acc = acc + jnp.dot(a.astype(jnp.bfloat16),
                                        w_t.astype(jnp.bfloat16),
                                        preferred_element_type=jnp.float32)
            out_ref[pl.ds(row0, TM), :] = jnp.maximum(acc + bias, 0.0)
            return carry

        lax.fori_loop(0, layer["n_tiles"], tile_body, 0)
        in_ref = out_ref

    # Compact the valid output positions of the last layer into the output
    # feature map, row-major over (n, y, x), channels last.
    HW = geom["H"] * geom["W"]
    W = geom["W"]
    D = geom["D"]
    ho, wo, R = geom["ho"], geom["wo"], geom["R"]
    last = scr[-1]
    for n in range(geom["batch"]):
        for y in range(ho):
            src = n * HW + (y * D) * W
            dst = n * R + y * wo
            if D > 1:
                chunk = last[pl.ds(src, wo, stride=D), :]
            else:
                chunk = last[pl.ds(src, wo), :]
            feat_ref[pl.ds(dst, wo), :] = chunk


def _fused_conv_call(geom, x_flat, conv_ws, conv_bs):
    cap = geom["cap"]
    in_specs = [pl.BlockSpec(x_flat.shape, lambda i: (0, 0))]
    inputs = [x_flat]
    for wk, bk in zip(conv_ws, conv_bs):
        in_specs.append(pl.BlockSpec(wk.shape, lambda i: (0, 0, 0)))
        in_specs.append(pl.BlockSpec(bk.shape, lambda i: (0, 0)))
        inputs.append(wk)
        inputs.append(bk)
    feat_shape = (geom["batch"] * geom["R"], geom["c_last"])
    scratch = [pltpu.VMEM((cap, l["cout"]), jnp.float32)
               for l in geom["layers"]]
    kernel = functools.partial(_fused_conv_kernel, geom=geom)
    return pl.pallas_call(
        kernel,
        out_shape=jax.ShapeDtypeStruct(feat_shape, jnp.float32),
        grid=(1,),
        in_specs=in_specs,
        out_specs=pl.BlockSpec(feat_shape, lambda i: (0, 0)),
        scratch_shapes=scratch,
        compiler_params=pltpu.CompilerParams(
            dimension_semantics=("arbitrary",)),
    )(*inputs)


# -------------------------------- head GEMM -------------------------------- #

def _head_kernel(f_ref, w_ref, b_ref, o_ref):
    f = f_ref[...].astype(jnp.bfloat16)
    acc = jnp.dot(f, w_ref[...], preferred_element_type=jnp.float32)
    o_ref[...] = acc + b_ref[...]


def _head_call(feat2, wh_k, bh_k):
    n, f = feat2.shape
    latent = wh_k.shape[1]
    return pl.pallas_call(
        _head_kernel,
        out_shape=jax.ShapeDtypeStruct((n, latent), jnp.float32),
        grid=(1,),
        in_specs=[pl.BlockSpec((n, f), lambda i: (0, 0)),
                  pl.BlockSpec((f, latent), lambda i: (0, 0)),
                  pl.BlockSpec((1, latent), lambda i: (0, 0))],
        out_specs=pl.BlockSpec((n, latent), lambda i: (0, 0)),
        compiler_params=pltpu.CompilerParams(
            dimension_semantics=("arbitrary",)),
    )(feat2, wh_k, bh_k)


# ------------------------------ forward wrapper ----------------------------- #

def prepare_params(params, geom):
    """Torch-layout params -> kernel-ready layout (done once)."""
    conv_ws, conv_bs = [], []
    for (w, b, _s) in params["convs"]:
        cout, cin, kh, kw = w.shape
        wk = jnp.transpose(w, (2, 3, 1, 0)).reshape(kh * kw, cin, cout)
        conv_ws.append(wk.astype(jnp.float32))
        conv_bs.append(b.reshape(1, cout).astype(jnp.float32))
    wh, bh = params["head"]
    latent = wh.shape[0]
    C, ho, wo = geom["c_last"], geom["ho"], geom["wo"]
    # torch flatten(1) index = c*ho*wo + y*wo + x; kernel feat index = (y*wo+x)*C + c
    wh_k = jnp.transpose(wh.reshape(latent, C, ho, wo),
                         (2, 3, 1, 0)).reshape(ho * wo * C, latent)
    wh_k = wh_k.astype(jnp.bfloat16)          # the one sizeable HBM tensor
    bh_k = bh.reshape(1, latent).astype(jnp.float32)
    return (tuple(conv_ws), tuple(conv_bs), wh_k, bh_k)


def make_encoder_forward(geom):
    @jax.jit
    def forward(x, params_k):
        conv_ws, conv_bs, wh_k, bh_k = params_k
        N, Cin, H, W = x.shape
        # The single host-side layout change: NCHW -> flat channels-last rows.
        xf = jnp.transpose(x, (0, 2, 3, 1)).reshape(N * H * W, Cin)
        xf = jnp.pad(xf, ((0, geom["cap"] - N * H * W), (0, 0)))
        feat = _fused_conv_call(geom, xf, conv_ws, conv_bs)
        feat2 = feat.reshape(N, geom["R"] * geom["c_last"])   # metadata-only
        pb = _round_up(N, 8)
        if pb != N:
            feat2 = jnp.pad(feat2, ((0, pb - N), (0, 0)))
        out = _head_call(feat2, wh_k, bh_k)
        return out[:N]
    return forward


# --------------------------- reference & init ------------------------------- #

def reference_forward(x, params):
    y = x
    for (w, b, s) in params["convs"]:
        y = lax.conv_general_dilated(
            y, w, window_strides=(s, s), padding="VALID",
            dimension_numbers=("NCHW", "OIHW", "NCHW"),
            precision=lax.Precision.HIGHEST)
        y = jnp.maximum(y + b.reshape(1, -1, 1, 1), 0.0)
    wh, bh = params["head"]
    feat = y.reshape(y.shape[0], -1)
    return jnp.dot(feat, wh.T, precision=lax.Precision.HIGHEST) + bh


def init_params(key, *, in_channels, hidden, kernel, stride, latent_size,
                conv_in_hw):
    layer_sizes = [in_channels, *hidden]
    kh, kw = kernel
    h, w = conv_in_hw
    convs = []
    for i, (cin, cout) in enumerate(zip(layer_sizes, layer_sizes[1:])):
        key, k1, k2 = jax.random.split(key, 3)
        scale = (2.0 / (cin * kh * kw)) ** 0.5
        wgt = jax.random.normal(k1, (cout, cin, kh, kw), jnp.float32) * scale
        bia = jax.random.normal(k2, (cout,), jnp.float32) * 0.05
        convs.append((wgt, bia, stride[i]))
        h = (h - kh) // stride[i] + 1
        w = (w - kw) // stride[i] + 1
    conv_out = hidden[-1] * h * w               # == conv_out_features()
    key, k1, k2 = jax.random.split(key, 3)
    wh = jax.random.normal(k1, (latent_size, conv_out), jnp.float32)
    wh = wh * (1.0 / conv_out) ** 0.5
    bh = jax.random.normal(k2, (latent_size,), jnp.float32) * 0.05
    return {"convs": convs, "head": (wh, bh)}, conv_out


# ----------------------------------- main ----------------------------------- #

if __name__ == "__main__":
    # Small EncoderConv instance (constructor-consistent):
    #   in_channels=1, hidden=[8, 8, 16], kernel=(3,3), stride=[2,1,1],
    #   latent_size=32, input images of shape (C=1, H=32, W=128).
    in_channels = 1
    hidden = [8, 8, 16]
    stride = [2, 1, 1]
    kernel = (3, 3)
    latent_size = 32
    batch = 2
    H, W = 32, 128

    key = jax.random.PRNGKey(0)
    key, pkey, xkey = jax.random.split(key, 3)
    params, conv_out = init_params(
        pkey, in_channels=in_channels, hidden=hidden, kernel=kernel,
        stride=stride, latent_size=latent_size, conv_in_hw=(H, W))
    x = jax.random.normal(xkey, (batch, in_channels, H, W), jnp.float32)

    geom = make_encoder_geometry(
        batch=batch, in_channels=in_channels, hidden=hidden, kernel=kernel,
        stride=stride, hw=(H, W), tile_m=256)
    assert geom["conv_out"] == conv_out, (geom["conv_out"], conv_out)

    params_k = prepare_params(params, geom)
    forward = make_encoder_forward(geom)

    out = jax.block_until_ready(forward(x, params_k))
    assert out.shape == (batch, latent_size), out.shape
    assert out.dtype == jnp.float32

    ref = reference_forward(x, params)
    err = float(jnp.max(jnp.abs(out - ref)))
    assert err < 1e-1, f"max abs error vs reference: {err}"
    print("KERNEL_OK")
</pallas_src>

<mosaic_0001>
module attributes {stable_mosaic.version = 11 : i64} {
  func.func @_fused_conv_kernel(%arg0: i32, %arg1: memref<10496x1xf32, #tpu.memory_space<vmem>>, %arg2: memref<9x1x8xf32, #tpu.memory_space<vmem>>, %arg3: memref<1x8xf32, #tpu.memory_space<vmem>>, %arg4: memref<9x8x8xf32, #tpu.memory_space<vmem>>, %arg5: memref<1x8xf32, #tpu.memory_space<vmem>>, %arg6: memref<9x8x16xf32, #tpu.memory_space<vmem>>, %arg7: memref<1x16xf32, #tpu.memory_space<vmem>>, %arg8: memref<1298x16xf32, #tpu.memory_space<vmem>>, %arg9: memref<10496x8xf32, #tpu.memory_space<vmem>>, %arg10: memref<10496x8xf32, #tpu.memory_space<vmem>>, %arg11: memref<10496x16xf32, #tpu.memory_space<vmem>>) attributes {dimension_semantics = [#tpu.dimension_semantics<arbitrary>], iteration_bounds = array<i64: 1>, scalar_prefetch = 0 : i64, scratch_operands = 3 : i64, tpu.core_type = #tpu.core_type<tc>, window_params = [{pipeline_mode = #tpu.pipeline_mode<synchronous>, transform_indices = @transform_0, window_bounds = array<i64: 10496, 1>}, {pipeline_mode = #tpu.pipeline_mode<synchronous>, transform_indices = @transform_1, window_bounds = array<i64: 9, 1, 8>}, {pipeline_mode = #tpu.pipeline_mode<synchronous>, transform_indices = @transform_2, window_bounds = array<i64: 1, 8>}, {pipeline_mode = #tpu.pipeline_mode<synchronous>, transform_indices = @transform_3, window_bounds = array<i64: 9, 8, 8>}, {pipeline_mode = #tpu.pipeline_mode<synchronous>, transform_indices = @transform_4, window_bounds = array<i64: 1, 8>}, {pipeline_mode = #tpu.pipeline_mode<synchronous>, transform_indices = @transform_5, window_bounds = array<i64: 9, 8, 16>}, {pipeline_mode = #tpu.pipeline_mode<synchronous>, transform_indices = @transform_6, window_bounds = array<i64: 1, 16>}, {pipeline_mode = #tpu.pipeline_mode<synchronous>, transform_indices = @transform_7, window_bounds = array<i64: 1298, 16>}]} {
    %c0 = arith.constant 0 : index
    %c0_0 = arith.constant 0 : index
    %c0_1 = arith.constant 0 : index
    %0 = vector.load %arg2[%c0, %c0_0, %c0_1] : memref<9x1x8xf32, #tpu.memory_space<vmem>>, vector<9x1x8xf32>
    %c0_2 = arith.constant 0 : index
    %c0_3 = arith.constant 0 : index
    %1 = vector.load %arg3[%c0_2, %c0_3] : memref<1x8xf32, #tpu.memory_space<vmem>>, vector<1x8xf32>
    %c0_i32 = arith.constant 0 : i32
    %c37_i32 = arith.constant 37 : i32
    %2 = arith.addi %c0_i32, %c37_i32 : i32
    %c1_i32 = arith.constant 1 : i32
    scf.for %arg12 = %c0_i32 to %2 step %c1_i32  : i32 {
      %c256_i32 = arith.constant 256 : i32
      %53 = arith.muli %arg12, %c256_i32 : i32
      %54 = tpu.assume_multiple %53, 256 : i32
      %cst = arith.constant 0.000000e+00 : f32
      %55 = vector.broadcast %cst : f32 to vector<256x8xf32>
      %c0_i32_67 = arith.constant 0 : i32
      %56 = arith.addi %54, %c0_i32_67 : i32
      %57 = arith.index_cast %56 : i32 to index
      %c0_68 = arith.constant 0 : index
      %58 = vector.load %arg1[%57, %c0_68] : memref<10496x1xf32, #tpu.memory_space<vmem>>, vector<256x1xf32>
      %59 = vector.extract_strided_slice %0 {offsets = [0, 0, 0], sizes = [1, 1, 8], strides = [1, 1, 1]} : vector<9x1x8xf32> to vector<1x1x8xf32>
      %60 = vector.shape_cast %59 : vector<1x1x8xf32> to vector<1x8xf32>
      %61 = vector.broadcast %58 : vector<256x1xf32> to vector<256x8xf32>
      %62 = vector.broadcast %60 : vector<1x8xf32> to vector<256x8xf32>
      %63 = arith.mulf %61, %62 : vector<256x8xf32>
      %64 = arith.addf %55, %63 : vector<256x8xf32>
      %c1_i32_69 = arith.constant 1 : i32
      %65 = arith.addi %54, %c1_i32_69 : i32
      %66 = arith.index_cast %65 : i32 to index
      %c0_70 = arith.constant 0 : index
      %67 = vector.load %arg1[%66, %c0_70] : memref<10496x1xf32, #tpu.memory_space<vmem>>, vector<256x1xf32>
      %68 = vector.extract_strided_slice %0 {offsets = [1, 0, 0], sizes = [1, 1, 8], strides = [1, 1, 1]} : vector<9x1x8xf32> to vector<1x1x8xf32>
      %69 = vector.shape_cast %68 : vector<1x1x8xf32> to vector<1x8xf32>
      %70 = vector.broadcast %67 : vector<256x1xf32> to vector<256x8xf32>
      %71 = vector.broadcast %69 : vector<1x8xf32> to vector<256x8xf32>
      %72 = arith.mulf %70, %71 : vector<256x8xf32>
      %73 = arith.addf %64, %72 : vector<256x8xf32>
      %c2_i32 = arith.constant 2 : i32
      %74 = arith.addi %54, %c2_i32 : i32
      %75 = arith.index_cast %74 : i32 to index
      %c0_71 = arith.constant 0 : index
      %76 = vector.load %arg1[%75, %c0_71] : memref<10496x1xf32, #tpu.memory_space<vmem>>, vector<256x1xf32>
      %77 = vector.extract_strided_slice %0 {offsets = [2, 0, 0], sizes = [1, 1, 8], strides = [1, 1, 1]} : vector<9x1x8xf32> to vector<1x1x8xf32>
      %78 = vector.shape_cast %77 : vector<1x1x8xf32> to vector<1x8xf32>
      %79 = vector.broadcast %76 : vector<256x1xf32> to vector<256x8xf32>
      %80 = vector.broadcast %78 : vector<1x8xf32> to vector<256x8xf32>
      %81 = arith.mulf %79, %80 : vector<256x8xf32>
      %82 = arith.addf %73, %81 : vector<256x8xf32>
      %c128_i32 = arith.constant 128 : i32
      %83 = arith.addi %54, %c128_i32 : i32
      %84 = arith.index_cast %83 : i32 to index
      %c0_72 = arith.constant 0 : index
      %85 = vector.load %arg1[%84, %c0_72] : memref<10496x1xf32, #tpu.memory_space<vmem>>, vector<256x1xf32>
      %86 = vector.extract_strided_slice %0 {offsets = [3, 0, 0], sizes = [1, 1, 8], strides = [1, 1, 1]} : vector<9x1x8xf32> to vector<1x1x8xf32>
      %87 = vector.shape_cast %86 : vector<1x1x8xf32> to vector<1x8xf32>
      %88 = vector.broadcast %85 : vector<256x1xf32> to vector<256x8xf32>
      %89 = vector.broadcast %87 : vector<1x8xf32> to vector<256x8xf32>
      %90 = arith.mulf %88, %89 : vector<256x8xf32>
      %91 = arith.addf %82, %90 : vector<256x8xf32>
      %c129_i32 = arith.constant 129 : i32
      %92 = arith.addi %54, %c129_i32 : i32
      %93 = arith.index_cast %92 : i32 to index
      %c0_73 = arith.constant 0 : index
      %94 = vector.load %arg1[%93, %c0_73] : memref<10496x1xf32, #tpu.memory_space<vmem>>, vector<256x1xf32>
      %95 = vector.extract_strided_slice %0 {offsets = [4, 0, 0], sizes = [1, 1, 8], strides = [1, 1, 1]} : vector<9x1x8xf32> to vector<1x1x8xf32>
      %96 = vector.shape_cast %95 : vector<1x1x8xf32> to vector<1x8xf32>
      %97 = vector.broadcast %94 : vector<256x1xf32> to vector<256x8xf32>
      %98 = vector.broadcast %96 : vector<1x8xf32> to vector<256x8xf32>
      %99 = arith.mulf %97, %98 : vector<256x8xf32>
      %100 = arith.addf %91, %99 : vector<256x8xf32>
      %c130_i32 = arith.constant 130 : i32
      %101 = arith.addi %54, %c130_i32 : i32
      %102 = arith.index_cast %101 : i32 to index
      %c0_74 = arith.constant 0 : index
      %103 = vector.load %arg1[%102, %c0_74] : memref<10496x1xf32, #tpu.memory_space<vmem>>, vector<256x1xf32>
      %104 = vector.extract_strided_slice %0 {offsets = [5, 0, 0], sizes = [1, 1, 8], strides = [1, 1, 1]} : vector<9x1x8xf32> to vector<1x1x8xf32>
      %105 = vector.shape_cast %104 : vector<1x1x8xf32> to vector<1x8xf32>
      %106 = vector.broadcast %103 : vector<256x1xf32> to vector<256x8xf32>
      %107 = vector.broadcast %105 : vector<1x8xf32> to vector<256x8xf32>
      %108 = arith.mulf %106, %107 : vector<256x8xf32>
      %109 = arith.addf %100, %108 : vector<256x8xf32>
      %c256_i32_75 = arith.constant 256 : i32
      %110 = arith.addi %54, %c256_i32_75 : i32
      %111 = arith.index_cast %110 : i32 to index
      %c0_76 = arith.constant 0 : index
      %112 = vector.load %arg1[%111, %c0_76] : memref<10496x1xf32, #tpu.memory_space<vmem>>, vector<256x1xf32>
      %113 = vector.extract_strided_slice %0 {offsets = [6, 0, 0], sizes = [1, 1, 8], strides = [1, 1, 1]} : vector<9x1x8xf32> to vector<1x1x8xf32>
      %114 = vector.shape_cast %113 : vector<1x1x8xf32> to vector<1x8xf32>
      %115 = vector.broadcast %112 : vector<256x1xf32> to vector<256x8xf32>
      %116 = vector.broadcast %114 : vector<1x8xf32> to vector<256x8xf32>
      %117 = arith.mulf %115, %116 : vector<256x8xf32>
      %118 = arith.addf %109, %117 : vector<256x8xf32>
      %c257_i32 = arith.constant 257 : i32
      %119 = arith.addi %54, %c257_i32 : i32
      %120 = arith.index_cast %119 : i32 to index
      %c0_77 = arith.constant 0 : index
      %121 = vector.load %arg1[%120, %c0_77] : memref<10496x1xf32, #tpu.memory_space<vmem>>, vector<256x1xf32>
      %122 = vector.extract_strided_slice %0 {offsets = [7, 0, 0], sizes = [1, 1, 8], strides = [1, 1, 1]} : vector<9x1x8xf32> to vector<1x1x8xf32>
      %123 = vector.shape_cast %122 : vector<1x1x8xf32> to vector<1x8xf32>
      %124 = vector.broadcast %121 : vector<256x1xf32> to vector<256x8xf32>
      %125 = vector.broadcast %123 : vector<1x8xf32> to vector<256x8xf32>
      %126 = arith.mulf %124, %125 : vector<256x8xf32>
      %127 = arith.addf %118, %126 : vector<256x8xf32>
      %c258_i32 = arith.constant 258 : i32
      %128 = arith.addi %54, %c258_i32 : i32
      %129 = arith.index_cast %128 : i32 to index
      %c0_78 = arith.constant 0 : index
      %130 = vector.load %arg1[%129, %c0_78] : memref<10496x1xf32, #tpu.memory_space<vmem>>, vector<256x1xf32>
      %131 = vector.extract_strided_slice %0 {offsets = [8, 0, 0], sizes = [1, 1, 8], strides = [1, 1, 1]} : vector<9x1x8xf32> to vector<1x1x8xf32>
      %132 = vector.shape_cast %131 : vector<1x1x8xf32> to vector<1x8xf32>
      %133 = vector.broadcast %130 : vector<256x1xf32> to vector<256x8xf32>
      %134 = vector.broadcast %132 : vector<1x8xf32> to vector<256x8xf32>
      %135 = arith.mulf %133, %134 : vector<256x8xf32>
      %136 = arith.addf %127, %135 : vector<256x8xf32>
      %137 = vector.broadcast %1 : vector<1x8xf32> to vector<256x8xf32>
      %138 = arith.addf %136, %137 : vector<256x8xf32>
      %cst_79 = arith.constant 0.000000e+00 : f32
      %139 = vector.broadcast %cst_79 : f32 to vector<256x8xf32>
      %140 = arith.maximumf %138, %139 : vector<256x8xf32>
      %141 = arith.index_cast %54 : i32 to index
      %c0_80 = arith.constant 0 : index
      %142 = vector.load %arg9[%141, %c0_80] : memref<10496x8xf32, #tpu.memory_space<vmem>>, vector<256x8xf32>
      tpu.vector_store %arg9[%141, %c0_80], %140 {strides = array<i32>} : memref<10496x8xf32, #tpu.memory_space<vmem>>, vector<256x8xf32>,
    }
    %c37_i32_4 = arith.constant 37 : i32
    %c0_5 = arith.constant 0 : index
    %c0_6 = arith.constant 0 : index
    %c0_7 = arith.constant 0 : index
    %3 = vector.load %arg4[%c0_5, %c0_6, %c0_7] : memref<9x8x8xf32, #tpu.memory_space<vmem>>, vector<9x8x8xf32>
    %c0_8 = arith.constant 0 : index
    %c0_9 = arith.constant 0 : index
    %4 = vector.load %arg5[%c0_8, %c0_9] : memref<1x8xf32, #tpu.memory_space<vmem>>, vector<1x8xf32>
    %c0_i32_10 = arith.constant 0 : i32
    %c35_i32 = arith.constant 35 : i32
    %5 = arith.addi %c0_i32_10, %c35_i32 : i32
    %c1_i32_11 = arith.constant 1 : i32
    scf.for %arg12 = %c0_i32_10 to %5 step %c1_i32_11  : i32 {
      %c256_i32 = arith.constant 256 : i32
      %53 = arith.muli %arg12, %c256_i32 : i32
      %54 = tpu.assume_multiple %53, 256 : i32
      %cst = arith.constant 0.000000e+00 : f32
      %55 = vector.broadcast %cst : f32 to vector<256x8xf32>
      %c0_i32_67 = arith.constant 0 : i32
      %56 = arith.addi %54, %c0_i32_67 : i32
      %57 = arith.index_cast %56 : i32 to index
      %c0_68 = arith.constant 0 : index
      %58 = vector.load %arg9[%57, %c0_68] : memref<10496x8xf32, #tpu.memory_space<vmem>>, vector<256x8xf32>
      %59 = vector.extract_strided_slice %3 {offsets = [0, 0, 0], sizes = [1, 8, 8], strides = [1, 1, 1]} : vector<9x8x8xf32> to vector<1x8x8xf32>
      %60 = vector.shape_cast %59 : vector<1x8x8xf32> to vector<8x8xf32>
      %61 = arith.truncf %58 : vector<256x8xf32> to vector<256x8xbf16>
      %62 = arith.truncf %60 : vector<8x8xf32> to vector<8x8xbf16>
      %cst_69 = arith.constant dense<0.000000e+00> : vector<256x8xf32>
      %63 = tpu.matmul %61, %62, %cst_69 {dimension_numbers = #tpu.dot_dimension_numbers<[1], [0], [0], [1], [0, 0, 1, 1], [], []>} : vector<256x8xbf16>, vector<8x8xbf16>, vector<256x8xf32> -> vector<256x8xf32>
      %64 = arith.addf %55, %63 : vector<256x8xf32>
      %c2_i32 = arith.constant 2 : i32
      %65 = arith.addi %54, %c2_i32 : i32
      %66 = arith.index_cast %65 : i32 to index
      %c0_70 = arith.constant 0 : index
      %67 = vector.load %arg9[%66, %c0_70] : memref<10496x8xf32, #tpu.memory_space<vmem>>, vector<256x8xf32>
      %68 = vector.extract_strided_slice %3 {offsets = [1, 0, 0], sizes = [1, 8, 8], strides = [1, 1, 1]} : vector<9x8x8xf32> to vector<1x8x8xf32>
      %69 = vector.shape_cast %68 : vector<1x8x8xf32> to vector<8x8xf32>
      %70 = arith.truncf %67 : vector<256x8xf32> to vector<256x8xbf16>
      %71 = arith.truncf %69 : vector<8x8xf32> to vector<8x8xbf16>
      %cst_71 = arith.constant dense<0.000000e+00> : vector<256x8xf32>
      %72 = tpu.matmul %70, %71, %cst_71 {dimension_numbers = #tpu.dot_dimension_numbers<[1], [0], [0], [1], [0, 0, 1, 1], [], []>} : vector<256x8xbf16>, vector<8x8xbf16>, vector<256x8xf32> -> vector<256x8xf32>
      %73 = arith.addf %64, %72 : vector<256x8xf32>
      %c4_i32 = arith.constant 4 : i32
      %74 = arith.addi %54, %c4_i32 : i32
      %75 = arith.index_cast %74 : i32 to index
      %c0_72 = arith.constant 0 : index
      %76 = vector.load %arg9[%75, %c0_72] : memref<10496x8xf32, #tpu.memory_space<vmem>>, vector<256x8xf32>
      %77 = vector.extract_strided_slice %3 {offsets = [2, 0, 0], sizes = [1, 8, 8], strides = [1, 1, 1]} : vector<9x8x8xf32> to vector<1x8x8xf32>
      %78 = vector.shape_cast %77 : vector<1x8x8xf32> to vector<8x8xf32>
      %79 = arith.truncf %76 : vector<256x8xf32> to vector<256x8xbf16>
      %80 = arith.truncf %78 : vector<8x8xf32> to vector<8x8xbf16>
      %cst_73 = arith.constant dense<0.000000e+00> : vector<256x8xf32>
      %81 = tpu.matmul %79, %80, %cst_73 {dimension_numbers = #tpu.dot_dimension_numbers<[1], [0], [0], [1], [0, 0, 1, 1], [], []>} : vector<256x8xbf16>, vector<8x8xbf16>, vector<256x8xf32> -> vector<256x8xf32>
      %82 = arith.addf %73, %81 : vector<256x8xf32>
      %c256_i32_74 = arith.constant 256 : i32
      %83 = arith.addi %54, %c256_i32_74 : i32
      %84 = arith.index_cast %83 : i32 to index
      %c0_75 = arith.constant 0 : index
      %85 = vector.load %arg9[%84, %c0_75] : memref<10496x8xf32, #tpu.memory_space<vmem>>, vector<256x8xf32>
      %86 = vector.extract_strided_slice %3 {offsets = [3, 0, 0], sizes = [1, 8, 8], strides = [1, 1, 1]} : vector<9x8x8xf32> to vector<1x8x8xf32>
      %87 = vector.shape_cast %86 : vector<1x8x8xf32> to vector<8x8xf32>
      %88 = arith.truncf %85 : vector<256x8xf32> to vector<256x8xbf16>
      %89 = arith.truncf %87 : vector<8x8xf32> to vector<8x8xbf16>
      %cst_76 = arith.constant dense<0.000000e+00> : vector<256x8xf32>
      %90 = tpu.matmul %88, %89, %cst_76 {dimension_numbers = #tpu.dot_dimension_numbers<[1], [0], [0], [1], [0, 0, 1, 1], [], []>} : vector<256x8xbf16>, vector<8x8xbf16>, vector<256x8xf32> -> vector<256x8xf32>
      %91 = arith.addf %82, %90 : vector<256x8xf32>
      %c258_i32 = arith.constant 258 : i32
      %92 = arith.addi %54, %c258_i32 : i32
      %93 = arith.index_cast %92 : i32 to index
      %c0_77 = arith.constant 0 : index
      %94 = vector.load %arg9[%93, %c0_77] : memref<10496x8xf32, #tpu.memory_space<vmem>>, vector<256x8xf32>
      %95 = vector.extract_strided_slice %3 {offsets = [4, 0, 0], sizes = [1, 8, 8], strides = [1, 1, 1]} : vector<9x8x8xf32> to vector<1x8x8xf32>
      %96 = vector.shape_cast %95 : vector<1x8x8xf32> to vector<8x8xf32>
      %97 = arith.truncf %94 : vector<256x8xf32> to vector<256x8xbf16>
      %98 = arith.truncf %96 : vector<8x8xf32> to vector<8x8xbf16>
      %cst_78 = arith.constant dense<0.000000e+00> : vector<256x8xf32>
      %99 = tpu.matmul %97, %98, %cst_78 {dimension_numbers = #tpu.dot_dimension_numbers<[1], [0], [0], [1], [0, 0, 1, 1], [], []>} : vector<256x8xbf16>, vector<8x8xbf16>, vector<256x8xf32> -> vector<256x8xf32>
      %100 = arith.addf %91, %99 : vector<256x8xf32>
      %c260_i32 = arith.constant 260 : i32
      %101 = arith.addi %54, %c260_i32 : i32
      %102 = arith.index_cast %101 : i32 to index
      %c0_79 = arith.constant 0 : index
      %103 = vector.load %arg9[%102, %c0_79] : memref<10496x8xf32, #tpu.memory_space<vmem>>, vector<256x8xf32>
      %104 = vector.extract_strided_slice %3 {offsets = [5, 0, 0], sizes = [1, 8, 8], strides = [1, 1, 1]} : vector<9x8x8xf32> to vector<1x8x8xf32>
      %105 = vector.shape_cast %104 : vector<1x8x8xf32> to vector<8x8xf32>
      %106 = arith.truncf %103 : vector<256x8xf32> to vector<256x8xbf16>
      %107 = arith.truncf %105 : vector<8x8xf32> to vector<8x8xbf16>
      %cst_80 = arith.constant dense<0.000000e+00> : vector<256x8xf32>
      %108 = tpu.matmul %106, %107, %cst_80 {dimension_numbers = #tpu.dot_dimension_numbers<[1], [0], [0], [1], [0, 0, 1, 1], [], []>} : vector<256x8xbf16>, vector<8x8xbf16>, vector<256x8xf32> -> vector<256x8xf32>
      %109 = arith.addf %100, %108 : vector<256x8xf32>
      %c512_i32 = arith.constant 512 : i32
      %110 = arith.addi %54, %c512_i32 : i32
      %111 = arith.index_cast %110 : i32 to index
      %c0_81 = arith.constant 0 : index
      %112 = vector.load %arg9[%111, %c0_81] : memref<10496x8xf32, #tpu.memory_space<vmem>>, vector<256x8xf32>
      %113 = vector.extract_strided_slice %3 {offsets = [6, 0, 0], sizes = [1, 8, 8], strides = [1, 1, 1]} : vector<9x8x8xf32> to vector<1x8x8xf32>
      %114 = vector.shape_cast %113 : vector<1x8x8xf32> to vector<8x8xf32>
      %115 = arith.truncf %112 : vector<256x8xf32> to vector<256x8xbf16>
      %116 = arith.truncf %114 : vector<8x8xf32> to vector<8x8xbf16>
      %cst_82 = arith.constant dense<0.000000e+00> : vector<256x8xf32>
      %117 = tpu.matmul %115, %116, %cst_82 {dimension_numbers = #tpu.dot_dimension_numbers<[1], [0], [0], [1], [0, 0, 1, 1], [], []>} : vector<256x8xbf16>, vector<8x8xbf16>, vector<256x8xf32> -> vector<256x8xf32>
      %118 = arith.addf %109, %117 : vector<256x8xf32>
      %c514_i32 = arith.constant 514 : i32
      %119 = arith.addi %54, %c514_i32 : i32
      %120 = arith.index_cast %119 : i32 to index
      %c0_83 = arith.constant 0 : index
      %121 = vector.load %arg9[%120, %c0_83] : memref<10496x8xf32, #tpu.memory_space<vmem>>, vector<256x8xf32>
      %122 = vector.extract_strided_slice %3 {offsets = [7, 0, 0], sizes = [1, 8, 8], strides = [1, 1, 1]} : vector<9x8x8xf32> to vector<1x8x8xf32>
      %123 = vector.shape_cast %122 : vector<1x8x8xf32> to vector<8x8xf32>
      %124 = arith.truncf %121 : vector<256x8xf32> to vector<256x8xbf16>
      %125 = arith.truncf %123 : vector<8x8xf32> to vector<8x8xbf16>
      %cst_84 = arith.constant dense<0.000000e+00> : vector<256x8xf32>
      %126 = tpu.matmul %124, %125, %cst_84 {dimension_numbers = #tpu.dot_dimension_numbers<[1], [0], [0], [1], [0, 0, 1, 1], [], []>} : vector<256x8xbf16>, vector<8x8xbf16>, vector<256x8xf32> -> vector<256x8xf32>
      %127 = arith.addf %118, %126 : vector<256x8xf32>
      %c516_i32 = arith.constant 516 : i32
      %128 = arith.addi %54, %c516_i32 : i32
      %129 = arith.index_cast %128 : i32 to index
      %c0_85 = arith.constant 0 : index
      %130 = vector.load %arg9[%129, %c0_85] : memref<10496x8xf32, #tpu.memory_space<vmem>>, vector<256x8xf32>
      %131 = vector.extract_strided_slice %3 {offsets = [8, 0, 0], sizes = [1, 8, 8], strides = [1, 1, 1]} : vector<9x8x8xf32> to vector<1x8x8xf32>
      %132 = vector.shape_cast %131 : vector<1x8x8xf32> to vector<8x8xf32>
      %133 = arith.truncf %130 : vector<256x8xf32> to vector<256x8xbf16>
      %134 = arith.truncf %132 : vector<8x8xf32> to vector<8x8xbf16>
      %cst_86 = arith.constant dense<0.000000e+00> : vector<256x8xf32>
      %135 = tpu.matmul %133, %134, %cst_86 {dimension_numbers = #tpu.dot_dimension_numbers<[1], [0], [0], [1], [0, 0, 1, 1], [], []>} : vector<256x8xbf16>, vector<8x8xbf16>, vector<256x8xf32> -> vector<256x8xf32>
      %136 = arith.addf %127, %135 : vector<256x8xf32>
      %137 = vector.broadcast %4 : vector<1x8xf32> to vector<256x8xf32>
      %138 = arith.addf %136, %137 : vector<256x8xf32>
      %cst_87 = arith.constant 0.000000e+00 : f32
      %139 = vector.broadcast %cst_87 : f32 to vector<256x8xf32>
      %140 = arith.maximumf %138, %139 : vector<256x8xf32>
      %141 = arith.index_cast %54 : i32 to index
      %c0_88 = arith.constant 0 : index
      %142 = vector.load %arg10[%141, %c0_88] : memref<10496x8xf32, #tpu.memory_space<vmem>>, vector<256x8xf32>
      tpu.vector_store %arg10[%141, %c0_88], %140 {strides = array<i32>} : memref<10496x8xf32, #tpu.memory_space<vmem>>, vector<256x8xf32>,
    }
    %c35_i32_12 = arith.constant 35 : i32
    %c0_13 = arith.constant 0 : index
    %c0_14 = arith.constant 0 : index
    %c0_15 = arith.constant 0 : index
    %6 = vector.load %arg6[%c0_13, %c0_14, %c0_15] : memref<9x8x16xf32, #tpu.memory_space<vmem>>, vector<9x8x16xf32>
    %c0_16 = arith.constant 0 : index
    %c0_17 = arith.constant 0 : index
    %7 = vector.load %arg7[%c0_16, %c0_17] : memref<1x16xf32, #tpu.memory_space<vmem>>, vector<1x16xf32>
    %c0_i32_18 = arith.constant 0 : i32
    %c32_i32 = arith.constant 32 : i32
    %8 = arith.addi %c0_i32_18, %c32_i32 : i32
    %c1_i32_19 = arith.constant 1 : i32
    scf.for %arg12 = %c0_i32_18 to %8 step %c1_i32_19  : i32 {
      %c256_i32 = arith.constant 256 : i32
      %53 = arith.muli %arg12, %c256_i32 : i32
      %54 = tpu.assume_multiple %53, 256 : i32
      %cst = arith.constant 0.000000e+00 : f32
      %55 = vector.broadcast %cst : f32 to vector<256x16xf32>
      %c0_i32_67 = arith.constant 0 : i32
      %56 = arith.addi %54, %c0_i32_67 : i32
      %57 = arith.index_cast %56 : i32 to index
      %c0_68 = arith.constant 0 : index
      %58 = vector.load %arg10[%57, %c0_68] : memref<10496x8xf32, #tpu.memory_space<vmem>>, vector<256x8xf32>
      %59 = vector.extract_strided_slice %6 {offsets = [0, 0, 0], sizes = [1, 8, 16], strides = [1, 1, 1]} : vector<9x8x16xf32> to vector<1x8x16xf32>
      %60 = vector.shape_cast %59 : vector<1x8x16xf32> to vector<8x16xf32>
      %61 = arith.truncf %58 : vector<256x8xf32> to vector<256x8xbf16>
      %62 = arith.truncf %60 : vector<8x16xf32> to vector<8x16xbf16>
      %cst_69 = arith.constant dense<0.000000e+00> : vector<256x16xf32>
      %63 = tpu.matmul %61, %62, %cst_69 {dimension_numbers = #tpu.dot_dimension_numbers<[1], [0], [0], [1], [0, 0, 1, 1], [], []>} : vector<256x8xbf16>, vector<8x16xbf16>, vector<256x16xf32> -> vector<256x16xf32>
      %64 = arith.addf %55, %63 : vector<256x16xf32>
      %c2_i32 = arith.constant 2 : i32
      %65 = arith.addi %54, %c2_i32 : i32
      %66 = arith.index_cast %65 : i32 to index
      %c0_70 = arith.constant 0 : index
      %67 = vector.load %arg10[%66, %c0_70] : memref<10496x8xf32, #tpu.memory_space<vmem>>, vector<256x8xf32>
      %68 = vector.extract_strided_slice %6 {offsets = [1, 0, 0], sizes = [1, 8, 16], strides = [1, 1, 1]} : vector<9x8x16xf32> to vector<1x8x16xf32>
      %69 = vector.shape_cast %68 : vector<1x8x16xf32> to vector<8x16xf32>
      %70 = arith.truncf %67 : vector<256x8xf32> to vector<256x8xbf16>
      %71 = arith.truncf %69 : vector<8x16xf32> to vector<8x16xbf16>
      %cst_71 = arith.constant dense<0.000000e+00> : vector<256x16xf32>
      %72 = tpu.matmul %70, %71, %cst_71 {dimension_numbers = #tpu.dot_dimension_numbers<[1], [0], [0], [1], [0, 0, 1, 1], [], []>} : vector<256x8xbf16>, vector<8x16xbf16>, vector<256x16xf32> -> vector<256x16xf32>
      %73 = arith.addf %64, %72 : vector<256x16xf32>
      %c4_i32 = arith.constant 4 : i32
      %74 = arith.addi %54, %c4_i32 : i32
      %75 = arith.index_cast %74 : i32 to index
      %c0_72 = arith.constant 0 : index
      %76 = vector.load %arg10[%75, %c0_72] : memref<10496x8xf32, #tpu.memory_space<vmem>>, vector<256x8xf32>
      %77 = vector.extract_strided_slice %6 {offsets = [2, 0, 0], sizes = [1, 8, 16], strides = [1, 1, 1]} : vector<9x8x16xf32> to vector<1x8x16xf32>
      %78 = vector.shape_cast %77 : vector<1x8x16xf32> to vector<8x16xf32>
      %79 = arith.truncf %76 : vector<256x8xf32> to vector<256x8xbf16>
      %80 = arith.truncf %78 : vector<8x16xf32> to vector<8x16xbf16>
      %cst_73 = arith.constant dense<0.000000e+00> : vector<256x16xf32>
      %81 = tpu.matmul %79, %80, %cst_73 {dimension_numbers = #tpu.dot_dimension_numbers<[1], [0], [0], [1], [0, 0, 1, 1], [], []>} : vector<256x8xbf16>, vector<8x16xbf16>, vector<256x16xf32> -> vector<256x16xf32>
      %82 = arith.addf %73, %81 : vector<256x16xf32>
      %c256_i32_74 = arith.constant 256 : i32
      %83 = arith.addi %54, %c256_i32_74 : i32
      %84 = arith.index_cast %83 : i32 to index
      %c0_75 = arith.constant 0 : index
      %85 = vector.load %arg10[%84, %c0_75] : memref<10496x8xf32, #tpu.memory_space<vmem>>, vector<256x8xf32>
      %86 = vector.extract_strided_slice %6 {offsets = [3, 0, 0], sizes = [1, 8, 16], strides = [1, 1, 1]} : vector<9x8x16xf32> to vector<1x8x16xf32>
      %87 = vector.shape_cast %86 : vector<1x8x16xf32> to vector<8x16xf32>
      %88 = arith.truncf %85 : vector<256x8xf32> to vector<256x8xbf16>
      %89 = arith.truncf %87 : vector<8x16xf32> to vector<8x16xbf16>
      %cst_76 = arith.constant dense<0.000000e+00> : vector<256x16xf32>
      %90 = tpu.matmul %88, %89, %cst_76 {dimension_numbers = #tpu.dot_dimension_numbers<[1], [0], [0], [1], [0, 0, 1, 1], [], []>} : vector<256x8xbf16>, vector<8x16xbf16>, vector<256x16xf32> -> vector<256x16xf32>
      %91 = arith.addf %82, %90 : vector<256x16xf32>
      %c258_i32 = arith.constant 258 : i32
      %92 = arith.addi %54, %c258_i32 : i32
      %93 = arith.index_cast %92 : i32 to index
      %c0_77 = arith.constant 0 : index
      %94 = vector.load %arg10[%93, %c0_77] : memref<10496x8xf32, #tpu.memory_space<vmem>>, vector<256x8xf32>
      %95 = vector.extract_strided_slice %6 {offsets = [4, 0, 0], sizes = [1, 8, 16], strides = [1, 1, 1]} : vector<9x8x16xf32> to vector<1x8x16xf32>
      %96 = vector.shape_cast %95 : vector<1x8x16xf32> to vector<8x16xf32>
      %97 = arith.truncf %94 : vector<256x8xf32> to vector<256x8xbf16>
      %98 = arith.truncf %96 : vector<8x16xf32> to vector<8x16xbf16>
      %cst_78 = arith.constant dense<0.000000e+00> : vector<256x16xf32>
      %99 = tpu.matmul %97, %98, %cst_78 {dimension_numbers = #tpu.dot_dimension_numbers<[1], [0], [0], [1], [0, 0, 1, 1], [], []>} : vector<256x8xbf16>, vector<8x16xbf16>, vector<256x16xf32> -> vector<256x16xf32>
      %100 = arith.addf %91, %99 : vector<256x16xf32>
      %c260_i32 = arith.constant 260 : i32
      %101 = arith.addi %54, %c260_i32 : i32
      %102 = arith.index_cast %101 : i32 to index
      %c0_79 = arith.constant 0 : index
      %103 = vector.load %arg10[%102, %c0_79] : memref<10496x8xf32, #tpu.memory_space<vmem>>, vector<256x8xf32>
      %104 = vector.extract_strided_slice %6 {offsets = [5, 0, 0], sizes = [1, 8, 16], strides = [1, 1, 1]} : vector<9x8x16xf32> to vector<1x8x16xf32>
      %105 = vector.shape_cast %104 : vector<1x8x16xf32> to vector<8x16xf32>
      %106 = arith.truncf %103 : vector<256x8xf32> to vector<256x8xbf16>
      %107 = arith.truncf %105 : vector<8x16xf32> to vector<8x16xbf16>
      %cst_80 = arith.constant dense<0.000000e+00> : vector<256x16xf32>
      %108 = tpu.matmul %106, %107, %cst_80 {dimension_numbers = #tpu.dot_dimension_numbers<[1], [0], [0], [1], [0, 0, 1, 1], [], []>} : vector<256x8xbf16>, vector<8x16xbf16>, vector<256x16xf32> -> vector<256x16xf32>
      %109 = arith.addf %100, %108 : vector<256x16xf32>
      %c512_i32 = arith.constant 512 : i32
      %110 = arith.addi %54, %c512_i32 : i32
      %111 = arith.index_cast %110 : i32 to index
      %c0_81 = arith.constant 0 : index
      %112 = vector.load %arg10[%111, %c0_81] : memref<10496x8xf32, #tpu.memory_space<vmem>>, vector<256x8xf32>
      %113 = vector.extract_strided_slice %6 {offsets = [6, 0, 0], sizes = [1, 8, 16], strides = [1, 1, 1]} : vector<9x8x16xf32> to vector<1x8x16xf32>
      %114 = vector.shape_cast %113 : vector<1x8x16xf32> to vector<8x16xf32>
      %115 = arith.truncf %112 : vector<256x8xf32> to vector<256x8xbf16>
      %116 = arith.truncf %114 : vector<8x16xf32> to vector<8x16xbf16>
      %cst_82 = arith.constant dense<0.000000e+00> : vector<256x16xf32>
      %117 = tpu.matmul %115, %116, %cst_82 {dimension_numbers = #tpu.dot_dimension_numbers<[1], [0], [0], [1], [0, 0, 1, 1], [], []>} : vector<256x8xbf16>, vector<8x16xbf16>, vector<256x16xf32> -> vector<256x16xf32>
      %118 = arith.addf %109, %117 : vector<256x16xf32>
      %c514_i32 = arith.constant 514 : i32
      %119 = arith.addi %54, %c514_i32 : i32
      %120 = arith.index_cast %119 : i32 to index
      %c0_83 = arith.constant 0 : index
      %121 = vector.load %arg10[%120, %c0_83] : memref<10496x8xf32, #tpu.memory_space<vmem>>, vector<256x8xf32>
      %122 = vector.extract_strided_slice %6 {offsets = [7, 0, 0], sizes = [1, 8, 16], strides = [1, 1, 1]} : vector<9x8x16xf32> to vector<1x8x16xf32>
      %123 = vector.shape_cast %122 : vector<1x8x16xf32> to vector<8x16xf32>
      %124 = arith.truncf %121 : vector<256x8xf32> to vector<256x8xbf16>
      %125 = arith.truncf %123 : vector<8x16xf32> to vector<8x16xbf16>
      %cst_84 = arith.constant dense<0.000000e+00> : vector<256x16xf32>
      %126 = tpu.matmul %124, %125, %cst_84 {dimension_numbers = #tpu.dot_dimension_numbers<[1], [0], [0], [1], [0, 0, 1, 1], [], []>} : vector<256x8xbf16>, vector<8x16xbf16>, vector<256x16xf32> -> vector<256x16xf32>
      %127 = arith.addf %118, %126 : vector<256x16xf32>
      %c516_i32 = arith.constant 516 : i32
      %128 = arith.addi %54, %c516_i32 : i32
      %129 = arith.index_cast %128 : i32 to index
      %c0_85 = arith.constant 0 : index
      %130 = vector.load %arg10[%129, %c0_85] : memref<10496x8xf32, #tpu.memory_space<vmem>>, vector<256x8xf32>
      %131 = vector.extract_strided_slice %6 {offsets = [8, 0, 0], sizes = [1, 8, 16], strides = [1, 1, 1]} : vector<9x8x16xf32> to vector<1x8x16xf32>
      %132 = vector.shape_cast %131 : vector<1x8x16xf32> to vector<8x16xf32>
      %133 = arith.truncf %130 : vector<256x8xf32> to vector<256x8xbf16>
      %134 = arith.truncf %132 : vector<8x16xf32> to vector<8x16xbf16>
      %cst_86 = arith.constant dense<0.000000e+00> : vector<256x16xf32>
      %135 = tpu.matmul %133, %134, %cst_86 {dimension_numbers = #tpu.dot_dimension_numbers<[1], [0], [0], [1], [0, 0, 1, 1], [], []>} : vector<256x8xbf16>, vector<8x16xbf16>, vector<256x16xf32> -> vector<256x16xf32>
      %136 = arith.addf %127, %135 : vector<256x16xf32>
      %137 = vector.broadcast %7 : vector<1x16xf32> to vector<256x16xf32>
      %138 = arith.addf %136, %137 : vector<256x16xf32>
      %cst_87 = arith.constant 0.000000e+00 : f32
      %139 = vector.broadcast %cst_87 : f32 to vector<256x16xf32>
      %140 = arith.maximumf %138, %139 : vector<256x16xf32>
      %141 = arith.index_cast %54 : i32 to index
      %c0_88 = arith.constant 0 : index
      %142 = vector.load %arg11[%141, %c0_88] : memref<10496x16xf32, #tpu.memory_space<vmem>>, vector<256x16xf32>
      tpu.vector_store %arg11[%141, %c0_88], %140 {strides = array<i32>} : memref<10496x16xf32, #tpu.memory_space<vmem>>, vector<256x16xf32>,
    }
    %c32_i32_20 = arith.constant 32 : i32
    %c0_21 = arith.constant 0 : index
    %c0_22 = arith.constant 0 : index
    %9 = tpu.strided_load %arg11[%c0_21, %c0_22] {strides = array<i32: 2, 1>} : memref<10496x16xf32, #tpu.memory_space<vmem>>, vector<59x16xf32>
    %c0_23 = arith.constant 0 : index
    %c0_24 = arith.constant 0 : index
    %10 = vector.load %arg8[%c0_23, %c0_24] : memref<1298x16xf32, #tpu.memory_space<vmem>>, vector<59x16xf32>
    tpu.vector_store %arg8[%c0_23, %c0_24], %9 {strides = array<i32>} : memref<1298x16xf32, #tpu.memory_space<vmem>>, vector<59x16xf32>,
    %c256 = arith.constant 256 : index
    %c0_25 = arith.constant 0 : index
    %11 = tpu.strided_load %arg11[%c256, %c0_25] {strides = array<i32: 2, 1>} : memref<10496x16xf32, #tpu.memory_space<vmem>>, vector<59x16xf32>
    %c59 = arith.constant 59 : index
    %c0_26 = arith.constant 0 : index
    %12 = vector.load %arg8[%c59, %c0_26] : memref<1298x16xf32, #tpu.memory_space<vmem>>, vector<59x16xf32>
    tpu.vector_store %arg8[%c59, %c0_26], %11 {strides = array<i32>} : memref<1298x16xf32, #tpu.memory_space<vmem>>, vector<59x16xf32>,
    %c512 = arith.constant 512 : index
    %c0_27 = arith.constant 0 : index
    %13 = tpu.strided_load %arg11[%c512, %c0_27] {strides = array<i32: 2, 1>} : memref<10496x16xf32, #tpu.memory_space<vmem>>, vector<59x16xf32>
    %c118 = arith.constant 118 : index
    %c0_28 = arith.constant 0 : index
    %14 = vector.load %arg8[%c118, %c0_28] : memref<1298x16xf32, #tpu.memory_space<vmem>>, vector<59x16xf32>
    tpu.vector_store %arg8[%c118, %c0_28], %13 {strides = array<i32>} : memref<1298x16xf32, #tpu.memory_space<vmem>>, vector<59x16xf32>,
    %c768 = arith.constant 768 : index
    %c0_29 = arith.constant 0 : index
    %15 = tpu.strided_load %arg11[%c768, %c0_29] {strides = array<i32: 2, 1>} : memref<10496x16xf32, #tpu.memory_space<vmem>>, vector<59x16xf32>
    %c177 = arith.constant 177 : index
    %c0_30 = arith.constant 0 : index
    %16 = vector.load %arg8[%c177, %c0_30] : memref<1298x16xf32, #tpu.memory_space<vmem>>, vector<59x16xf32>
    tpu.vector_store %arg8[%c177, %c0_30], %15 {strides = array<i32>} : memref<1298x16xf32, #tpu.memory_space<vmem>>, vector<59x16xf32>,
    %c1024 = arith.constant 1024 : index
    %c0_31 = arith.constant 0 : index
    %17 = tpu.strided_load %arg11[%c1024, %c0_31] {strides = array<i32: 2, 1>} : memref<10496x16xf32, #tpu.memory_space<vmem>>, vector<59x16xf32>
    %c236 = arith.constant 236 : index
    %c0_32 = arith.constant 0 : index
    %18 = vector.load %arg8[%c236, %c0_32] : memref<1298x16xf32, #tpu.memory_space<vmem>>, vector<59x16xf32>
    tpu.vector_store %arg8[%c236, %c0_32], %17 {strides = array<i32>} : memref<1298x16xf32, #tpu.memory_space<vmem>>, vector<59x16xf32>,
    %c1280 = arith.constant 1280 : index
    %c0_33 = arith.constant 0 : index
    %19 = tpu.strided_load %arg11[%c1280, %c0_33] {strides = array<i32: 2, 1>} : memref<10496x16xf32, #tpu.memory_space<vmem>>, vector<59x16xf32>
    %c295 = arith.constant 295 : index
    %c0_34 = arith.constant 0 : index
    %20 = vector.load %arg8[%c295, %c0_34] : memref<1298x16xf32, #tpu.memory_space<vmem>>, vector<59x16xf32>
    tpu.vector_store %arg8[%c295, %c0_34], %19 {strides = array<i32>} : memref<1298x16xf32, #tpu.memory_space<vmem>>, vector<59x16xf32>,
    %c1536 = arith.constant 1536 : index
    %c0_35 = arith.constant 0 : index
    %21 = tpu.strided_load %arg11[%c1536, %c0_35] {strides = array<i32: 2, 1>} : memref<10496x16xf32, #tpu.memory_space<vmem>>, vector<59x16xf32>
    %c354 = arith.constant 354 : index
    %c0_36 = arith.constant 0 : index
    %22 = vector.load %arg8[%c354, %c0_36] : memref<1298x16xf32, #tpu.memory_space<vmem>>, vector<59x16xf32>
    tpu.vector_store %arg8[%c354, %c0_36], %21 {strides = array<i32>} : memref<1298x16xf32, #tpu.memory_space<vmem>>, vector<59x16xf32>,
    %c1792 = arith.constant 1792 : index
    %c0_37 = arith.constant 0 : index
    %23 = tpu.strided_load %arg11[%c1792, %c0_37] {strides = array<i32: 2, 1>} : memref<10496x16xf32, #tpu.memory_space<vmem>>, vector<59x16xf32>
    %c413 = arith.constant 413 : index
    %c0_38 = arith.constant 0 : index
    %24 = vector.load %arg8[%c413, %c0_38] : memref<1298x16xf32, #tpu.memory_space<vmem>>, vector<59x16xf32>
    tpu.vector_store %arg8[%c413, %c0_38], %23 {strides = array<i32>} : memref<1298x16xf32, #tpu.memory_space<vmem>>, vector<59x16xf32>,
    %c2048 = arith.constant 2048 : index
    %c0_39 = arith.constant 0 : index
    %25 = tpu.strided_load %arg11[%c2048, %c0_39] {strides = array<i32: 2, 1>} : memref<10496x16xf32, #tpu.memory_space<vmem>>, vector<59x16xf32>
    %c472 = arith.constant 472 : index
    %c0_40 = arith.constant 0 : index
    %26 = vector.load %arg8[%c472, %c0_40] : memref<1298x16xf32, #tpu.memory_space<vmem>>, vector<59x16xf32>
    tpu.vector_store %arg8[%c472, %c0_40], %25 {strides = array<i32>} : memref<1298x16xf32, #tpu.memory_space<vmem>>, vector<59x16xf32>,
    %c2304 = arith.constant 2304 : index
    %c0_41 = arith.constant 0 : index
    %27 = tpu.strided_load %arg11[%c2304, %c0_41] {strides = array<i32: 2, 1>} : memref<10496x16xf32, #tpu.memory_space<vmem>>, vector<59x16xf32>
    %c531 = arith.constant 531 : index
    %c0_42 = arith.constant 0 : index
    %28 = vector.load %arg8[%c531, %c0_42] : memref<1298x16xf32, #tpu.memory_space<vmem>>, vector<59x16xf32>
    tpu.vector_store %arg8[%c531, %c0_42], %27 {strides = array<i32>} : memref<1298x16xf32, #tpu.memory_space<vmem>>, vector<59x16xf32>,
    %c2560 = arith.constant 2560 : index
    %c0_43 = arith.constant 0 : index
    %29 = tpu.strided_load %arg11[%c2560, %c0_43] {strides = array<i32: 2, 1>} : memref<10496x16xf32, #tpu.memory_space<vmem>>, vector<59x16xf32>
    %c590 = arith.constant 590 : index
    %c0_44 = arith.constant 0 : index
    %30 = vector.load %arg8[%c590, %c0_44] : memref<1298x16xf32, #tpu.memory_space<vmem>>, vector<59x16xf32>
    tpu.vector_store %arg8[%c590, %c0_44], %29 {strides = array<i32>} : memref<1298x16xf32, #tpu.memory_space<vmem>>, vector<59x16xf32>,
    %c4096 = arith.constant 4096 : index
    %c0_45 = arith.constant 0 : index
    %31 = tpu.strided_load %arg11[%c4096, %c0_45] {strides = array<i32: 2, 1>} : memref<10496x16xf32, #tpu.memory_space<vmem>>, vector<59x16xf32>
    %c649 = arith.constant 649 : index
    %c0_46 = arith.constant 0 : index
    %32 = vector.load %arg8[%c649, %c0_46] : memref<1298x16xf32, #tpu.memory_space<vmem>>, vector<59x16xf32>
    tpu.vector_store %arg8[%c649, %c0_46], %31 {strides = array<i32>} : memref<1298x16xf32, #tpu.memory_space<vmem>>, vector<59x16xf32>,
    %c4352 = arith.constant 4352 : index
    %c0_47 = arith.constant 0 : index
    %33 = tpu.strided_load %arg11[%c4352, %c0_47] {strides = array<i32: 2, 1>} : memref<10496x16xf32, #tpu.memory_space<vmem>>, vector<59x16xf32>
    %c708 = arith.constant 708 : index
    %c0_48 = arith.constant 0 : index
    %34 = vector.load %arg8[%c708, %c0_48] : memref<1298x16xf32, #tpu.memory_space<vmem>>, vector<59x16xf32>
    tpu.vector_store %arg8[%c708, %c0_48], %33 {strides = array<i32>} : memref<1298x16xf32, #tpu.memory_space<vmem>>, vector<59x16xf32>,
    %c4608 = arith.constant 4608 : index
    %c0_49 = arith.constant 0 : index
    %35 = tpu.strided_load %arg11[%c4608, %c0_49] {strides = array<i32: 2, 1>} : memref<10496x16xf32, #tpu.memory_space<vmem>>, vector<59x16xf32>
    %c767 = arith.constant 767 : index
    %c0_50 = arith.constant 0 : index
    %36 = vector.load %arg8[%c767, %c0_50] : memref<1298x16xf32, #tpu.memory_space<vmem>>, vector<59x16xf32>
    tpu.vector_store %arg8[%c767, %c0_50], %35 {strides = array<i32>} : memref<1298x16xf32, #tpu.memory_space<vmem>>, vector<59x16xf32>,
    %c4864 = arith.constant 4864 : index
    %c0_51 = arith.constant 0 : index
    %37 = tpu.strided_load %arg11[%c4864, %c0_51] {strides = array<i32: 2, 1>} : memref<10496x16xf32, #tpu.memory_space<vmem>>, vector<59x16xf32>
    %c826 = arith.constant 826 : index
    %c0_52 = arith.constant 0 : index
    %38 = vector.load %arg8[%c826, %c0_52] : memref<1298x16xf32, #tpu.memory_space<vmem>>, vector<59x16xf32>
    tpu.vector_store %arg8[%c826, %c0_52], %37 {strides = array<i32>} : memref<1298x16xf32, #tpu.memory_space<vmem>>, vector<59x16xf32>,
    %c5120 = arith.constant 5120 : index
    %c0_53 = arith.constant 0 : index
    %39 = tpu.strided_load %arg11[%c5120, %c0_53] {strides = array<i32: 2, 1>} : memref<10496x16xf32, #tpu.memory_space<vmem>>, vector<59x16xf32>
    %c885 = arith.constant 885 : index
    %c0_54 = arith.constant 0 : index
    %40 = vector.load %arg8[%c885, %c0_54] : memref<1298x16xf32, #tpu.memory_space<vmem>>, vector<59x16xf32>
    tpu.vector_store %arg8[%c885, %c0_54], %39 {strides = array<i32>} : memref<1298x16xf32, #tpu.memory_space<vmem>>, vector<59x16xf32>,
    %c5376 = arith.constant 5376 : index
    %c0_55 = arith.constant 0 : index
    %41 = tpu.strided_load %arg11[%c5376, %c0_55] {strides = array<i32: 2, 1>} : memref<10496x16xf32, #tpu.memory_space<vmem>>, vector<59x16xf32>
    %c944 = arith.constant 944 : index
    %c0_56 = arith.constant 0 : index
    %42 = vector.load %arg8[%c944, %c0_56] : memref<1298x16xf32, #tpu.memory_space<vmem>>, vector<59x16xf32>
    tpu.vector_store %arg8[%c944, %c0_56], %41 {strides = array<i32>} : memref<1298x16xf32, #tpu.memory_space<vmem>>, vector<59x16xf32>,
    %c5632 = arith.constant 5632 : index
    %c0_57 = arith.constant 0 : index
    %43 = tpu.strided_load %arg11[%c5632, %c0_57] {strides = array<i32: 2, 1>} : memref<10496x16xf32, #tpu.memory_space<vmem>>, vector<59x16xf32>
    %c1003 = arith.constant 1003 : index
    %c0_58 = arith.constant 0 : index
    %44 = vector.load %arg8[%c1003, %c0_58] : memref<1298x16xf32, #tpu.memory_space<vmem>>, vector<59x16xf32>
    tpu.vector_store %arg8[%c1003, %c0_58], %43 {strides = array<i32>} : memref<1298x16xf32, #tpu.memory_space<vmem>>, vector<59x16xf32>,
    %c5888 = arith.constant 5888 : index
    %c0_59 = arith.constant 0 : index
    %45 = tpu.strided_load %arg11[%c5888, %c0_59] {strides = array<i32: 2, 1>} : memref<10496x16xf32, #tpu.memory_space<vmem>>, vector<59x16xf32>
    %c1062 = arith.constant 1062 : index
    %c0_60 = arith.constant 0 : index
    %46 = vector.load %arg8[%c1062, %c0_60] : memref<1298x16xf32, #tpu.memory_space<vmem>>, vector<59x16xf32>
    tpu.vector_store %arg8[%c1062, %c0_60], %45 {strides = array<i32>} : memref<1298x16xf32, #tpu.memory_space<vmem>>, vector<59x16xf32>,
    %c6144 = arith.constant 6144 : index
    %c0_61 = arith.constant 0 : index
    %47 = tpu.strided_load %arg11[%c6144, %c0_61] {strides = array<i32: 2, 1>} : memref<10496x16xf32, #tpu.memory_space<vmem>>, vector<59x16xf32>
    %c1121 = arith.constant 1121 : index
    %c0_62 = arith.constant 0 : index
    %48 = vector.load %arg8[%c1121, %c0_62] : memref<1298x16xf32, #tpu.memory_space<vmem>>, vector<59x16xf32>
    tpu.vector_store %arg8[%c1121, %c0_62], %47 {strides = array<i32>} : memref<1298x16xf32, #tpu.memory_space<vmem>>, vector<59x16xf32>,
    %c6400 = arith.constant 6400 : index
    %c0_63 = arith.constant 0 : index
    %49 = tpu.strided_load %arg11[%c6400, %c0_63] {strides = array<i32: 2, 1>} : memref<10496x16xf32, #tpu.memory_space<vmem>>, vector<59x16xf32>
    %c1180 = arith.constant 1180 : index
    %c0_64 = arith.constant 0 : index
    %50 = vector.load %arg8[%c1180, %c0_64] : memref<1298x16xf32, #tpu.memory_space<vmem>>, vector<59x16xf32>
    tpu.vector_store %arg8[%c1180, %c0_64], %49 {strides = array<i32>} : memref<1298x16xf32, #tpu.memory_space<vmem>>, vector<59x16xf32>,
    %c6656 = arith.constant 6656 : index
    %c0_65 = arith.constant 0 : index
    %51 = tpu.strided_load %arg11[%c6656, %c0_65] {strides = array<i32: 2, 1>} : memref<10496x16xf32, #tpu.memory_space<vmem>>, vector<59x16xf32>
    %c1239 = arith.constant 1239 : index
    %c0_66 = arith.constant 0 : index
    %52 = vector.load %arg8[%c1239, %c0_66] : memref<1298x16xf32, #tpu.memory_space<vmem>>, vector<59x16xf32>
    tpu.vector_store %arg8[%c1239, %c0_66], %51 {strides = array<i32>} : memref<1298x16xf32, #tpu.memory_space<vmem>>, vector<59x16xf32>,
    return
  }
  func.func @transform_0(%arg0: i32) -> (i32, i32) {
    %c0_i32 = arith.constant 0 : i32
    %c0_i32_0 = arith.constant 0 : i32
    %c0_i32_1 = arith.constant 0 : i32
    return %c0_i32, %c0_i32_0 : i32, i32
  }
  func.func @transform_1(%arg0: i32) -> (i32, i32, i32) {
    %c0_i32 = arith.constant 0 : i32
    %c0_i32_0 = arith.constant 0 : i32
    %c0_i32_1 = arith.constant 0 : i32
    %c0_i32_2 = arith.constant 0 : i32
    return %c0_i32, %c0_i32_0, %c0_i32_1 : i32, i32, i32
  }
  func.func @transform_2(%arg0: i32) -> (i32, i32) {
    %c0_i32 = arith.constant 0 : i32
    %c0_i32_0 = arith.constant 0 : i32
    %c0_i32_1 = arith.constant 0 : i32
    return %c0_i32, %c0_i32_0 : i32, i32
  }
  func.func @transform_3(%arg0: i32) -> (i32, i32, i32) {
    %c0_i32 = arith.constant 0 : i32
    %c0_i32_0 = arith.constant 0 : i32
    %c0_i32_1 = arith.constant 0 : i32
    %c0_i32_2 = arith.constant 0 : i32
    return %c0_i32, %c0_i32_0, %c0_i32_1 : i32, i32, i32
  }
  func.func @transform_4(%arg0: i32) -> (i32, i32) {
    %c0_i32 = arith.constant 0 : i32
    %c0_i32_0 = arith.constant 0 : i32
    %c0_i32_1 = arith.constant 0 : i32
    return %c0_i32, %c0_i32_0 : i32, i32
  }
  func.func @transform_5(%arg0: i32) -> (i32, i32, i32) {
    %c0_i32 = arith.constant 0 : i32
    %c0_i32_0 = arith.constant 0 : i32
    %c0_i32_1 = arith.constant 0 : i32
    %c0_i32_2 = arith.constant 0 : i32
    return %c0_i32, %c0_i32_0, %c0_i32_1 : i32, i32, i32
  }
  func.func @transform_6(%arg0: i32) -> (i32, i32) {
    %c0_i32 = arith.constant 0 : i32
    %c0_i32_0 = arith.constant 0 : i32
    %c0_i32_1 = arith.constant 0 : i32
    return %c0_i32, %c0_i32_0 : i32, i32
  }
  func.func @transform_7(%arg0: i32) -> (i32, i32) {
    %c0_i32 = arith.constant 0 : i32
    %c0_i32_0 = arith.constant 0 : i32
    %c0_i32_1 = arith.constant 0 : i32
    return %c0_i32, %c0_i32_0 : i32, i32
  }
}

module attributes {stable_mosaic.version = 11 : i64} {
  func.func @_head_kernel(%arg0: i32, %arg1: memref<8x10384xf32, #tpu.memory_space<vmem>>, %arg2: memref<10384x32xbf16, #tpu.memory_space<vmem>>, %arg3: memref<1x32xf32, #tpu.memory_space<vmem>>, %arg4: memref<8x32xf32, #tpu.memory_space<vmem>>) attributes {dimension_semantics = [#tpu.dimension_semantics<arbitrary>], iteration_bounds = array<i64: 1>, scalar_prefetch = 0 : i64, scratch_operands = 0 : i64, tpu.core_type = #tpu.core_type<tc>, window_params = [{pipeline_mode = #tpu.pipeline_mode<synchronous>, transform_indices = @transform_0, window_bounds = array<i64: 8, 10384>}, {pipeline_mode = #tpu.pipeline_mode<synchronous>, transform_indices = @transform_1, window_bounds = array<i64: 10384, 32>}, {pipeline_mode = #tpu.pipeline_mode<synchronous>, transform_indices = @transform_2, window_bounds = array<i64: 1, 32>}, {pipeline_mode = #tpu.pipeline_mode<synchronous>, transform_indices = @transform_3, window_bounds = array<i64: 8, 32>}]} {
    %c0 = arith.constant 0 : index
    %c0_0 = arith.constant 0 : index
    %0 = vector.load %arg1[%c0, %c0_0] : memref<8x10384xf32, #tpu.memory_space<vmem>>, vector<8x10384xf32>
    %1 = arith.truncf %0 : vector<8x10384xf32> to vector<8x10384xbf16>
    %c0_1 = arith.constant 0 : index
    %c0_2 = arith.constant 0 : index
    %2 = vector.load %arg2[%c0_1, %c0_2] : memref<10384x32xbf16, #tpu.memory_space<vmem>>, vector<10384x32xbf16>
    %cst = arith.constant dense<0.000000e+00> : vector<8x32xf32>
    %3 = tpu.matmul %1, %2, %cst {dimension_numbers = #tpu.dot_dimension_numbers<[1], [0], [0], [1], [0, 0, 1, 1], [], []>} : vector<8x10384xbf16>, vector<10384x32xbf16>, vector<8x32xf32> -> vector<8x32xf32>
    %c0_3 = arith.constant 0 : index
    %c0_4 = arith.constant 0 : index
    %4 = vector.load %arg3[%c0_3, %c0_4] : memref<1x32xf32, #tpu.memory_space<vmem>>, vector<1x32xf32>
    %5 = vector.broadcast %4 : vector<1x32xf32> to vector<8x32xf32>
    %6 = arith.addf %3, %5 : vector<8x32xf32>
    %c0_5 = arith.constant 0 : index
    %c0_6 = arith.constant 0 : index
    %7 = vector.load %arg4[%c0_5, %c0_6] : memref<8x32xf32, #tpu.memory_space<vmem>>, vector<8x32xf32>
    tpu.vector_store %arg4[%c0_5, %c0_6], %6 {strides = array<i32>} : memref<8x32xf32, #tpu.memory_space<vmem>>, vector<8x32xf32>,
    return
  }
  func.func @transform_0(%arg0: i32) -> (i32, i32) {
    %c0_i32 = arith.constant 0 : i32
    %c0_i32_0 = arith.constant 0 : i32
    %c0_i32_1 = arith.constant 0 : i32
    return %c0_i32, %c0_i32_0 : i32, i32
  }
  func.func @transform_1(%arg0: i32) -> (i32, i32) {
    %c0_i32 = arith.constant 0 : i32
    %c0_i32_0 = arith.constant 0 : i32
    %c0_i32_1 = arith.constant 0 : i32
    return %c0_i32, %c0_i32_0 : i32, i32
  }
  func.func @transform_2(%arg0: i32) -> (i32, i32) {
    %c0_i32 = arith.constant 0 : i32
    %c0_i32_0 = arith.constant 0 : i32
    %c0_i32_1 = arith.constant 0 : i32
    return %c0_i32, %c0_i32_0 : i32, i32
  }
  func.func @transform_3(%arg0: i32) -> (i32, i32) {
    %c0_i32 = arith.constant 0 : i32
    %c0_i32_0 = arith.constant 0 : i32
    %c0_i32_1 = arith.constant 0 : i32
    return %c0_i32, %c0_i32_0 : i32, i32
  }
}

</mosaic_0001>

<llo_original>
// kernel: forward.2
$region0: #{forward.2}
  #allocation0 [shape = 'u32[]', space=smem, size = 0x4, offset = 0x4, fixed_abs, tag = 'smem constant byte address 0x4 - core index']
  #allocation1 [shape = 'u32[72,128]{1,0:T(1,128)}', space=vmem, size = 0x9000, scoped, tag = 'internal scratch']
  #allocation2 [shape = 'f32[10496,8]{1,0:T(8,128)}', space=vmem, size = 0x520000, scoped, tag = 'scratch operand']
  #allocation3 [shape = 'f32[10496,8]{1,0:T(8,128)}', space=vmem, size = 0x520000, scoped, tag = 'scratch operand']
  #allocation4 [shape = 'f32[10496,16]{1,0:T(8,128)}', space=vmem, size = 0x520000, scoped, tag = 'scratch operand']
  %s0 = inlined_call_operand.vmem [shape: f32[10496,1], index: 0, kind: input, shape index: {}]
  %s1 = inlined_call_operand.vmem [shape: f32[9,1,8], index: 1, kind: input, shape index: {}]
  %s2 = inlined_call_operand.vmem [shape: f32[1,8], index: 2, kind: input, shape index: {}]
  %s3 = inlined_call_operand.vmem [shape: f32[9,8,8], index: 3, kind: input, shape index: {}]
  %s4 = inlined_call_operand.vmem [shape: f32[1,8], index: 4, kind: input, shape index: {}]
  %s5 = inlined_call_operand.vmem [shape: f32[9,8,16], index: 5, kind: input, shape index: {}]
  %s6 = inlined_call_operand.vmem [shape: f32[1,16], index: 6, kind: input, shape index: {}]
  %s7 = inlined_call_operand.vmem [shape: f32[1298,16], index: 7, kind: output, shape index: {}]
  %s8 = sld [smem:[#allocation0]]
  $region59: #{forward.2} parent=0
    _
  %s10 = ssub.s32 1, %s8
  %s11 = scalar_select 0, %s10, %s8
  // Predicated region
  $region2: #{forward.2} parent=0 // pred_check
    _
  $region3: #{forward.2} parent=0 // pred_check_branch
    %13 = sbr.rel (0) target = $region5
  $region4: #{forward.2} parent=0 // pred_region
    _
  $region5: #{forward.2} parent=0 // pred_fallthru
    _
  // Predicated region
  $region6: #{forward.2} parent=0 // pred_check
    _
  $region7: #{forward.2} parent=0 // pred_check_branch
    %15 = sbr.rel (0) target = $region9
  $region8: #{forward.2} parent=0 // pred_region
    _
  $region9: #{forward.2} parent=0 // pred_fallthru
    _
  // Predicated region
  $region10: #{forward.2} parent=0 // pred_check
    _
  $region11: #{forward.2} parent=0 // pred_check_branch
    %17 = sbr.rel (0) target = $region13
  $region12: #{forward.2} parent=0 // pred_region
    _
  $region13: #{forward.2} parent=0 // pred_fallthru
    _
  // Predicated region
  $region14: #{forward.2} parent=0 // pred_check
    _
  $region15: #{forward.2} parent=0 // pred_check_branch
    %19 = sbr.rel (0) target = $region17
  $region16: #{forward.2} parent=0 // pred_region
    _
  $region17: #{forward.2} parent=0 // pred_fallthru
    _
  // Predicated region
  $region18: #{forward.2} parent=0 // pred_check
    _
  $region19: #{forward.2} parent=0 // pred_check_branch
    %21 = sbr.rel (0) target = $region21
  $region20: #{forward.2} parent=0 // pred_region
    _
  $region21: #{forward.2} parent=0 // pred_fallthru
    _
  // Predicated region
  $region22: #{forward.2} parent=0 // pred_check
    _
  $region23: #{forward.2} parent=0 // pred_check_branch
    %23 = sbr.rel (0) target = $region25
  $region24: #{forward.2} parent=0 // pred_region
    _
  $region25: #{forward.2} parent=0 // pred_fallthru
    _
  // Predicated region
  $region26: #{forward.2} parent=0 // pred_check
    _
  $region27: #{forward.2} parent=0 // pred_check_branch
    %25 = sbr.rel (0) target = $region29
  $region28: #{forward.2} parent=0 // pred_region
    _
  $region29: #{forward.2} parent=0 // pred_fallthru
    _
  %v27 = vld [vmem:[%s1] sm:$0x1]
  %v28 = vld [vmem:[%s1 + $0x1] sm:$0x1]
  %v29 = vld [vmem:[%s1 + $0x2] sm:$0x1]
  %v30 = vld [vmem:[%s1 + $0x3] sm:$0x1]
  %v31 = vld [vmem:[%s1 + $0x4] sm:$0x1]
  %v32 = vld [vmem:[%s1 + $0x5] sm:$0x1]
  %v33 = vld [vmem:[%s1 + $0x6] sm:$0x1]
  %v34 = vld [vmem:[%s1 + $0x7] sm:$0x1]
  %v35 = vld [vmem:[%s1 + $0x8] sm:$0x1]
  %v36 = vld [vmem:[%s2] sm:$0x1]
  loop: start=0, step=1, limit=37
  $region30: #{forward.2} parent=0 // loop_pre_header
    _
  $region31: #{forward.2} parent=0 // loop_header
    %s38 = sphi 0, %s42
    %p39 = scmp.ge.s32.totalorder %s38, 37
  $region32: #{forward.2} parent=0 // loop_header_branch
    %41 = sbr.rel (%p39) target = $region36
  $region33: #{forward.2} parent=0 // loop_body
    %s43 = smul.u32 %s38, 256
    %s44 = scalar_lea.vmem %s0, %s43
    %v45 = vld [vmem:[%s44] sm:$0xff]
    %v46 = vld [vmem:[%s44 + $0x8] sm:$0xff]
    %v47 = vld [vmem:[%s44 + $0x10] sm:$0xff]
    %v48 = vld [vmem:[%s44 + $0x18] sm:$0xff]
    %v49 = vld [vmem:[%s44 + $0x20] sm:$0xff]
    %v50 = vld [vmem:[%s44 + $0x28] sm:$0xff]
    %v51 = vld [vmem:[%s44 + $0x30] sm:$0xff]
    %v52 = vld [vmem:[%s44 + $0x38] sm:$0xff]
    %v53 = vld [vmem:[%s44 + $0x40] sm:$0xff]
    %v54 = vld [vmem:[%s44 + $0x48] sm:$0xff]
    %v55 = vld [vmem:[%s44 + $0x50] sm:$0xff]
    %v56 = vld [vmem:[%s44 + $0x58] sm:$0xff]
    %v57 = vld [vmem:[%s44 + $0x60] sm:$0xff]
    %v58 = vld [vmem:[%s44 + $0x68] sm:$0xff]
    %v59 = vld [vmem:[%s44 + $0x70] sm:$0xff]
    %v60 = vld [vmem:[%s44 + $0x78] sm:$0xff]
    %v61 = vld [vmem:[%s44 + $0x80] sm:$0xff]
    %v62 = vld [vmem:[%s44 + $0x88] sm:$0xff]
    %v63 = vld [vmem:[%s44 + $0x90] sm:$0xff]
    %v64 = vld [vmem:[%s44 + $0x98] sm:$0xff]
    %v65 = vld [vmem:[%s44 + $0xa0] sm:$0xff]
    %v66 = vld [vmem:[%s44 + $0xa8] sm:$0xff]
    %v67 = vld [vmem:[%s44 + $0xb0] sm:$0xff]
    %v68 = vld [vmem:[%s44 + $0xb8] sm:$0xff]
    %v69 = vld [vmem:[%s44 + $0xc0] sm:$0xff]
    %v70 = vld [vmem:[%s44 + $0xc8] sm:$0xff]
    %v71 = vld [vmem:[%s44 + $0xd0] sm:$0xff]
    %v72 = vld [vmem:[%s44 + $0xd8] sm:$0xff]
    %v73 = vld [vmem:[%s44 + $0xe0] sm:$0xff]
    %v74 = vld [vmem:[%s44 + $0xe8] sm:$0xff]
    %v75 = vld [vmem:[%s44 + $0xf0] sm:$0xff]
    %v76 = vld [vmem:[%s44 + $0xf8] sm:$0xff]
    %78 = vset.pattern.permute.xlu0 0
    %79 = vperm.xlu0 %78, %v45
    %v80 = vpop.permute.xlu0 %79
    %83 = vset.pattern.permute.xlu0 0
    %84 = vperm.xlu0 %83, %v46
    %v85 = vpop.permute.xlu0 %84
    %88 = vset.pattern.permute.xlu0 0
    %89 = vperm.xlu0 %88, %v47
    %v90 = vpop.permute.xlu0 %89
    %93 = vset.pattern.permute.xlu0 0
    %94 = vperm.xlu0 %93, %v48
    %v95 = vpop.permute.xlu0 %94
    %98 = vset.pattern.permute.xlu0 0
    %99 = vperm.xlu0 %98, %v49
    %v100 = vpop.permute.xlu0 %99
    %103 = vset.pattern.permute.xlu0 0
    %104 = vperm.xlu0 %103, %v50
    %v105 = vpop.permute.xlu0 %104
    %108 = vset.pattern.permute.xlu0 0
    %109 = vperm.xlu0 %108, %v51
    %v110 = vpop.permute.xlu0 %109
    %113 = vset.pattern.permute.xlu0 0
    %114 = vperm.xlu0 %113, %v52
    %v115 = vpop.permute.xlu0 %114
    %118 = vset.pattern.permute.xlu0 0
    %119 = vperm.xlu0 %118, %v53
    %v120 = vpop.permute.xlu0 %119
    %123 = vset.pattern.permute.xlu0 0
    %124 = vperm.xlu0 %123, %v54
    %v125 = vpop.permute.xlu0 %124
    %128 = vset.pattern.permute.xlu0 0
    %129 = vperm.xlu0 %128, %v55
    %v130 = vpop.permute.xlu0 %129
    %133 = vset.pattern.permute.xlu0 0
    %134 = vperm.xlu0 %133, %v56
    %v135 = vpop.permute.xlu0 %134
    %138 = vset.pattern.permute.xlu0 0
    %139 = vperm.xlu0 %138, %v57
    %v140 = vpop.permute.xlu0 %139
    %143 = vset.pattern.permute.xlu0 0
    %144 = vperm.xlu0 %143, %v58
    %v145 = vpop.permute.xlu0 %144
    %148 = vset.pattern.permute.xlu0 0
    %149 = vperm.xlu0 %148, %v59
    %v150 = vpop.permute.xlu0 %149
    %153 = vset.pattern.permute.xlu0 0
    %154 = vperm.xlu0 %153, %v60
    %v155 = vpop.permute.xlu0 %154
    %158 = vset.pattern.permute.xlu0 0
    %159 = vperm.xlu0 %158, %v61
    %v160 = vpop.permute.xlu0 %159
    %163 = vset.pattern.permute.xlu0 0
    %164 = vperm.xlu0 %163, %v62
    %v165 = vpop.permute.xlu0 %164
    %168 = vset.pattern.permute.xlu0 0
    %169 = vperm.xlu0 %168, %v63
    %v170 = vpop.permute.xlu0 %169
    %173 = vset.pattern.permute.xlu0 0
    %174 = vperm.xlu0 %173, %v64
    %v175 = vpop.permute.xlu0 %174
    %178 = vset.pattern.permute.xlu0 0
    %179 = vperm.xlu0 %178, %v65
    %v180 = vpop.permute.xlu0 %179
    %183 = vset.pattern.permute.xlu0 0
    %184 = vperm.xlu0 %183, %v66
    %v185 = vpop.permute.xlu0 %184
    %188 = vset.pattern.permute.xlu0 0
    %189 = vperm.xlu0 %188, %v67
    %v190 = vpop.permute.xlu0 %189
    %193 = vset.pattern.permute.xlu0 0
    %194 = vperm.xlu0 %193, %v68
    %v195 = vpop.permute.xlu0 %194
    %198 = vset.pattern.permute.xlu0 0
    %199 = vperm.xlu0 %198, %v69
    %v200 = vpop.permute.xlu0 %199
    %203 = vset.pattern.permute.xlu0 0
    %204 = vperm.xlu0 %203, %v70
    %v205 = vpop.permute.xlu0 %204
    %208 = vset.pattern.permute.xlu0 0
    %209 = vperm.xlu0 %208, %v71
    %v210 = vpop.permute.xlu0 %209
    %213 = vset.pattern.permute.xlu0 0
    %214 = vperm.xlu0 %213, %v72
    %v215 = vpop.permute.xlu0 %214
    %218 = vset.pattern.permute.xlu0 0
    %219 = vperm.xlu0 %218, %v73
    %v220 = vpop.permute.xlu0 %219
    %223 = vset.pattern.permute.xlu0 0
    %224 = vperm.xlu0 %223, %v74
    %v225 = vpop.permute.xlu0 %224
    %228 = vset.pattern.permute.xlu0 0
    %229 = vperm.xlu0 %228, %v75
    %v230 = vpop.permute.xlu0 %229
    %233 = vset.pattern.permute.xlu0 0
    %234 = vperm.xlu0 %233, %v76
    %v235 = vpop.permute.xlu0 %234
    %v238 = vperm.slane %v27, 0
    %v240 = vmul.f32 %v80, %v238
    %v241 = vmul.f32 %v85, %v238
    %v242 = vmul.f32 %v90, %v238
    %v243 = vmul.f32 %v95, %v238
    %v244 = vmul.f32 %v100, %v238
    %v245 = vmul.f32 %v105, %v238
    %v246 = vmul.f32 %v110, %v238
    %v247 = vmul.f32 %v115, %v238
    %v248 = vmul.f32 %v120, %v238
    %v249 = vmul.f32 %v125, %v238
    %v250 = vmul.f32 %v130, %v238
    %v251 = vmul.f32 %v135, %v238
    %v252 = vmul.f32 %v140, %v238
    %v253 = vmul.f32 %v145, %v238
    %v254 = vmul.f32 %v150, %v238
    %v255 = vmul.f32 %v155, %v238
    %v256 = vmul.f32 %v160, %v238
    %v257 = vmul.f32 %v165, %v238
    %v258 = vmul.f32 %v170, %v238
    %v259 = vmul.f32 %v175, %v238
    %v260 = vmul.f32 %v180, %v238
    %v261 = vmul.f32 %v185, %v238
    %v262 = vmul.f32 %v190, %v238
    %v263 = vmul.f32 %v195, %v238
    %v264 = vmul.f32 %v200, %v238
    %v265 = vmul.f32 %v205, %v238
    %v266 = vmul.f32 %v210, %v238
    %v267 = vmul.f32 %v215, %v238
    %v268 = vmul.f32 %v220, %v238
    %v269 = vmul.f32 %v225, %v238
    %v270 = vmul.f32 %v230, %v238
    %v271 = vmul.f32 %v235, %v238
    %v272 = vadd.f32 %v240, 0.0
    %v273 = vadd.f32 %v241, 0.0
    %v274 = vadd.f32 %v242, 0.0
    %v275 = vadd.f32 %v243, 0.0
    %v276 = vadd.f32 %v244, 0.0
    %v277 = vadd.f32 %v245, 0.0
    %v278 = vadd.f32 %v246, 0.0
    %v279 = vadd.f32 %v247, 0.0
    %v280 = vadd.f32 %v248, 0.0
    %v281 = vadd.f32 %v249, 0.0
    %v282 = vadd.f32 %v250, 0.0
    %v283 = vadd.f32 %v251, 0.0
    %v284 = vadd.f32 %v252, 0.0
    %v285 = vadd.f32 %v253, 0.0
    %v286 = vadd.f32 %v254, 0.0
    %v287 = vadd.f32 %v255, 0.0
    %v288 = vadd.f32 %v256, 0.0
    %v289 = vadd.f32 %v257, 0.0
    %v290 = vadd.f32 %v258, 0.0
    %v291 = vadd.f32 %v259, 0.0
    %v292 = vadd.f32 %v260, 0.0
    %v293 = vadd.f32 %v261, 0.0
    %v294 = vadd.f32 %v262, 0.0
    %v295 = vadd.f32 %v263, 0.0
    %v296 = vadd.f32 %v264, 0.0
    %v297 = vadd.f32 %v265, 0.0
    %v298 = vadd.f32 %v266, 0.0
    %v299 = vadd.f32 %v267, 0.0
    %v300 = vadd.f32 %v268, 0.0
    %v301 = vadd.f32 %v269, 0.0
    %v302 = vadd.f32 %v270, 0.0
    %v303 = vadd.f32 %v271, 0.0
    %s304 = sadd.s32 %s43, 1
    %s305 = scalar_lea.vmem %s0, %s304
    %v306 = vld [vmem:[%s305] sm:$0xff]
    %v307 = vld [vmem:[%s305 + $0x8] sm:$0xff]
    %v308 = vld [vmem:[%s305 + $0x10] sm:$0xff]
    %v309 = vld [vmem:[%s305 + $0x18] sm:$0xff]
    %v310 = vld [vmem:[%s305 + $0x20] sm:$0xff]
    %v311 = vld [vmem:[%s305 + $0x28] sm:$0xff]
    %v312 = vld [vmem:[%s305 + $0x30] sm:$0xff]
    %v313 = vld [vmem:[%s305 + $0x38] sm:$0xff]
    %v314 = vld [vmem:[%s305 + $0x40] sm:$0xff]
    %v315 = vld [vmem:[%s305 + $0x48] sm:$0xff]
    %v316 = vld [vmem:[%s305 + $0x50] sm:$0xff]
    %v317 = vld [vmem:[%s305 + $0x58] sm:$0xff]
    %v318 = vld [vmem:[%s305 + $0x60] sm:$0xff]
    %v319 = vld [vmem:[%s305 + $0x68] sm:$0xff]
    %v320 = vld [vmem:[%s305 + $0x70] sm:$0xff]
    %v321 = vld [vmem:[%s305 + $0x78] sm:$0xff]
    %v322 = vld [vmem:[%s305 + $0x80] sm:$0xff]
    %v323 = vld [vmem:[%s305 + $0x88] sm:$0xff]
    %v324 = vld [vmem:[%s305 + $0x90] sm:$0xff]
    %v325 = vld [vmem:[%s305 + $0x98] sm:$0xff]
    %v326 = vld [vmem:[%s305 + $0xa0] sm:$0xff]
    %v327 = vld [vmem:[%s305 + $0xa8] sm:$0xff]
    %v328 = vld [vmem:[%s305 + $0xb0] sm:$0xff]
    %v329 = vld [vmem:[%s305 + $0xb8] sm:$0xff]
    %v330 = vld [vmem:[%s305 + $0xc0] sm:$0xff]
    %v331 = vld [vmem:[%s305 + $0xc8] sm:$0xff]
    %v332 = vld [vmem:[%s305 + $0xd0] sm:$0xff]
    %v333 = vld [vmem:[%s305 + $0xd8] sm:$0xff]
    %v334 = vld [vmem:[%s305 + $0xe0] sm:$0xff]
    %v335 = vld [vmem:[%s305 + $0xe8] sm:$0xff]
    %v336 = vld [vmem:[%s305 + $0xf0] sm:$0xff]
    %v337 = vld [vmem:[%s305 + $0xf8] sm:$0xff]
    %339 = vset.pattern.permute.xlu0 0
    %340 = vperm.xlu0 %339, %v306
    %v341 = vpop.permute.xlu0 %340
    %344 = vset.pattern.permute.xlu0 0
    %345 = vperm.xlu0 %344, %v307
    %v346 = vpop.permute.xlu0 %345
    %349 = vset.pattern.permute.xlu0 0
    %350 = vperm.xlu0 %349, %v308
    %v351 = vpop.permute.xlu0 %350
    %354 = vset.pattern.permute.xlu0 0
    %355 = vperm.xlu0 %354, %v309
    %v356 = vpop.permute.xlu0 %355
    %359 = vset.pattern.permute.xlu0 0
    %360 = vperm.xlu0 %359, %v310
    %v361 = vpop.permute.xlu0 %360
    %364 = vset.pattern.permute.xlu0 0
    %365 = vperm.xlu0 %364, %v311
    %v366 = vpop.permute.xlu0 %365
    %369 = vset.pattern.permute.xlu0 0
    %370 = vperm.xlu0 %369, %v312
    %v371 = vpop.permute.xlu0 %370
    %374 = vset.pattern.permute.xlu0 0
    %375 = vperm.xlu0 %374, %v313
    %v376 = vpop.permute.xlu0 %375
    %379 = vset.pattern.permute.xlu0 0
    %380 = vperm.xlu0 %379, %v314
    %v381 = vpop.permute.xlu0 %380
    %384 = vset.pattern.permute.xlu0 0
    %385 = vperm.xlu0 %384, %v315
    %v386 = vpop.permute.xlu0 %385
    %389 = vset.pattern.permute.xlu0 0
    %390 = vperm.xlu0 %389, %v316
    %v391 = vpop.permute.xlu0 %390
    %394 = vset.pattern.permute.xlu0 0
    %395 = vperm.xlu0 %394, %v317
    %v396 = vpop.permute.xlu0 %395
    %399 = vset.pattern.permute.xlu0 0
    %400 = vperm.xlu0 %399, %v318
    %v401 = vpop.permute.xlu0 %400
    %404 = vset.pattern.permute.xlu0 0
    %405 = vperm.xlu0 %404, %v319
    %v406 = vpop.permute.xlu0 %405
    %409 = vset.pattern.permute.xlu0 0
    %410 = vperm.xlu0 %409, %v320
    %v411 = vpop.permute.xlu0 %410
    %414 = vset.pattern.permute.xlu0 0
    %415 = vperm.xlu0 %414, %v321
    %v416 = vpop.permute.xlu0 %415
    %419 = vset.pattern.permute.xlu0 0
    %420 = vperm.xlu0 %419, %v322
    %v421 = vpop.permute.xlu0 %420
    %424 = vset.pattern.permute.xlu0 0
    %425 = vperm.xlu0 %424, %v323
    %v426 = vpop.permute.xlu0 %425
    %429 = vset.pattern.permute.xlu0 0
    %430 = vperm.xlu0 %429, %v324
    %v431 = vpop.permute.xlu0 %430
    %434 = vset.pattern.permute.xlu0 0
    %435 = vperm.xlu0 %434, %v325
    %v436 = vpop.permute.xlu0 %435
    %439 = vset.pattern.permute.xlu0 0
    %440 = vperm.xlu0 %439, %v326
    %v441 = vpop.permute.xlu0 %440
    %444 = vset.pattern.permute.xlu0 0
    %445 = vperm.xlu0 %444, %v327
    %v446 = vpop.permute.xlu0 %445
    %449 = vset.pattern.permute.xlu0 0
    %450 = vperm.xlu0 %449, %v328
    %v451 = vpop.permute.xlu0 %450
    %454 = vset.pattern.permute.xlu0 0
    %455 = vperm.xlu0 %454, %v329
    %v456 = vpop.permute.xlu0 %455
    %459 = vset.pattern.permute.xlu0 0
    %460 = vperm.xlu0 %459, %v330
    %v461 = vpop.permute.xlu0 %460
    %464 = vset.pattern.permute.xlu0 0
    %465 = vperm.xlu0 %464, %v331
    %v466 = vpop.permute.xlu0 %465
    %469 = vset.pattern.permute.xlu0 0
    %470 = vperm.xlu0 %469, %v332
    %v471 = vpop.permute.xlu0 %470
    %474 = vset.pattern.permute.xlu0 0
    %475 = vperm.xlu0 %474, %v333
    %v476 = vpop.permute.xlu0 %475
    %479 = vset.pattern.permute.xlu0 0
    %480 = vperm.xlu0 %479, %v334
    %v481 = vpop.permute.xlu0 %480
    %484 = vset.pattern.permute.xlu0 0
    %485 = vperm.xlu0 %484, %v335
    %v486 = vpop.permute.xlu0 %485
    %489 = vset.pattern.permute.xlu0 0
    %490 = vperm.xlu0 %489, %v336
    %v491 = vpop.permute.xlu0 %490
    %494 = vset.pattern.permute.xlu0 0
    %495 = vperm.xlu0 %494, %v337
    %v496 = vpop.permute.xlu0 %495
    %v499 = vperm.slane %v28, 0
    %v501 = vmul.f32 %v341, %v499
    %v502 = vmul.f32 %v346, %v499
    %v503 = vmul.f32 %v351, %v499
    %v504 = vmul.f32 %v356, %v499
    %v505 = vmul.f32 %v361, %v499
    %v506 = vmul.f32 %v366, %v499
    %v507 = vmul.f32 %v371, %v499
    %v508 = vmul.f32 %v376, %v499
    %v509 = vmul.f32 %v381, %v499
    %v510 = vmul.f32 %v386, %v499
    %v511 = vmul.f32 %v391, %v499
    %v512 = vmul.f32 %v396, %v499
    %v513 = vmul.f32 %v401, %v499
    %v514 = vmul.f32 %v406, %v499
    %v515 = vmul.f32 %v411, %v499
    %v516 = vmul.f32 %v416, %v499
    %v517 = vmul.f32 %v421, %v499
    %v518 = vmul.f32 %v426, %v499
    %v519 = vmul.f32 %v431, %v499
    %v520 = vmul.f32 %v436, %v499
    %v521 = vmul.f32 %v441, %v499
    %v522 = vmul.f32 %v446, %v499
    %v523 = vmul.f32 %v451, %v499
    %v524 = vmul.f32 %v456, %v499
    %v525 = vmul.f32 %v461, %v499
    %v526 = vmul.f32 %v466, %v499
    %v527 = vmul.f32 %v471, %v499
    %v528 = vmul.f32 %v476, %v499
    %v529 = vmul.f32 %v481, %v499
    %v530 = vmul.f32 %v486, %v499
    %v531 = vmul.f32 %v491, %v499
    %v532 = vmul.f32 %v496, %v499
    %v533 = vadd.f32 %v272, %v501
    %v534 = vadd.f32 %v273, %v502
    %v535 = vadd.f32 %v274, %v503
    %v536 = vadd.f32 %v275, %v504
    %v537 = vadd.f32 %v276, %v505
    %v538 = vadd.f32 %v277, %v506
    %v539 = vadd.f32 %v278, %v507
    %v540 = vadd.f32 %v279, %v508
    %v541 = vadd.f32 %v280, %v509
    %v542 = vadd.f32 %v281, %v510
    %v543 = vadd.f32 %v282, %v511
    %v544 = vadd.f32 %v283, %v512
    %v545 = vadd.f32 %v284, %v513
    %v546 = vadd.f32 %v285, %v514
    %v547 = vadd.f32 %v286, %v515
    %v548 = vadd.f32 %v287, %v516
    %v549 = vadd.f32 %v288, %v517
    %v550 = vadd.f32 %v289, %v518
    %v551 = vadd.f32 %v290, %v519
    %v552 = vadd.f32 %v291, %v520
    %v553 = vadd.f32 %v292, %v521
    %v554 = vadd.f32 %v293, %v522
    %v555 = vadd.f32 %v294, %v523
    %v556 = vadd.f32 %v295, %v524
    %v557 = vadd.f32 %v296, %v525
    %v558 = vadd.f32 %v297, %v526
    %v559 = vadd.f32 %v298, %v527
    %v560 = vadd.f32 %v299, %v528
    %v561 = vadd.f32 %v300, %v529
    %v562 = vadd.f32 %v301, %v530
    %v563 = vadd.f32 %v302, %v531
    %v564 = vadd.f32 %v303, %v532
    %s565 = sadd.s32 %s43, 2
    %s566 = scalar_lea.vmem %s0, %s565
    %v567 = vld [vmem:[%s566] sm:$0xff]
    %v568 = vld [vmem:[%s566 + $0x8] sm:$0xff]
    %v569 = vld [vmem:[%s566 + $0x10] sm:$0xff]
    %v570 = vld [vmem:[%s566 + $0x18] sm:$0xff]
    %v571 = vld [vmem:[%s566 + $0x20] sm:$0xff]
    %v572 = vld [vmem:[%s566 + $0x28] sm:$0xff]
    %v573 = vld [vmem:[%s566 + $0x30] sm:$0xff]
    %v574 = vld [vmem:[%s566 + $0x38] sm:$0xff]
    %v575 = vld [vmem:[%s566 + $0x40] sm:$0xff]
    %v576 = vld [vmem:[%s566 + $0x48] sm:$0xff]
    %v577 = vld [vmem:[%s566 + $0x50] sm:$0xff]
    %v578 = vld [vmem:[%s566 + $0x58] sm:$0xff]
    %v579 = vld [vmem:[%s566 + $0x60] sm:$0xff]
    %v580 = vld [vmem:[%s566 + $0x68] sm:$0xff]
    %v581 = vld [vmem:[%s566 + $0x70] sm:$0xff]
    %v582 = vld [vmem:[%s566 + $0x78] sm:$0xff]
    %v583 = vld [vmem:[%s566 + $0x80] sm:$0xff]
    %v584 = vld [vmem:[%s566 + $0x88] sm:$0xff]
    %v585 = vld [vmem:[%s566 + $0x90] sm:$0xff]
    %v586 = vld [vmem:[%s566 + $0x98] sm:$0xff]
    %v587 = vld [vmem:[%s566 + $0xa0] sm:$0xff]
    %v588 = vld [vmem:[%s566 + $0xa8] sm:$0xff]
    %v589 = vld [vmem:[%s566 + $0xb0] sm:$0xff]
    %v590 = vld [vmem:[%s566 + $0xb8] sm:$0xff]
    %v591 = vld [vmem:[%s566 + $0xc0] sm:$0xff]
    %v592 = vld [vmem:[%s566 + $0xc8] sm:$0xff]
    %v593 = vld [vmem:[%s566 + $0xd0] sm:$0xff]
    %v594 = vld [vmem:[%s566 + $0xd8] sm:$0xff]
    %v595 = vld [vmem:[%s566 + $0xe0] sm:$0xff]
    %v596 = vld [vmem:[%s566 + $0xe8] sm:$0xff]
    %v597 = vld [vmem:[%s566 + $0xf0] sm:$0xff]
    %v598 = vld [vmem:[%s566 + $0xf8] sm:$0xff]
    %600 = vset.pattern.permute.xlu0 0
    %601 = vperm.xlu0 %600, %v567
    %v602 = vpop.permute.xlu0 %601
    %605 = vset.pattern.permute.xlu0 0
    %606 = vperm.xlu0 %605, %v568
    %v607 = vpop.permute.xlu0 %606
    %610 = vset.pattern.permute.xlu0 0
    %611 = vperm.xlu0 %610, %v569
    %v612 = vpop.permute.xlu0 %611
    %615 = vset.pattern.permute.xlu0 0
    %616 = vperm.xlu0 %615, %v570
    %v617 = vpop.permute.xlu0 %616
    %620 = vset.pattern.permute.xlu0 0
    %621 = vperm.xlu0 %620, %v571
    %v622 = vpop.permute.xlu0 %621
    %625 = vset.pattern.permute.xlu0 0
    %626 = vperm.xlu0 %625, %v572
    %v627 = vpop.permute.xlu0 %626
    %630 = vset.pattern.permute.xlu0 0
    %631 = vperm.xlu0 %630, %v573
    %v632 = vpop.permute.xlu0 %631
    %635 = vset.pattern.permute.xlu0 0
    %636 = vperm.xlu0 %635, %v574
    %v637 = vpop.permute.xlu0 %636
    %640 = vset.pattern.permute.xlu0 0
    %641 = vperm.xlu0 %640, %v575
    %v642 = vpop.permute.xlu0 %641
    %645 = vset.pattern.permute.xlu0 0
    %646 = vperm.xlu0 %645, %v576
    %v647 = vpop.permute.xlu0 %646
    %650 = vset.pattern.permute.xlu0 0
    %651 = vperm.xlu0 %650, %v577
    %v652 = vpop.permute.xlu0 %651
    %655 = vset.pattern.permute.xlu0 0
    %656 = vperm.xlu0 %655, %v578
    %v657 = vpop.permute.xlu0 %656
    %660 = vset.pattern.permute.xlu0 0
    %661 = vperm.xlu0 %660, %v579
    %v662 = vpop.permute.xlu0 %661
    %665 = vset.pattern.permute.xlu0 0
    %666 = vperm.xlu0 %665, %v580
    %v667 = vpop.permute.xlu0 %666
    %670 = vset.pattern.permute.xlu0 0
    %671 = vperm.xlu0 %670, %v581
    %v672 = vpop.permute.xlu0 %671
    %675 = vset.pattern.permute.xlu0 0
    %676 = vperm.xlu0 %675, %v582
    %v677 = vpop.permute.xlu0 %676
    %680 = vset.pattern.permute.xlu0 0
    %681 = vperm.xlu0 %680, %v583
    %v682 = vpop.permute.xlu0 %681
    %685 = vset.pattern.permute.xlu0 0
    %686 = vperm.xlu0 %685, %v584
    %v687 = vpop.permute.xlu0 %686
    %690 = vset.pattern.permute.xlu0 0
    %691 = vperm.xlu0 %690, %v585
    %v692 = vpop.permute.xlu0 %691
    %695 = vset.pattern.permute.xlu0 0
    %696 = vperm.xlu0 %695, %v586
    %v697 = vpop.permute.xlu0 %696
    %700 = vset.pattern.permute.xlu0 0
    %701 = vperm.xlu0 %700, %v587
    %v702 = vpop.permute.xlu0 %701
    %705 = vset.pattern.permute.xlu0 0
    %706 = vperm.xlu0 %705, %v588
    %v707 = vpop.permute.xlu0 %706
    %710 = vset.pattern.permute.xlu0 0
    %711 = vperm.xlu0 %710, %v589
    %v712 = vpop.permute.xlu0 %711
    %715 = vset.pattern.permute.xlu0 0
    %716 = vperm.xlu0 %715, %v590
    %v717 = vpop.permute.xlu0 %716
    %720 = vset.pattern.permute.xlu0 0
    %721 = vperm.xlu0 %720, %v591
    %v722 = vpop.permute.xlu0 %721
    %725 = vset.pattern.permute.xlu0 0
    %726 = vperm.xlu0 %725, %v592
    %v727 = vpop.permute.xlu0 %726
    %730 = vset.pattern.permute.xlu0 0
    %731 = vperm.xlu0 %730, %v593
    %v732 = vpop.permute.xlu0 %731
    %735 = vset.pattern.permute.xlu0 0
    %736 = vperm.xlu0 %735, %v594
    %v737 = vpop.permute.xlu0 %736
    %740 = vset.pattern.permute.xlu0 0
    %741 = vperm.xlu0 %740, %v595
    %v742 = vpop.permute.xlu0 %741
    %745 = vset.pattern.permute.xlu0 0
    %746 = vperm.xlu0 %745, %v596
    %v747 = vpop.permute.xlu0 %746
    %750 = vset.pattern.permute.xlu0 0
    %751 = vperm.xlu0 %750, %v597
    %v752 = vpop.permute.xlu0 %751
    %755 = vset.pattern.permute.xlu0 0
    %756 = vperm.xlu0 %755, %v598
    %v757 = vpop.permute.xlu0 %756
    %v760 = vperm.slane %v29, 0
    %v762 = vmul.f32 %v602, %v760
    %v763 = vmul.f32 %v607, %v760
    %v764 = vmul.f32 %v612, %v760
    %v765 = vmul.f32 %v617, %v760
    %v766 = vmul.f32 %v622, %v760
    %v767 = vmul.f32 %v627, %v760
    %v768 = vmul.f32 %v632, %v760
    %v769 = vmul.f32 %v637, %v760
    %v770 = vmul.f32 %v642, %v760
    %v771 = vmul.f32 %v647, %v760
    %v772 = vmul.f32 %v652, %v760
    %v773 = vmul.f32 %v657, %v760
    %v774 = vmul.f32 %v662, %v760
    %v775 = vmul.f32 %v667, %v760
    %v776 = vmul.f32 %v672, %v760
    %v777 = vmul.f32 %v677, %v760
    %v778 = vmul.f32 %v682, %v760
    %v779 = vmul.f32 %v687, %v760
    %v780 = vmul.f32 %v692, %v760
    %v781 = vmul.f32 %v697, %v760
    %v782 = vmul.f32 %v702, %v760
    %v783 = vmul.f32 %v707, %v760
    %v784 = vmul.f32 %v712, %v760
    %v785 = vmul.f32 %v717, %v760
    %v786 = vmul.f32 %v722, %v760
    %v787 = vmul.f32 %v727, %v760
    %v788 = vmul.f32 %v732, %v760
    %v789 = vmul.f32 %v737, %v760
    %v790 = vmul.f32 %v742, %v760
    %v791 = vmul.f32 %v747, %v760
    %v792 = vmul.f32 %v752, %v760
    %v793 = vmul.f32 %v757, %v760
    %v794 = vadd.f32 %v533, %v762
    %v795 = vadd.f32 %v534, %v763
    %v796 = vadd.f32 %v535, %v764
    %v797 = vadd.f32 %v536, %v765
    %v798 = vadd.f32 %v537, %v766
    %v799 = vadd.f32 %v538, %v767
    %v800 = vadd.f32 %v539, %v768
    %v801 = vadd.f32 %v540, %v769
    %v802 = vadd.f32 %v541, %v770
    %v803 = vadd.f32 %v542, %v771
    %v804 = vadd.f32 %v543, %v772
    %v805 = vadd.f32 %v544, %v773
    %v806 = vadd.f32 %v545, %v774
    %v807 = vadd.f32 %v546, %v775
    %v808 = vadd.f32 %v547, %v776
    %v809 = vadd.f32 %v548, %v777
    %v810 = vadd.f32 %v549, %v778
    %v811 = vadd.f32 %v550, %v779
    %v812 = vadd.f32 %v551, %v780
    %v813 = vadd.f32 %v552, %v781
    %v814 = vadd.f32 %v553, %v782
    %v815 = vadd.f32 %v554, %v783
    %v816 = vadd.f32 %v555, %v784
    %v817 = vadd.f32 %v556, %v785
    %v818 = vadd.f32 %v557, %v786
    %v819 = vadd.f32 %v558, %v787
    %v820 = vadd.f32 %v559, %v788
    %v821 = vadd.f32 %v560, %v789
    %v822 = vadd.f32 %v561, %v790
    %v823 = vadd.f32 %v562, %v791
    %v824 = vadd.f32 %v563, %v792
    %v825 = vadd.f32 %v564, %v793
    %s826 = sadd.s32 %s43, 128
    %s827 = scalar_lea.vmem %s0, %s826
    %v828 = vld [vmem:[%s827] sm:$0xff]
    %v829 = vld [vmem:[%s827 + $0x8] sm:$0xff]
    %v830 = vld [vmem:[%s827 + $0x10] sm:$0xff]
    %v831 = vld [vmem:[%s827 + $0x18] sm:$0xff]
    %v832 = vld [vmem:[%s827 + $0x20] sm:$0xff]
    %v833 = vld [vmem:[%s827 + $0x28] sm:$0xff]
    %v834 = vld [vmem:[%s827 + $0x30] sm:$0xff]
    %v835 = vld [vmem:[%s827 + $0x38] sm:$0xff]
    %v836 = vld [vmem:[%s827 + $0x40] sm:$0xff]
    %v837 = vld [vmem:[%s827 + $0x48] sm:$0xff]
    %v838 = vld [vmem:[%s827 + $0x50] sm:$0xff]
    %v839 = vld [vmem:[%s827 + $0x58] sm:$0xff]
    %v840 = vld [vmem:[%s827 + $0x60] sm:$0xff]
    %v841 = vld [vmem:[%s827 + $0x68] sm:$0xff]
    %v842 = vld [vmem:[%s827 + $0x70] sm:$0xff]
    %v843 = vld [vmem:[%s827 + $0x78] sm:$0xff]
    %v844 = vld [vmem:[%s827 + $0x80] sm:$0xff]
    %v845 = vld [vmem:[%s827 + $0x88] sm:$0xff]
    %v846 = vld [vmem:[%s827 + $0x90] sm:$0xff]
    %v847 = vld [vmem:[%s827 + $0x98] sm:$0xff]
    %v848 = vld [vmem:[%s827 + $0xa0] sm:$0xff]
    %v849 = vld [vmem:[%s827 + $0xa8] sm:$0xff]
    %v850 = vld [vmem:[%s827 + $0xb0] sm:$0xff]
    %v851 = vld [vmem:[%s827 + $0xb8] sm:$0xff]
    %v852 = vld [vmem:[%s827 + $0xc0] sm:$0xff]
    %v853 = vld [vmem:[%s827 + $0xc8] sm:$0xff]
    %v854 = vld [vmem:[%s827 + $0xd0] sm:$0xff]
    %v855 = vld [vmem:[%s827 + $0xd8] sm:$0xff]
    %v856 = vld [vmem:[%s827 + $0xe0] sm:$0xff]
    %v857 = vld [vmem:[%s827 + $0xe8] sm:$0xff]
    %v858 = vld [vmem:[%s827 + $0xf0] sm:$0xff]
    %v859 = vld [vmem:[%s827 + $0xf8] sm:$0xff]
    %861 = vset.pattern.permute.xlu0 0
    %862 = vperm.xlu0 %861, %v828
    %v863 = vpop.permute.xlu0 %862
    %866 = vset.pattern.permute.xlu0 0
    %867 = vperm.xlu0 %866, %v829
    %v868 = vpop.permute.xlu0 %867
    %871 = vset.pattern.permute.xlu0 0
    %872 = vperm.xlu0 %871, %v830
    %v873 = vpop.permute.xlu0 %872
    %876 = vset.pattern.permute.xlu0 0
    %877 = vperm.xlu0 %876, %v831
    %v878 = vpop.permute.xlu0 %877
    %881 = vset.pattern.permute.xlu0 0
    %882 = vperm.xlu0 %881, %v832
    %v883 = vpop.permute.xlu0 %882
    %886 = vset.pattern.permute.xlu0 0
    %887 = vperm.xlu0 %886, %v833
    %v888 = vpop.permute.xlu0 %887
    %891 = vset.pattern.permute.xlu0 0
    %892 = vperm.xlu0 %891, %v834
    %v893 = vpop.permute.xlu0 %892
    %896 = vset.pattern.permute.xlu0 0
    %897 = vperm.xlu0 %896, %v835
    %v898 = vpop.permute.xlu0 %897
    %901 = vset.pattern.permute.xlu0 0
    %902 = vperm.xlu0 %901, %v836
    %v903 = vpop.permute.xlu0 %902
    %906 = vset.pattern.permute.xlu0 0
    %907 = vperm.xlu0 %906, %v837
    %v908 = vpop.permute.xlu0 %907
    %911 = vset.pattern.permute.xlu0 0
    %912 = vperm.xlu0 %911, %v838
    %v913 = vpop.permute.xlu0 %912
    %916 = vset.pattern.permute.xlu0 0
    %917 = vperm.xlu0 %916, %v839
    %v918 = vpop.permute.xlu0 %917
    %921 = vset.pattern.permute.xlu0 0
    %922 = vperm.xlu0 %921, %v840
    %v923 = vpop.permute.xlu0 %922
    %926 = vset.pattern.permute.xlu0 0
    %927 = vperm.xlu0 %926, %v841
    %v928 = vpop.permute.xlu0 %927
    %931 = vset.pattern.permute.xlu0 0
    %932 = vperm.xlu0 %931, %v842
    %v933 = vpop.permute.xlu0 %932
    %936 = vset.pattern.permute.xlu0 0
    %937 = vperm.xlu0 %936, %v843
    %v938 = vpop.permute.xlu0 %937
    %941 = vset.pattern.permute.xlu0 0
    %942 = vperm.xlu0 %941, %v844
    %v943 = vpop.permute.xlu0 %942
    %946 = vset.pattern.permute.xlu0 0
    %947 = vperm.xlu0 %946, %v845
    %v948 = vpop.permute.xlu0 %947
    %951 = vset.pattern.permute.xlu0 0
    %952 = vperm.xlu0 %951, %v846
    %v953 = vpop.permute.xlu0 %952
    %956 = vset.pattern.permute.xlu0 0
    %957 = vperm.xlu0 %956, %v847
    %v958 = vpop.permute.xlu0 %957
    %961 = vset.pattern.permute.xlu0 0
    %962 = vperm.xlu0 %961, %v848
    %v963 = vpop.permute.xlu0 %962
    %966 = vset.pattern.permute.xlu0 0
    %967 = vperm.xlu0 %966, %v849
    %v968 = vpop.permute.xlu0 %967
    %971 = vset.pattern.permute.xlu0 0
    %972 = vperm.xlu0 %971, %v850
    %v973 = vpop.permute.xlu0 %972
    %976 = vset.pattern.permute.xlu0 0
    %977 = vperm.xlu0 %976, %v851
    %v978 = vpop.permute.xlu0 %977
    %981 = vset.pattern.permute.xlu0 0
    %982 = vperm.xlu0 %981, %v852
    %v983 = vpop.permute.xlu0 %982
    %986 = vset.pattern.permute.xlu0 0
    %987 = vperm.xlu0 %986, %v853
    %v988 = vpop.permute.xlu0 %987
    %991 = vset.pattern.permute.xlu0 0
    %992 = vperm.xlu0 %991, %v854
    %v993 = vpop.permute.xlu0 %992
    %996 = vset.pattern.permute.xlu0 0
    %997 = vperm.xlu0 %996, %v855
    %v998 = vpop.permute.xlu0 %997
    %1001 = vset.pattern.permute.xlu0 0
    %1002 = vperm.xlu0 %1001, %v856
    %v1003 = vpop.permute.xlu0 %1002
    %1006 = vset.pattern.permute.xlu0 0
    %1007 = vperm.xlu0 %1006, %v857
    %v1008 = vpop.permute.xlu0 %1007
    %1011 = vset.pattern.permute.xlu0 0
    %1012 = vperm.xlu0 %1011, %v858
    %v1013 = vpop.permute.xlu0 %1012
    %1016 = vset.pattern.permute.xlu0 0
    %1017 = vperm.xlu0 %1016, %v859
    %v1018 = vpop.permute.xlu0 %1017
    %v1021 = vperm.slane %v30, 0
    %v1023 = vmul.f32 %v863, %v1021
    %v1024 = vmul.f32 %v868, %v1021
    %v1025 = vmul.f32 %v873, %v1021
    %v1026 = vmul.f32 %v878, %v1021
    %v1027 = vmul.f32 %v883, %v1021
    %v1028 = vmul.f32 %v888, %v1021
    %v1029 = vmul.f32 %v893, %v1021
    %v1030 = vmul.f32 %v898, %v1021
    %v1031 = vmul.f32 %v903, %v1021
    %v1032 = vmul.f32 %v908, %v1021
    %v1033 = vmul.f32 %v913, %v1021
    %v1034 = vmul.f32 %v918, %v1021
    %v1035 = vmul.f32 %v923, %v1021
    %v1036 = vmul.f32 %v928, %v1021
    %v1037 = vmul.f32 %v933, %v1021
    %v1038 = vmul.f32 %v938, %v1021
    %v1039 = vmul.f32 %v943, %v1021
    %v1040 = vmul.f32 %v948, %v1021
    %v1041 = vmul.f32 %v953, %v1021
    %v1042 = vmul.f32 %v958, %v1021
    %v1043 = vmul.f32 %v963, %v1021
    %v1044 = vmul.f32 %v968, %v1021
    %v1045 = vmul.f32 %v973, %v1021
    %v1046 = vmul.f32 %v978, %v1021
    %v1047 = vmul.f32 %v983, %v1021
    %v1048 = vmul.f32 %v988, %v1021
    %v1049 = vmul.f32 %v993, %v1021
    %v1050 = vmul.f32 %v998, %v1021
    %v1051 = vmul.f32 %v1003, %v1021
    %v1052 = vmul.f32 %v1008, %v1021
    %v1053 = vmul.f32 %v1013, %v1021
    %v1054 = vmul.f32 %v1018, %v1021
    %v1055 = vadd.f32 %v794, %v1023
    %v1056 = vadd.f32 %v795, %v1024
    %v1057 = vadd.f32 %v796, %v1025
    %v1058 = vadd.f32 %v797, %v1026
    %v1059 = vadd.f32 %v798, %v1027
    %v1060 = vadd.f32 %v799, %v1028
    %v1061 = vadd.f32 %v800, %v1029
    %v1062 = vadd.f32 %v801, %v1030
    %v1063 = vadd.f32 %v802, %v1031
    %v1064 = vadd.f32 %v803, %v1032
    %v1065 = vadd.f32 %v804, %v1033
    %v1066 = vadd.f32 %v805, %v1034
    %v1067 = vadd.f32 %v806, %v1035
    %v1068 = vadd.f32 %v807, %v1036
    %v1069 = vadd.f32 %v808, %v1037
    %v1070 = vadd.f32 %v809, %v1038
    %v1071 = vadd.f32 %v810, %v1039
    %v1072 = vadd.f32 %v811, %v1040
    %v1073 = vadd.f32 %v812, %v1041
    %v1074 = vadd.f32 %v813, %v1042
    %v1075 = vadd.f32 %v814, %v1043
    %v1076 = vadd.f32 %v815, %v1044
    %v1077 = vadd.f32 %v816, %v1045
    %v1078 = vadd.f32 %v817, %v1046
    %v1079 = vadd.f32 %v818, %v1047
    %v1080 = vadd.f32 %v819, %v1048
    %v1081 = vadd.f32 %v820, %v1049
    %v1082 = vadd.f32 %v821, %v1050
    %v1083 = vadd.f32 %v822, %v1051
    %v1084 = vadd.f32 %v823, %v1052
    %v1085 = vadd.f32 %v824, %v1053
    %v1086 = vadd.f32 %v825, %v1054
    %s1087 = sadd.s32 %s43, 129
    %s1088 = scalar_lea.vmem %s0, %s1087
    %v1089 = vld [vmem:[%s1088] sm:$0xff]
    %v1090 = vld [vmem:[%s1088 + $0x8] sm:$0xff]
    %v1091 = vld [vmem:[%s1088 + $0x10] sm:$0xff]
    %v1092 = vld [vmem:[%s1088 + $0x18] sm:$0xff]
    %v1093 = vld [vmem:[%s1088 + $0x20] sm:$0xff]
    %v1094 = vld [vmem:[%s1088 + $0x28] sm:$0xff]
    %v1095 = vld [vmem:[%s1088 + $0x30] sm:$0xff]
    %v1096 = vld [vmem:[%s1088 + $0x38] sm:$0xff]
    %v1097 = vld [vmem:[%s1088 + $0x40] sm:$0xff]
    %v1098 = vld [vmem:[%s1088 + $0x48] sm:$0xff]
    %v1099 = vld [vmem:[%s1088 + $0x50] sm:$0xff]
    %v1100 = vld [vmem:[%s1088 + $0x58] sm:$0xff]
    %v1101 = vld [vmem:[%s1088 + $0x60] sm:$0xff]
    %v1102 = vld [vmem:[%s1088 + $0x68] sm:$0xff]
    %v1103 = vld [vmem:[%s1088 + $0x70] sm:$0xff]
    %v1104 = vld [vmem:[%s1088 + $0x78] sm:$0xff]
    %v1105 = vld [vmem:[%s1088 + $0x80] sm:$0xff]
    %v1106 = vld [vmem:[%s1088 + $0x88] sm:$0xff]
    %v1107 = vld [vmem:[%s1088 + $0x90] sm:$0xff]
    %v1108 = vld [vmem:[%s1088 + $0x98] sm:$0xff]
    %v1109 = vld [vmem:[%s1088 + $0xa0] sm:$0xff]
    %v1110 = vld [vmem:[%s1088 + $0xa8] sm:$0xff]
    %v1111 = vld [vmem:[%s1088 + $0xb0] sm:$0xff]
    %v1112 = vld [vmem:[%s1088 + $0xb8] sm:$0xff]
    %v1113 = vld [vmem:[%s1088 + $0xc0] sm:$0xff]
    %v1114 = vld [vmem:[%s1088 + $0xc8] sm:$0xff]
    %v1115 = vld [vmem:[%s1088 + $0xd0] sm:$0xff]
    %v1116 = vld [vmem:[%s1088 + $0xd8] sm:$0xff]
    %v1117 = vld [vmem:[%s1088 + $0xe0] sm:$0xff]
    %v1118 = vld [vmem:[%s1088 + $0xe8] sm:$0xff]
    %v1119 = vld [vmem:[%s1088 + $0xf0] sm:$0xff]
    %v1120 = vld [vmem:[%s1088 + $0xf8] sm:$0xff]
    %1122 = vset.pattern.permute.xlu0 0
    %1123 = vperm.xlu0 %1122, %v1089
    %v1124 = vpop.permute.xlu0 %1123
    %1127 = vset.pattern.permute.xlu0 0
    %1128 = vperm.xlu0 %1127, %v1090
    %v1129 = vpop.permute.xlu0 %1128
    %1132 = vset.pattern.permute.xlu0 0
    %1133 = vperm.xlu0 %1132, %v1091
    %v1134 = vpop.permute.xlu0 %1133
    %1137 = vset.pattern.permute.xlu0 0
    %1138 = vperm.xlu0 %1137, %v1092
    %v1139 = vpop.permute.xlu0 %1138
    %1142 = vset.pattern.permute.xlu0 0
    %1143 = vperm.xlu0 %1142, %v1093
    %v1144 = vpop.permute.xlu0 %1143
    %1147 = vset.pattern.permute.xlu0 0
    %1148 = vperm.xlu0 %1147, %v1094
    %v1149 = vpop.permute.xlu0 %1148
    %1152 = vset.pattern.permute.xlu0 0
    %1153 = vperm.xlu0 %1152, %v1095
    %v1154 = vpop.permute.xlu0 %1153
    %1157 = vset.pattern.permute.xlu0 0
    %1158 = vperm.xlu0 %1157, %v1096
    %v1159 = vpop.permute.xlu0 %1158
    %1162 = vset.pattern.permute.xlu0 0
    %1163 = vperm.xlu0 %1162, %v1097
    %v1164 = vpop.permute.xlu0 %1163
    %1167 = vset.pattern.permute.xlu0 0
    %1168 = vperm.xlu0 %1167, %v1098
    %v1169 = vpop.permute.xlu0 %1168
    %1172 = vset.pattern.permute.xlu0 0
    %1173 = vperm.xlu0 %1172, %v1099
    %v1174 = vpop.permute.xlu0 %1173
    %1177 = vset.pattern.permute.xlu0 0
    %1178 = vperm.xlu0 %1177, %v1100
    %v1179 = vpop.permute.xlu0 %1178
    %1182 = vset.pattern.permute.xlu0 0
    %1183 = vperm.xlu0 %1182, %v1101
    %v1184 = vpop.permute.xlu0 %1183
    %1187 = vset.pattern.permute.xlu0 0
    %1188 = vperm.xlu0 %1187, %v1102
    %v1189 = vpop.permute.xlu0 %1188
    %1192 = vset.pattern.permute.xlu0 0
    %1193 = vperm.xlu0 %1192, %v1103
    %v1194 = vpop.permute.xlu0 %1193
    %1197 = vset.pattern.permute.xlu0 0
    %1198 = vperm.xlu0 %1197, %v1104
    %v1199 = vpop.permute.xlu0 %1198
    %1202 = vset.pattern.permute.xlu0 0
    %1203 = vperm.xlu0 %1202, %v1105
    %v1204 = vpop.permute.xlu0 %1203
    %1207 = vset.pattern.permute.xlu0 0
    %1208 = vperm.xlu0 %1207, %v1106
    %v1209 = vpop.permute.xlu0 %1208
    %1212 = vset.pattern.permute.xlu0 0
    %1213 = vperm.xlu0 %1212, %v1107
    %v1214 = vpop.permute.xlu0 %1213
    %1217 = vset.pattern.permute.xlu0 0
    %1218 = vperm.xlu0 %1217, %v1108
    %v1219 = vpop.permute.xlu0 %1218
    %1222 = vset.pattern.permute.xlu0 0
    %1223 = vperm.xlu0 %1222, %v1109
    %v1224 = vpop.permute.xlu0 %1223
    %1227 = vset.pattern.permute.xlu0 0
    %1228 = vperm.xlu0 %1227, %v1110
    %v1229 = vpop.permute.xlu0 %1228
    %1232 = vset.pattern.permute.xlu0 0
    %1233 = vperm.xlu0 %1232, %v1111
    %v1234 = vpop.permute.xlu0 %1233
    %1237 = vset.pattern.permute.xlu0 0
    %1238 = vperm.xlu0 %1237, %v1112
    %v1239 = vpop.permute.xlu0 %1238
    %1242 = vset.pattern.permute.xlu0 0
    %1243 = vperm.xlu0 %1242, %v1113
    %v1244 = vpop.permute.xlu0 %1243
    %1247 = vset.pattern.permute.xlu0 0
    %1248 = vperm.xlu0 %1247, %v1114
    %v1249 = vpop.permute.xlu0 %1248
    %1252 = vset.pattern.permute.xlu0 0
    %1253 = vperm.xlu0 %1252, %v1115
    %v1254 = vpop.permute.xlu0 %1253
    %1257 = vset.pattern.permute.xlu0 0
    %1258 = vperm.xlu0 %1257, %v1116
    %v1259 = vpop.permute.xlu0 %1258
    %1262 = vset.pattern.permute.xlu0 0
    %1263 = vperm.xlu0 %1262, %v1117
    %v1264 = vpop.permute.xlu0 %1263
    %1267 = vset.pattern.permute.xlu0 0
    %1268 = vperm.xlu0 %1267, %v1118
    %v1269 = vpop.permute.xlu0 %1268
    %1272 = vset.pattern.permute.xlu0 0
    %1273 = vperm.xlu0 %1272, %v1119
    %v1274 = vpop.permute.xlu0 %1273
    %1277 = vset.pattern.permute.xlu0 0
    %1278 = vperm.xlu0 %1277, %v1120
    %v1279 = vpop.permute.xlu0 %1278
    %v1282 = vperm.slane %v31, 0
    %v1284 = vmul.f32 %v1124, %v1282
    %v1285 = vmul.f32 %v1129, %v1282
    %v1286 = vmul.f32 %v1134, %v1282
    %v1287 = vmul.f32 %v1139, %v1282
    %v1288 = vmul.f32 %v1144, %v1282
    %v1289 = vmul.f32 %v1149, %v1282
    %v1290 = vmul.f32 %v1154, %v1282
    %v1291 = vmul.f32 %v1159, %v1282
    %v1292 = vmul.f32 %v1164, %v1282
    %v1293 = vmul.f32 %v1169, %v1282
    %v1294 = vmul.f32 %v1174, %v1282
    %v1295 = vmul.f32 %v1179, %v1282
    %v1296 = vmul.f32 %v1184, %v1282
    %v1297 = vmul.f32 %v1189, %v1282
    %v1298 = vmul.f32 %v1194, %v1282
    %v1299 = vmul.f32 %v1199, %v1282
    %v1300 = vmul.f32 %v1204, %v1282
    %v1301 = vmul.f32 %v1209, %v1282
    %v1302 = vmul.f32 %v1214, %v1282
    %v1303 = vmul.f32 %v1219, %v1282
    %v1304 = vmul.f32 %v1224, %v1282
    %v1305 = vmul.f32 %v1229, %v1282
    %v1306 = vmul.f32 %v1234, %v1282
    %v1307 = vmul.f32 %v1239, %v1282
    %v1308 = vmul.f32 %v1244, %v1282
    %v1309 = vmul.f32 %v1249, %v1282
    %v1310 = vmul.f32 %v1254, %v1282
    %v1311 = vmul.f32 %v1259, %v1282
    %v1312 = vmul.f32 %v1264, %v1282
    %v1313 = vmul.f32 %v1269, %v1282
    %v1314 = vmul.f32 %v1274, %v1282
    %v1315 = vmul.f32 %v1279, %v1282
    %v1316 = vadd.f32 %v1055, %v1284
    %v1317 = vadd.f32 %v1056, %v1285
    %v1318 = vadd.f32 %v1057, %v1286
    %v1319 = vadd.f32 %v1058, %v1287
    %v1320 = vadd.f32 %v1059, %v1288
    %v1321 = vadd.f32 %v1060, %v1289
    %v1322 = vadd.f32 %v1061, %v1290
    %v1323 = vadd.f32 %v1062, %v1291
    %v1324 = vadd.f32 %v1063, %v1292
    %v1325 = vadd.f32 %v1064, %v1293
    %v1326 = vadd.f32 %v1065, %v1294
    %v1327 = vadd.f32 %v1066, %v1295
    %v1328 = vadd.f32 %v1067, %v1296
    %v1329 = vadd.f32 %v1068, %v1297
    %v1330 = vadd.f32 %v1069, %v1298
    %v1331 = vadd.f32 %v1070, %v1299
    %v1332 = vadd.f32 %v1071, %v1300
    %v1333 = vadd.f32 %v1072, %v1301
    %v1334 = vadd.f32 %v1073, %v1302
    %v1335 = vadd.f32 %v1074, %v1303
    %v1336 = vadd.f32 %v1075, %v1304
    %v1337 = vadd.f32 %v1076, %v1305
    %v1338 = vadd.f32 %v1077, %v1306
    %v1339 = vadd.f32 %v1078, %v1307
    %v1340 = vadd.f32 %v1079, %v1308
    %v1341 = vadd.f32 %v1080, %v1309
    %v1342 = vadd.f32 %v1081, %v1310
    %v1343 = vadd.f32 %v1082, %v1311
    %v1344 = vadd.f32 %v1083, %v1312
    %v1345 = vadd.f32 %v1084, %v1313
    %v1346 = vadd.f32 %v1085, %v1314
    %v1347 = vadd.f32 %v1086, %v1315
    %s1348 = sadd.s32 %s43, 130
    %s1349 = scalar_lea.vmem %s0, %s1348
    %v1350 = vld [vmem:[%s1349] sm:$0xff]
    %v1351 = vld [vmem:[%s1349 + $0x8] sm:$0xff]
    %v1352 = vld [vmem:[%s1349 + $0x10] sm:$0xff]
    %v1353 = vld [vmem:[%s1349 + $0x18] sm:$0xff]
    %v1354 = vld [vmem:[%s1349 + $0x20] sm:$0xff]
    %v1355 = vld [vmem:[%s1349 + $0x28] sm:$0xff]
    %v1356 = vld [vmem:[%s1349 + $0x30] sm:$0xff]
    %v1357 = vld [vmem:[%s1349 + $0x38] sm:$0xff]
    %v1358 = vld [vmem:[%s1349 + $0x40] sm:$0xff]
    %v1359 = vld [vmem:[%s1349 + $0x48] sm:$0xff]
    %v1360 = vld [vmem:[%s1349 + $0x50] sm:$0xff]
    %v1361 = vld [vmem:[%s1349 + $0x58] sm:$0xff]
    %v1362 = vld [vmem:[%s1349 + $0x60] sm:$0xff]
    %v1363 = vld [vmem:[%s1349 + $0x68] sm:$0xff]
    %v1364 = vld [vmem:[%s1349 + $0x70] sm:$0xff]
    %v1365 = vld [vmem:[%s1349 + $0x78] sm:$0xff]
    %v1366 = vld [vmem:[%s1349 + $0x80] sm:$0xff]
    %v1367 = vld [vmem:[%s1349 + $0x88] sm:$0xff]
    %v1368 = vld [vmem:[%s1349 + $0x90] sm:$0xff]
    %v1369 = vld [vmem:[%s1349 + $0x98] sm:$0xff]
    %v1370 = vld [vmem:[%s1349 + $0xa0] sm:$0xff]
    %v1371 = vld [vmem:[%s1349 + $0xa8] sm:$0xff]
    %v1372 = vld [vmem:[%s1349 + $0xb0] sm:$0xff]
    %v1373 = vld [vmem:[%s1349 + $0xb8] sm:$0xff]
    %v1374 = vld [vmem:[%s1349 + $0xc0] sm:$0xff]
    %v1375 = vld [vmem:[%s1349 + $0xc8] sm:$0xff]
    %v1376 = vld [vmem:[%s1349 + $0xd0] sm:$0xff]
    %v1377 = vld [vmem:[%s1349 + $0xd8] sm:$0xff]
    %v1378 = vld [vmem:[%s1349 + $0xe0] sm:$0xff]
    %v1379 = vld [vmem:[%s1349 + $0xe8] sm:$0xff]
    %v1380 = vld [vmem:[%s1349 + $0xf0] sm:$0xff]
    %v1381 = vld [vmem:[%s1349 + $0xf8] sm:$0xff]
    %1383 = vset.pattern.permute.xlu0 0
    %1384 = vperm.xlu0 %1383, %v1350
    %v1385 = vpop.permute.xlu0 %1384
    %1388 = vset.pattern.permute.xlu0 0
    %1389 = vperm.xlu0 %1388, %v1351
    %v1390 = vpop.permute.xlu0 %1389
    %1393 = vset.pattern.permute.xlu0 0
    %1394 = vperm.xlu0 %1393, %v1352
    %v1395 = vpop.permute.xlu0 %1394
    %1398 = vset.pattern.permute.xlu0 0
    %1399 = vperm.xlu0 %1398, %v1353
    %v1400 = vpop.permute.xlu0 %1399
    %1403 = vset.pattern.permute.xlu0 0
    %1404 = vperm.xlu0 %1403, %v1354
    %v1405 = vpop.permute.xlu0 %1404
    %1408 = vset.pattern.permute.xlu0 0
    %1409 = vperm.xlu0 %1408, %v1355
    %v1410 = vpop.permute.xlu0 %1409
    %1413 = vset.pattern.permute.xlu0 0
    %1414 = vperm.xlu0 %1413, %v1356
    %v1415 = vpop.permute.xlu0 %1414
    %1418 = vset.pattern.permute.xlu0 0
    %1419 = vperm.xlu0 %1418, %v1357
    %v1420 = vpop.permute.xlu0 %1419
    %1423 = vset.pattern.permute.xlu0 0
    %1424 = vperm.xlu0 %1423, %v1358
    %v1425 = vpop.permute.xlu0 %1424
    %1428 = vset.pattern.permute.xlu0 0
    %1429 = vperm.xlu0 %1428, %v1359
    %v1430 = vpop.permute.xlu0 %1429
    %1433 = vset.pattern.permute.xlu0 0
    %1434 = vperm.xlu0 %1433, %v1360
    %v1435 = vpop.permute.xlu0 %1434
    %1438 = vset.pattern.permute.xlu0 0
    %1439 = vperm.xlu0 %1438, %v1361
    %v1440 = vpop.permute.xlu0 %1439
    %1443 = vset.pattern.permute.xlu0 0
    %1444 = vperm.xlu0 %1443, %v1362
    %v1445 = vpop.permute.xlu0 %1444
    %1448 = vset.pattern.permute.xlu0 0
    %1449 = vperm.xlu0 %1448, %v1363
    %v1450 = vpop.permute.xlu0 %1449
    %1453 = vset.pattern.permute.xlu0 0
    %1454 = vperm.xlu0 %1453, %v1364
    %v1455 = vpop.permute.xlu0 %1454
    %1458 = vset.pattern.permute.xlu0 0
    %1459 = vperm.xlu0 %1458, %v1365
    %v1460 = vpop.permute.xlu0 %1459
    %1463 = vset.pattern.permute.xlu0 0
    %1464 = vperm.xlu0 %1463, %v1366
    %v1465 = vpop.permute.xlu0 %1464
    %1468 = vset.pattern.permute.xlu0 0
    %1469 = vperm.xlu0 %1468, %v1367
    %v1470 = vpop.permute.xlu0 %1469
    %1473 = vset.pattern.permute.xlu0 0
    %1474 = vperm.xlu0 %1473, %v1368
    %v1475 = vpop.permute.xlu0 %1474
    %1478 = vset.pattern.permute.xlu0 0
    %1479 = vperm.xlu0 %1478, %v1369
    %v1480 = vpop.permute.xlu0 %1479
    %1483 = vset.pattern.permute.xlu0 0
    %1484 = vperm.xlu0 %1483, %v1370
    %v1485 = vpop.permute.xlu0 %1484
    %1488 = vset.pattern.permute.xlu0 0
    %1489 = vperm.xlu0 %1488, %v1371
    %v1490 = vpop.permute.xlu0 %1489
    %1493 = vset.pattern.permute.xlu0 0
    %1494 = vperm.xlu0 %1493, %v1372
    %v1495 = vpop.permute.xlu0 %1494
    %1498 = vset.pattern.permute.xlu0 0
    %1499 = vperm.xlu0 %1498, %v1373
    %v1500 = vpop.permute.xlu0 %1499
    %1503 = vset.pattern.permute.xlu0 0
    %1504 = vperm.xlu0 %1503, %v1374
    %v1505 = vpop.permute.xlu0 %1504
    %1508 = vset.pattern.permute.xlu0 0
    %1509 = vperm.xlu0 %1508, %v1375
    %v1510 = vpop.permute.xlu0 %1509
    %1513 = vset.pattern.permute.xlu0 0
    %1514 = vperm.xlu0 %1513, %v1376
    %v1515 = vpop.permute.xlu0 %1514
    %1518 = vset.pattern.permute.xlu0 0
    %1519 = vperm.xlu0 %1518, %v1377
    %v1520 = vpop.permute.xlu0 %1519
    %1523 = vset.pattern.permute.xlu0 0
    %1524 = vperm.xlu0 %1523, %v1378
    %v1525 = vpop.permute.xlu0 %1524
    %1528 = vset.pattern.permute.xlu0 0
    %1529 = vperm.xlu0 %1528, %v1379
    %v1530 = vpop.permute.xlu0 %1529
    %1533 = vset.pattern.permute.xlu0 0
    %1534 = vperm.xlu0 %1533, %v1380
    %v1535 = vpop.permute.xlu0 %1534
    %1538 = vset.pattern.permute.xlu0 0
    %1539 = vperm.xlu0 %1538, %v1381
    %v1540 = vpop.permute.xlu0 %1539
    %v1543 = vperm.slane %v32, 0
    %v1545 = vmul.f32 %v1385, %v1543
    %v1546 = vmul.f32 %v1390, %v1543
    %v1547 = vmul.f32 %v1395, %v1543
    %v1548 = vmul.f32 %v1400, %v1543
    %v1549 = vmul.f32 %v1405, %v1543
    %v1550 = vmul.f32 %v1410, %v1543
    %v1551 = vmul.f32 %v1415, %v1543
    %v1552 = vmul.f32 %v1420, %v1543
    %v1553 = vmul.f32 %v1425, %v1543
    %v1554 = vmul.f32 %v1430, %v1543
    %v1555 = vmul.f32 %v1435, %v1543
    %v1556 = vmul.f32 %v1440, %v1543
    %v1557 = vmul.f32 %v1445, %v1543
    %v1558 = vmul.f32 %v1450, %v1543
    %v1559 = vmul.f32 %v1455, %v1543
    %v1560 = vmul.f32 %v1460, %v1543
    %v1561 = vmul.f32 %v1465, %v1543
    %v1562 = vmul.f32 %v1470, %v1543
    %v1563 = vmul.f32 %v1475, %v1543
    %v1564 = vmul.f32 %v1480, %v1543
    %v1565 = vmul.f32 %v1485, %v1543
    %v1566 = vmul.f32 %v1490, %v1543
    %v1567 = vmul.f32 %v1495, %v1543
    %v1568 = vmul.f32 %v1500, %v1543
    %v1569 = vmul.f32 %v1505, %v1543
    %v1570 = vmul.f32 %v1510, %v1543
    %v1571 = vmul.f32 %v1515, %v1543
    %v1572 = vmul.f32 %v1520, %v1543
    %v1573 = vmul.f32 %v1525, %v1543
    %v1574 = vmul.f32 %v1530, %v1543
    %v1575 = vmul.f32 %v1535, %v1543
    %v1576 = vmul.f32 %v1540, %v1543
    %v1577 = vadd.f32 %v1316, %v1545
    %v1578 = vadd.f32 %v1317, %v1546
    %v1579 = vadd.f32 %v1318, %v1547
    %v1580 = vadd.f32 %v1319, %v1548
    %v1581 = vadd.f32 %v1320, %v1549
    %v1582 = vadd.f32 %v1321, %v1550
    %v1583 = vadd.f32 %v1322, %v1551
    %v1584 = vadd.f32 %v1323, %v1552
    %v1585 = vadd.f32 %v1324, %v1553
    %v1586 = vadd.f32 %v1325, %v1554
    %v1587 = vadd.f32 %v1326, %v1555
    %v1588 = vadd.f32 %v1327, %v1556
    %v1589 = vadd.f32 %v1328, %v1557
    %v1590 = vadd.f32 %v1329, %v1558
    %v1591 = vadd.f32 %v1330, %v1559
    %v1592 = vadd.f32 %v1331, %v1560
    %v1593 = vadd.f32 %v1332, %v1561
    %v1594 = vadd.f32 %v1333, %v1562
    %v1595 = vadd.f32 %v1334, %v1563
    %v1596 = vadd.f32 %v1335, %v1564
    %v1597 = vadd.f32 %v1336, %v1565
    %v1598 = vadd.f32 %v1337, %v1566
    %v1599 = vadd.f32 %v1338, %v1567
    %v1600 = vadd.f32 %v1339, %v1568
    %v1601 = vadd.f32 %v1340, %v1569
    %v1602 = vadd.f32 %v1341, %v1570
    %v1603 = vadd.f32 %v1342, %v1571
    %v1604 = vadd.f32 %v1343, %v1572
    %v1605 = vadd.f32 %v1344, %v1573
    %v1606 = vadd.f32 %v1345, %v1574
    %v1607 = vadd.f32 %v1346, %v1575
    %v1608 = vadd.f32 %v1347, %v1576
    %s1609 = sadd.s32 %s43, 256
    %s1610 = scalar_lea.vmem %s0, %s1609
    %v1611 = vld [vmem:[%s1610] sm:$0xff]
    %v1612 = vld [vmem:[%s1610 + $0x8] sm:$0xff]
    %v1613 = vld [vmem:[%s1610 + $0x10] sm:$0xff]
    %v1614 = vld [vmem:[%s1610 + $0x18] sm:$0xff]
    %v1615 = vld [vmem:[%s1610 + $0x20] sm:$0xff]
    %v1616 = vld [vmem:[%s1610 + $0x28] sm:$0xff]
    %v1617 = vld [vmem:[%s1610 + $0x30] sm:$0xff]
    %v1618 = vld [vmem:[%s1610 + $0x38] sm:$0xff]
    %v1619 = vld [vmem:[%s1610 + $0x40] sm:$0xff]
    %v1620 = vld [vmem:[%s1610 + $0x48] sm:$0xff]
    %v1621 = vld [vmem:[%s1610 + $0x50] sm:$0xff]
    %v1622 = vld [vmem:[%s1610 + $0x58] sm:$0xff]
    %v1623 = vld [vmem:[%s1610 + $0x60] sm:$0xff]
    %v1624 = vld [vmem:[%s1610 + $0x68] sm:$0xff]
    %v1625 = vld [vmem:[%s1610 + $0x70] sm:$0xff]
    %v1626 = vld [vmem:[%s1610 + $0x78] sm:$0xff]
    %v1627 = vld [vmem:[%s1610 + $0x80] sm:$0xff]
    %v1628 = vld [vmem:[%s1610 + $0x88] sm:$0xff]
    %v1629 = vld [vmem:[%s1610 + $0x90] sm:$0xff]
    %v1630 = vld [vmem:[%s1610 + $0x98] sm:$0xff]
    %v1631 = vld [vmem:[%s1610 + $0xa0] sm:$0xff]
    %v1632 = vld [vmem:[%s1610 + $0xa8] sm:$0xff]
    %v1633 = vld [vmem:[%s1610 + $0xb0] sm:$0xff]
    %v1634 = vld [vmem:[%s1610 + $0xb8] sm:$0xff]
    %v1635 = vld [vmem:[%s1610 + $0xc0] sm:$0xff]
    %v1636 = vld [vmem:[%s1610 + $0xc8] sm:$0xff]
    %v1637 = vld [vmem:[%s1610 + $0xd0] sm:$0xff]
    %v1638 = vld [vmem:[%s1610 + $0xd8] sm:$0xff]
    %v1639 = vld [vmem:[%s1610 + $0xe0] sm:$0xff]
    %v1640 = vld [vmem:[%s1610 + $0xe8] sm:$0xff]
    %v1641 = vld [vmem:[%s1610 + $0xf0] sm:$0xff]
    %v1642 = vld [vmem:[%s1610 + $0xf8] sm:$0xff]
    %1644 = vset.pattern.permute.xlu0 0
    %1645 = vperm.xlu0 %1644, %v1611
    %v1646 = vpop.permute.xlu0 %1645
    %1649 = vset.pattern.permute.xlu0 0
    %1650 = vperm.xlu0 %1649, %v1612
    %v1651 = vpop.permute.xlu0 %1650
    %1654 = vset.pattern.permute.xlu0 0
    %1655 = vperm.xlu0 %1654, %v1613
    %v1656 = vpop.permute.xlu0 %1655
    %1659 = vset.pattern.permute.xlu0 0
    %1660 = vperm.xlu0 %1659, %v1614
    %v1661 = vpop.permute.xlu0 %1660
    %1664 = vset.pattern.permute.xlu0 0
    %1665 = vperm.xlu0 %1664, %v1615
    %v1666 = vpop.permute.xlu0 %1665
    %1669 = vset.pattern.permute.xlu0 0
    %1670 = vperm.xlu0 %1669, %v1616
    %v1671 = vpop.permute.xlu0 %1670
    %1674 = vset.pattern.permute.xlu0 0
    %1675 = vperm.xlu0 %1674, %v1617
    %v1676 = vpop.permute.xlu0 %1675
    %1679 = vset.pattern.permute.xlu0 0
    %1680 = vperm.xlu0 %1679, %v1618
    %v1681 = vpop.permute.xlu0 %1680
    %1684 = vset.pattern.permute.xlu0 0
    %1685 = vperm.xlu0 %1684, %v1619
    %v1686 = vpop.permute.xlu0 %1685
    %1689 = vset.pattern.permute.xlu0 0
    %1690 = vperm.xlu0 %1689, %v1620
    %v1691 = vpop.permute.xlu0 %1690
    %1694 = vset.pattern.permute.xlu0 0
    %1695 = vperm.xlu0 %1694, %v1621
    %v1696 = vpop.permute.xlu0 %1695
    %1699 = vset.pattern.permute.xlu0 0
    %1700 = vperm.xlu0 %1699, %v1622
    %v1701 = vpop.permute.xlu0 %1700
    %1704 = vset.pattern.permute.xlu0 0
    %1705 = vperm.xlu0 %1704, %v1623
    %v1706 = vpop.permute.xlu0 %1705
    %1709 = vset.pattern.permute.xlu0 0
    %1710 = vperm.xlu0 %1709, %v1624
    %v1711 = vpop.permute.xlu0 %1710
    %1714 = vset.pattern.permute.xlu0 0
    %1715 = vperm.xlu0 %1714, %v1625
    %v1716 = vpop.permute.xlu0 %1715
    %1719 = vset.pattern.permute.xlu0 0
    %1720 = vperm.xlu0 %1719, %v1626
    %v1721 = vpop.permute.xlu0 %1720
    %1724 = vset.pattern.permute.xlu0 0
    %1725 = vperm.xlu0 %1724, %v1627
    %v1726 = vpop.permute.xlu0 %1725
    %1729 = vset.pattern.permute.xlu0 0
    %1730 = vperm.xlu0 %1729, %v1628
    %v1731 = vpop.permute.xlu0 %1730
    %1734 = vset.pattern.permute.xlu0 0
    %1735 = vperm.xlu0 %1734, %v1629
    %v1736 = vpop.permute.xlu0 %1735
    %1739 = vset.pattern.permute.xlu0 0
    %1740 = vperm.xlu0 %1739, %v1630
    %v1741 = vpop.permute.xlu0 %1740
    %1744 = vset.pattern.permute.xlu0 0
    %1745 = vperm.xlu0 %1744, %v1631
    %v1746 = vpop.permute.xlu0 %1745
    %1749 = vset.pattern.permute.xlu0 0
    %1750 = vperm.xlu0 %1749, %v1632
    %v1751 = vpop.permute.xlu0 %1750
    %1754 = vset.pattern.permute.xlu0 0
    %1755 = vperm.xlu0 %1754, %v1633
    %v1756 = vpop.permute.xlu0 %1755
    %1759 = vset.pattern.permute.xlu0 0
    %1760 = vperm.xlu0 %1759, %v1634
    %v1761 = vpop.permute.xlu0 %1760
    %1764 = vset.pattern.permute.xlu0 0
    %1765 = vperm.xlu0 %1764, %v1635
    %v1766 = vpop.permute.xlu0 %1765
    %1769 = vset.pattern.permute.xlu0 0
    %1770 = vperm.xlu0 %1769, %v1636
    %v1771 = vpop.permute.xlu0 %1770
    %1774 = vset.pattern.permute.xlu0 0
    %1775 = vperm.xlu0 %1774, %v1637
    %v1776 = vpop.permute.xlu0 %1775
    %1779 = vset.pattern.permute.xlu0 0
    %1780 = vperm.xlu0 %1779, %v1638
    %v1781 = vpop.permute.xlu0 %1780
    %1784 = vset.pattern.permute.xlu0 0
    %1785 = vperm.xlu0 %1784, %v1639
    %v1786 = vpop.permute.xlu0 %1785
    %1789 = vset.pattern.permute.xlu0 0
    %1790 = vperm.xlu0 %1789, %v1640
    %v1791 = vpop.permute.xlu0 %1790
    %1794 = vset.pattern.permute.xlu0 0
    %1795 = vperm.xlu0 %1794, %v1641
    %v1796 = vpop.permute.xlu0 %1795
    %1799 = vset.pattern.permute.xlu0 0
    %1800 = vperm.xlu0 %1799, %v1642
    %v1801 = vpop.permute.xlu0 %1800
    %v1804 = vperm.slane %v33, 0
    %v1806 = vmul.f32 %v1646, %v1804
    %v1807 = vmul.f32 %v1651, %v1804
    %v1808 = vmul.f32 %v1656, %v1804
    %v1809 = vmul.f32 %v1661, %v1804
    %v1810 = vmul.f32 %v1666, %v1804
    %v1811 = vmul.f32 %v1671, %v1804
    %v1812 = vmul.f32 %v1676, %v1804
    %v1813 = vmul.f32 %v1681, %v1804
    %v1814 = vmul.f32 %v1686, %v1804
    %v1815 = vmul.f32 %v1691, %v1804
    %v1816 = vmul.f32 %v1696, %v1804
    %v1817 = vmul.f32 %v1701, %v1804
    %v1818 = vmul.f32 %v1706, %v1804
    %v1819 = vmul.f32 %v1711, %v1804
    %v1820 = vmul.f32 %v1716, %v1804
    %v1821 = vmul.f32 %v1721, %v1804
    %v1822 = vmul.f32 %v1726, %v1804
    %v1823 = vmul.f32 %v1731, %v1804
    %v1824 = vmul.f32 %v1736, %v1804
    %v1825 = vmul.f32 %v1741, %v1804
    %v1826 = vmul.f32 %v1746, %v1804
    %v1827 = vmul.f32 %v1751, %v1804
    %v1828 = vmul.f32 %v1756, %v1804
    %v1829 = vmul.f32 %v1761, %v1804
    %v1830 = vmul.f32 %v1766, %v1804
    %v1831 = vmul.f32 %v1771, %v1804
    %v1832 = vmul.f32 %v1776, %v1804
    %v1833 = vmul.f32 %v1781, %v1804
    %v1834 = vmul.f32 %v1786, %v1804
    %v1835 = vmul.f32 %v1791, %v1804
    %v1836 = vmul.f32 %v1796, %v1804
    %v1837 = vmul.f32 %v1801, %v1804
    %v1838 = vadd.f32 %v1577, %v1806
    %v1839 = vadd.f32 %v1578, %v1807
    %v1840 = vadd.f32 %v1579, %v1808
    %v1841 = vadd.f32 %v1580, %v1809
    %v1842 = vadd.f32 %v1581, %v1810
    %v1843 = vadd.f32 %v1582, %v1811
    %v1844 = vadd.f32 %v1583, %v1812
    %v1845 = vadd.f32 %v1584, %v1813
    %v1846 = vadd.f32 %v1585, %v1814
    %v1847 = vadd.f32 %v1586, %v1815
    %v1848 = vadd.f32 %v1587, %v1816
    %v1849 = vadd.f32 %v1588, %v1817
    %v1850 = vadd.f32 %v1589, %v1818
    %v1851 = vadd.f32 %v1590, %v1819
    %v1852 = vadd.f32 %v1591, %v1820
    %v1853 = vadd.f32 %v1592, %v1821
    %v1854 = vadd.f32 %v1593, %v1822
    %v1855 = vadd.f32 %v1594, %v1823
    %v1856 = vadd.f32 %v1595, %v1824
    %v1857 = vadd.f32 %v1596, %v1825
    %v1858 = vadd.f32 %v1597, %v1826
    %v1859 = vadd.f32 %v1598, %v1827
    %v1860 = vadd.f32 %v1599, %v1828
    %v1861 = vadd.f32 %v1600, %v1829
    %v1862 = vadd.f32 %v1601, %v1830
    %v1863 = vadd.f32 %v1602, %v1831
    %v1864 = vadd.f32 %v1603, %v1832
    %v1865 = vadd.f32 %v1604, %v1833
    %v1866 = vadd.f32 %v1605, %v1834
    %v1867 = vadd.f32 %v1606, %v1835
    %v1868 = vadd.f32 %v1607, %v1836
    %v1869 = vadd.f32 %v1608, %v1837
    %s1870 = sadd.s32 %s43, 257
    %s1871 = scalar_lea.vmem %s0, %s1870
    %v1872 = vld [vmem:[%s1871] sm:$0xff]
    %v1873 = vld [vmem:[%s1871 + $0x8] sm:$0xff]
    %v1874 = vld [vmem:[%s1871 + $0x10] sm:$0xff]
    %v1875 = vld [vmem:[%s1871 + $0x18] sm:$0xff]
    %v1876 = vld [vmem:[%s1871 + $0x20] sm:$0xff]
    %v1877 = vld [vmem:[%s1871 + $0x28] sm:$0xff]
    %v1878 = vld [vmem:[%s1871 + $0x30] sm:$0xff]
    %v1879 = vld [vmem:[%s1871 + $0x38] sm:$0xff]
    %v1880 = vld [vmem:[%s1871 + $0x40] sm:$0xff]
    %v1881 = vld [vmem:[%s1871 + $0x48] sm:$0xff]
    %v1882 = vld [vmem:[%s1871 + $0x50] sm:$0xff]
    %v1883 = vld [vmem:[%s1871 + $0x58] sm:$0xff]
    %v1884 = vld [vmem:[%s1871 + $0x60] sm:$0xff]
    %v1885 = vld [vmem:[%s1871 + $0x68] sm:$0xff]
    %v1886 = vld [vmem:[%s1871 + $0x70] sm:$0xff]
    %v1887 = vld [vmem:[%s1871 + $0x78] sm:$0xff]
    %v1888 = vld [vmem:[%s1871 + $0x80] sm:$0xff]
    %v1889 = vld [vmem:[%s1871 + $0x88] sm:$0xff]
    %v1890 = vld [vmem:[%s1871 + $0x90] sm:$0xff]
    %v1891 = vld [vmem:[%s1871 + $0x98] sm:$0xff]
    %v1892 = vld [vmem:[%s1871 + $0xa0] sm:$0xff]
    %v1893 = vld [vmem:[%s1871 + $0xa8] sm:$0xff]
    %v1894 = vld [vmem:[%s1871 + $0xb0] sm:$0xff]
    %v1895 = vld [vmem:[%s1871 + $0xb8] sm:$0xff]
    %v1896 = vld [vmem:[%s1871 + $0xc0] sm:$0xff]
    %v1897 = vld [vmem:[%s1871 + $0xc8] sm:$0xff]
    %v1898 = vld [vmem:[%s1871 + $0xd0] sm:$0xff]
    %v1899 = vld [vmem:[%s1871 + $0xd8] sm:$0xff]
    %v1900 = vld [vmem:[%s1871 + $0xe0] sm:$0xff]
    %v1901 = vld [vmem:[%s1871 + $0xe8] sm:$0xff]
    %v1902 = vld [vmem:[%s1871 + $0xf0] sm:$0xff]
    %v1903 = vld [vmem:[%s1871 + $0xf8] sm:$0xff]
    %1905 = vset.pattern.permute.xlu0 0
    %1906 = vperm.xlu0 %1905, %v1872
    %v1907 = vpop.permute.xlu0 %1906
    %1910 = vset.pattern.permute.xlu0 0
    %1911 = vperm.xlu0 %1910, %v1873
    %v1912 = vpop.permute.xlu0 %1911
    %1915 = vset.pattern.permute.xlu0 0
    %1916 = vperm.xlu0 %1915, %v1874
    %v1917 = vpop.permute.xlu0 %1916
    %1920 = vset.pattern.permute.xlu0 0
    %1921 = vperm.xlu0 %1920, %v1875
    %v1922 = vpop.permute.xlu0 %1921
    %1925 = vset.pattern.permute.xlu0 0
    %1926 = vperm.xlu0 %1925, %v1876
    %v1927 = vpop.permute.xlu0 %1926
    %1930 = vset.pattern.permute.xlu0 0
    %1931 = vperm.xlu0 %1930, %v1877
    %v1932 = vpop.permute.xlu0 %1931
    %1935 = vset.pattern.permute.xlu0 0
    %1936 = vperm.xlu0 %1935, %v1878
    %v1937 = vpop.permute.xlu0 %1936
    %1940 = vset.pattern.permute.xlu0 0
    %1941 = vperm.xlu0 %1940, %v1879
    %v1942 = vpop.permute.xlu0 %1941
    %1945 = vset.pattern.permute.xlu0 0
    %1946 = vperm.xlu0 %1945, %v1880
    %v1947 = vpop.permute.xlu0 %1946
    %1950 = vset.pattern.permute.xlu0 0
    %1951 = vperm.xlu0 %1950, %v1881
    %v1952 = vpop.permute.xlu0 %1951
    %1955 = vset.pattern.permute.xlu0 0
    %1956 = vperm.xlu0 %1955, %v1882
    %v1957 = vpop.permute.xlu0 %1956
    %1960 = vset.pattern.permute.xlu0 0
    %1961 = vperm.xlu0 %1960, %v1883
    %v1962 = vpop.permute.xlu0 %1961
    %1965 = vset.pattern.permute.xlu0 0
    %1966 = vperm.xlu0 %1965, %v1884
    %v1967 = vpop.permute.xlu0 %1966
    %1970 = vset.pattern.permute.xlu0 0
    %1971 = vperm.xlu0 %1970, %v1885
    %v1972 = vpop.permute.xlu0 %1971
    %1975 = vset.pattern.permute.xlu0 0
    %1976 = vperm.xlu0 %1975, %v1886
    %v1977 = vpop.permute.xlu0 %1976
    %1980 = vset.pattern.permute.xlu0 0
    %1981 = vperm.xlu0 %1980, %v1887
    %v1982 = vpop.permute.xlu0 %1981
    %1985 = vset.pattern.permute.xlu0 0
    %1986 = vperm.xlu0 %1985, %v1888
    %v1987 = vpop.permute.xlu0 %1986
    %1990 = vset.pattern.permute.xlu0 0
    %1991 = vperm.xlu0 %1990, %v1889
    %v1992 = vpop.permute.xlu0 %1991
    %1995 = vset.pattern.permute.xlu0 0
    %1996 = vperm.xlu0 %1995, %v1890
    %v1997 = vpop.permute.xlu0 %1996
    %2000 = vset.pattern.permute.xlu0 0
    %2001 = vperm.xlu0 %2000, %v1891
    %v2002 = vpop.permute.xlu0 %2001
    %2005 = vset.pattern.permute.xlu0 0
    %2006 = vperm.xlu0 %2005, %v1892
    %v2007 = vpop.permute.xlu0 %2006
    %2010 = vset.pattern.permute.xlu0 0
    %2011 = vperm.xlu0 %2010, %v1893
    %v2012 = vpop.permute.xlu0 %2011
    %2015 = vset.pattern.permute.xlu0 0
    %2016 = vperm.xlu0 %2015, %v1894
    %v2017 = vpop.permute.xlu0 %2016
    %2020 = vset.pattern.permute.xlu0 0
    %2021 = vperm.xlu0 %2020, %v1895
    %v2022 = vpop.permute.xlu0 %2021
    %2025 = vset.pattern.permute.xlu0 0
    %2026 = vperm.xlu0 %2025, %v1896
    %v2027 = vpop.permute.xlu0 %2026
    %2030 = vset.pattern.permute.xlu0 0
    %2031 = vperm.xlu0 %2030, %v1897
    %v2032 = vpop.permute.xlu0 %2031
    %2035 = vset.pattern.permute.xlu0 0
    %2036 = vperm.xlu0 %2035, %v1898
    %v2037 = vpop.permute.xlu0 %2036
    %2040 = vset.pattern.permute.xlu0 0
    %2041 = vperm.xlu0 %2040, %v1899
    %v2042 = vpop.permute.xlu0 %2041
    %2045 = vset.pattern.permute.xlu0 0
    %2046 = vperm.xlu0 %2045, %v1900
    %v2047 = vpop.permute.xlu0 %2046
    %2050 = vset.pattern.permute.xlu0 0
    %2051 = vperm.xlu0 %2050, %v1901
    %v2052 = vpop.permute.xlu0 %2051
    %2055 = vset.pattern.permute.xlu0 0
    %2056 = vperm.xlu0 %2055, %v1902
    %v2057 = vpop.permute.xlu0 %2056
    %2060 = vset.pattern.permute.xlu0 0
    %2061 = vperm.xlu0 %2060, %v1903
    %v2062 = vpop.permute.xlu0 %2061
    %v2065 = vperm.slane %v34, 0
    %v2067 = vmul.f32 %v1907, %v2065
    %v2068 = vmul.f32 %v1912, %v2065
    %v2069 = vmul.f32 %v1917, %v2065
    %v2070 = vmul.f32 %v1922, %v2065
    %v2071 = vmul.f32 %v1927, %v2065
    %v2072 = vmul.f32 %v1932, %v2065
    %v2073 = vmul.f32 %v1937, %v2065
    %v2074 = vmul.f32 %v1942, %v2065
    %v2075 = vmul.f32 %v1947, %v2065
    %v2076 = vmul.f32 %v1952, %v2065
    %v2077 = vmul.f32 %v1957, %v2065
    %v2078 = vmul.f32 %v1962, %v2065
    %v2079 = vmul.f32 %v1967, %v2065
    %v2080 = vmul.f32 %v1972, %v2065
    %v2081 = vmul.f32 %v1977, %v2065
    %v2082 = vmul.f32 %v1982, %v2065
    %v2083 = vmul.f32 %v1987, %v2065
    %v2084 = vmul.f32 %v1992, %v2065
    %v2085 = vmul.f32 %v1997, %v2065
    %v2086 = vmul.f32 %v2002, %v2065
    %v2087 = vmul.f32 %v2007, %v2065
    %v2088 = vmul.f32 %v2012, %v2065
    %v2089 = vmul.f32 %v2017, %v2065
    %v2090 = vmul.f32 %v2022, %v2065
    %v2091 = vmul.f32 %v2027, %v2065
    %v2092 = vmul.f32 %v2032, %v2065
    %v2093 = vmul.f32 %v2037, %v2065
    %v2094 = vmul.f32 %v2042, %v2065
    %v2095 = vmul.f32 %v2047, %v2065
    %v2096 = vmul.f32 %v2052, %v2065
    %v2097 = vmul.f32 %v2057, %v2065
    %v2098 = vmul.f32 %v2062, %v2065
    %v2099 = vadd.f32 %v1838, %v2067
    %v2100 = vadd.f32 %v1839, %v2068
    %v2101 = vadd.f32 %v1840, %v2069
    %v2102 = vadd.f32 %v1841, %v2070
    %v2103 = vadd.f32 %v1842, %v2071
    %v2104 = vadd.f32 %v1843, %v2072
    %v2105 = vadd.f32 %v1844, %v2073
    %v2106 = vadd.f32 %v1845, %v2074
    %v2107 = vadd.f32 %v1846, %v2075
    %v2108 = vadd.f32 %v1847, %v2076
    %v2109 = vadd.f32 %v1848, %v2077
    %v2110 = vadd.f32 %v1849, %v2078
    %v2111 = vadd.f32 %v1850, %v2079
    %v2112 = vadd.f32 %v1851, %v2080
    %v2113 = vadd.f32 %v1852, %v2081
    %v2114 = vadd.f32 %v1853, %v2082
    %v2115 = vadd.f32 %v1854, %v2083
    %v2116 = vadd.f32 %v1855, %v2084
    %v2117 = vadd.f32 %v1856, %v2085
    %v2118 = vadd.f32 %v1857, %v2086
    %v2119 = vadd.f32 %v1858, %v2087
    %v2120 = vadd.f32 %v1859, %v2088
    %v2121 = vadd.f32 %v1860, %v2089
    %v2122 = vadd.f32 %v1861, %v2090
    %v2123 = vadd.f32 %v1862, %v2091
    %v2124 = vadd.f32 %v1863, %v2092
    %v2125 = vadd.f32 %v1864, %v2093
    %v2126 = vadd.f32 %v1865, %v2094
    %v2127 = vadd.f32 %v1866, %v2095
    %v2128 = vadd.f32 %v1867, %v2096
    %v2129 = vadd.f32 %v1868, %v2097
    %v2130 = vadd.f32 %v1869, %v2098
    %s2131 = sadd.s32 %s43, 258
    %s2132 = scalar_lea.vmem %s0, %s2131
    %v2133 = vld [vmem:[%s2132] sm:$0xff]
    %v2134 = vld [vmem:[%s2132 + $0x8] sm:$0xff]
    %v2135 = vld [vmem:[%s2132 + $0x10] sm:$0xff]
    %v2136 = vld [vmem:[%s2132 + $0x18] sm:$0xff]
    %v2137 = vld [vmem:[%s2132 + $0x20] sm:$0xff]
    %v2138 = vld [vmem:[%s2132 + $0x28] sm:$0xff]
    %v2139 = vld [vmem:[%s2132 + $0x30] sm:$0xff]
    %v2140 = vld [vmem:[%s2132 + $0x38] sm:$0xff]
    %v2141 = vld [vmem:[%s2132 + $0x40] sm:$0xff]
    %v2142 = vld [vmem:[%s2132 + $0x48] sm:$0xff]
    %v2143 = vld [vmem:[%s2132 + $0x50] sm:$0xff]
    %v2144 = vld [vmem:[%s2132 + $0x58] sm:$0xff]
    %v2145 = vld [vmem:[%s2132 + $0x60] sm:$0xff]
    %v2146 = vld [vmem:[%s2132 + $0x68] sm:$0xff]
    %v2147 = vld [vmem:[%s2132 + $0x70] sm:$0xff]
    %v2148 = vld [vmem:[%s2132 + $0x78] sm:$0xff]
    %v2149 = vld [vmem:[%s2132 + $0x80] sm:$0xff]
    %v2150 = vld [vmem:[%s2132 + $0x88] sm:$0xff]
    %v2151 = vld [vmem:[%s2132 + $0x90] sm:$0xff]
    %v2152 = vld [vmem:[%s2132 + $0x98] sm:$0xff]
    %v2153 = vld [vmem:[%s2132 + $0xa0] sm:$0xff]
    %v2154 = vld [vmem:[%s2132 + $0xa8] sm:$0xff]
    %v2155 = vld [vmem:[%s2132 + $0xb0] sm:$0xff]
    %v2156 = vld [vmem:[%s2132 + $0xb8] sm:$0xff]
    %v2157 = vld [vmem:[%s2132 + $0xc0] sm:$0xff]
    %v2158 = vld [vmem:[%s2132 + $0xc8] sm:$0xff]
    %v2159 = vld [vmem:[%s2132 + $0xd0] sm:$0xff]
    %v2160 = vld [vmem:[%s2132 + $0xd8] sm:$0xff]
    %v2161 = vld [vmem:[%s2132 + $0xe0] sm:$0xff]
    %v2162 = vld [vmem:[%s2132 + $0xe8] sm:$0xff]
    %v2163 = vld [vmem:[%s2132 + $0xf0] sm:$0xff]
    %v2164 = vld [vmem:[%s2132 + $0xf8] sm:$0xff]
    %2166 = vset.pattern.permute.xlu0 0
    %2167 = vperm.xlu0 %2166, %v2133
    %v2168 = vpop.permute.xlu0 %2167
    %2171 = vset.pattern.permute.xlu0 0
    %2172 = vperm.xlu0 %2171, %v2134
    %v2173 = vpop.permute.xlu0 %2172
    %2176 = vset.pattern.permute.xlu0 0
    %2177 = vperm.xlu0 %2176, %v2135
    %v2178 = vpop.permute.xlu0 %2177
    %2181 = vset.pattern.permute.xlu0 0
    %2182 = vperm.xlu0 %2181, %v2136
    %v2183 = vpop.permute.xlu0 %2182
    %2186 = vset.pattern.permute.xlu0 0
    %2187 = vperm.xlu0 %2186, %v2137
    %v2188 = vpop.permute.xlu0 %2187
    %2191 = vset.pattern.permute.xlu0 0
    %2192 = vperm.xlu0 %2191, %v2138
    %v2193 = vpop.permute.xlu0 %2192
    %2196 = vset.pattern.permute.xlu0 0
    %2197 = vperm.xlu0 %2196, %v2139
    %v2198 = vpop.permute.xlu0 %2197
    %2201 = vset.pattern.permute.xlu0 0
    %2202 = vperm.xlu0 %2201, %v2140
    %v2203 = vpop.permute.xlu0 %2202
    %2206 = vset.pattern.permute.xlu0 0
    %2207 = vperm.xlu0 %2206, %v2141
    %v2208 = vpop.permute.xlu0 %2207
    %2211 = vset.pattern.permute.xlu0 0
    %2212 = vperm.xlu0 %2211, %v2142
    %v2213 = vpop.permute.xlu0 %2212
    %2216 = vset.pattern.permute.xlu0 0
    %2217 = vperm.xlu0 %2216, %v2143
    %v2218 = vpop.permute.xlu0 %2217
    %2221 = vset.pattern.permute.xlu0 0
    %2222 = vperm.xlu0 %2221, %v2144
    %v2223 = vpop.permute.xlu0 %2222
    %2226 = vset.pattern.permute.xlu0 0
    %2227 = vperm.xlu0 %2226, %v2145
    %v2228 = vpop.permute.xlu0 %2227
    %2231 = vset.pattern.permute.xlu0 0
    %2232 = vperm.xlu0 %2231, %v2146
    %v2233 = vpop.permute.xlu0 %2232
    %2236 = vset.pattern.permute.xlu0 0
    %2237 = vperm.xlu0 %2236, %v2147
    %v2238 = vpop.permute.xlu0 %2237
    %2241 = vset.pattern.permute.xlu0 0
    %2242 = vperm.xlu0 %2241, %v2148
    %v2243 = vpop.permute.xlu0 %2242
    %2246 = vset.pattern.permute.xlu0 0
    %2247 = vperm.xlu0 %2246, %v2149
    %v2248 = vpop.permute.xlu0 %2247
    %2251 = vset.pattern.permute.xlu0 0
    %2252 = vperm.xlu0 %2251, %v2150
    %v2253 = vpop.permute.xlu0 %2252
    %2256 = vset.pattern.permute.xlu0 0
    %2257 = vperm.xlu0 %2256, %v2151
    %v2258 = vpop.permute.xlu0 %2257
    %2261 = vset.pattern.permute.xlu0 0
    %2262 = vperm.xlu0 %2261, %v2152
    %v2263 = vpop.permute.xlu0 %2262
    %2266 = vset.pattern.permute.xlu0 0
    %2267 = vperm.xlu0 %2266, %v2153
    %v2268 = vpop.permute.xlu0 %2267
    %2271 = vset.pattern.permute.xlu0 0
    %2272 = vperm.xlu0 %2271, %v2154
    %v2273 = vpop.permute.xlu0 %2272
    %2276 = vset.pattern.permute.xlu0 0
    %2277 = vperm.xlu0 %2276, %v2155
    %v2278 = vpop.permute.xlu0 %2277
    %2281 = vset.pattern.permute.xlu0 0
    %2282 = vperm.xlu0 %2281, %v2156
    %v2283 = vpop.permute.xlu0 %2282
    %2286 = vset.pattern.permute.xlu0 0
    %2287 = vperm.xlu0 %2286, %v2157
    %v2288 = vpop.permute.xlu0 %2287
    %2291 = vset.pattern.permute.xlu0 0
    %2292 = vperm.xlu0 %2291, %v2158
    %v2293 = vpop.permute.xlu0 %2292
    %2296 = vset.pattern.permute.xlu0 0
    %2297 = vperm.xlu0 %2296, %v2159
    %v2298 = vpop.permute.xlu0 %2297
    %2301 = vset.pattern.permute.xlu0 0
    %2302 = vperm.xlu0 %2301, %v2160
    %v2303 = vpop.permute.xlu0 %2302
    %2306 = vset.pattern.permute.xlu0 0
    %2307 = vperm.xlu0 %2306, %v2161
    %v2308 = vpop.permute.xlu0 %2307
    %2311 = vset.pattern.permute.xlu0 0
    %2312 = vperm.xlu0 %2311, %v2162
    %v2313 = vpop.permute.xlu0 %2312
    %2316 = vset.pattern.permute.xlu0 0
    %2317 = vperm.xlu0 %2316, %v2163
    %v2318 = vpop.permute.xlu0 %2317
    %2321 = vset.pattern.permute.xlu0 0
    %2322 = vperm.xlu0 %2321, %v2164
    %v2323 = vpop.permute.xlu0 %2322
    %v2326 = vperm.slane %v35, 0
    %v2328 = vmul.f32 %v2168, %v2326
    %v2329 = vmul.f32 %v2173, %v2326
    %v2330 = vmul.f32 %v2178, %v2326
    %v2331 = vmul.f32 %v2183, %v2326
    %v2332 = vmul.f32 %v2188, %v2326
    %v2333 = vmul.f32 %v2193, %v2326
    %v2334 = vmul.f32 %v2198, %v2326
    %v2335 = vmul.f32 %v2203, %v2326
    %v2336 = vmul.f32 %v2208, %v2326
    %v2337 = vmul.f32 %v2213, %v2326
    %v2338 = vmul.f32 %v2218, %v2326
    %v2339 = vmul.f32 %v2223, %v2326
    %v2340 = vmul.f32 %v2228, %v2326
    %v2341 = vmul.f32 %v2233, %v2326
    %v2342 = vmul.f32 %v2238, %v2326
    %v2343 = vmul.f32 %v2243, %v2326
    %v2344 = vmul.f32 %v2248, %v2326
    %v2345 = vmul.f32 %v2253, %v2326
    %v2346 = vmul.f32 %v2258, %v2326
    %v2347 = vmul.f32 %v2263, %v2326
    %v2348 = vmul.f32 %v2268, %v2326
    %v2349 = vmul.f32 %v2273, %v2326
    %v2350 = vmul.f32 %v2278, %v2326
    %v2351 = vmul.f32 %v2283, %v2326
    %v2352 = vmul.f32 %v2288, %v2326
    %v2353 = vmul.f32 %v2293, %v2326
    %v2354 = vmul.f32 %v2298, %v2326
    %v2355 = vmul.f32 %v2303, %v2326
    %v2356 = vmul.f32 %v2308, %v2326
    %v2357 = vmul.f32 %v2313, %v2326
    %v2358 = vmul.f32 %v2318, %v2326
    %v2359 = vmul.f32 %v2323, %v2326
    %v2360 = vadd.f32 %v2099, %v2328
    %v2361 = vadd.f32 %v2100, %v2329
    %v2362 = vadd.f32 %v2101, %v2330
    %v2363 = vadd.f32 %v2102, %v2331
    %v2364 = vadd.f32 %v2103, %v2332
    %v2365 = vadd.f32 %v2104, %v2333
    %v2366 = vadd.f32 %v2105, %v2334
    %v2367 = vadd.f32 %v2106, %v2335
    %v2368 = vadd.f32 %v2107, %v2336
    %v2369 = vadd.f32 %v2108, %v2337
    %v2370 = vadd.f32 %v2109, %v2338
    %v2371 = vadd.f32 %v2110, %v2339
    %v2372 = vadd.f32 %v2111, %v2340
    %v2373 = vadd.f32 %v2112, %v2341
    %v2374 = vadd.f32 %v2113, %v2342
    %v2375 = vadd.f32 %v2114, %v2343
    %v2376 = vadd.f32 %v2115, %v2344
    %v2377 = vadd.f32 %v2116, %v2345
    %v2378 = vadd.f32 %v2117, %v2346
    %v2379 = vadd.f32 %v2118, %v2347
    %v2380 = vadd.f32 %v2119, %v2348
    %v2381 = vadd.f32 %v2120, %v2349
    %v2382 = vadd.f32 %v2121, %v2350
    %v2383 = vadd.f32 %v2122, %v2351
    %v2384 = vadd.f32 %v2123, %v2352
    %v2385 = vadd.f32 %v2124, %v2353
    %v2386 = vadd.f32 %v2125, %v2354
    %v2387 = vadd.f32 %v2126, %v2355
    %v2388 = vadd.f32 %v2127, %v2356
    %v2389 = vadd.f32 %v2128, %v2357
    %v2390 = vadd.f32 %v2129, %v2358
    %v2391 = vadd.f32 %v2130, %v2359
    %v2393 = vperm.slane %v36, 0
    %v2395 = vadd.f32 %v2360, %v2393
    %v2396 = vadd.f32 %v2361, %v2393
    %v2397 = vadd.f32 %v2362, %v2393
    %v2398 = vadd.f32 %v2363, %v2393
    %v2399 = vadd.f32 %v2364, %v2393
    %v2400 = vadd.f32 %v2365, %v2393
    %v2401 = vadd.f32 %v2366, %v2393
    %v2402 = vadd.f32 %v2367, %v2393
    %v2403 = vadd.f32 %v2368, %v2393
    %v2404 = vadd.f32 %v2369, %v2393
    %v2405 = vadd.f32 %v2370, %v2393
    %v2406 = vadd.f32 %v2371, %v2393
    %v2407 = vadd.f32 %v2372, %v2393
    %v2408 = vadd.f32 %v2373, %v2393
    %v2409 = vadd.f32 %v2374, %v2393
    %v2410 = vadd.f32 %v2375, %v2393
    %v2411 = vadd.f32 %v2376, %v2393
    %v2412 = vadd.f32 %v2377, %v2393
    %v2413 = vadd.f32 %v2378, %v2393
    %v2414 = vadd.f32 %v2379, %v2393
    %v2415 = vadd.f32 %v2380, %v2393
    %v2416 = vadd.f32 %v2381, %v2393
    %v2417 = vadd.f32 %v2382, %v2393
    %v2418 = vadd.f32 %v2383, %v2393
    %v2419 = vadd.f32 %v2384, %v2393
    %v2420 = vadd.f32 %v2385, %v2393
    %v2421 = vadd.f32 %v2386, %v2393
    %v2422 = vadd.f32 %v2387, %v2393
    %v2423 = vadd.f32 %v2388, %v2393
    %v2424 = vadd.f32 %v2389, %v2393
    %v2425 = vadd.f32 %v2390, %v2393
    %v2426 = vadd.f32 %v2391, %v2393
    %v2427 = vmax.f32 %v2395, 0.0
    %v2428 = vmax.f32 %v2396, 0.0
    %v2429 = vmax.f32 %v2397, 0.0
    %v2430 = vmax.f32 %v2398, 0.0
    %v2431 = vmax.f32 %v2399, 0.0
    %v2432 = vmax.f32 %v2400, 0.0
    %v2433 = vmax.f32 %v2401, 0.0
    %v2434 = vmax.f32 %v2402, 0.0
    %v2435 = vmax.f32 %v2403, 0.0
    %v2436 = vmax.f32 %v2404, 0.0
    %v2437 = vmax.f32 %v2405, 0.0
    %v2438 = vmax.f32 %v2406, 0.0
    %v2439 = vmax.f32 %v2407, 0.0
    %v2440 = vmax.f32 %v2408, 0.0
    %v2441 = vmax.f32 %v2409, 0.0
    %v2442 = vmax.f32 %v2410, 0.0
    %v2443 = vmax.f32 %v2411, 0.0
    %v2444 = vmax.f32 %v2412, 0.0
    %v2445 = vmax.f32 %v2413, 0.0
    %v2446 = vmax.f32 %v2414, 0.0
    %v2447 = vmax.f32 %v2415, 0.0
    %v2448 = vmax.f32 %v2416, 0.0
    %v2449 = vmax.f32 %v2417, 0.0
    %v2450 = vmax.f32 %v2418, 0.0
    %v2451 = vmax.f32 %v2419, 0.0
    %v2452 = vmax.f32 %v2420, 0.0
    %v2453 = vmax.f32 %v2421, 0.0
    %v2454 = vmax.f32 %v2422, 0.0
    %v2455 = vmax.f32 %v2423, 0.0
    %v2456 = vmax.f32 %v2424, 0.0
    %v2457 = vmax.f32 %v2425, 0.0
    %v2458 = vmax.f32 %v2426, 0.0
    %s2459 = scalar_lea.vmem [#allocation2], %s43
    %vm2460 = vcmask 64512
    %2461 = vst.msk [vmem:[%s2459] sm:$0xff] %vm2460, %v2427
    %2462 = vst.msk [vmem:[%s2459 + $0x8] sm:$0xff] %vm2460, %v2428
    %2463 = vst.msk [vmem:[%s2459 + $0x10] sm:$0xff] %vm2460, %v2429
    %2464 = vst.msk [vmem:[%s2459 + $0x18] sm:$0xff] %vm2460, %v2430
    %2465 = vst.msk [vmem:[%s2459 + $0x20] sm:$0xff] %vm2460, %v2431
    %2466 = vst.msk [vmem:[%s2459 + $0x28] sm:$0xff] %vm2460, %v2432
    %2467 = vst.msk [vmem:[%s2459 + $0x30] sm:$0xff] %vm2460, %v2433
    %2468 = vst.msk [vmem:[%s2459 + $0x38] sm:$0xff] %vm2460, %v2434
    %2469 = vst.msk [vmem:[%s2459 + $0x40] sm:$0xff] %vm2460, %v2435
    %2470 = vst.msk [vmem:[%s2459 + $0x48] sm:$0xff] %vm2460, %v2436
    %2471 = vst.msk [vmem:[%s2459 + $0x50] sm:$0xff] %vm2460, %v2437
    %2472 = vst.msk [vmem:[%s2459 + $0x58] sm:$0xff] %vm2460, %v2438
    %2473 = vst.msk [vmem:[%s2459 + $0x60] sm:$0xff] %vm2460, %v2439
    %2474 = vst.msk [vmem:[%s2459 + $0x68] sm:$0xff] %vm2460, %v2440
    %2475 = vst.msk [vmem:[%s2459 + $0x70] sm:$0xff] %vm2460, %v2441
    %2476 = vst.msk [vmem:[%s2459 + $0x78] sm:$0xff] %vm2460, %v2442
    %2477 = vst.msk [vmem:[%s2459 + $0x80] sm:$0xff] %vm2460, %v2443
    %2478 = vst.msk [vmem:[%s2459 + $0x88] sm:$0xff] %vm2460, %v2444
    %2479 = vst.msk [vmem:[%s2459 + $0x90] sm:$0xff] %vm2460, %v2445
    %2480 = vst.msk [vmem:[%s2459 + $0x98] sm:$0xff] %vm2460, %v2446
    %2481 = vst.msk [vmem:[%s2459 + $0xa0] sm:$0xff] %vm2460, %v2447
    %2482 = vst.msk [vmem:[%s2459 + $0xa8] sm:$0xff] %vm2460, %v2448
    %2483 = vst.msk [vmem:[%s2459 + $0xb0] sm:$0xff] %vm2460, %v2449
    %2484 = vst.msk [vmem:[%s2459 + $0xb8] sm:$0xff] %vm2460, %v2450
    %2485 = vst.msk [vmem:[%s2459 + $0xc0] sm:$0xff] %vm2460, %v2451
    %2486 = vst.msk [vmem:[%s2459 + $0xc8] sm:$0xff] %vm2460, %v2452
    %2487 = vst.msk [vmem:[%s2459 + $0xd0] sm:$0xff] %vm2460, %v2453
    %2488 = vst.msk [vmem:[%s2459 + $0xd8] sm:$0xff] %vm2460, %v2454
    %2489 = vst.msk [vmem:[%s2459 + $0xe0] sm:$0xff] %vm2460, %v2455
    %2490 = vst.msk [vmem:[%s2459 + $0xe8] sm:$0xff] %vm2460, %v2456
    %2491 = vst.msk [vmem:[%s2459 + $0xf0] sm:$0xff] %vm2460, %v2457
    %2492 = vst.msk [vmem:[%s2459 + $0xf8] sm:$0xff] %vm2460, %v2458
  $region34: #{forward.2} parent=0 // loop_footer
    %s42 = sadd.s32 1, %s38
  $region35: #{forward.2} parent=0 // loop_footer_branch
    %37 = sbr.rel target = $region31
  $region36: #{forward.2} parent=0 // loop_exit
    _
  %v2493 = vld [vmem:[%s3] sm:$0xff]
  %v2494 = vld [vmem:[%s3 + $0x8] sm:$0xff]
  %v2495 = vld [vmem:[%s3 + $0x10] sm:$0xff]
  %v2496 = vld [vmem:[%s3 + $0x18] sm:$0xff]
  %v2497 = vld [vmem:[%s3 + $0x20] sm:$0xff]
  %v2498 = vld [vmem:[%s3 + $0x28] sm:$0xff]
  %v2499 = vld [vmem:[%s3 + $0x30] sm:$0xff]
  %v2500 = vld [vmem:[%s3 + $0x38] sm:$0xff]
  %v2501 = vld [vmem:[%s3 + $0x40] sm:$0xff]
  %v2502 = vld [vmem:[%s4] sm:$0x1]
  loop: start=0, step=1, limit=35
  $region37: #{forward.2} parent=0 // loop_pre_header
    _
  $region38: #{forward.2} parent=0 // loop_header
    %s2504 = sphi 0, %s2508
    %p2505 = scmp.ge.s32.totalorder %s2504, 35
  $region39: #{forward.2} parent=0 // loop_header_branch
    %2507 = sbr.rel (%p2505) target = $region43
  $region40: #{forward.2} parent=0 // loop_body
    %s2509 = smul.u32 %s2504, 256
    %s2510 = scalar_lea.vmem [#allocation2], %s2509
    %v2511 = vld [vmem:[%s2510] sm:$0xff]
    %v2512 = vld [vmem:[%s2510 + $0x8] sm:$0xff]
    %v2513 = vld [vmem:[%s2510 + $0x10] sm:$0xff]
    %v2514 = vld [vmem:[%s2510 + $0x18] sm:$0xff]
    %v2515 = vld [vmem:[%s2510 + $0x20] sm:$0xff]
    %v2516 = vld [vmem:[%s2510 + $0x28] sm:$0xff]
    %v2517 = vld [vmem:[%s2510 + $0x30] sm:$0xff]
    %v2518 = vld [vmem:[%s2510 + $0x38] sm:$0xff]
    %v2519 = vld [vmem:[%s2510 + $0x40] sm:$0xff]
    %v2520 = vld [vmem:[%s2510 + $0x48] sm:$0xff]
    %v2521 = vld [vmem:[%s2510 + $0x50] sm:$0xff]
    %v2522 = vld [vmem:[%s2510 + $0x58] sm:$0xff]
    %v2523 = vld [vmem:[%s2510 + $0x60] sm:$0xff]
    %v2524 = vld [vmem:[%s2510 + $0x68] sm:$0xff]
    %v2525 = vld [vmem:[%s2510 + $0x70] sm:$0xff]
    %v2526 = vld [vmem:[%s2510 + $0x78] sm:$0xff]
    %v2527 = vld [vmem:[%s2510 + $0x80] sm:$0xff]
    %v2528 = vld [vmem:[%s2510 + $0x88] sm:$0xff]
    %v2529 = vld [vmem:[%s2510 + $0x90] sm:$0xff]
    %v2530 = vld [vmem:[%s2510 + $0x98] sm:$0xff]
    %v2531 = vld [vmem:[%s2510 + $0xa0] sm:$0xff]
    %v2532 = vld [vmem:[%s2510 + $0xa8] sm:$0xff]
    %v2533 = vld [vmem:[%s2510 + $0xb0] sm:$0xff]
    %v2534 = vld [vmem:[%s2510 + $0xb8] sm:$0xff]
    %v2535 = vld [vmem:[%s2510 + $0xc0] sm:$0xff]
    %v2536 = vld [vmem:[%s2510 + $0xc8] sm:$0xff]
    %v2537 = vld [vmem:[%s2510 + $0xd0] sm:$0xff]
    %v2538 = vld [vmem:[%s2510 + $0xd8] sm:$0xff]
    %v2539 = vld [vmem:[%s2510 + $0xe0] sm:$0xff]
    %v2540 = vld [vmem:[%s2510 + $0xe8] sm:$0xff]
    %v2541 = vld [vmem:[%s2510 + $0xf0] sm:$0xff]
    %v2542 = vld [vmem:[%s2510 + $0xf8] sm:$0xff]
    %v2543 = vpack.c.bf16 %v2512, %v2511
    %v2544 = vpack.c.bf16 %v2514, %v2513
    %v2545 = vpack.c.bf16 %v2516, %v2515
    %v2546 = vpack.c.bf16 %v2518, %v2517
    %v2547 = vpack.c.bf16 %v2520, %v2519
    %v2548 = vpack.c.bf16 %v2522, %v2521
    %v2549 = vpack.c.bf16 %v2524, %v2523
    %v2550 = vpack.c.bf16 %v2526, %v2525
    %v2551 = vpack.c.bf16 %v2528, %v2527
    %v2552 = vpack.c.bf16 %v2530, %v2529
    %v2553 = vpack.c.bf16 %v2532, %v2531
    %v2554 = vpack.c.bf16 %v2534, %v2533
    %v2555 = vpack.c.bf16 %v2536, %v2535
    %v2556 = vpack.c.bf16 %v2538, %v2537
    %v2557 = vpack.c.bf16 %v2540, %v2539
    %v2558 = vpack.c.bf16 %v2542, %v2541
    %v2559 = vpack.c.bf16 %v2493, %v2493
    %s2560 = sadd.s32 %s2509, 2
    %s2561 = scalar_lea.vmem [#allocation2], %s2560
    %v2562 = vld [vmem:[%s2561] sm:$0xff]
    %v2563 = vld [vmem:[%s2561 + $0x8] sm:$0xff]
    %v2564 = vld [vmem:[%s2561 + $0x10] sm:$0xff]
    %v2565 = vld [vmem:[%s2561 + $0x18] sm:$0xff]
    %v2566 = vld [vmem:[%s2561 + $0x20] sm:$0xff]
    %v2567 = vld [vmem:[%s2561 + $0x28] sm:$0xff]
    %v2568 = vld [vmem:[%s2561 + $0x30] sm:$0xff]
    %v2569 = vld [vmem:[%s2561 + $0x38] sm:$0xff]
    %v2570 = vld [vmem:[%s2561 + $0x40] sm:$0xff]
    %v2571 = vld [vmem:[%s2561 + $0x48] sm:$0xff]
    %v2572 = vld [vmem:[%s2561 + $0x50] sm:$0xff]
    %v2573 = vld [vmem:[%s2561 + $0x58] sm:$0xff]
    %v2574 = vld [vmem:[%s2561 + $0x60] sm:$0xff]
    %v2575 = vld [vmem:[%s2561 + $0x68] sm:$0xff]
    %v2576 = vld [vmem:[%s2561 + $0x70] sm:$0xff]
    %v2577 = vld [vmem:[%s2561 + $0x78] sm:$0xff]
    %v2578 = vld [vmem:[%s2561 + $0x80] sm:$0xff]
    %v2579 = vld [vmem:[%s2561 + $0x88] sm:$0xff]
    %v2580 = vld [vmem:[%s2561 + $0x90] sm:$0xff]
    %v2581 = vld [vmem:[%s2561 + $0x98] sm:$0xff]
    %v2582 = vld [vmem:[%s2561 + $0xa0] sm:$0xff]
    %v2583 = vld [vmem:[%s2561 + $0xa8] sm:$0xff]
    %v2584 = vld [vmem:[%s2561 + $0xb0] sm:$0xff]
    %v2585 = vld [vmem:[%s2561 + $0xb8] sm:$0xff]
    %v2586 = vld [vmem:[%s2561 + $0xc0] sm:$0xff]
    %v2587 = vld [vmem:[%s2561 + $0xc8] sm:$0xff]
    %v2588 = vld [vmem:[%s2561 + $0xd0] sm:$0xff]
    %v2589 = vld [vmem:[%s2561 + $0xd8] sm:$0xff]
    %v2590 = vld [vmem:[%s2561 + $0xe0] sm:$0xff]
    %v2591 = vld [vmem:[%s2561 + $0xe8] sm:$0xff]
    %v2592 = vld [vmem:[%s2561 + $0xf0] sm:$0xff]
    %v2593 = vld [vmem:[%s2561 + $0xf8] sm:$0xff]
    %v2594 = vpack.c.bf16 %v2563, %v2562
    %v2595 = vpack.c.bf16 %v2565, %v2564
    %v2596 = vpack.c.bf16 %v2567, %v2566
    %v2597 = vpack.c.bf16 %v2569, %v2568
    %v2598 = vpack.c.bf16 %v2571, %v2570
    %v2599 = vpack.c.bf16 %v2573, %v2572
    %v2600 = vpack.c.bf16 %v2575, %v2574
    %v2601 = vpack.c.bf16 %v2577, %v2576
    %v2602 = vpack.c.bf16 %v2579, %v2578
    %v2603 = vpack.c.bf16 %v2581, %v2580
    %v2604 = vpack.c.bf16 %v2583, %v2582
    %v2605 = vpack.c.bf16 %v2585, %v2584
    %v2606 = vpack.c.bf16 %v2587, %v2586
    %v2607 = vpack.c.bf16 %v2589, %v2588
    %v2608 = vpack.c.bf16 %v2591, %v2590
    %v2609 = vpack.c.bf16 %v2593, %v2592
    %v2610 = vpack.c.bf16 %v2494, %v2494
    %vm2611 = vcmask 64512
    %v2613 = vsel %vm2611, %v2594, 0
    %v2616 = vsel %vm2611, %v2595, 0
    %v2619 = vsel %vm2611, %v2596, 0
    %v2622 = vsel %vm2611, %v2597, 0
    %v2625 = vsel %vm2611, %v2598, 0
    %v2628 = vsel %vm2611, %v2599, 0
    %v2631 = vsel %vm2611, %v2600, 0
    %v2634 = vsel %vm2611, %v2601, 0
    %v2637 = vsel %vm2611, %v2602, 0
    %v2640 = vsel %vm2611, %v2603, 0
    %v2643 = vsel %vm2611, %v2604, 0
    %v2646 = vsel %vm2611, %v2605, 0
    %v2649 = vsel %vm2611, %v2606, 0
    %v2652 = vsel %vm2611, %v2607, 0
    %v2655 = vsel %vm2611, %v2608, 0
    %v2658 = vsel %vm2611, %v2609, 0
    %vm2660 = vcmask 1043456
    %v2662 = vsel %vm2660, %v2610, 0
    %2664 = vmatpush.bf16.msra.mxu0 0
    %2665 = vmatpush.bf16.msra.mxu0 0
    %2666 = vmatpush.bf16.msra.mxu0 0
    %2667 = vmatpush.bf16.msra.mxu0 0
    %2668 = vmatpush.bf16.msra.mxu0 0
    %2669 = vmatpush.bf16.msra.mxu0 0
    %2670 = vmatpush.bf16.msra.mxu0 0
    %2671 = vmatpush.bf16.msra.mxu0 %v2662
    %2672 = vmatmul.bf16.gmra.mxu0 %v2613
    %v2673 = vpop.f32.mrf.mxu0
    %v2674 = vadd.f32 0.0, %v2673
    %v2675 = vpop.f32.mrf.mxu0
    %v2676 = vadd.f32 0.0, %v2675
    %2677 = vmatmul.bf16.gmra.mxu0 %v2616
    %v2678 = vpop.f32.mrf.mxu0
    %v2679 = vadd.f32 0.0, %v2678
    %v2680 = vpop.f32.mrf.mxu0
    %v2681 = vadd.f32 0.0, %v2680
    %2682 = vmatmul.bf16.gmra.mxu0 %v2619
    %v2683 = vpop.f32.mrf.mxu0
    %v2684 = vadd.f32 0.0, %v2683
    %v2685 = vpop.f32.mrf.mxu0
    %v2686 = vadd.f32 0.0, %v2685
    %2687 = vmatmul.bf16.gmra.mxu0 %v2622
    %v2688 = vpop.f32.mrf.mxu0
    %v2689 = vadd.f32 0.0, %v2688
    %v2690 = vpop.f32.mrf.mxu0
    %v2691 = vadd.f32 0.0, %v2690
    %2692 = vmatmul.bf16.gmra.mxu0 %v2625
    %v2693 = vpop.f32.mrf.mxu0
    %v2694 = vadd.f32 0.0, %v2693
    %v2695 = vpop.f32.mrf.mxu0
    %v2696 = vadd.f32 0.0, %v2695
    %2697 = vmatmul.bf16.gmra.mxu0 %v2628
    %v2698 = vpop.f32.mrf.mxu0
    %v2699 = vadd.f32 0.0, %v2698
    %v2700 = vpop.f32.mrf.mxu0
    %v2701 = vadd.f32 0.0, %v2700
    %2702 = vmatmul.bf16.gmra.mxu0 %v2631
    %v2703 = vpop.f32.mrf.mxu0
    %v2704 = vadd.f32 0.0, %v2703
    %v2705 = vpop.f32.mrf.mxu0
    %v2706 = vadd.f32 0.0, %v2705
    %2707 = vmatmul.bf16.gmra.mxu0 %v2634
    %v2708 = vpop.f32.mrf.mxu0
    %v2709 = vadd.f32 0.0, %v2708
    %v2710 = vpop.f32.mrf.mxu0
    %v2711 = vadd.f32 0.0, %v2710
    %2712 = vmatmul.bf16.gmra.mxu0 %v2637
    %v2713 = vpop.f32.mrf.mxu0
    %v2714 = vadd.f32 0.0, %v2713
    %v2715 = vpop.f32.mrf.mxu0
    %v2716 = vadd.f32 0.0, %v2715
    %2717 = vmatmul.bf16.gmra.mxu0 %v2640
    %v2718 = vpop.f32.mrf.mxu0
    %v2719 = vadd.f32 0.0, %v2718
    %v2720 = vpop.f32.mrf.mxu0
    %v2721 = vadd.f32 0.0, %v2720
    %2722 = vmatmul.bf16.gmra.mxu0 %v2643
    %v2723 = vpop.f32.mrf.mxu0
    %v2724 = vadd.f32 0.0, %v2723
    %v2725 = vpop.f32.mrf.mxu0
    %v2726 = vadd.f32 0.0, %v2725
    %2727 = vmatmul.bf16.gmra.mxu0 %v2646
    %v2728 = vpop.f32.mrf.mxu0
    %v2729 = vadd.f32 0.0, %v2728
    %v2730 = vpop.f32.mrf.mxu0
    %v2731 = vadd.f32 0.0, %v2730
    %2732 = vmatmul.bf16.gmra.mxu0 %v2649
    %v2733 = vpop.f32.mrf.mxu0
    %v2734 = vadd.f32 0.0, %v2733
    %v2735 = vpop.f32.mrf.mxu0
    %v2736 = vadd.f32 0.0, %v2735
    %2737 = vmatmul.bf16.gmra.mxu0 %v2652
    %v2738 = vpop.f32.mrf.mxu0
    %v2739 = vadd.f32 0.0, %v2738
    %v2740 = vpop.f32.mrf.mxu0
    %v2741 = vadd.f32 0.0, %v2740
    %2742 = vmatmul.bf16.gmra.mxu0 %v2655
    %v2743 = vpop.f32.mrf.mxu0
    %v2744 = vadd.f32 0.0, %v2743
    %v2745 = vpop.f32.mrf.mxu0
    %v2746 = vadd.f32 0.0, %v2745
    %2747 = vmatmul.bf16.gmra.mxu0 %v2658
    %v2748 = vpop.f32.mrf.mxu0
    %v2749 = vadd.f32 0.0, %v2748
    %v2750 = vpop.f32.mrf.mxu0
    %v2751 = vadd.f32 0.0, %v2750
    %2752 = vdwg.mxu0
    %v2754 = vsel %vm2611, %v2543, 0
    %v2757 = vsel %vm2611, %v2544, 0
    %v2760 = vsel %vm2611, %v2545, 0
    %v2763 = vsel %vm2611, %v2546, 0
    %v2766 = vsel %vm2611, %v2547, 0
    %v2769 = vsel %vm2611, %v2548, 0
    %v2772 = vsel %vm2611, %v2549, 0
    %v2775 = vsel %vm2611, %v2550, 0
    %v2778 = vsel %vm2611, %v2551, 0
    %v2781 = vsel %vm2611, %v2552, 0
    %v2784 = vsel %vm2611, %v2553, 0
    %v2787 = vsel %vm2611, %v2554, 0
    %v2790 = vsel %vm2611, %v2555, 0
    %v2793 = vsel %vm2611, %v2556, 0
    %v2796 = vsel %vm2611, %v2557, 0
    %v2799 = vsel %vm2611, %v2558, 0
    %v2802 = vsel %vm2660, %v2559, 0
    %2804 = vmatpush.bf16.msra.mxu0 0
    %2805 = vmatpush.bf16.msra.mxu0 0
    %2806 = vmatpush.bf16.msra.mxu0 0
    %2807 = vmatpush.bf16.msra.mxu0 0
    %2808 = vmatpush.bf16.msra.mxu0 0
    %2809 = vmatpush.bf16.msra.mxu0 0
    %2810 = vmatpush.bf16.msra.mxu0 0
    %2811 = vmatpush.bf16.msra.mxu0 %v2802
    %2812 = vmatmul.bf16.gmra.mxu0 %v2754
    %v2813 = vpop.f32.mrf.mxu0
    %v2814 = vadd.f32 %v2674, %v2813
    %v2815 = vpop.f32.mrf.mxu0
    %v2816 = vadd.f32 %v2676, %v2815
    %2817 = vmatmul.bf16.gmra.mxu0 %v2757
    %v2818 = vpop.f32.mrf.mxu0
    %v2819 = vadd.f32 %v2679, %v2818
    %v2820 = vpop.f32.mrf.mxu0
    %v2821 = vadd.f32 %v2681, %v2820
    %2822 = vmatmul.bf16.gmra.mxu0 %v2760
    %v2823 = vpop.f32.mrf.mxu0
    %v2824 = vadd.f32 %v2684, %v2823
    %v2825 = vpop.f32.mrf.mxu0
    %v2826 = vadd.f32 %v2686, %v2825
    %2827 = vmatmul.bf16.gmra.mxu0 %v2763
    %v2828 = vpop.f32.mrf.mxu0
    %v2829 = vadd.f32 %v2689, %v2828
    %v2830 = vpop.f32.mrf.mxu0
    %v2831 = vadd.f32 %v2691, %v2830
    %2832 = vmatmul.bf16.gmra.mxu0 %v2766
    %v2833 = vpop.f32.mrf.mxu0
    %v2834 = vadd.f32 %v2694, %v2833
    %v2835 = vpop.f32.mrf.mxu0
    %v2836 = vadd.f32 %v2696, %v2835
    %2837 = vmatmul.bf16.gmra.mxu0 %v2769
    %v2838 = vpop.f32.mrf.mxu0
    %v2839 = vadd.f32 %v2699, %v2838
    %v2840 = vpop.f32.mrf.mxu0
    %v2841 = vadd.f32 %v2701, %v2840
    %2842 = vmatmul.bf16.gmra.mxu0 %v2772
    %v2843 = vpop.f32.mrf.mxu0
    %v2844 = vadd.f32 %v2704, %v2843
    %v2845 = vpop.f32.mrf.mxu0
    %v2846 = vadd.f32 %v2706, %v2845
    %2847 = vmatmul.bf16.gmra.mxu0 %v2775
    %v2848 = vpop.f32.mrf.mxu0
    %v2849 = vadd.f32 %v2709, %v2848
    %v2850 = vpop.f32.mrf.mxu0
    %v2851 = vadd.f32 %v2711, %v2850
    %2852 = vmatmul.bf16.gmra.mxu0 %v2778
    %v2853 = vpop.f32.mrf.mxu0
    %v2854 = vadd.f32 %v2714, %v2853
    %v2855 = vpop.f32.mrf.mxu0
    %v2856 = vadd.f32 %v2716, %v2855
    %2857 = vmatmul.bf16.gmra.mxu0 %v2781
    %v2858 = vpop.f32.mrf.mxu0
    %v2859 = vadd.f32 %v2719, %v2858
    %v2860 = vpop.f32.mrf.mxu0
    %v2861 = vadd.f32 %v2721, %v2860
    %2862 = vmatmul.bf16.gmra.mxu0 %v2784
    %v2863 = vpop.f32.mrf.mxu0
    %v2864 = vadd.f32 %v2724, %v2863
    %v2865 = vpop.f32.mrf.mxu0
    %v2866 = vadd.f32 %v2726, %v2865
    %2867 = vmatmul.bf16.gmra.mxu0 %v2787
    %v2868 = vpop.f32.mrf.mxu0
    %v2869 = vadd.f32 %v2729, %v2868
    %v2870 = vpop.f32.mrf.mxu0
    %v2871 = vadd.f32 %v2731, %v2870
    %2872 = vmatmul.bf16.gmra.mxu0 %v2790
    %v2873 = vpop.f32.mrf.mxu0
    %v2874 = vadd.f32 %v2734, %v2873
    %v2875 = vpop.f32.mrf.mxu0
    %v2876 = vadd.f32 %v2736, %v2875
    %2877 = vmatmul.bf16.gmra.mxu0 %v2793
    %v2878 = vpop.f32.mrf.mxu0
    %v2879 = vadd.f32 %v2739, %v2878
    %v2880 = vpop.f32.mrf.mxu0
    %v2881 = vadd.f32 %v2741, %v2880
    %2882 = vmatmul.bf16.gmra.mxu0 %v2796
    %v2883 = vpop.f32.mrf.mxu0
    %v2884 = vadd.f32 %v2744, %v2883
    %v2885 = vpop.f32.mrf.mxu0
    %v2886 = vadd.f32 %v2746, %v2885
    %2887 = vmatmul.bf16.gmra.mxu0 %v2799
    %v2888 = vpop.f32.mrf.mxu0
    %v2889 = vadd.f32 %v2749, %v2888
    %v2890 = vpop.f32.mrf.mxu0
    %v2891 = vadd.f32 %v2751, %v2890
    %2892 = vdwg.mxu0
    %s2893 = sadd.s32 %s2509, 4
    %s2894 = scalar_lea.vmem [#allocation2], %s2893
    %v2895 = vld [vmem:[%s2894] sm:$0xff]
    %v2896 = vld [vmem:[%s2894 + $0x8] sm:$0xff]
    %v2897 = vld [vmem:[%s2894 + $0x10] sm:$0xff]
    %v2898 = vld [vmem:[%s2894 + $0x18] sm:$0xff]
    %v2899 = vld [vmem:[%s2894 + $0x20] sm:$0xff]
    %v2900 = vld [vmem:[%s2894 + $0x28] sm:$0xff]
    %v2901 = vld [vmem:[%s2894 + $0x30] sm:$0xff]
    %v2902 = vld [vmem:[%s2894 + $0x38] sm:$0xff]
    %v2903 = vld [vmem:[%s2894 + $0x40] sm:$0xff]
    %v2904 = vld [vmem:[%s2894 + $0x48] sm:$0xff]
    %v2905 = vld [vmem:[%s2894 + $0x50] sm:$0xff]
    %v2906 = vld [vmem:[%s2894 + $0x58] sm:$0xff]
    %v2907 = vld [vmem:[%s2894 + $0x60] sm:$0xff]
    %v2908 = vld [vmem:[%s2894 + $0x68] sm:$0xff]
    %v2909 = vld [vmem:[%s2894 + $0x70] sm:$0xff]
    %v2910 = vld [vmem:[%s2894 + $0x78] sm:$0xff]
    %v2911 = vld [vmem:[%s2894 + $0x80] sm:$0xff]
    %v2912 = vld [vmem:[%s2894 + $0x88] sm:$0xff]
    %v2913 = vld [vmem:[%s2894 + $0x90] sm:$0xff]
    %v2914 = vld [vmem:[%s2894 + $0x98] sm:$0xff]
    %v2915 = vld [vmem:[%s2894 + $0xa0] sm:$0xff]
    %v2916 = vld [vmem:[%s2894 + $0xa8] sm:$0xff]
    %v2917 = vld [vmem:[%s2894 + $0xb0] sm:$0xff]
    %v2918 = vld [vmem:[%s2894 + $0xb8] sm:$0xff]
    %v2919 = vld [vmem:[%s2894 + $0xc0] sm:$0xff]
    %v2920 = vld [vmem:[%s2894 + $0xc8] sm:$0xff]
    %v2921 = vld [vmem:[%s2894 + $0xd0] sm:$0xff]
    %v2922 = vld [vmem:[%s2894 + $0xd8] sm:$0xff]
    %v2923 = vld [vmem:[%s2894 + $0xe0] sm:$0xff]
    %v2924 = vld [vmem:[%s2894 + $0xe8] sm:$0xff]
    %v2925 = vld [vmem:[%s2894 + $0xf0] sm:$0xff]
    %v2926 = vld [vmem:[%s2894 + $0xf8] sm:$0xff]
    %v2927 = vpack.c.bf16 %v2896, %v2895
    %v2928 = vpack.c.bf16 %v2898, %v2897
    %v2929 = vpack.c.bf16 %v2900, %v2899
    %v2930 = vpack.c.bf16 %v2902, %v2901
    %v2931 = vpack.c.bf16 %v2904, %v2903
    %v2932 = vpack.c.bf16 %v2906, %v2905
    %v2933 = vpack.c.bf16 %v2908, %v2907
    %v2934 = vpack.c.bf16 %v2910, %v2909
    %v2935 = vpack.c.bf16 %v2912, %v2911
    %v2936 = vpack.c.bf16 %v2914, %v2913
    %v2937 = vpack.c.bf16 %v2916, %v2915
    %v2938 = vpack.c.bf16 %v2918, %v2917
    %v2939 = vpack.c.bf16 %v2920, %v2919
    %v2940 = vpack.c.bf16 %v2922, %v2921
    %v2941 = vpack.c.bf16 %v2924, %v2923
    %v2942 = vpack.c.bf16 %v2926, %v2925
    %v2943 = vpack.c.bf16 %v2495, %v2495
    %v2945 = vsel %vm2611, %v2927, 0
    %v2948 = vsel %vm2611, %v2928, 0
    %v2951 = vsel %vm2611, %v2929, 0
    %v2954 = vsel %vm2611, %v2930, 0
    %v2957 = vsel %vm2611, %v2931, 0
    %v2960 = vsel %vm2611, %v2932, 0
    %v2963 = vsel %vm2611, %v2933, 0
    %v2966 = vsel %vm2611, %v2934, 0
    %v2969 = vsel %vm2611, %v2935, 0
    %v2972 = vsel %vm2611, %v2936, 0
    %v2975 = vsel %vm2611, %v2937, 0
    %v2978 = vsel %vm2611, %v2938, 0
    %v2981 = vsel %vm2611, %v2939, 0
    %v2984 = vsel %vm2611, %v2940, 0
    %v2987 = vsel %vm2611, %v2941, 0
    %v2990 = vsel %vm2611, %v2942, 0
    %v2993 = vsel %vm2660, %v2943, 0
    %2995 = vmatpush.bf16.msra.mxu0 0
    %2996 = vmatpush.bf16.msra.mxu0 0
    %2997 = vmatpush.bf16.msra.mxu0 0
    %2998 = vmatpush.bf16.msra.mxu0 0
    %2999 = vmatpush.bf16.msra.mxu0 0
    %3000 = vmatpush.bf16.msra.mxu0 0
    %3001 = vmatpush.bf16.msra.mxu0 0
    %3002 = vmatpush.bf16.msra.mxu0 %v2993
    %3003 = vmatmul.bf16.gmra.mxu0 %v2945
    %v3004 = vpop.f32.mrf.mxu0
    %v3005 = vadd.f32 0.0, %v3004
    %v3006 = vpop.f32.mrf.mxu0
    %v3007 = vadd.f32 0.0, %v3006
    %3008 = vmatmul.bf16.gmra.mxu0 %v2948
    %v3009 = vpop.f32.mrf.mxu0
    %v3010 = vadd.f32 0.0, %v3009
    %v3011 = vpop.f32.mrf.mxu0
    %v3012 = vadd.f32 0.0, %v3011
    %3013 = vmatmul.bf16.gmra.mxu0 %v2951
    %v3014 = vpop.f32.mrf.mxu0
    %v3015 = vadd.f32 0.0, %v3014
    %v3016 = vpop.f32.mrf.mxu0
    %v3017 = vadd.f32 0.0, %v3016
    %3018 = vmatmul.bf16.gmra.mxu0 %v2954
    %v3019 = vpop.f32.mrf.mxu0
    %v3020 = vadd.f32 0.0, %v3019
    %v3021 = vpop.f32.mrf.mxu0
    %v3022 = vadd.f32 0.0, %v3021
    %3023 = vmatmul.bf16.gmra.mxu0 %v2957
    %v3024 = vpop.f32.mrf.mxu0
    %v3025 = vadd.f32 0.0, %v3024
    %v3026 = vpop.f32.mrf.mxu0
    %v3027 = vadd.f32 0.0, %v3026
    %3028 = vmatmul.bf16.gmra.mxu0 %v2960
    %v3029 = vpop.f32.mrf.mxu0
    %v3030 = vadd.f32 0.0, %v3029
    %v3031 = vpop.f32.mrf.mxu0
    %v3032 = vadd.f32 0.0, %v3031
    %3033 = vmatmul.bf16.gmra.mxu0 %v2963
    %v3034 = vpop.f32.mrf.mxu0
    %v3035 = vadd.f32 0.0, %v3034
    %v3036 = vpop.f32.mrf.mxu0
    %v3037 = vadd.f32 0.0, %v3036
    %3038 = vmatmul.bf16.gmra.mxu0 %v2966
    %v3039 = vpop.f32.mrf.mxu0
    %v3040 = vadd.f32 0.0, %v3039
    %v3041 = vpop.f32.mrf.mxu0
    %v3042 = vadd.f32 0.0, %v3041
    %3043 = vmatmul.bf16.gmra.mxu0 %v2969
    %v3044 = vpop.f32.mrf.mxu0
    %v3045 = vadd.f32 0.0, %v3044
    %v3046 = vpop.f32.mrf.mxu0
    %v3047 = vadd.f32 0.0, %v3046
    %3048 = vmatmul.bf16.gmra.mxu0 %v2972
    %v3049 = vpop.f32.mrf.mxu0
    %v3050 = vadd.f32 0.0, %v3049
    %v3051 = vpop.f32.mrf.mxu0
    %v3052 = vadd.f32 0.0, %v3051
    %3053 = vmatmul.bf16.gmra.mxu0 %v2975
    %v3054 = vpop.f32.mrf.mxu0
    %v3055 = vadd.f32 0.0, %v3054
    %v3056 = vpop.f32.mrf.mxu0
    %v3057 = vadd.f32 0.0, %v3056
    %3058 = vmatmul.bf16.gmra.mxu0 %v2978
    %v3059 = vpop.f32.mrf.mxu0
    %v3060 = vadd.f32 0.0, %v3059
    %v3061 = vpop.f32.mrf.mxu0
    %v3062 = vadd.f32 0.0, %v3061
    %3063 = vmatmul.bf16.gmra.mxu0 %v2981
    %v3064 = vpop.f32.mrf.mxu0
    %v3065 = vadd.f32 0.0, %v3064
    %v3066 = vpop.f32.mrf.mxu0
    %v3067 = vadd.f32 0.0, %v3066
    %3068 = vmatmul.bf16.gmra.mxu0 %v2984
    %v3069 = vpop.f32.mrf.mxu0
    %v3070 = vadd.f32 0.0, %v3069
    %v3071 = vpop.f32.mrf.mxu0
    %v3072 = vadd.f32 0.0, %v3071
    %3073 = vmatmul.bf16.gmra.mxu0 %v2987
    %v3074 = vpop.f32.mrf.mxu0
    %v3075 = vadd.f32 0.0, %v3074
    %v3076 = vpop.f32.mrf.mxu0
    %v3077 = vadd.f32 0.0, %v3076
    %3078 = vmatmul.bf16.gmra.mxu0 %v2990
    %v3079 = vpop.f32.mrf.mxu0
    %v3080 = vadd.f32 0.0, %v3079
    %v3081 = vpop.f32.mrf.mxu0
    %v3082 = vadd.f32 0.0, %v3081
    %3083 = vdwg.mxu0
    %v3084 = vadd.f32 %v2814, %v3005
    %v3085 = vadd.f32 %v2816, %v3007
    %v3086 = vadd.f32 %v2819, %v3010
    %v3087 = vadd.f32 %v2821, %v3012
    %v3088 = vadd.f32 %v2824, %v3015
    %v3089 = vadd.f32 %v2826, %v3017
    %v3090 = vadd.f32 %v2829, %v3020
    %v3091 = vadd.f32 %v2831, %v3022
    %v3092 = vadd.f32 %v2834, %v3025
    %v3093 = vadd.f32 %v2836, %v3027
    %v3094 = vadd.f32 %v2839, %v3030
    %v3095 = vadd.f32 %v2841, %v3032
    %v3096 = vadd.f32 %v2844, %v3035
    %v3097 = vadd.f32 %v2846, %v3037
    %v3098 = vadd.f32 %v2849, %v3040
    %v3099 = vadd.f32 %v2851, %v3042
    %v3100 = vadd.f32 %v2854, %v3045
    %v3101 = vadd.f32 %v2856, %v3047
    %v3102 = vadd.f32 %v2859, %v3050
    %v3103 = vadd.f32 %v2861, %v3052
    %v3104 = vadd.f32 %v2864, %v3055
    %v3105 = vadd.f32 %v2866, %v3057
    %v3106 = vadd.f32 %v2869, %v3060
    %v3107 = vadd.f32 %v2871, %v3062
    %v3108 = vadd.f32 %v2874, %v3065
    %v3109 = vadd.f32 %v2876, %v3067
    %v3110 = vadd.f32 %v2879, %v3070
    %v3111 = vadd.f32 %v2881, %v3072
    %v3112 = vadd.f32 %v2884, %v3075
    %v3113 = vadd.f32 %v2886, %v3077
    %v3114 = vadd.f32 %v2889, %v3080
    %v3115 = vadd.f32 %v2891, %v3082
    %s3116 = sadd.s32 %s2509, 256
    %s3117 = scalar_lea.vmem [#allocation2], %s3116
    %v3118 = vld [vmem:[%s3117] sm:$0xff]
    %v3119 = vld [vmem:[%s3117 + $0x8] sm:$0xff]
    %v3120 = vld [vmem:[%s3117 + $0x10] sm:$0xff]
    %v3121 = vld [vmem:[%s3117 + $0x18] sm:$0xff]
    %v3122 = vld [vmem:[%s3117 + $0x20] sm:$0xff]
    %v3123 = vld [vmem:[%s3117 + $0x28] sm:$0xff]
    %v3124 = vld [vmem:[%s3117 + $0x30] sm:$0xff]
    %v3125 = vld [vmem:[%s3117 + $0x38] sm:$0xff]
    %v3126 = vld [vmem:[%s3117 + $0x40] sm:$0xff]
    %v3127 = vld [vmem:[%s3117 + $0x48] sm:$0xff]
    %v3128 = vld [vmem:[%s3117 + $0x50] sm:$0xff]
    %v3129 = vld [vmem:[%s3117 + $0x58] sm:$0xff]
    %v3130 = vld [vmem:[%s3117 + $0x60] sm:$0xff]
    %v3131 = vld [vmem:[%s3117 + $0x68] sm:$0xff]
    %v3132 = vld [vmem:[%s3117 + $0x70] sm:$0xff]
    %v3133 = vld [vmem:[%s3117 + $0x78] sm:$0xff]
    %v3134 = vld [vmem:[%s3117 + $0x80] sm:$0xff]
    %v3135 = vld [vmem:[%s3117 + $0x88] sm:$0xff]
    %v3136 = vld [vmem:[%s3117 + $0x90] sm:$0xff]
    %v3137 = vld [vmem:[%s3117 + $0x98] sm:$0xff]
    %v3138 = vld [vmem:[%s3117 + $0xa0] sm:$0xff]
    %v3139 = vld [vmem:[%s3117 + $0xa8] sm:$0xff]
    %v3140 = vld [vmem:[%s3117 + $0xb0] sm:$0xff]
    %v3141 = vld [vmem:[%s3117 + $0xb8] sm:$0xff]
    %v3142 = vld [vmem:[%s3117 + $0xc0] sm:$0xff]
    %v3143 = vld [vmem:[%s3117 + $0xc8] sm:$0xff]
    %v3144 = vld [vmem:[%s3117 + $0xd0] sm:$0xff]
    %v3145 = vld [vmem:[%s3117 + $0xd8] sm:$0xff]
    %v3146 = vld [vmem:[%s3117 + $0xe0] sm:$0xff]
    %v3147 = vld [vmem:[%s3117 + $0xe8] sm:$0xff]
    %v3148 = vld [vmem:[%s3117 + $0xf0] sm:$0xff]
    %v3149 = vld [vmem:[%s3117 + $0xf8] sm:$0xff]
    %v3150 = vpack.c.bf16 %v3119, %v3118
    %v3151 = vpack.c.bf16 %v3121, %v3120
    %v3152 = vpack.c.bf16 %v3123, %v3122
    %v3153 = vpack.c.bf16 %v3125, %v3124
    %v3154 = vpack.c.bf16 %v3127, %v3126
    %v3155 = vpack.c.bf16 %v3129, %v3128
    %v3156 = vpack.c.bf16 %v3131, %v3130
    %v3157 = vpack.c.bf16 %v3133, %v3132
    %v3158 = vpack.c.bf16 %v3135, %v3134
    %v3159 = vpack.c.bf16 %v3137, %v3136
    %v3160 = vpack.c.bf16 %v3139, %v3138
    %v3161 = vpack.c.bf16 %v3141, %v3140
    %v3162 = vpack.c.bf16 %v3143, %v3142
    %v3163 = vpack.c.bf16 %v3145, %v3144
    %v3164 = vpack.c.bf16 %v3147, %v3146
    %v3165 = vpack.c.bf16 %v3149, %v3148
    %v3166 = vpack.c.bf16 %v2496, %v2496
    %v3168 = vsel %vm2611, %v3150, 0
    %v3171 = vsel %vm2611, %v3151, 0
    %v3174 = vsel %vm2611, %v3152, 0
    %v3177 = vsel %vm2611, %v3153, 0
    %v3180 = vsel %vm2611, %v3154, 0
    %v3183 = vsel %vm2611, %v3155, 0
    %v3186 = vsel %vm2611, %v3156, 0
    %v3189 = vsel %vm2611, %v3157, 0
    %v3192 = vsel %vm2611, %v3158, 0
    %v3195 = vsel %vm2611, %v3159, 0
    %v3198 = vsel %vm2611, %v3160, 0
    %v3201 = vsel %vm2611, %v3161, 0
    %v3204 = vsel %vm2611, %v3162, 0
    %v3207 = vsel %vm2611, %v3163, 0
    %v3210 = vsel %vm2611, %v3164, 0
    %v3213 = vsel %vm2611, %v3165, 0
    %v3216 = vsel %vm2660, %v3166, 0
    %3218 = vmatpush.bf16.msra.mxu0 0
    %3219 = vmatpush.bf16.msra.mxu0 0
    %3220 = vmatpush.bf16.msra.mxu0 0
    %3221 = vmatpush.bf16.msra.mxu0 0
    %3222 = vmatpush.bf16.msra.mxu0 0
    %3223 = vmatpush.bf16.msra.mxu0 0
    %3224 = vmatpush.bf16.msra.mxu0 0
    %3225 = vmatpush.bf16.msra.mxu0 %v3216
    %3226 = vmatmul.bf16.gmra.mxu0 %v3168
    %v3227 = vpop.f32.mrf.mxu0
    %v3228 = vadd.f32 0.0, %v3227
    %v3229 = vpop.f32.mrf.mxu0
    %v3230 = vadd.f32 0.0, %v3229
    %3231 = vmatmul.bf16.gmra.mxu0 %v3171
    %v3232 = vpop.f32.mrf.mxu0
    %v3233 = vadd.f32 0.0, %v3232
    %v3234 = vpop.f32.mrf.mxu0
    %v3235 = vadd.f32 0.0, %v3234
    %3236 = vmatmul.bf16.gmra.mxu0 %v3174
    %v3237 = vpop.f32.mrf.mxu0
    %v3238 = vadd.f32 0.0, %v3237
    %v3239 = vpop.f32.mrf.mxu0
    %v3240 = vadd.f32 0.0, %v3239
    %3241 = vmatmul.bf16.gmra.mxu0 %v3177
    %v3242 = vpop.f32.mrf.mxu0
    %v3243 = vadd.f32 0.0, %v3242
    %v3244 = vpop.f32.mrf.mxu0
    %v3245 = vadd.f32 0.0, %v3244
    %3246 = vmatmul.bf16.gmra.mxu0 %v3180
    %v3247 = vpop.f32.mrf.mxu0
    %v3248 = vadd.f32 0.0, %v3247
    %v3249 = vpop.f32.mrf.mxu0
    %v3250 = vadd.f32 0.0, %v3249
    %3251 = vmatmul.bf16.gmra.mxu0 %v3183
    %v3252 = vpop.f32.mrf.mxu0
    %v3253 = vadd.f32 0.0, %v3252
    %v3254 = vpop.f32.mrf.mxu0
    %v3255 = vadd.f32 0.0, %v3254
    %3256 = vmatmul.bf16.gmra.mxu0 %v3186
    %v3257 = vpop.f32.mrf.mxu0
    %v3258 = vadd.f32 0.0, %v3257
    %v3259 = vpop.f32.mrf.mxu0
    %v3260 = vadd.f32 0.0, %v3259
    %3261 = vmatmul.bf16.gmra.mxu0 %v3189
    %v3262 = vpop.f32.mrf.mxu0
    %v3263 = vadd.f32 0.0, %v3262
    %v3264 = vpop.f32.mrf.mxu0
    %v3265 = vadd.f32 0.0, %v3264
    %3266 = vmatmul.bf16.gmra.mxu0 %v3192
    %v3267 = vpop.f32.mrf.mxu0
    %v3268 = vadd.f32 0.0, %v3267
    %v3269 = vpop.f32.mrf.mxu0
    %v3270 = vadd.f32 0.0, %v3269
    %3271 = vmatmul.bf16.gmra.mxu0 %v3195
    %v3272 = vpop.f32.mrf.mxu0
    %v3273 = vadd.f32 0.0, %v3272
    %v3274 = vpop.f32.mrf.mxu0
    %v3275 = vadd.f32 0.0, %v3274
    %3276 = vmatmul.bf16.gmra.mxu0 %v3198
    %v3277 = vpop.f32.mrf.mxu0
    %v3278 = vadd.f32 0.0, %v3277
    %v3279 = vpop.f32.mrf.mxu0
    %v3280 = vadd.f32 0.0, %v3279
    %3281 = vmatmul.bf16.gmra.mxu0 %v3201
    %v3282 = vpop.f32.mrf.mxu0
    %v3283 = vadd.f32 0.0, %v3282
    %v3284 = vpop.f32.mrf.mxu0
    %v3285 = vadd.f32 0.0, %v3284
    %3286 = vmatmul.bf16.gmra.mxu0 %v3204
    %v3287 = vpop.f32.mrf.mxu0
    %v3288 = vadd.f32 0.0, %v3287
    %v3289 = vpop.f32.mrf.mxu0
    %v3290 = vadd.f32 0.0, %v3289
    %3291 = vmatmul.bf16.gmra.mxu0 %v3207
    %v3292 = vpop.f32.mrf.mxu0
    %v3293 = vadd.f32 0.0, %v3292
    %v3294 = vpop.f32.mrf.mxu0
    %v3295 = vadd.f32 0.0, %v3294
    %3296 = vmatmul.bf16.gmra.mxu0 %v3210
    %v3297 = vpop.f32.mrf.mxu0
    %v3298 = vadd.f32 0.0, %v3297
    %v3299 = vpop.f32.mrf.mxu0
    %v3300 = vadd.f32 0.0, %v3299
    %3301 = vmatmul.bf16.gmra.mxu0 %v3213
    %v3302 = vpop.f32.mrf.mxu0
    %v3303 = vadd.f32 0.0, %v3302
    %v3304 = vpop.f32.mrf.mxu0
    %v3305 = vadd.f32 0.0, %v3304
    %3306 = vdwg.mxu0
    %v3307 = vadd.f32 %v3084, %v3228
    %v3308 = vadd.f32 %v3085, %v3230
    %v3309 = vadd.f32 %v3086, %v3233
    %v3310 = vadd.f32 %v3087, %v3235
    %v3311 = vadd.f32 %v3088, %v3238
    %v3312 = vadd.f32 %v3089, %v3240
    %v3313 = vadd.f32 %v3090, %v3243
    %v3314 = vadd.f32 %v3091, %v3245
    %v3315 = vadd.f32 %v3092, %v3248
    %v3316 = vadd.f32 %v3093, %v3250
    %v3317 = vadd.f32 %v3094, %v3253
    %v3318 = vadd.f32 %v3095, %v3255
    %v3319 = vadd.f32 %v3096, %v3258
    %v3320 = vadd.f32 %v3097, %v3260
    %v3321 = vadd.f32 %v3098, %v3263
    %v3322 = vadd.f32 %v3099, %v3265
    %v3323 = vadd.f32 %v3100, %v3268
    %v3324 = vadd.f32 %v3101, %v3270
    %v3325 = vadd.f32 %v3102, %v3273
    %v3326 = vadd.f32 %v3103, %v3275
    %v3327 = vadd.f32 %v3104, %v3278
    %v3328 = vadd.f32 %v3105, %v3280
    %v3329 = vadd.f32 %v3106, %v3283
    %v3330 = vadd.f32 %v3107, %v3285
    %v3331 = vadd.f32 %v3108, %v3288
    %v3332 = vadd.f32 %v3109, %v3290
    %v3333 = vadd.f32 %v3110, %v3293
    %v3334 = vadd.f32 %v3111, %v3295
    %v3335 = vadd.f32 %v3112, %v3298
    %v3336 = vadd.f32 %v3113, %v3300
    %v3337 = vadd.f32 %v3114, %v3303
    %v3338 = vadd.f32 %v3115, %v3305
    %s3339 = sadd.s32 %s2509, 258
    %s3340 = scalar_lea.vmem [#allocation2], %s3339
    %v3341 = vld [vmem:[%s3340] sm:$0xff]
    %v3342 = vld [vmem:[%s3340 + $0x8] sm:$0xff]
    %v3343 = vld [vmem:[%s3340 + $0x10] sm:$0xff]
    %v3344 = vld [vmem:[%s3340 + $0x18] sm:$0xff]
    %v3345 = vld [vmem:[%s3340 + $0x20] sm:$0xff]
    %v3346 = vld [vmem:[%s3340 + $0x28] sm:$0xff]
    %v3347 = vld [vmem:[%s3340 + $0x30] sm:$0xff]
    %v3348 = vld [vmem:[%s3340 + $0x38] sm:$0xff]
    %v3349 = vld [vmem:[%s3340 + $0x40] sm:$0xff]
    %v3350 = vld [vmem:[%s3340 + $0x48] sm:$0xff]
    %v3351 = vld [vmem:[%s3340 + $0x50] sm:$0xff]
    %v3352 = vld [vmem:[%s3340 + $0x58] sm:$0xff]
    %v3353 = vld [vmem:[%s3340 + $0x60] sm:$0xff]
    %v3354 = vld [vmem:[%s3340 + $0x68] sm:$0xff]
    %v3355 = vld [vmem:[%s3340 + $0x70] sm:$0xff]
    %v3356 = vld [vmem:[%s3340 + $0x78] sm:$0xff]
    %v3357 = vld [vmem:[%s3340 + $0x80] sm:$0xff]
    %v3358 = vld [vmem:[%s3340 + $0x88] sm:$0xff]
    %v3359 = vld [vmem:[%s3340 + $0x90] sm:$0xff]
    %v3360 = vld [vmem:[%s3340 + $0x98] sm:$0xff]
    %v3361 = vld [vmem:[%s3340 + $0xa0] sm:$0xff]
    %v3362 = vld [vmem:[%s3340 + $0xa8] sm:$0xff]
    %v3363 = vld [vmem:[%s3340 + $0xb0] sm:$0xff]
    %v3364 = vld [vmem:[%s3340 + $0xb8] sm:$0xff]
    %v3365 = vld [vmem:[%s3340 + $0xc0] sm:$0xff]
    %v3366 = vld [vmem:[%s3340 + $0xc8] sm:$0xff]
    %v3367 = vld [vmem:[%s3340 + $0xd0] sm:$0xff]
    %v3368 = vld [vmem:[%s3340 + $0xd8] sm:$0xff]
    %v3369 = vld [vmem:[%s3340 + $0xe0] sm:$0xff]
    %v3370 = vld [vmem:[%s3340 + $0xe8] sm:$0xff]
    %v3371 = vld [vmem:[%s3340 + $0xf0] sm:$0xff]
    %v3372 = vld [vmem:[%s3340 + $0xf8] sm:$0xff]
    %v3373 = vpack.c.bf16 %v3342, %v3341
    %v3374 = vpack.c.bf16 %v3344, %v3343
    %v3375 = vpack.c.bf16 %v3346, %v3345
    %v3376 = vpack.c.bf16 %v3348, %v3347
    %v3377 = vpack.c.bf16 %v3350, %v3349
    %v3378 = vpack.c.bf16 %v3352, %v3351
    %v3379 = vpack.c.bf16 %v3354, %v3353
    %v3380 = vpack.c.bf16 %v3356, %v3355
    %v3381 = vpack.c.bf16 %v3358, %v3357
    %v3382 = vpack.c.bf16 %v3360, %v3359
    %v3383 = vpack.c.bf16 %v3362, %v3361
    %v3384 = vpack.c.bf16 %v3364, %v3363
    %v3385 = vpack.c.bf16 %v3366, %v3365
    %v3386 = vpack.c.bf16 %v3368, %v3367
    %v3387 = vpack.c.bf16 %v3370, %v3369
    %v3388 = vpack.c.bf16 %v3372, %v3371
    %v3389 = vpack.c.bf16 %v2497, %v2497
    %v3391 = vsel %vm2611, %v3373, 0
    %v3394 = vsel %vm2611, %v3374, 0
    %v3397 = vsel %vm2611, %v3375, 0
    %v3400 = vsel %vm2611, %v3376, 0
    %v3403 = vsel %vm2611, %v3377, 0
    %v3406 = vsel %vm2611, %v3378, 0
    %v3409 = vsel %vm2611, %v3379, 0
    %v3412 = vsel %vm2611, %v3380, 0
    %v3415 = vsel %vm2611, %v3381, 0
    %v3418 = vsel %vm2611, %v3382, 0
    %v3421 = vsel %vm2611, %v3383, 0
    %v3424 = vsel %vm2611, %v3384, 0
    %v3427 = vsel %vm2611, %v3385, 0
    %v3430 = vsel %vm2611, %v3386, 0
    %v3433 = vsel %vm2611, %v3387, 0
    %v3436 = vsel %vm2611, %v3388, 0
    %v3439 = vsel %vm2660, %v3389, 0
    %3441 = vmatpush.bf16.msra.mxu0 0
    %3442 = vmatpush.bf16.msra.mxu0 0
    %3443 = vmatpush.bf16.msra.mxu0 0
    %3444 = vmatpush.bf16.msra.mxu0 0
    %3445 = vmatpush.bf16.msra.mxu0 0
    %3446 = vmatpush.bf16.msra.mxu0 0
    %3447 = vmatpush.bf16.msra.mxu0 0
    %3448 = vmatpush.bf16.msra.mxu0 %v3439
    %3449 = vmatmul.bf16.gmra.mxu0 %v3391
    %v3450 = vpop.f32.mrf.mxu0
    %v3451 = vadd.f32 0.0, %v3450
    %v3452 = vpop.f32.mrf.mxu0
    %v3453 = vadd.f32 0.0, %v3452
    %3454 = vmatmul.bf16.gmra.mxu0 %v3394
    %v3455 = vpop.f32.mrf.mxu0
    %v3456 = vadd.f32 0.0, %v3455
    %v3457 = vpop.f32.mrf.mxu0
    %v3458 = vadd.f32 0.0, %v3457
    %3459 = vmatmul.bf16.gmra.mxu0 %v3397
    %v3460 = vpop.f32.mrf.mxu0
    %v3461 = vadd.f32 0.0, %v3460
    %v3462 = vpop.f32.mrf.mxu0
    %v3463 = vadd.f32 0.0, %v3462
    %3464 = vmatmul.bf16.gmra.mxu0 %v3400
    %v3465 = vpop.f32.mrf.mxu0
    %v3466 = vadd.f32 0.0, %v3465
    %v3467 = vpop.f32.mrf.mxu0
    %v3468 = vadd.f32 0.0, %v3467
    %3469 = vmatmul.bf16.gmra.mxu0 %v3403
    %v3470 = vpop.f32.mrf.mxu0
    %v3471 = vadd.f32 0.0, %v3470
    %v3472 = vpop.f32.mrf.mxu0
    %v3473 = vadd.f32 0.0, %v3472
    %3474 = vmatmul.bf16.gmra.mxu0 %v3406
    %v3475 = vpop.f32.mrf.mxu0
    %v3476 = vadd.f32 0.0, %v3475
    %v3477 = vpop.f32.mrf.mxu0
    %v3478 = vadd.f32 0.0, %v3477
    %3479 = vmatmul.bf16.gmra.mxu0 %v3409
    %v3480 = vpop.f32.mrf.mxu0
    %v3481 = vadd.f32 0.0, %v3480
    %v3482 = vpop.f32.mrf.mxu0
    %v3483 = vadd.f32 0.0, %v3482
    %3484 = vmatmul.bf16.gmra.mxu0 %v3412
    %v3485 = vpop.f32.mrf.mxu0
    %v3486 = vadd.f32 0.0, %v3485
    %v3487 = vpop.f32.mrf.mxu0
    %v3488 = vadd.f32 0.0, %v3487
    %3489 = vmatmul.bf16.gmra.mxu0 %v3415
    %v3490 = vpop.f32.mrf.mxu0
    %v3491 = vadd.f32 0.0, %v3490
    %v3492 = vpop.f32.mrf.mxu0
    %v3493 = vadd.f32 0.0, %v3492
    %3494 = vmatmul.bf16.gmra.mxu0 %v3418
    %v3495 = vpop.f32.mrf.mxu0
    %v3496 = vadd.f32 0.0, %v3495
    %v3497 = vpop.f32.mrf.mxu0
    %v3498 = vadd.f32 0.0, %v3497
    %3499 = vmatmul.bf16.gmra.mxu0 %v3421
    %v3500 = vpop.f32.mrf.mxu0
    %v3501 = vadd.f32 0.0, %v3500
    %v3502 = vpop.f32.mrf.mxu0
    %v3503 = vadd.f32 0.0, %v3502
    %3504 = vmatmul.bf16.gmra.mxu0 %v3424
    %v3505 = vpop.f32.mrf.mxu0
    %v3506 = vadd.f32 0.0, %v3505
    %v3507 = vpop.f32.mrf.mxu0
    %v3508 = vadd.f32 0.0, %v3507
    %3509 = vmatmul.bf16.gmra.mxu0 %v3427
    %v3510 = vpop.f32.mrf.mxu0
    %v3511 = vadd.f32 0.0, %v3510
    %v3512 = vpop.f32.mrf.mxu0
    %v3513 = vadd.f32 0.0, %v3512
    %3514 = vmatmul.bf16.gmra.mxu0 %v3430
    %v3515 = vpop.f32.mrf.mxu0
    %v3516 = vadd.f32 0.0, %v3515
    %v3517 = vpop.f32.mrf.mxu0
    %v3518 = vadd.f32 0.0, %v3517
    %3519 = vmatmul.bf16.gmra.mxu0 %v3433
    %v3520 = vpop.f32.mrf.mxu0
    %v3521 = vadd.f32 0.0, %v3520
    %v3522 = vpop.f32.mrf.mxu0
    %v3523 = vadd.f32 0.0, %v3522
    %3524 = vmatmul.bf16.gmra.mxu0 %v3436
    %v3525 = vpop.f32.mrf.mxu0
    %v3526 = vadd.f32 0.0, %v3525
    %v3527 = vpop.f32.mrf.mxu0
    %v3528 = vadd.f32 0.0, %v3527
    %3529 = vdwg.mxu0
    %v3530 = vadd.f32 %v3307, %v3451
    %v3531 = vadd.f32 %v3308, %v3453
    %v3532 = vadd.f32 %v3309, %v3456
    %v3533 = vadd.f32 %v3310, %v3458
    %v3534 = vadd.f32 %v3311, %v3461
    %v3535 = vadd.f32 %v3312, %v3463
    %v3536 = vadd.f32 %v3313, %v3466
    %v3537 = vadd.f32 %v3314, %v3468
    %v3538 = vadd.f32 %v3315, %v3471
    %v3539 = vadd.f32 %v3316, %v3473
    %v3540 = vadd.f32 %v3317, %v3476
    %v3541 = vadd.f32 %v3318, %v3478
    %v3542 = vadd.f32 %v3319, %v3481
    %v3543 = vadd.f32 %v3320, %v3483
    %v3544 = vadd.f32 %v3321, %v3486
    %v3545 = vadd.f32 %v3322, %v3488
    %v3546 = vadd.f32 %v3323, %v3491
    %v3547 = vadd.f32 %v3324, %v3493
    %v3548 = vadd.f32 %v3325, %v3496
    %v3549 = vadd.f32 %v3326, %v3498
    %v3550 = vadd.f32 %v3327, %v3501
    %v3551 = vadd.f32 %v3328, %v3503
    %v3552 = vadd.f32 %v3329, %v3506
    %v3553 = vadd.f32 %v3330, %v3508
    %v3554 = vadd.f32 %v3331, %v3511
    %v3555 = vadd.f32 %v3332, %v3513
    %v3556 = vadd.f32 %v3333, %v3516
    %v3557 = vadd.f32 %v3334, %v3518
    %v3558 = vadd.f32 %v3335, %v3521
    %v3559 = vadd.f32 %v3336, %v3523
    %v3560 = vadd.f32 %v3337, %v3526
    %v3561 = vadd.f32 %v3338, %v3528
    %s3562 = sadd.s32 %s2509, 260
    %s3563 = scalar_lea.vmem [#allocation2], %s3562
    %v3564 = vld [vmem:[%s3563] sm:$0xff]
    %v3565 = vld [vmem:[%s3563 + $0x8] sm:$0xff]
    %v3566 = vld [vmem:[%s3563 + $0x10] sm:$0xff]
    %v3567 = vld [vmem:[%s3563 + $0x18] sm:$0xff]
    %v3568 = vld [vmem:[%s3563 + $0x20] sm:$0xff]
    %v3569 = vld [vmem:[%s3563 + $0x28] sm:$0xff]
    %v3570 = vld [vmem:[%s3563 + $0x30] sm:$0xff]
    %v3571 = vld [vmem:[%s3563 + $0x38] sm:$0xff]
    %v3572 = vld [vmem:[%s3563 + $0x40] sm:$0xff]
    %v3573 = vld [vmem:[%s3563 + $0x48] sm:$0xff]
    %v3574 = vld [vmem:[%s3563 + $0x50] sm:$0xff]
    %v3575 = vld [vmem:[%s3563 + $0x58] sm:$0xff]
    %v3576 = vld [vmem:[%s3563 + $0x60] sm:$0xff]
    %v3577 = vld [vmem:[%s3563 + $0x68] sm:$0xff]
    %v3578 = vld [vmem:[%s3563 + $0x70] sm:$0xff]
    %v3579 = vld [vmem:[%s3563 + $0x78] sm:$0xff]
    %v3580 = vld [vmem:[%s3563 + $0x80] sm:$0xff]
    %v3581 = vld [vmem:[%s3563 + $0x88] sm:$0xff]
    %v3582 = vld [vmem:[%s3563 + $0x90] sm:$0xff]
    %v3583 = vld [vmem:[%s3563 + $0x98] sm:$0xff]
    %v3584 = vld [vmem:[%s3563 + $0xa0] sm:$0xff]
    %v3585 = vld [vmem:[%s3563 + $0xa8] sm:$0xff]
    %v3586 = vld [vmem:[%s3563 + $0xb0] sm:$0xff]
    %v3587 = vld [vmem:[%s3563 + $0xb8] sm:$0xff]
    %v3588 = vld [vmem:[%s3563 + $0xc0] sm:$0xff]
    %v3589 = vld [vmem:[%s3563 + $0xc8] sm:$0xff]
    %v3590 = vld [vmem:[%s3563 + $0xd0] sm:$0xff]
    %v3591 = vld [vmem:[%s3563 + $0xd8] sm:$0xff]
    %v3592 = vld [vmem:[%s3563 + $0xe0] sm:$0xff]
    %v3593 = vld [vmem:[%s3563 + $0xe8] sm:$0xff]
    %v3594 = vld [vmem:[%s3563 + $0xf0] sm:$0xff]
    %v3595 = vld [vmem:[%s3563 + $0xf8] sm:$0xff]
    %v3596 = vpack.c.bf16 %v3565, %v3564
    %v3597 = vpack.c.bf16 %v3567, %v3566
    %v3598 = vpack.c.bf16 %v3569, %v3568
    %v3599 = vpack.c.bf16 %v3571, %v3570
    %v3600 = vpack.c.bf16 %v3573, %v3572
    %v3601 = vpack.c.bf16 %v3575, %v3574
    %v3602 = vpack.c.bf16 %v3577, %v3576
    %v3603 = vpack.c.bf16 %v3579, %v3578
    %v3604 = vpack.c.bf16 %v3581, %v3580
    %v3605 = vpack.c.bf16 %v3583, %v3582
    %v3606 = vpack.c.bf16 %v3585, %v3584
    %v3607 = vpack.c.bf16 %v3587, %v3586
    %v3608 = vpack.c.bf16 %v3589, %v3588
    %v3609 = vpack.c.bf16 %v3591, %v3590
    %v3610 = vpack.c.bf16 %v3593, %v3592
    %v3611 = vpack.c.bf16 %v3595, %v3594
    %v3612 = vpack.c.bf16 %v2498, %v2498
    %v3614 = vsel %vm2611, %v3596, 0
    %v3617 = vsel %vm2611, %v3597, 0
    %v3620 = vsel %vm2611, %v3598, 0
    %v3623 = vsel %vm2611, %v3599, 0
    %v3626 = vsel %vm2611, %v3600, 0
    %v3629 = vsel %vm2611, %v3601, 0
    %v3632 = vsel %vm2611, %v3602, 0
    %v3635 = vsel %vm2611, %v3603, 0
    %v3638 = vsel %vm2611, %v3604, 0
    %v3641 = vsel %vm2611, %v3605, 0
    %v3644 = vsel %vm2611, %v3606, 0
    %v3647 = vsel %vm2611, %v3607, 0
    %v3650 = vsel %vm2611, %v3608, 0
    %v3653 = vsel %vm2611, %v3609, 0
    %v3656 = vsel %vm2611, %v3610, 0
    %v3659 = vsel %vm2611, %v3611, 0
    %v3662 = vsel %vm2660, %v3612, 0
    %3664 = vmatpush.bf16.msra.mxu0 0
    %3665 = vmatpush.bf16.msra.mxu0 0
    %3666 = vmatpush.bf16.msra.mxu0 0
    %3667 = vmatpush.bf16.msra.mxu0 0
    %3668 = vmatpush.bf16.msra.mxu0 0
    %3669 = vmatpush.bf16.msra.mxu0 0
    %3670 = vmatpush.bf16.msra.mxu0 0
    %3671 = vmatpush.bf16.msra.mxu0 %v3662
    %3672 = vmatmul.bf16.gmra.mxu0 %v3614
    %v3673 = vpop.f32.mrf.mxu0
    %v3674 = vadd.f32 0.0, %v3673
    %v3675 = vpop.f32.mrf.mxu0
    %v3676 = vadd.f32 0.0, %v3675
    %3677 = vmatmul.bf16.gmra.mxu0 %v3617
    %v3678 = vpop.f32.mrf.mxu0
    %v3679 = vadd.f32 0.0, %v3678
    %v3680 = vpop.f32.mrf.mxu0
    %v3681 = vadd.f32 0.0, %v3680
    %3682 = vmatmul.bf16.gmra.mxu0 %v3620
    %v3683 = vpop.f32.mrf.mxu0
    %v3684 = vadd.f32 0.0, %v3683
    %v3685 = vpop.f32.mrf.mxu0
    %v3686 = vadd.f32 0.0, %v3685
    %3687 = vmatmul.bf16.gmra.mxu0 %v3623
    %v3688 = vpop.f32.mrf.mxu0
    %v3689 = vadd.f32 0.0, %v3688
    %v3690 = vpop.f32.mrf.mxu0
    %v3691 = vadd.f32 0.0, %v3690
    %3692 = vmatmul.bf16.gmra.mxu0 %v3626
    %v3693 = vpop.f32.mrf.mxu0
    %v3694 = vadd.f32 0.0, %v3693
    %v3695 = vpop.f32.mrf.mxu0
    %v3696 = vadd.f32 0.0, %v3695
    %3697 = vmatmul.bf16.gmra.mxu0 %v3629
    %v3698 = vpop.f32.mrf.mxu0
    %v3699 = vadd.f32 0.0, %v3698
    %v3700 = vpop.f32.mrf.mxu0
    %v3701 = vadd.f32 0.0, %v3700
    %3702 = vmatmul.bf16.gmra.mxu0 %v3632
    %v3703 = vpop.f32.mrf.mxu0
    %v3704 = vadd.f32 0.0, %v3703
    %v3705 = vpop.f32.mrf.mxu0
    %v3706 = vadd.f32 0.0, %v3705
    %3707 = vmatmul.bf16.gmra.mxu0 %v3635
    %v3708 = vpop.f32.mrf.mxu0
    %v3709 = vadd.f32 0.0, %v3708
    %v3710 = vpop.f32.mrf.mxu0
    %v3711 = vadd.f32 0.0, %v3710
    %3712 = vmatmul.bf16.gmra.mxu0 %v3638
    %v3713 = vpop.f32.mrf.mxu0
    %v3714 = vadd.f32 0.0, %v3713
    %v3715 = vpop.f32.mrf.mxu0
    %v3716 = vadd.f32 0.0, %v3715
    %3717 = vmatmul.bf16.gmra.mxu0 %v3641
    %v3718 = vpop.f32.mrf.mxu0
    %v3719 = vadd.f32 0.0, %v3718
    %v3720 = vpop.f32.mrf.mxu0
    %v3721 = vadd.f32 0.0, %v3720
    %3722 = vmatmul.bf16.gmra.mxu0 %v3644
    %v3723 = vpop.f32.mrf.mxu0
    %v3724 = vadd.f32 0.0, %v3723
    %v3725 = vpop.f32.mrf.mxu0
    %v3726 = vadd.f32 0.0, %v3725
    %3727 = vmatmul.bf16.gmra.mxu0 %v3647
    %v3728 = vpop.f32.mrf.mxu0
    %v3729 = vadd.f32 0.0, %v3728
    %v3730 = vpop.f32.mrf.mxu0
    %v3731 = vadd.f32 0.0, %v3730
    %3732 = vmatmul.bf16.gmra.mxu0 %v3650
    %v3733 = vpop.f32.mrf.mxu0
    %v3734 = vadd.f32 0.0, %v3733
    %v3735 = vpop.f32.mrf.mxu0
    %v3736 = vadd.f32 0.0, %v3735
    %3737 = vmatmul.bf16.gmra.mxu0 %v3653
    %v3738 = vpop.f32.mrf.mxu0
    %v3739 = vadd.f32 0.0, %v3738
    %v3740 = vpop.f32.mrf.mxu0
    %v3741 = vadd.f32 0.0, %v3740
    %3742 = vmatmul.bf16.gmra.mxu0 %v3656
    %v3743 = vpop.f32.mrf.mxu0
    %v3744 = vadd.f32 0.0, %v3743
    %v3745 = vpop.f32.mrf.mxu0
    %v3746 = vadd.f32 0.0, %v3745
    %3747 = vmatmul.bf16.gmra.mxu0 %v3659
    %v3748 = vpop.f32.mrf.mxu0
    %v3749 = vadd.f32 0.0, %v3748
    %v3750 = vpop.f32.mrf.mxu0
    %v3751 = vadd.f32 0.0, %v3750
    %3752 = vdwg.mxu0
    %v3753 = vadd.f32 %v3530, %v3674
    %v3754 = vadd.f32 %v3531, %v3676
    %v3755 = vadd.f32 %v3532, %v3679
    %v3756 = vadd.f32 %v3533, %v3681
    %v3757 = vadd.f32 %v3534, %v3684
    %v3758 = vadd.f32 %v3535, %v3686
    %v3759 = vadd.f32 %v3536, %v3689
    %v3760 = vadd.f32 %v3537, %v3691
    %v3761 = vadd.f32 %v3538, %v3694
    %v3762 = vadd.f32 %v3539, %v3696
    %v3763 = vadd.f32 %v3540, %v3699
    %v3764 = vadd.f32 %v3541, %v3701
    %v3765 = vadd.f32 %v3542, %v3704
    %v3766 = vadd.f32 %v3543, %v3706
    %v3767 = vadd.f32 %v3544, %v3709
    %v3768 = vadd.f32 %v3545, %v3711
    %v3769 = vadd.f32 %v3546, %v3714
    %v3770 = vadd.f32 %v3547, %v3716
    %v3771 = vadd.f32 %v3548, %v3719
    %v3772 = vadd.f32 %v3549, %v3721
    %v3773 = vadd.f32 %v3550, %v3724
    %v3774 = vadd.f32 %v3551, %v3726
    %v3775 = vadd.f32 %v3552, %v3729
    %v3776 = vadd.f32 %v3553, %v3731
    %v3777 = vadd.f32 %v3554, %v3734
    %v3778 = vadd.f32 %v3555, %v3736
    %v3779 = vadd.f32 %v3556, %v3739
    %v3780 = vadd.f32 %v3557, %v3741
    %v3781 = vadd.f32 %v3558, %v3744
    %v3782 = vadd.f32 %v3559, %v3746
    %v3783 = vadd.f32 %v3560, %v3749
    %v3784 = vadd.f32 %v3561, %v3751
    %s3785 = sadd.s32 %s2509, 512
    %s3786 = scalar_lea.vmem [#allocation2], %s3785
    %v3787 = vld [vmem:[%s3786] sm:$0xff]
    %v3788 = vld [vmem:[%s3786 + $0x8] sm:$0xff]
    %v3789 = vld [vmem:[%s3786 + $0x10] sm:$0xff]
    %v3790 = vld [vmem:[%s3786 + $0x18] sm:$0xff]
    %v3791 = vld [vmem:[%s3786 + $0x20] sm:$0xff]
    %v3792 = vld [vmem:[%s3786 + $0x28] sm:$0xff]
    %v3793 = vld [vmem:[%s3786 + $0x30] sm:$0xff]
    %v3794 = vld [vmem:[%s3786 + $0x38] sm:$0xff]
    %v3795 = vld [vmem:[%s3786 + $0x40] sm:$0xff]
    %v3796 = vld [vmem:[%s3786 + $0x48] sm:$0xff]
    %v3797 = vld [vmem:[%s3786 + $0x50] sm:$0xff]
    %v3798 = vld [vmem:[%s3786 + $0x58] sm:$0xff]
    %v3799 = vld [vmem:[%s3786 + $0x60] sm:$0xff]
    %v3800 = vld [vmem:[%s3786 + $0x68] sm:$0xff]
    %v3801 = vld [vmem:[%s3786 + $0x70] sm:$0xff]
    %v3802 = vld [vmem:[%s3786 + $0x78] sm:$0xff]
    %v3803 = vld [vmem:[%s3786 + $0x80] sm:$0xff]
    %v3804 = vld [vmem:[%s3786 + $0x88] sm:$0xff]
    %v3805 = vld [vmem:[%s3786 + $0x90] sm:$0xff]
    %v3806 = vld [vmem:[%s3786 + $0x98] sm:$0xff]
    %v3807 = vld [vmem:[%s3786 + $0xa0] sm:$0xff]
    %v3808 = vld [vmem:[%s3786 + $0xa8] sm:$0xff]
    %v3809 = vld [vmem:[%s3786 + $0xb0] sm:$0xff]
    %v3810 = vld [vmem:[%s3786 + $0xb8] sm:$0xff]
    %v3811 = vld [vmem:[%s3786 + $0xc0] sm:$0xff]
    %v3812 = vld [vmem:[%s3786 + $0xc8] sm:$0xff]
    %v3813 = vld [vmem:[%s3786 + $0xd0] sm:$0xff]
    %v3814 = vld [vmem:[%s3786 + $0xd8] sm:$0xff]
    %v3815 = vld [vmem:[%s3786 + $0xe0] sm:$0xff]
    %v3816 = vld [vmem:[%s3786 + $0xe8] sm:$0xff]
    %v3817 = vld [vmem:[%s3786 + $0xf0] sm:$0xff]
    %v3818 = vld [vmem:[%s3786 + $0xf8] sm:$0xff]
    %v3819 = vpack.c.bf16 %v3788, %v3787
    %v3820 = vpack.c.bf16 %v3790, %v3789
    %v3821 = vpack.c.bf16 %v3792, %v3791
    %v3822 = vpack.c.bf16 %v3794, %v3793
    %v3823 = vpack.c.bf16 %v3796, %v3795
    %v3824 = vpack.c.bf16 %v3798, %v3797
    %v3825 = vpack.c.bf16 %v3800, %v3799
    %v3826 = vpack.c.bf16 %v3802, %v3801
    %v3827 = vpack.c.bf16 %v3804, %v3803
    %v3828 = vpack.c.bf16 %v3806, %v3805
    %v3829 = vpack.c.bf16 %v3808, %v3807
    %v3830 = vpack.c.bf16 %v3810, %v3809
    %v3831 = vpack.c.bf16 %v3812, %v3811
    %v3832 = vpack.c.bf16 %v3814, %v3813
    %v3833 = vpack.c.bf16 %v3816, %v3815
    %v3834 = vpack.c.bf16 %v3818, %v3817
    %v3835 = vpack.c.bf16 %v2499, %v2499
    %v3837 = vsel %vm2611, %v3819, 0
    %v3840 = vsel %vm2611, %v3820, 0
    %v3843 = vsel %vm2611, %v3821, 0
    %v3846 = vsel %vm2611, %v3822, 0
    %v3849 = vsel %vm2611, %v3823, 0
    %v3852 = vsel %vm2611, %v3824, 0
    %v3855 = vsel %vm2611, %v3825, 0
    %v3858 = vsel %vm2611, %v3826, 0
    %v3861 = vsel %vm2611, %v3827, 0
    %v3864 = vsel %vm2611, %v3828, 0
    %v3867 = vsel %vm2611, %v3829, 0
    %v3870 = vsel %vm2611, %v3830, 0
    %v3873 = vsel %vm2611, %v3831, 0
    %v3876 = vsel %vm2611, %v3832, 0
    %v3879 = vsel %vm2611, %v3833, 0
    %v3882 = vsel %vm2611, %v3834, 0
    %v3885 = vsel %vm2660, %v3835, 0
    %3887 = vmatpush.bf16.msra.mxu0 0
    %3888 = vmatpush.bf16.msra.mxu0 0
    %3889 = vmatpush.bf16.msra.mxu0 0
    %3890 = vmatpush.bf16.msra.mxu0 0
    %3891 = vmatpush.bf16.msra.mxu0 0
    %3892 = vmatpush.bf16.msra.mxu0 0
    %3893 = vmatpush.bf16.msra.mxu0 0
    %3894 = vmatpush.bf16.msra.mxu0 %v3885
    %3895 = vmatmul.bf16.gmra.mxu0 %v3837
    %v3896 = vpop.f32.mrf.mxu0
    %v3897 = vadd.f32 0.0, %v3896
    %v3898 = vpop.f32.mrf.mxu0
    %v3899 = vadd.f32 0.0, %v3898
    %3900 = vmatmul.bf16.gmra.mxu0 %v3840
    %v3901 = vpop.f32.mrf.mxu0
    %v3902 = vadd.f32 0.0, %v3901
    %v3903 = vpop.f32.mrf.mxu0
    %v3904 = vadd.f32 0.0, %v3903
    %3905 = vmatmul.bf16.gmra.mxu0 %v3843
    %v3906 = vpop.f32.mrf.mxu0
    %v3907 = vadd.f32 0.0, %v3906
    %v3908 = vpop.f32.mrf.mxu0
    %v3909 = vadd.f32 0.0, %v3908
    %3910 = vmatmul.bf16.gmra.mxu0 %v3846
    %v3911 = vpop.f32.mrf.mxu0
    %v3912 = vadd.f32 0.0, %v3911
    %v3913 = vpop.f32.mrf.mxu0
    %v3914 = vadd.f32 0.0, %v3913
    %3915 = vmatmul.bf16.gmra.mxu0 %v3849
    %v3916 = vpop.f32.mrf.mxu0
    %v3917 = vadd.f32 0.0, %v3916
    %v3918 = vpop.f32.mrf.mxu0
    %v3919 = vadd.f32 0.0, %v3918
    %3920 = vmatmul.bf16.gmra.mxu0 %v3852
    %v3921 = vpop.f32.mrf.mxu0
    %v3922 = vadd.f32 0.0, %v3921
    %v3923 = vpop.f32.mrf.mxu0
    %v3924 = vadd.f32 0.0, %v3923
    %3925 = vmatmul.bf16.gmra.mxu0 %v3855
    %v3926 = vpop.f32.mrf.mxu0
    %v3927 = vadd.f32 0.0, %v3926
    %v3928 = vpop.f32.mrf.mxu0
    %v3929 = vadd.f32 0.0, %v3928
    %3930 = vmatmul.bf16.gmra.mxu0 %v3858
    %v3931 = vpop.f32.mrf.mxu0
    %v3932 = vadd.f32 0.0, %v3931
    %v3933 = vpop.f32.mrf.mxu0
    %v3934 = vadd.f32 0.0, %v3933
    %3935 = vmatmul.bf16.gmra.mxu0 %v3861
    %v3936 = vpop.f32.mrf.mxu0
    %v3937 = vadd.f32 0.0, %v3936
    %v3938 = vpop.f32.mrf.mxu0
    %v3939 = vadd.f32 0.0, %v3938
    %3940 = vmatmul.bf16.gmra.mxu0 %v3864
    %v3941 = vpop.f32.mrf.mxu0
    %v3942 = vadd.f32 0.0, %v3941
    %v3943 = vpop.f32.mrf.mxu0
    %v3944 = vadd.f32 0.0, %v3943
    %3945 = vmatmul.bf16.gmra.mxu0 %v3867
    %v3946 = vpop.f32.mrf.mxu0
    %v3947 = vadd.f32 0.0, %v3946
    %v3948 = vpop.f32.mrf.mxu0
    %v3949 = vadd.f32 0.0, %v3948
    %3950 = vmatmul.bf16.gmra.mxu0 %v3870
    %v3951 = vpop.f32.mrf.mxu0
    %v3952 = vadd.f32 0.0, %v3951
    %v3953 = vpop.f32.mrf.mxu0
    %v3954 = vadd.f32 0.0, %v3953
    %3955 = vmatmul.bf16.gmra.mxu0 %v3873
    %v3956 = vpop.f32.mrf.mxu0
    %v3957 = vadd.f32 0.0, %v3956
    %v3958 = vpop.f32.mrf.mxu0
    %v3959 = vadd.f32 0.0, %v3958
    %3960 = vmatmul.bf16.gmra.mxu0 %v3876
    %v3961 = vpop.f32.mrf.mxu0
    %v3962 = vadd.f32 0.0, %v3961
    %v3963 = vpop.f32.mrf.mxu0
    %v3964 = vadd.f32 0.0, %v3963
    %3965 = vmatmul.bf16.gmra.mxu0 %v3879
    %v3966 = vpop.f32.mrf.mxu0
    %v3967 = vadd.f32 0.0, %v3966
    %v3968 = vpop.f32.mrf.mxu0
    %v3969 = vadd.f32 0.0, %v3968
    %3970 = vmatmul.bf16.gmra.mxu0 %v3882
    %v3971 = vpop.f32.mrf.mxu0
    %v3972 = vadd.f32 0.0, %v3971
    %v3973 = vpop.f32.mrf.mxu0
    %v3974 = vadd.f32 0.0, %v3973
    %3975 = vdwg.mxu0
    %v3976 = vadd.f32 %v3753, %v3897
    %v3977 = vadd.f32 %v3754, %v3899
    %v3978 = vadd.f32 %v3755, %v3902
    %v3979 = vadd.f32 %v3756, %v3904
    %v3980 = vadd.f32 %v3757, %v3907
    %v3981 = vadd.f32 %v3758, %v3909
    %v3982 = vadd.f32 %v3759, %v3912
    %v3983 = vadd.f32 %v3760, %v3914
    %v3984 = vadd.f32 %v3761, %v3917
    %v3985 = vadd.f32 %v3762, %v3919
    %v3986 = vadd.f32 %v3763, %v3922
    %v3987 = vadd.f32 %v3764, %v3924
    %v3988 = vadd.f32 %v3765, %v3927
    %v3989 = vadd.f32 %v3766, %v3929
    %v3990 = vadd.f32 %v3767, %v3932
    %v3991 = vadd.f32 %v3768, %v3934
    %v3992 = vadd.f32 %v3769, %v3937
    %v3993 = vadd.f32 %v3770, %v3939
    %v3994 = vadd.f32 %v3771, %v3942
    %v3995 = vadd.f32 %v3772, %v3944
    %v3996 = vadd.f32 %v3773, %v3947
    %v3997 = vadd.f32 %v3774, %v3949
    %v3998 = vadd.f32 %v3775, %v3952
    %v3999 = vadd.f32 %v3776, %v3954
    %v4000 = vadd.f32 %v3777, %v3957
    %v4001 = vadd.f32 %v3778, %v3959
    %v4002 = vadd.f32 %v3779, %v3962
    %v4003 = vadd.f32 %v3780, %v3964
    %v4004 = vadd.f32 %v3781, %v3967
    %v4005 = vadd.f32 %v3782, %v3969
    %v4006 = vadd.f32 %v3783, %v3972
    %v4007 = vadd.f32 %v3784, %v3974
    %s4008 = sadd.s32 %s2509, 514
    %s4009 = scalar_lea.vmem [#allocation2], %s4008
    %v4010 = vld [vmem:[%s4009] sm:$0xff]
    %v4011 = vld [vmem:[%s4009 + $0x8] sm:$0xff]
    %v4012 = vld [vmem:[%s4009 + $0x10] sm:$0xff]
    %v4013 = vld [vmem:[%s4009 + $0x18] sm:$0xff]
    %v4014 = vld [vmem:[%s4009 + $0x20] sm:$0xff]
    %v4015 = vld [vmem:[%s4009 + $0x28] sm:$0xff]
    %v4016 = vld [vmem:[%s4009 + $0x30] sm:$0xff]
    %v4017 = vld [vmem:[%s4009 + $0x38] sm:$0xff]
    %v4018 = vld [vmem:[%s4009 + $0x40] sm:$0xff]
    %v4019 = vld [vmem:[%s4009 + $0x48] sm:$0xff]
    %v4020 = vld [vmem:[%s4009 + $0x50] sm:$0xff]
    %v4021 = vld [vmem:[%s4009 + $0x58] sm:$0xff]
    %v4022 = vld [vmem:[%s4009 + $0x60] sm:$0xff]
    %v4023 = vld [vmem:[%s4009 + $0x68] sm:$0xff]
    %v4024 = vld [vmem:[%s4009 + $0x70] sm:$0xff]
    %v4025 = vld [vmem:[%s4009 + $0x78] sm:$0xff]
    %v4026 = vld [vmem:[%s4009 + $0x80] sm:$0xff]
    %v4027 = vld [vmem:[%s4009 + $0x88] sm:$0xff]
    %v4028 = vld [vmem:[%s4009 + $0x90] sm:$0xff]
    %v4029 = vld [vmem:[%s4009 + $0x98] sm:$0xff]
    %v4030 = vld [vmem:[%s4009 + $0xa0] sm:$0xff]
    %v4031 = vld [vmem:[%s4009 + $0xa8] sm:$0xff]
    %v4032 = vld [vmem:[%s4009 + $0xb0] sm:$0xff]
    %v4033 = vld [vmem:[%s4009 + $0xb8] sm:$0xff]
    %v4034 = vld [vmem:[%s4009 + $0xc0] sm:$0xff]
    %v4035 = vld [vmem:[%s4009 + $0xc8] sm:$0xff]
    %v4036 = vld [vmem:[%s4009 + $0xd0] sm:$0xff]
    %v4037 = vld [vmem:[%s4009 + $0xd8] sm:$0xff]
    %v4038 = vld [vmem:[%s4009 + $0xe0] sm:$0xff]
    %v4039 = vld [vmem:[%s4009 + $0xe8] sm:$0xff]
    %v4040 = vld [vmem:[%s4009 + $0xf0] sm:$0xff]
    %v4041 = vld [vmem:[%s4009 + $0xf8] sm:$0xff]
    %v4042 = vpack.c.bf16 %v4011, %v4010
    %v4043 = vpack.c.bf16 %v4013, %v4012
    %v4044 = vpack.c.bf16 %v4015, %v4014
    %v4045 = vpack.c.bf16 %v4017, %v4016
    %v4046 = vpack.c.bf16 %v4019, %v4018
    %v4047 = vpack.c.bf16 %v4021, %v4020
    %v4048 = vpack.c.bf16 %v4023, %v4022
    %v4049 = vpack.c.bf16 %v4025, %v4024
    %v4050 = vpack.c.bf16 %v4027, %v4026
    %v4051 = vpack.c.bf16 %v4029, %v4028
    %v4052 = vpack.c.bf16 %v4031, %v4030
    %v4053 = vpack.c.bf16 %v4033, %v4032
    %v4054 = vpack.c.bf16 %v4035, %v4034
    %v4055 = vpack.c.bf16 %v4037, %v4036
    %v4056 = vpack.c.bf16 %v4039, %v4038
    %v4057 = vpack.c.bf16 %v4041, %v4040
    %v4058 = vpack.c.bf16 %v2500, %v2500
    %v4060 = vsel %vm2611, %v4042, 0
    %v4063 = vsel %vm2611, %v4043, 0
    %v4066 = vsel %vm2611, %v4044, 0
    %v4069 = vsel %vm2611, %v4045, 0
    %v4072 = vsel %vm2611, %v4046, 0
    %v4075 = vsel %vm2611, %v4047, 0
    %v4078 = vsel %vm2611, %v4048, 0
    %v4081 = vsel %vm2611, %v4049, 0
    %v4084 = vsel %vm2611, %v4050, 0
    %v4087 = vsel %vm2611, %v4051, 0
    %v4090 = vsel %vm2611, %v4052, 0
    %v4093 = vsel %vm2611, %v4053, 0
    %v4096 = vsel %vm2611, %v4054, 0
    %v4099 = vsel %vm2611, %v4055, 0
    %v4102 = vsel %vm2611, %v4056, 0
    %v4105 = vsel %vm2611, %v4057, 0
    %v4108 = vsel %vm2660, %v4058, 0
    %4110 = vmatpush.bf16.msra.mxu0 0
    %4111 = vmatpush.bf16.msra.mxu0 0
    %4112 = vmatpush.bf16.msra.mxu0 0
    %4113 = vmatpush.bf16.msra.mxu0 0
    %4114 = vmatpush.bf16.msra.mxu0 0
    %4115 = vmatpush.bf16.msra.mxu0 0
    %4116 = vmatpush.bf16.msra.mxu0 0
    %4117 = vmatpush.bf16.msra.mxu0 %v4108
    %4118 = vmatmul.bf16.gmra.mxu0 %v4060
    %v4119 = vpop.f32.mrf.mxu0
    %v4120 = vadd.f32 0.0, %v4119
    %v4121 = vpop.f32.mrf.mxu0
    %v4122 = vadd.f32 0.0, %v4121
    %4123 = vmatmul.bf16.gmra.mxu0 %v4063
    %v4124 = vpop.f32.mrf.mxu0
    %v4125 = vadd.f32 0.0, %v4124
    %v4126 = vpop.f32.mrf.mxu0
    %v4127 = vadd.f32 0.0, %v4126
    %4128 = vmatmul.bf16.gmra.mxu0 %v4066
    %v4129 = vpop.f32.mrf.mxu0
    %v4130 = vadd.f32 0.0, %v4129
    %v4131 = vpop.f32.mrf.mxu0
    %v4132 = vadd.f32 0.0, %v4131
    %4133 = vmatmul.bf16.gmra.mxu0 %v4069
    %v4134 = vpop.f32.mrf.mxu0
    %v4135 = vadd.f32 0.0, %v4134
    %v4136 = vpop.f32.mrf.mxu0
    %v4137 = vadd.f32 0.0, %v4136
    %4138 = vmatmul.bf16.gmra.mxu0 %v4072
    %v4139 = vpop.f32.mrf.mxu0
    %v4140 = vadd.f32 0.0, %v4139
    %v4141 = vpop.f32.mrf.mxu0
    %v4142 = vadd.f32 0.0, %v4141
    %4143 = vmatmul.bf16.gmra.mxu0 %v4075
    %v4144 = vpop.f32.mrf.mxu0
    %v4145 = vadd.f32 0.0, %v4144
    %v4146 = vpop.f32.mrf.mxu0
    %v4147 = vadd.f32 0.0, %v4146
    %4148 = vmatmul.bf16.gmra.mxu0 %v4078
    %v4149 = vpop.f32.mrf.mxu0
    %v4150 = vadd.f32 0.0, %v4149
    %v4151 = vpop.f32.mrf.mxu0
    %v4152 = vadd.f32 0.0, %v4151
    %4153 = vmatmul.bf16.gmra.mxu0 %v4081
    %v4154 = vpop.f32.mrf.mxu0
    %v4155 = vadd.f32 0.0, %v4154
    %v4156 = vpop.f32.mrf.mxu0
    %v4157 = vadd.f32 0.0, %v4156
    %4158 = vmatmul.bf16.gmra.mxu0 %v4084
    %v4159 = vpop.f32.mrf.mxu0
    %v4160 = vadd.f32 0.0, %v4159
    %v4161 = vpop.f32.mrf.mxu0
    %v4162 = vadd.f32 0.0, %v4161
    %4163 = vmatmul.bf16.gmra.mxu0 %v4087
    %v4164 = vpop.f32.mrf.mxu0
    %v4165 = vadd.f32 0.0, %v4164
    %v4166 = vpop.f32.mrf.mxu0
    %v4167 = vadd.f32 0.0, %v4166
    %4168 = vmatmul.bf16.gmra.mxu0 %v4090
    %v4169 = vpop.f32.mrf.mxu0
    %v4170 = vadd.f32 0.0, %v4169
    %v4171 = vpop.f32.mrf.mxu0
    %v4172 = vadd.f32 0.0, %v4171
    %4173 = vmatmul.bf16.gmra.mxu0 %v4093
    %v4174 = vpop.f32.mrf.mxu0
    %v4175 = vadd.f32 0.0, %v4174
    %v4176 = vpop.f32.mrf.mxu0
    %v4177 = vadd.f32 0.0, %v4176
    %4178 = vmatmul.bf16.gmra.mxu0 %v4096
    %v4179 = vpop.f32.mrf.mxu0
    %v4180 = vadd.f32 0.0, %v4179
    %v4181 = vpop.f32.mrf.mxu0
    %v4182 = vadd.f32 0.0, %v4181
    %4183 = vmatmul.bf16.gmra.mxu0 %v4099
    %v4184 = vpop.f32.mrf.mxu0
    %v4185 = vadd.f32 0.0, %v4184
    %v4186 = vpop.f32.mrf.mxu0
    %v4187 = vadd.f32 0.0, %v4186
    %4188 = vmatmul.bf16.gmra.mxu0 %v4102
    %v4189 = vpop.f32.mrf.mxu0
    %v4190 = vadd.f32 0.0, %v4189
    %v4191 = vpop.f32.mrf.mxu0
    %v4192 = vadd.f32 0.0, %v4191
    %4193 = vmatmul.bf16.gmra.mxu0 %v4105
    %v4194 = vpop.f32.mrf.mxu0
    %v4195 = vadd.f32 0.0, %v4194
    %v4196 = vpop.f32.mrf.mxu0
    %v4197 = vadd.f32 0.0, %v4196
    %4198 = vdwg.mxu0
    %v4199 = vadd.f32 %v3976, %v4120
    %v4200 = vadd.f32 %v3977, %v4122
    %v4201 = vadd.f32 %v3978, %v4125
    %v4202 = vadd.f32 %v3979, %v4127
    %v4203 = vadd.f32 %v3980, %v4130
    %v4204 = vadd.f32 %v3981, %v4132
    %v4205 = vadd.f32 %v3982, %v4135
    %v4206 = vadd.f32 %v3983, %v4137
    %v4207 = vadd.f32 %v3984, %v4140
    %v4208 = vadd.f32 %v3985, %v4142
    %v4209 = vadd.f32 %v3986, %v4145
    %v4210 = vadd.f32 %v3987, %v4147
    %v4211 = vadd.f32 %v3988, %v4150
    %v4212 = vadd.f32 %v3989, %v4152
    %v4213 = vadd.f32 %v3990, %v4155
    %v4214 = vadd.f32 %v3991, %v4157
    %v4215 = vadd.f32 %v3992, %v4160
    %v4216 = vadd.f32 %v3993, %v4162
    %v4217 = vadd.f32 %v3994, %v4165
    %v4218 = vadd.f32 %v3995, %v4167
    %v4219 = vadd.f32 %v3996, %v4170
    %v4220 = vadd.f32 %v3997, %v4172
    %v4221 = vadd.f32 %v3998, %v4175
    %v4222 = vadd.f32 %v3999, %v4177
    %v4223 = vadd.f32 %v4000, %v4180
    %v4224 = vadd.f32 %v4001, %v4182
    %v4225 = vadd.f32 %v4002, %v4185
    %v4226 = vadd.f32 %v4003, %v4187
    %v4227 = vadd.f32 %v4004, %v4190
    %v4228 = vadd.f32 %v4005, %v4192
    %v4229 = vadd.f32 %v4006, %v4195
    %v4230 = vadd.f32 %v4007, %v4197
    %s4231 = sadd.s32 %s2509, 516
    %s4232 = scalar_lea.vmem [#allocation2], %s4231
    %v4233 = vld [vmem:[%s4232] sm:$0xff]
    %v4234 = vld [vmem:[%s4232 + $0x8] sm:$0xff]
    %v4235 = vld [vmem:[%s4232 + $0x10] sm:$0xff]
    %v4236 = vld [vmem:[%s4232 + $0x18] sm:$0xff]
    %v4237 = vld [vmem:[%s4232 + $0x20] sm:$0xff]
    %v4238 = vld [vmem:[%s4232 + $0x28] sm:$0xff]
    %v4239 = vld [vmem:[%s4232 + $0x30] sm:$0xff]
    %v4240 = vld [vmem:[%s4232 + $0x38] sm:$0xff]
    %v4241 = vld [vmem:[%s4232 + $0x40] sm:$0xff]
    %v4242 = vld [vmem:[%s4232 + $0x48] sm:$0xff]
    %v4243 = vld [vmem:[%s4232 + $0x50] sm:$0xff]
    %v4244 = vld [vmem:[%s4232 + $0x58] sm:$0xff]
    %v4245 = vld [vmem:[%s4232 + $0x60] sm:$0xff]
    %v4246 = vld [vmem:[%s4232 + $0x68] sm:$0xff]
    %v4247 = vld [vmem:[%s4232 + $0x70] sm:$0xff]
    %v4248 = vld [vmem:[%s4232 + $0x78] sm:$0xff]
    %v4249 = vld [vmem:[%s4232 + $0x80] sm:$0xff]
    %v4250 = vld [vmem:[%s4232 + $0x88] sm:$0xff]
    %v4251 = vld [vmem:[%s4232 + $0x90] sm:$0xff]
    %v4252 = vld [vmem:[%s4232 + $0x98] sm:$0xff]
    %v4253 = vld [vmem:[%s4232 + $0xa0] sm:$0xff]
    %v4254 = vld [vmem:[%s4232 + $0xa8] sm:$0xff]
    %v4255 = vld [vmem:[%s4232 + $0xb0] sm:$0xff]
    %v4256 = vld [vmem:[%s4232 + $0xb8] sm:$0xff]
    %v4257 = vld [vmem:[%s4232 + $0xc0] sm:$0xff]
    %v4258 = vld [vmem:[%s4232 + $0xc8] sm:$0xff]
    %v4259 = vld [vmem:[%s4232 + $0xd0] sm:$0xff]
    %v4260 = vld [vmem:[%s4232 + $0xd8] sm:$0xff]
    %v4261 = vld [vmem:[%s4232 + $0xe0] sm:$0xff]
    %v4262 = vld [vmem:[%s4232 + $0xe8] sm:$0xff]
    %v4263 = vld [vmem:[%s4232 + $0xf0] sm:$0xff]
    %v4264 = vld [vmem:[%s4232 + $0xf8] sm:$0xff]
    %v4265 = vpack.c.bf16 %v4234, %v4233
    %v4266 = vpack.c.bf16 %v4236, %v4235
    %v4267 = vpack.c.bf16 %v4238, %v4237
    %v4268 = vpack.c.bf16 %v4240, %v4239
    %v4269 = vpack.c.bf16 %v4242, %v4241
    %v4270 = vpack.c.bf16 %v4244, %v4243
    %v4271 = vpack.c.bf16 %v4246, %v4245
    %v4272 = vpack.c.bf16 %v4248, %v4247
    %v4273 = vpack.c.bf16 %v4250, %v4249
    %v4274 = vpack.c.bf16 %v4252, %v4251
    %v4275 = vpack.c.bf16 %v4254, %v4253
    %v4276 = vpack.c.bf16 %v4256, %v4255
    %v4277 = vpack.c.bf16 %v4258, %v4257
    %v4278 = vpack.c.bf16 %v4260, %v4259
    %v4279 = vpack.c.bf16 %v4262, %v4261
    %v4280 = vpack.c.bf16 %v4264, %v4263
    %v4281 = vpack.c.bf16 %v2501, %v2501
    %v4283 = vsel %vm2611, %v4265, 0
    %v4286 = vsel %vm2611, %v4266, 0
    %v4289 = vsel %vm2611, %v4267, 0
    %v4292 = vsel %vm2611, %v4268, 0
    %v4295 = vsel %vm2611, %v4269, 0
    %v4298 = vsel %vm2611, %v4270, 0
    %v4301 = vsel %vm2611, %v4271, 0
    %v4304 = vsel %vm2611, %v4272, 0
    %v4307 = vsel %vm2611, %v4273, 0
    %v4310 = vsel %vm2611, %v4274, 0
    %v4313 = vsel %vm2611, %v4275, 0
    %v4316 = vsel %vm2611, %v4276, 0
    %v4319 = vsel %vm2611, %v4277, 0
    %v4322 = vsel %vm2611, %v4278, 0
    %v4325 = vsel %vm2611, %v4279, 0
    %v4328 = vsel %vm2611, %v4280, 0
    %v4331 = vsel %vm2660, %v4281, 0
    %4333 = vmatpush.bf16.msra.mxu0 0
    %4334 = vmatpush.bf16.msra.mxu0 0
    %4335 = vmatpush.bf16.msra.mxu0 0
    %4336 = vmatpush.bf16.msra.mxu0 0
    %4337 = vmatpush.bf16.msra.mxu0 0
    %4338 = vmatpush.bf16.msra.mxu0 0
    %4339 = vmatpush.bf16.msra.mxu0 0
    %4340 = vmatpush.bf16.msra.mxu0 %v4331
    %4341 = vmatmul.bf16.gmra.mxu0 %v4283
    %v4342 = vpop.f32.mrf.mxu0
    %v4343 = vadd.f32 0.0, %v4342
    %v4344 = vpop.f32.mrf.mxu0
    %v4345 = vadd.f32 0.0, %v4344
    %4346 = vmatmul.bf16.gmra.mxu0 %v4286
    %v4347 = vpop.f32.mrf.mxu0
    %v4348 = vadd.f32 0.0, %v4347
    %v4349 = vpop.f32.mrf.mxu0
    %v4350 = vadd.f32 0.0, %v4349
    %4351 = vmatmul.bf16.gmra.mxu0 %v4289
    %v4352 = vpop.f32.mrf.mxu0
    %v4353 = vadd.f32 0.0, %v4352
    %v4354 = vpop.f32.mrf.mxu0
    %v4355 = vadd.f32 0.0, %v4354
    %4356 = vmatmul.bf16.gmra.mxu0 %v4292
    %v4357 = vpop.f32.mrf.mxu0
    %v4358 = vadd.f32 0.0, %v4357
    %v4359 = vpop.f32.mrf.mxu0
    %v4360 = vadd.f32 0.0, %v4359
    %4361 = vmatmul.bf16.gmra.mxu0 %v4295
    %v4362 = vpop.f32.mrf.mxu0
    %v4363 = vadd.f32 0.0, %v4362
    %v4364 = vpop.f32.mrf.mxu0
    %v4365 = vadd.f32 0.0, %v4364
    %4366 = vmatmul.bf16.gmra.mxu0 %v4298
    %v4367 = vpop.f32.mrf.mxu0
    %v4368 = vadd.f32 0.0, %v4367
    %v4369 = vpop.f32.mrf.mxu0
    %v4370 = vadd.f32 0.0, %v4369
    %4371 = vmatmul.bf16.gmra.mxu0 %v4301
    %v4372 = vpop.f32.mrf.mxu0
    %v4373 = vadd.f32 0.0, %v4372
    %v4374 = vpop.f32.mrf.mxu0
    %v4375 = vadd.f32 0.0, %v4374
    %4376 = vmatmul.bf16.gmra.mxu0 %v4304
    %v4377 = vpop.f32.mrf.mxu0
    %v4378 = vadd.f32 0.0, %v4377
    %v4379 = vpop.f32.mrf.mxu0
    %v4380 = vadd.f32 0.0, %v4379
    %4381 = vmatmul.bf16.gmra.mxu0 %v4307
    %v4382 = vpop.f32.mrf.mxu0
    %v4383 = vadd.f32 0.0, %v4382
    %v4384 = vpop.f32.mrf.mxu0
    %v4385 = vadd.f32 0.0, %v4384
    %4386 = vmatmul.bf16.gmra.mxu0 %v4310
    %v4387 = vpop.f32.mrf.mxu0
    %v4388 = vadd.f32 0.0, %v4387
    %v4389 = vpop.f32.mrf.mxu0
    %v4390 = vadd.f32 0.0, %v4389
    %4391 = vmatmul.bf16.gmra.mxu0 %v4313
    %v4392 = vpop.f32.mrf.mxu0
    %v4393 = vadd.f32 0.0, %v4392
    %v4394 = vpop.f32.mrf.mxu0
    %v4395 = vadd.f32 0.0, %v4394
    %4396 = vmatmul.bf16.gmra.mxu0 %v4316
    %v4397 = vpop.f32.mrf.mxu0
    %v4398 = vadd.f32 0.0, %v4397
    %v4399 = vpop.f32.mrf.mxu0
    %v4400 = vadd.f32 0.0, %v4399
    %4401 = vmatmul.bf16.gmra.mxu0 %v4319
    %v4402 = vpop.f32.mrf.mxu0
    %v4403 = vadd.f32 0.0, %v4402
    %v4404 = vpop.f32.mrf.mxu0
    %v4405 = vadd.f32 0.0, %v4404
    %4406 = vmatmul.bf16.gmra.mxu0 %v4322
    %v4407 = vpop.f32.mrf.mxu0
    %v4408 = vadd.f32 0.0, %v4407
    %v4409 = vpop.f32.mrf.mxu0
    %v4410 = vadd.f32 0.0, %v4409
    %4411 = vmatmul.bf16.gmra.mxu0 %v4325
    %v4412 = vpop.f32.mrf.mxu0
    %v4413 = vadd.f32 0.0, %v4412
    %v4414 = vpop.f32.mrf.mxu0
    %v4415 = vadd.f32 0.0, %v4414
    %4416 = vmatmul.bf16.gmra.mxu0 %v4328
    %v4417 = vpop.f32.mrf.mxu0
    %v4418 = vadd.f32 0.0, %v4417
    %v4419 = vpop.f32.mrf.mxu0
    %v4420 = vadd.f32 0.0, %v4419
    %4421 = vdwg.mxu0
    %v4422 = vadd.f32 %v4199, %v4343
    %v4423 = vadd.f32 %v4200, %v4345
    %v4424 = vadd.f32 %v4201, %v4348
    %v4425 = vadd.f32 %v4202, %v4350
    %v4426 = vadd.f32 %v4203, %v4353
    %v4427 = vadd.f32 %v4204, %v4355
    %v4428 = vadd.f32 %v4205, %v4358
    %v4429 = vadd.f32 %v4206, %v4360
    %v4430 = vadd.f32 %v4207, %v4363
    %v4431 = vadd.f32 %v4208, %v4365
    %v4432 = vadd.f32 %v4209, %v4368
    %v4433 = vadd.f32 %v4210, %v4370
    %v4434 = vadd.f32 %v4211, %v4373
    %v4435 = vadd.f32 %v4212, %v4375
    %v4436 = vadd.f32 %v4213, %v4378
    %v4437 = vadd.f32 %v4214, %v4380
    %v4438 = vadd.f32 %v4215, %v4383
    %v4439 = vadd.f32 %v4216, %v4385
    %v4440 = vadd.f32 %v4217, %v4388
    %v4441 = vadd.f32 %v4218, %v4390
    %v4442 = vadd.f32 %v4219, %v4393
    %v4443 = vadd.f32 %v4220, %v4395
    %v4444 = vadd.f32 %v4221, %v4398
    %v4445 = vadd.f32 %v4222, %v4400
    %v4446 = vadd.f32 %v4223, %v4403
    %v4447 = vadd.f32 %v4224, %v4405
    %v4448 = vadd.f32 %v4225, %v4408
    %v4449 = vadd.f32 %v4226, %v4410
    %v4450 = vadd.f32 %v4227, %v4413
    %v4451 = vadd.f32 %v4228, %v4415
    %v4452 = vadd.f32 %v4229, %v4418
    %v4453 = vadd.f32 %v4230, %v4420
    %v4455 = vperm.slane %v2502, 0
    %v4457 = vadd.f32 %v4422, %v4455
    %v4458 = vadd.f32 %v4423, %v4455
    %v4459 = vadd.f32 %v4424, %v4455
    %v4460 = vadd.f32 %v4425, %v4455
    %v4461 = vadd.f32 %v4426, %v4455
    %v4462 = vadd.f32 %v4427, %v4455
    %v4463 = vadd.f32 %v4428, %v4455
    %v4464 = vadd.f32 %v4429, %v4455
    %v4465 = vadd.f32 %v4430, %v4455
    %v4466 = vadd.f32 %v4431, %v4455
    %v4467 = vadd.f32 %v4432, %v4455
    %v4468 = vadd.f32 %v4433, %v4455
    %v4469 = vadd.f32 %v4434, %v4455
    %v4470 = vadd.f32 %v4435, %v4455
    %v4471 = vadd.f32 %v4436, %v4455
    %v4472 = vadd.f32 %v4437, %v4455
    %v4473 = vadd.f32 %v4438, %v4455
    %v4474 = vadd.f32 %v4439, %v4455
    %v4475 = vadd.f32 %v4440, %v4455
    %v4476 = vadd.f32 %v4441, %v4455
    %v4477 = vadd.f32 %v4442, %v4455
    %v4478 = vadd.f32 %v4443, %v4455
    %v4479 = vadd.f32 %v4444, %v4455
    %v4480 = vadd.f32 %v4445, %v4455
    %v4481 = vadd.f32 %v4446, %v4455
    %v4482 = vadd.f32 %v4447, %v4455
    %v4483 = vadd.f32 %v4448, %v4455
    %v4484 = vadd.f32 %v4449, %v4455
    %v4485 = vadd.f32 %v4450, %v4455
    %v4486 = vadd.f32 %v4451, %v4455
    %v4487 = vadd.f32 %v4452, %v4455
    %v4488 = vadd.f32 %v4453, %v4455
    %v4489 = vmax.f32 %v4457, 0.0
    %v4490 = vmax.f32 %v4458, 0.0
    %v4491 = vmax.f32 %v4459, 0.0
    %v4492 = vmax.f32 %v4460, 0.0
    %v4493 = vmax.f32 %v4461, 0.0
    %v4494 = vmax.f32 %v4462, 0.0
    %v4495 = vmax.f32 %v4463, 0.0
    %v4496 = vmax.f32 %v4464, 0.0
    %v4497 = vmax.f32 %v4465, 0.0
    %v4498 = vmax.f32 %v4466, 0.0
    %v4499 = vmax.f32 %v4467, 0.0
    %v4500 = vmax.f32 %v4468, 0.0
    %v4501 = vmax.f32 %v4469, 0.0
    %v4502 = vmax.f32 %v4470, 0.0
    %v4503 = vmax.f32 %v4471, 0.0
    %v4504 = vmax.f32 %v4472, 0.0
    %v4505 = vmax.f32 %v4473, 0.0
    %v4506 = vmax.f32 %v4474, 0.0
    %v4507 = vmax.f32 %v4475, 0.0
    %v4508 = vmax.f32 %v4476, 0.0
    %v4509 = vmax.f32 %v4477, 0.0
    %v4510 = vmax.f32 %v4478, 0.0
    %v4511 = vmax.f32 %v4479, 0.0
    %v4512 = vmax.f32 %v4480, 0.0
    %v4513 = vmax.f32 %v4481, 0.0
    %v4514 = vmax.f32 %v4482, 0.0
    %v4515 = vmax.f32 %v4483, 0.0
    %v4516 = vmax.f32 %v4484, 0.0
    %v4517 = vmax.f32 %v4485, 0.0
    %v4518 = vmax.f32 %v4486, 0.0
    %v4519 = vmax.f32 %v4487, 0.0
    %v4520 = vmax.f32 %v4488, 0.0
    %s4521 = scalar_lea.vmem [#allocation3], %s2509
    %4522 = vst.msk [vmem:[%s4521] sm:$0xff] %vm2611, %v4489
    %4523 = vst.msk [vmem:[%s4521 + $0x8] sm:$0xff] %vm2611, %v4490
    %4524 = vst.msk [vmem:[%s4521 + $0x10] sm:$0xff] %vm2611, %v4491
    %4525 = vst.msk [vmem:[%s4521 + $0x18] sm:$0xff] %vm2611, %v4492
    %4526 = vst.msk [vmem:[%s4521 + $0x20] sm:$0xff] %vm2611, %v4493
    %4527 = vst.msk [vmem:[%s4521 + $0x28] sm:$0xff] %vm2611, %v4494
    %4528 = vst.msk [vmem:[%s4521 + $0x30] sm:$0xff] %vm2611, %v4495
    %4529 = vst.msk [vmem:[%s4521 + $0x38] sm:$0xff] %vm2611, %v4496
    %4530 = vst.msk [vmem:[%s4521 + $0x40] sm:$0xff] %vm2611, %v4497
    %4531 = vst.msk [vmem:[%s4521 + $0x48] sm:$0xff] %vm2611, %v4498
    %4532 = vst.msk [vmem:[%s4521 + $0x50] sm:$0xff] %vm2611, %v4499
    %4533 = vst.msk [vmem:[%s4521 + $0x58] sm:$0xff] %vm2611, %v4500
    %4534 = vst.msk [vmem:[%s4521 + $0x60] sm:$0xff] %vm2611, %v4501
    %4535 = vst.msk [vmem:[%s4521 + $0x68] sm:$0xff] %vm2611, %v4502
    %4536 = vst.msk [vmem:[%s4521 + $0x70] sm:$0xff] %vm2611, %v4503
    %4537 = vst.msk [vmem:[%s4521 + $0x78] sm:$0xff] %vm2611, %v4504
    %4538 = vst.msk [vmem:[%s4521 + $0x80] sm:$0xff] %vm2611, %v4505
    %4539 = vst.msk [vmem:[%s4521 + $0x88] sm:$0xff] %vm2611, %v4506
    %4540 = vst.msk [vmem:[%s4521 + $0x90] sm:$0xff] %vm2611, %v4507
    %4541 = vst.msk [vmem:[%s4521 + $0x98] sm:$0xff] %vm2611, %v4508
    %4542 = vst.msk [vmem:[%s4521 + $0xa0] sm:$0xff] %vm2611, %v4509
    %4543 = vst.msk [vmem:[%s4521 + $0xa8] sm:$0xff] %vm2611, %v4510
    %4544 = vst.msk [vmem:[%s4521 + $0xb0] sm:$0xff] %vm2611, %v4511
    %4545 = vst.msk [vmem:[%s4521 + $0xb8] sm:$0xff] %vm2611, %v4512
    %4546 = vst.msk [vmem:[%s4521 + $0xc0] sm:$0xff] %vm2611, %v4513
    %4547 = vst.msk [vmem:[%s4521 + $0xc8] sm:$0xff] %vm2611, %v4514
    %4548 = vst.msk [vmem:[%s4521 + $0xd0] sm:$0xff] %vm2611, %v4515
    %4549 = vst.msk [vmem:[%s4521 + $0xd8] sm:$0xff] %vm2611, %v4516
    %4550 = vst.msk [vmem:[%s4521 + $0xe0] sm:$0xff] %vm2611, %v4517
    %4551 = vst.msk [vmem:[%s4521 + $0xe8] sm:$0xff] %vm2611, %v4518
    %4552 = vst.msk [vmem:[%s4521 + $0xf0] sm:$0xff] %vm2611, %v4519
    %4553 = vst.msk [vmem:[%s4521 + $0xf8] sm:$0xff] %vm2611, %v4520
  $region41: #{forward.2} parent=0 // loop_footer
    %s2508 = sadd.s32 1, %s2504
  $region42: #{forward.2} parent=0 // loop_footer_branch
    %2503 = sbr.rel target = $region38
  $region43: #{forward.2} parent=0 // loop_exit
    _
  %v4554 = vld [vmem:[%s5] sm:$0xff]
  %v4555 = vld [vmem:[%s5 + $0x8] sm:$0xff]
  %v4556 = vld [vmem:[%s5 + $0x10] sm:$0xff]
  %v4557 = vld [vmem:[%s5 + $0x18] sm:$0xff]
  %v4558 = vld [vmem:[%s5 + $0x20] sm:$0xff]
  %v4559 = vld [vmem:[%s5 + $0x28] sm:$0xff]
  %v4560 = vld [vmem:[%s5 + $0x30] sm:$0xff]
  %v4561 = vld [vmem:[%s5 + $0x38] sm:$0xff]
  %v4562 = vld [vmem:[%s5 + $0x40] sm:$0xff]
  %v4563 = vld [vmem:[%s6] sm:$0x1]
  loop: start=0, step=1, limit=32
  $region44: #{forward.2} parent=0 // loop_pre_header
    _
  $region45: #{forward.2} parent=0 // loop_header
    %s4565 = sphi 0, %s4569
    %p4566 = scmp.ge.s32.totalorder %s4565, 32
  $region46: #{forward.2} parent=0 // loop_header_branch
    %4568 = sbr.rel (%p4566) target = $region50
  $region47: #{forward.2} parent=0 // loop_body
    %s4570 = smul.u32 %s4565, 256
    %s4571 = scalar_lea.vmem [#allocation3], %s4570
    %v4572 = vld [vmem:[%s4571] sm:$0xff]
    %v4573 = vld [vmem:[%s4571 + $0x8] sm:$0xff]
    %v4574 = vld [vmem:[%s4571 + $0x10] sm:$0xff]
    %v4575 = vld [vmem:[%s4571 + $0x18] sm:$0xff]
    %v4576 = vld [vmem:[%s4571 + $0x20] sm:$0xff]
    %v4577 = vld [vmem:[%s4571 + $0x28] sm:$0xff]
    %v4578 = vld [vmem:[%s4571 + $0x30] sm:$0xff]
    %v4579 = vld [vmem:[%s4571 + $0x38] sm:$0xff]
    %v4580 = vld [vmem:[%s4571 + $0x40] sm:$0xff]
    %v4581 = vld [vmem:[%s4571 + $0x48] sm:$0xff]
    %v4582 = vld [vmem:[%s4571 + $0x50] sm:$0xff]
    %v4583 = vld [vmem:[%s4571 + $0x58] sm:$0xff]
    %v4584 = vld [vmem:[%s4571 + $0x60] sm:$0xff]
    %v4585 = vld [vmem:[%s4571 + $0x68] sm:$0xff]
    %v4586 = vld [vmem:[%s4571 + $0x70] sm:$0xff]
    %v4587 = vld [vmem:[%s4571 + $0x78] sm:$0xff]
    %v4588 = vld [vmem:[%s4571 + $0x80] sm:$0xff]
    %v4589 = vld [vmem:[%s4571 + $0x88] sm:$0xff]
    %v4590 = vld [vmem:[%s4571 + $0x90] sm:$0xff]
    %v4591 = vld [vmem:[%s4571 + $0x98] sm:$0xff]
    %v4592 = vld [vmem:[%s4571 + $0xa0] sm:$0xff]
    %v4593 = vld [vmem:[%s4571 + $0xa8] sm:$0xff]
    %v4594 = vld [vmem:[%s4571 + $0xb0] sm:$0xff]
    %v4595 = vld [vmem:[%s4571 + $0xb8] sm:$0xff]
    %v4596 = vld [vmem:[%s4571 + $0xc0] sm:$0xff]
    %v4597 = vld [vmem:[%s4571 + $0xc8] sm:$0xff]
    %v4598 = vld [vmem:[%s4571 + $0xd0] sm:$0xff]
    %v4599 = vld [vmem:[%s4571 + $0xd8] sm:$0xff]
    %v4600 = vld [vmem:[%s4571 + $0xe0] sm:$0xff]
    %v4601 = vld [vmem:[%s4571 + $0xe8] sm:$0xff]
    %v4602 = vld [vmem:[%s4571 + $0xf0] sm:$0xff]
    %v4603 = vld [vmem:[%s4571 + $0xf8] sm:$0xff]
    %v4604 = vpack.c.bf16 %v4573, %v4572
    %v4605 = vpack.c.bf16 %v4575, %v4574
    %v4606 = vpack.c.bf16 %v4577, %v4576
    %v4607 = vpack.c.bf16 %v4579, %v4578
    %v4608 = vpack.c.bf16 %v4581, %v4580
    %v4609 = vpack.c.bf16 %v4583, %v4582
    %v4610 = vpack.c.bf16 %v4585, %v4584
    %v4611 = vpack.c.bf16 %v4587, %v4586
    %v4612 = vpack.c.bf16 %v4589, %v4588
    %v4613 = vpack.c.bf16 %v4591, %v4590
    %v4614 = vpack.c.bf16 %v4593, %v4592
    %v4615 = vpack.c.bf16 %v4595, %v4594
    %v4616 = vpack.c.bf16 %v4597, %v4596
    %v4617 = vpack.c.bf16 %v4599, %v4598
    %v4618 = vpack.c.bf16 %v4601, %v4600
    %v4619 = vpack.c.bf16 %v4603, %v4602
    %v4620 = vpack.c.bf16 %v4554, %v4554
    %s4621 = sadd.s32 %s4570, 2
    %s4622 = scalar_lea.vmem [#allocation3], %s4621
    %v4623 = vld [vmem:[%s4622] sm:$0xff]
    %v4624 = vld [vmem:[%s4622 + $0x8] sm:$0xff]
    %v4625 = vld [vmem:[%s4622 + $0x10] sm:$0xff]
    %v4626 = vld [vmem:[%s4622 + $0x18] sm:$0xff]
    %v4627 = vld [vmem:[%s4622 + $0x20] sm:$0xff]
    %v4628 = vld [vmem:[%s4622 + $0x28] sm:$0xff]
    %v4629 = vld [vmem:[%s4622 + $0x30] sm:$0xff]
    %v4630 = vld [vmem:[%s4622 + $0x38] sm:$0xff]
    %v4631 = vld [vmem:[%s4622 + $0x40] sm:$0xff]
    %v4632 = vld [vmem:[%s4622 + $0x48] sm:$0xff]
    %v4633 = vld [vmem:[%s4622 + $0x50] sm:$0xff]
    %v4634 = vld [vmem:[%s4622 + $0x58] sm:$0xff]
    %v4635 = vld [vmem:[%s4622 + $0x60] sm:$0xff]
    %v4636 = vld [vmem:[%s4622 + $0x68] sm:$0xff]
    %v4637 = vld [vmem:[%s4622 + $0x70] sm:$0xff]
    %v4638 = vld [vmem:[%s4622 + $0x78] sm:$0xff]
    %v4639 = vld [vmem:[%s4622 + $0x80] sm:$0xff]
    %v4640 = vld [vmem:[%s4622 + $0x88] sm:$0xff]
    %v4641 = vld [vmem:[%s4622 + $0x90] sm:$0xff]
    %v4642 = vld [vmem:[%s4622 + $0x98] sm:$0xff]
    %v4643 = vld [vmem:[%s4622 + $0xa0] sm:$0xff]
    %v4644 = vld [vmem:[%s4622 + $0xa8] sm:$0xff]
    %v4645 = vld [vmem:[%s4622 + $0xb0] sm:$0xff]
    %v4646 = vld [vmem:[%s4622 + $0xb8] sm:$0xff]
    %v4647 = vld [vmem:[%s4622 + $0xc0] sm:$0xff]
    %v4648 = vld [vmem:[%s4622 + $0xc8] sm:$0xff]
    %v4649 = vld [vmem:[%s4622 + $0xd0] sm:$0xff]
    %v4650 = vld [vmem:[%s4622 + $0xd8] sm:$0xff]
    %v4651 = vld [vmem:[%s4622 + $0xe0] sm:$0xff]
    %v4652 = vld [vmem:[%s4622 + $0xe8] sm:$0xff]
    %v4653 = vld [vmem:[%s4622 + $0xf0] sm:$0xff]
    %v4654 = vld [vmem:[%s4622 + $0xf8] sm:$0xff]
    %v4655 = vpack.c.bf16 %v4624, %v4623
    %v4656 = vpack.c.bf16 %v4626, %v4625
    %v4657 = vpack.c.bf16 %v4628, %v4627
    %v4658 = vpack.c.bf16 %v4630, %v4629
    %v4659 = vpack.c.bf16 %v4632, %v4631
    %v4660 = vpack.c.bf16 %v4634, %v4633
    %v4661 = vpack.c.bf16 %v4636, %v4635
    %v4662 = vpack.c.bf16 %v4638, %v4637
    %v4663 = vpack.c.bf16 %v4640, %v4639
    %v4664 = vpack.c.bf16 %v4642, %v4641
    %v4665 = vpack.c.bf16 %v4644, %v4643
    %v4666 = vpack.c.bf16 %v4646, %v4645
    %v4667 = vpack.c.bf16 %v4648, %v4647
    %v4668 = vpack.c.bf16 %v4650, %v4649
    %v4669 = vpack.c.bf16 %v4652, %v4651
    %v4670 = vpack.c.bf16 %v4654, %v4653
    %v4671 = vpack.c.bf16 %v4555, %v4555
    %vm4672 = vcmask 64512
    %v4674 = vsel %vm4672, %v4655, 0
    %v4677 = vsel %vm4672, %v4656, 0
    %v4680 = vsel %vm4672, %v4657, 0
    %v4683 = vsel %vm4672, %v4658, 0
    %v4686 = vsel %vm4672, %v4659, 0
    %v4689 = vsel %vm4672, %v4660, 0
    %v4692 = vsel %vm4672, %v4661, 0
    %v4695 = vsel %vm4672, %v4662, 0
    %v4698 = vsel %vm4672, %v4663, 0
    %v4701 = vsel %vm4672, %v4664, 0
    %v4704 = vsel %vm4672, %v4665, 0
    %v4707 = vsel %vm4672, %v4666, 0
    %v4710 = vsel %vm4672, %v4667, 0
    %v4713 = vsel %vm4672, %v4668, 0
    %v4716 = vsel %vm4672, %v4669, 0
    %v4719 = vsel %vm4672, %v4670, 0
    %vm4721 = vcmask 1043456
    %v4723 = vsel %vm4721, %v4671, 0
    %4725 = vmatpush.bf16.msra.mxu0 0
    %4726 = vmatpush.bf16.msra.mxu0 0
    %4727 = vmatpush.bf16.msra.mxu0 0
    %4728 = vmatpush.bf16.msra.mxu0 0
    %4729 = vmatpush.bf16.msra.mxu0 0
    %4730 = vmatpush.bf16.msra.mxu0 0
    %4731 = vmatpush.bf16.msra.mxu0 0
    %4732 = vmatpush.bf16.msra.mxu0 %v4723
    %4733 = vmatmul.bf16.gmra.mxu0 %v4674
    %v4734 = vpop.f32.mrf.mxu0
    %v4735 = vadd.f32 0.0, %v4734
    %v4736 = vpop.f32.mrf.mxu0
    %v4737 = vadd.f32 0.0, %v4736
    %4738 = vmatmul.bf16.gmra.mxu0 %v4677
    %v4739 = vpop.f32.mrf.mxu0
    %v4740 = vadd.f32 0.0, %v4739
    %v4741 = vpop.f32.mrf.mxu0
    %v4742 = vadd.f32 0.0, %v4741
    %4743 = vmatmul.bf16.gmra.mxu0 %v4680
    %v4744 = vpop.f32.mrf.mxu0
    %v4745 = vadd.f32 0.0, %v4744
    %v4746 = vpop.f32.mrf.mxu0
    %v4747 = vadd.f32 0.0, %v4746
    %4748 = vmatmul.bf16.gmra.mxu0 %v4683
    %v4749 = vpop.f32.mrf.mxu0
    %v4750 = vadd.f32 0.0, %v4749
    %v4751 = vpop.f32.mrf.mxu0
    %v4752 = vadd.f32 0.0, %v4751
    %4753 = vmatmul.bf16.gmra.mxu0 %v4686
    %v4754 = vpop.f32.mrf.mxu0
    %v4755 = vadd.f32 0.0, %v4754
    %v4756 = vpop.f32.mrf.mxu0
    %v4757 = vadd.f32 0.0, %v4756
    %4758 = vmatmul.bf16.gmra.mxu0 %v4689
    %v4759 = vpop.f32.mrf.mxu0
    %v4760 = vadd.f32 0.0, %v4759
    %v4761 = vpop.f32.mrf.mxu0
    %v4762 = vadd.f32 0.0, %v4761
    %4763 = vmatmul.bf16.gmra.mxu0 %v4692
    %v4764 = vpop.f32.mrf.mxu0
    %v4765 = vadd.f32 0.0, %v4764
    %v4766 = vpop.f32.mrf.mxu0
    %v4767 = vadd.f32 0.0, %v4766
    %4768 = vmatmul.bf16.gmra.mxu0 %v4695
    %v4769 = vpop.f32.mrf.mxu0
    %v4770 = vadd.f32 0.0, %v4769
    %v4771 = vpop.f32.mrf.mxu0
    %v4772 = vadd.f32 0.0, %v4771
    %4773 = vmatmul.bf16.gmra.mxu0 %v4698
    %v4774 = vpop.f32.mrf.mxu0
    %v4775 = vadd.f32 0.0, %v4774
    %v4776 = vpop.f32.mrf.mxu0
    %v4777 = vadd.f32 0.0, %v4776
    %4778 = vmatmul.bf16.gmra.mxu0 %v4701
    %v4779 = vpop.f32.mrf.mxu0
    %v4780 = vadd.f32 0.0, %v4779
    %v4781 = vpop.f32.mrf.mxu0
    %v4782 = vadd.f32 0.0, %v4781
    %4783 = vmatmul.bf16.gmra.mxu0 %v4704
    %v4784 = vpop.f32.mrf.mxu0
    %v4785 = vadd.f32 0.0, %v4784
    %v4786 = vpop.f32.mrf.mxu0
    %v4787 = vadd.f32 0.0, %v4786
    %4788 = vmatmul.bf16.gmra.mxu0 %v4707
    %v4789 = vpop.f32.mrf.mxu0
    %v4790 = vadd.f32 0.0, %v4789
    %v4791 = vpop.f32.mrf.mxu0
    %v4792 = vadd.f32 0.0, %v4791
    %4793 = vmatmul.bf16.gmra.mxu0 %v4710
    %v4794 = vpop.f32.mrf.mxu0
    %v4795 = vadd.f32 0.0, %v4794
    %v4796 = vpop.f32.mrf.mxu0
    %v4797 = vadd.f32 0.0, %v4796
    %4798 = vmatmul.bf16.gmra.mxu0 %v4713
    %v4799 = vpop.f32.mrf.mxu0
    %v4800 = vadd.f32 0.0, %v4799
    %v4801 = vpop.f32.mrf.mxu0
    %v4802 = vadd.f32 0.0, %v4801
    %4803 = vmatmul.bf16.gmra.mxu0 %v4716
    %v4804 = vpop.f32.mrf.mxu0
    %v4805 = vadd.f32 0.0, %v4804
    %v4806 = vpop.f32.mrf.mxu0
    %v4807 = vadd.f32 0.0, %v4806
    %4808 = vmatmul.bf16.gmra.mxu0 %v4719
    %v4809 = vpop.f32.mrf.mxu0
    %v4810 = vadd.f32 0.0, %v4809
    %v4811 = vpop.f32.mrf.mxu0
    %v4812 = vadd.f32 0.0, %v4811
    %4813 = vdwg.mxu0
    %v4815 = vsel %vm4672, %v4604, 0
    %v4818 = vsel %vm4672, %v4605, 0
    %v4821 = vsel %vm4672, %v4606, 0
    %v4824 = vsel %vm4672, %v4607, 0
    %v4827 = vsel %vm4672, %v4608, 0
    %v4830 = vsel %vm4672, %v4609, 0
    %v4833 = vsel %vm4672, %v4610, 0
    %v4836 = vsel %vm4672, %v4611, 0
    %v4839 = vsel %vm4672, %v4612, 0
    %v4842 = vsel %vm4672, %v4613, 0
    %v4845 = vsel %vm4672, %v4614, 0
    %v4848 = vsel %vm4672, %v4615, 0
    %v4851 = vsel %vm4672, %v4616, 0
    %v4854 = vsel %vm4672, %v4617, 0
    %v4857 = vsel %vm4672, %v4618, 0
    %v4860 = vsel %vm4672, %v4619, 0
    %v4863 = vsel %vm4721, %v4620, 0
    %4865 = vmatpush.bf16.msra.mxu0 0
    %4866 = vmatpush.bf16.msra.mxu0 0
    %4867 = vmatpush.bf16.msra.mxu0 0
    %4868 = vmatpush.bf16.msra.mxu0 0
    %4869 = vmatpush.bf16.msra.mxu0 0
    %4870 = vmatpush.bf16.msra.mxu0 0
    %4871 = vmatpush.bf16.msra.mxu0 0
    %4872 = vmatpush.bf16.msra.mxu0 %v4863
    %4873 = vmatmul.bf16.gmra.mxu0 %v4815
    %v4874 = vpop.f32.mrf.mxu0
    %v4875 = vadd.f32 %v4735, %v4874
    %v4876 = vpop.f32.mrf.mxu0
    %v4877 = vadd.f32 %v4737, %v4876
    %4878 = vmatmul.bf16.gmra.mxu0 %v4818
    %v4879 = vpop.f32.mrf.mxu0
    %v4880 = vadd.f32 %v4740, %v4879
    %v4881 = vpop.f32.mrf.mxu0
    %v4882 = vadd.f32 %v4742, %v4881
    %4883 = vmatmul.bf16.gmra.mxu0 %v4821
    %v4884 = vpop.f32.mrf.mxu0
    %v4885 = vadd.f32 %v4745, %v4884
    %v4886 = vpop.f32.mrf.mxu0
    %v4887 = vadd.f32 %v4747, %v4886
    %4888 = vmatmul.bf16.gmra.mxu0 %v4824
    %v4889 = vpop.f32.mrf.mxu0
    %v4890 = vadd.f32 %v4750, %v4889
    %v4891 = vpop.f32.mrf.mxu0
    %v4892 = vadd.f32 %v4752, %v4891
    %4893 = vmatmul.bf16.gmra.mxu0 %v4827
    %v4894 = vpop.f32.mrf.mxu0
    %v4895 = vadd.f32 %v4755, %v4894
    %v4896 = vpop.f32.mrf.mxu0
    %v4897 = vadd.f32 %v4757, %v4896
    %4898 = vmatmul.bf16.gmra.mxu0 %v4830
    %v4899 = vpop.f32.mrf.mxu0
    %v4900 = vadd.f32 %v4760, %v4899
    %v4901 = vpop.f32.mrf.mxu0
    %v4902 = vadd.f32 %v4762, %v4901
    %4903 = vmatmul.bf16.gmra.mxu0 %v4833
    %v4904 = vpop.f32.mrf.mxu0
    %v4905 = vadd.f32 %v4765, %v4904
    %v4906 = vpop.f32.mrf.mxu0
    %v4907 = vadd.f32 %v4767, %v4906
    %4908 = vmatmul.bf16.gmra.mxu0 %v4836
    %v4909 = vpop.f32.mrf.mxu0
    %v4910 = vadd.f32 %v4770, %v4909
    %v4911 = vpop.f32.mrf.mxu0
    %v4912 = vadd.f32 %v4772, %v4911
    %4913 = vmatmul.bf16.gmra.mxu0 %v4839
    %v4914 = vpop.f32.mrf.mxu0
    %v4915 = vadd.f32 %v4775, %v4914
    %v4916 = vpop.f32.mrf.mxu0
    %v4917 = vadd.f32 %v4777, %v4916
    %4918 = vmatmul.bf16.gmra.mxu0 %v4842
    %v4919 = vpop.f32.mrf.mxu0
    %v4920 = vadd.f32 %v4780, %v4919
    %v4921 = vpop.f32.mrf.mxu0
    %v4922 = vadd.f32 %v4782, %v4921
    %4923 = vmatmul.bf16.gmra.mxu0 %v4845
    %v4924 = vpop.f32.mrf.mxu0
    %v4925 = vadd.f32 %v4785, %v4924
    %v4926 = vpop.f32.mrf.mxu0
    %v4927 = vadd.f32 %v4787, %v4926
    %4928 = vmatmul.bf16.gmra.mxu0 %v4848
    %v4929 = vpop.f32.mrf.mxu0
    %v4930 = vadd.f32 %v4790, %v4929
    %v4931 = vpop.f32.mrf.mxu0
    %v4932 = vadd.f32 %v4792, %v4931
    %4933 = vmatmul.bf16.gmra.mxu0 %v4851
    %v4934 = vpop.f32.mrf.mxu0
    %v4935 = vadd.f32 %v4795, %v4934
    %v4936 = vpop.f32.mrf.mxu0
    %v4937 = vadd.f32 %v4797, %v4936
    %4938 = vmatmul.bf16.gmra.mxu0 %v4854
    %v4939 = vpop.f32.mrf.mxu0
    %v4940 = vadd.f32 %v4800, %v4939
    %v4941 = vpop.f32.mrf.mxu0
    %v4942 = vadd.f32 %v4802, %v4941
    %4943 = vmatmul.bf16.gmra.mxu0 %v4857
    %v4944 = vpop.f32.mrf.mxu0
    %v4945 = vadd.f32 %v4805, %v4944
    %v4946 = vpop.f32.mrf.mxu0
    %v4947 = vadd.f32 %v4807, %v4946
    %4948 = vmatmul.bf16.gmra.mxu0 %v4860
    %v4949 = vpop.f32.mrf.mxu0
    %v4950 = vadd.f32 %v4810, %v4949
    %v4951 = vpop.f32.mrf.mxu0
    %v4952 = vadd.f32 %v4812, %v4951
    %4953 = vdwg.mxu0
    %s4954 = sadd.s32 %s4570, 4
    %s4955 = scalar_lea.vmem [#allocation3], %s4954
    %v4956 = vld [vmem:[%s4955] sm:$0xff]
    %v4957 = vld [vmem:[%s4955 + $0x8] sm:$0xff]
    %v4958 = vld [vmem:[%s4955 + $0x10] sm:$0xff]
    %v4959 = vld [vmem:[%s4955 + $0x18] sm:$0xff]
    %v4960 = vld [vmem:[%s4955 + $0x20] sm:$0xff]
    %v4961 = vld [vmem:[%s4955 + $0x28] sm:$0xff]
    %v4962 = vld [vmem:[%s4955 + $0x30] sm:$0xff]
    %v4963 = vld [vmem:[%s4955 + $0x38] sm:$0xff]
    %v4964 = vld [vmem:[%s4955 + $0x40] sm:$0xff]
    %v4965 = vld [vmem:[%s4955 + $0x48] sm:$0xff]
    %v4966 = vld [vmem:[%s4955 + $0x50] sm:$0xff]
    %v4967 = vld [vmem:[%s4955 + $0x58] sm:$0xff]
    %v4968 = vld [vmem:[%s4955 + $0x60] sm:$0xff]
    %v4969 = vld [vmem:[%s4955 + $0x68] sm:$0xff]
    %v4970 = vld [vmem:[%s4955 + $0x70] sm:$0xff]
    %v4971 = vld [vmem:[%s4955 + $0x78] sm:$0xff]
    %v4972 = vld [vmem:[%s4955 + $0x80] sm:$0xff]
    %v4973 = vld [vmem:[%s4955 + $0x88] sm:$0xff]
    %v4974 = vld [vmem:[%s4955 + $0x90] sm:$0xff]
    %v4975 = vld [vmem:[%s4955 + $0x98] sm:$0xff]
    %v4976 = vld [vmem:[%s4955 + $0xa0] sm:$0xff]
    %v4977 = vld [vmem:[%s4955 + $0xa8] sm:$0xff]
    %v4978 = vld [vmem:[%s4955 + $0xb0] sm:$0xff]
    %v4979 = vld [vmem:[%s4955 + $0xb8] sm:$0xff]
    %v4980 = vld [vmem:[%s4955 + $0xc0] sm:$0xff]
    %v4981 = vld [vmem:[%s4955 + $0xc8] sm:$0xff]
    %v4982 = vld [vmem:[%s4955 + $0xd0] sm:$0xff]
    %v4983 = vld [vmem:[%s4955 + $0xd8] sm:$0xff]
    %v4984 = vld [vmem:[%s4955 + $0xe0] sm:$0xff]
    %v4985 = vld [vmem:[%s4955 + $0xe8] sm:$0xff]
    %v4986 = vld [vmem:[%s4955 + $0xf0] sm:$0xff]
    %v4987 = vld [vmem:[%s4955 + $0xf8] sm:$0xff]
    %v4988 = vpack.c.bf16 %v4957, %v4956
    %v4989 = vpack.c.bf16 %v4959, %v4958
    %v4990 = vpack.c.bf16 %v4961, %v4960
    %v4991 = vpack.c.bf16 %v4963, %v4962
    %v4992 = vpack.c.bf16 %v4965, %v4964
    %v4993 = vpack.c.bf16 %v4967, %v4966
    %v4994 = vpack.c.bf16 %v4969, %v4968
    %v4995 = vpack.c.bf16 %v4971, %v4970
    %v4996 = vpack.c.bf16 %v4973, %v4972
    %v4997 = vpack.c.bf16 %v4975, %v4974
    %v4998 = vpack.c.bf16 %v4977, %v4976
    %v4999 = vpack.c.bf16 %v4979, %v4978
    %v5000 = vpack.c.bf16 %v4981, %v4980
    %v5001 = vpack.c.bf16 %v4983, %v4982
    %v5002 = vpack.c.bf16 %v4985, %v4984
    %v5003 = vpack.c.bf16 %v4987, %v4986
    %v5004 = vpack.c.bf16 %v4556, %v4556
    %v5006 = vsel %vm4672, %v4988, 0
    %v5009 = vsel %vm4672, %v4989, 0
    %v5012 = vsel %vm4672, %v4990, 0
    %v5015 = vsel %vm4672, %v4991, 0
    %v5018 = vsel %vm4672, %v4992, 0
    %v5021 = vsel %vm4672, %v4993, 0
    %v5024 = vsel %vm4672, %v4994, 0
    %v5027 = vsel %vm4672, %v4995, 0
    %v5030 = vsel %vm4672, %v4996, 0
    %v5033 = vsel %vm4672, %v4997, 0
    %v5036 = vsel %vm4672, %v4998, 0
    %v5039 = vsel %vm4672, %v4999, 0
    %v5042 = vsel %vm4672, %v5000, 0
    %v5045 = vsel %vm4672, %v5001, 0
    %v5048 = vsel %vm4672, %v5002, 0
    %v5051 = vsel %vm4672, %v5003, 0
    %v5054 = vsel %vm4721, %v5004, 0
    %5056 = vmatpush.bf16.msra.mxu0 0
    %5057 = vmatpush.bf16.msra.mxu0 0
    %5058 = vmatpush.bf16.msra.mxu0 0
    %5059 = vmatpush.bf16.msra.mxu0 0
    %5060 = vmatpush.bf16.msra.mxu0 0
    %5061 = vmatpush.bf16.msra.mxu0 0
    %5062 = vmatpush.bf16.msra.mxu0 0
    %5063 = vmatpush.bf16.msra.mxu0 %v5054
    %5064 = vmatmul.bf16.gmra.mxu0 %v5006
    %v5065 = vpop.f32.mrf.mxu0
    %v5066 = vadd.f32 0.0, %v5065
    %v5067 = vpop.f32.mrf.mxu0
    %v5068 = vadd.f32 0.0, %v5067
    %5069 = vmatmul.bf16.gmra.mxu0 %v5009
    %v5070 = vpop.f32.mrf.mxu0
    %v5071 = vadd.f32 0.0, %v5070
    %v5072 = vpop.f32.mrf.mxu0
    %v5073 = vadd.f32 0.0, %v5072
    %5074 = vmatmul.bf16.gmra.mxu0 %v5012
    %v5075 = vpop.f32.mrf.mxu0
    %v5076 = vadd.f32 0.0, %v5075
    %v5077 = vpop.f32.mrf.mxu0
    %v5078 = vadd.f32 0.0, %v5077
    %5079 = vmatmul.bf16.gmra.mxu0 %v5015
    %v5080 = vpop.f32.mrf.mxu0
    %v5081 = vadd.f32 0.0, %v5080
    %v5082 = vpop.f32.mrf.mxu0
    %v5083 = vadd.f32 0.0, %v5082
    %5084 = vmatmul.bf16.gmra.mxu0 %v5018
    %v5085 = vpop.f32.mrf.mxu0
    %v5086 = vadd.f32 0.0, %v5085
    %v5087 = vpop.f32.mrf.mxu0
    %v5088 = vadd.f32 0.0, %v5087
    %5089 = vmatmul.bf16.gmra.mxu0 %v5021
    %v5090 = vpop.f32.mrf.mxu0
    %v5091 = vadd.f32 0.0, %v5090
    %v5092 = vpop.f32.mrf.mxu0
    %v5093 = vadd.f32 0.0, %v5092
    %5094 = vmatmul.bf16.gmra.mxu0 %v5024
    %v5095 = vpop.f32.mrf.mxu0
    %v5096 = vadd.f32 0.0, %v5095
    %v5097 = vpop.f32.mrf.mxu0
    %v5098 = vadd.f32 0.0, %v5097
    %5099 = vmatmul.bf16.gmra.mxu0 %v5027
    %v5100 = vpop.f32.mrf.mxu0
    %v5101 = vadd.f32 0.0, %v5100
    %v5102 = vpop.f32.mrf.mxu0
    %v5103 = vadd.f32 0.0, %v5102
    %5104 = vmatmul.bf16.gmra.mxu0 %v5030
    %v5105 = vpop.f32.mrf.mxu0
    %v5106 = vadd.f32 0.0, %v5105
    %v5107 = vpop.f32.mrf.mxu0
    %v5108 = vadd.f32 0.0, %v5107
    %5109 = vmatmul.bf16.gmra.mxu0 %v5033
    %v5110 = vpop.f32.mrf.mxu0
    %v5111 = vadd.f32 0.0, %v5110
    %v5112 = vpop.f32.mrf.mxu0
    %v5113 = vadd.f32 0.0, %v5112
    %5114 = vmatmul.bf16.gmra.mxu0 %v5036
    %v5115 = vpop.f32.mrf.mxu0
    %v5116 = vadd.f32 0.0, %v5115
    %v5117 = vpop.f32.mrf.mxu0
    %v5118 = vadd.f32 0.0, %v5117
    %5119 = vmatmul.bf16.gmra.mxu0 %v5039
    %v5120 = vpop.f32.mrf.mxu0
    %v5121 = vadd.f32 0.0, %v5120
    %v5122 = vpop.f32.mrf.mxu0
    %v5123 = vadd.f32 0.0, %v5122
    %5124 = vmatmul.bf16.gmra.mxu0 %v5042
    %v5125 = vpop.f32.mrf.mxu0
    %v5126 = vadd.f32 0.0, %v5125
    %v5127 = vpop.f32.mrf.mxu0
    %v5128 = vadd.f32 0.0, %v5127
    %5129 = vmatmul.bf16.gmra.mxu0 %v5045
    %v5130 = vpop.f32.mrf.mxu0
    %v5131 = vadd.f32 0.0, %v5130
    %v5132 = vpop.f32.mrf.mxu0
    %v5133 = vadd.f32 0.0, %v5132
    %5134 = vmatmul.bf16.gmra.mxu0 %v5048
    %v5135 = vpop.f32.mrf.mxu0
    %v5136 = vadd.f32 0.0, %v5135
    %v5137 = vpop.f32.mrf.mxu0
    %v5138 = vadd.f32 0.0, %v5137
    %5139 = vmatmul.bf16.gmra.mxu0 %v5051
    %v5140 = vpop.f32.mrf.mxu0
    %v5141 = vadd.f32 0.0, %v5140
    %v5142 = vpop.f32.mrf.mxu0
    %v5143 = vadd.f32 0.0, %v5142
    %5144 = vdwg.mxu0
    %v5145 = vadd.f32 %v4875, %v5066
    %v5146 = vadd.f32 %v4877, %v5068
    %v5147 = vadd.f32 %v4880, %v5071
    %v5148 = vadd.f32 %v4882, %v5073
    %v5149 = vadd.f32 %v4885, %v5076
    %v5150 = vadd.f32 %v4887, %v5078
    %v5151 = vadd.f32 %v4890, %v5081
    %v5152 = vadd.f32 %v4892, %v5083
    %v5153 = vadd.f32 %v4895, %v5086
    %v5154 = vadd.f32 %v4897, %v5088
    %v5155 = vadd.f32 %v4900, %v5091
    %v5156 = vadd.f32 %v4902, %v5093
    %v5157 = vadd.f32 %v4905, %v5096
    %v5158 = vadd.f32 %v4907, %v5098
    %v5159 = vadd.f32 %v4910, %v5101
    %v5160 = vadd.f32 %v4912, %v5103
    %v5161 = vadd.f32 %v4915, %v5106
    %v5162 = vadd.f32 %v4917, %v5108
    %v5163 = vadd.f32 %v4920, %v5111
    %v5164 = vadd.f32 %v4922, %v5113
    %v5165 = vadd.f32 %v4925, %v5116
    %v5166 = vadd.f32 %v4927, %v5118
    %v5167 = vadd.f32 %v4930, %v5121
    %v5168 = vadd.f32 %v4932, %v5123
    %v5169 = vadd.f32 %v4935, %v5126
    %v5170 = vadd.f32 %v4937, %v5128
    %v5171 = vadd.f32 %v4940, %v5131
    %v5172 = vadd.f32 %v4942, %v5133
    %v5173 = vadd.f32 %v4945, %v5136
    %v5174 = vadd.f32 %v4947, %v5138
    %v5175 = vadd.f32 %v4950, %v5141
    %v5176 = vadd.f32 %v4952, %v5143
    %s5177 = sadd.s32 %s4570, 256
    %s5178 = scalar_lea.vmem [#allocation3], %s5177
    %v5179 = vld [vmem:[%s5178] sm:$0xff]
    %v5180 = vld [vmem:[%s5178 + $0x8] sm:$0xff]
    %v5181 = vld [vmem:[%s5178 + $0x10] sm:$0xff]
    %v5182 = vld [vmem:[%s5178 + $0x18] sm:$0xff]
    %v5183 = vld [vmem:[%s5178 + $0x20] sm:$0xff]
    %v5184 = vld [vmem:[%s5178 + $0x28] sm:$0xff]
    %v5185 = vld [vmem:[%s5178 + $0x30] sm:$0xff]
    %v5186 = vld [vmem:[%s5178 + $0x38] sm:$0xff]
    %v5187 = vld [vmem:[%s5178 + $0x40] sm:$0xff]
    %v5188 = vld [vmem:[%s5178 + $0x48] sm:$0xff]
    %v5189 = vld [vmem:[%s5178 + $0x50] sm:$0xff]
    %v5190 = vld [vmem:[%s5178 + $0x58] sm:$0xff]
    %v5191 = vld [vmem:[%s5178 + $0x60] sm:$0xff]
    %v5192 = vld [vmem:[%s5178 + $0x68] sm:$0xff]
    %v5193 = vld [vmem:[%s5178 + $0x70] sm:$0xff]
    %v5194 = vld [vmem:[%s5178 + $0x78] sm:$0xff]
    %v5195 = vld [vmem:[%s5178 + $0x80] sm:$0xff]
    %v5196 = vld [vmem:[%s5178 + $0x88] sm:$0xff]
    %v5197 = vld [vmem:[%s5178 + $0x90] sm:$0xff]
    %v5198 = vld [vmem:[%s5178 + $0x98] sm:$0xff]
    %v5199 = vld [vmem:[%s5178 + $0xa0] sm:$0xff]
    %v5200 = vld [vmem:[%s5178 + $0xa8] sm:$0xff]
    %v5201 = vld [vmem:[%s5178 + $0xb0] sm:$0xff]
    %v5202 = vld [vmem:[%s5178 + $0xb8] sm:$0xff]
    %v5203 = vld [vmem:[%s5178 + $0xc0] sm:$0xff]
    %v5204 = vld [vmem:[%s5178 + $0xc8] sm:$0xff]
    %v5205 = vld [vmem:[%s5178 + $0xd0] sm:$0xff]
    %v5206 = vld [vmem:[%s5178 + $0xd8] sm:$0xff]
    %v5207 = vld [vmem:[%s5178 + $0xe0] sm:$0xff]
    %v5208 = vld [vmem:[%s5178 + $0xe8] sm:$0xff]
    %v5209 = vld [vmem:[%s5178 + $0xf0] sm:$0xff]
    %v5210 = vld [vmem:[%s5178 + $0xf8] sm:$0xff]
    %v5211 = vpack.c.bf16 %v5180, %v5179
    %v5212 = vpack.c.bf16 %v5182, %v5181
    %v5213 = vpack.c.bf16 %v5184, %v5183
    %v5214 = vpack.c.bf16 %v5186, %v5185
    %v5215 = vpack.c.bf16 %v5188, %v5187
    %v5216 = vpack.c.bf16 %v5190, %v5189
    %v5217 = vpack.c.bf16 %v5192, %v5191
    %v5218 = vpack.c.bf16 %v5194, %v5193
    %v5219 = vpack.c.bf16 %v5196, %v5195
    %v5220 = vpack.c.bf16 %v5198, %v5197
    %v5221 = vpack.c.bf16 %v5200, %v5199
    %v5222 = vpack.c.bf16 %v5202, %v5201
    %v5223 = vpack.c.bf16 %v5204, %v5203
    %v5224 = vpack.c.bf16 %v5206, %v5205
    %v5225 = vpack.c.bf16 %v5208, %v5207
    %v5226 = vpack.c.bf16 %v5210, %v5209
    %v5227 = vpack.c.bf16 %v4557, %v4557
    %v5229 = vsel %vm4672, %v5211, 0
    %v5232 = vsel %vm4672, %v5212, 0
    %v5235 = vsel %vm4672, %v5213, 0
    %v5238 = vsel %vm4672, %v5214, 0
    %v5241 = vsel %vm4672, %v5215, 0
    %v5244 = vsel %vm4672, %v5216, 0
    %v5247 = vsel %vm4672, %v5217, 0
    %v5250 = vsel %vm4672, %v5218, 0
    %v5253 = vsel %vm4672, %v5219, 0
    %v5256 = vsel %vm4672, %v5220, 0
    %v5259 = vsel %vm4672, %v5221, 0
    %v5262 = vsel %vm4672, %v5222, 0
    %v5265 = vsel %vm4672, %v5223, 0
    %v5268 = vsel %vm4672, %v5224, 0
    %v5271 = vsel %vm4672, %v5225, 0
    %v5274 = vsel %vm4672, %v5226, 0
    %v5277 = vsel %vm4721, %v5227, 0
    %5279 = vmatpush.bf16.msra.mxu0 0
    %5280 = vmatpush.bf16.msra.mxu0 0
    %5281 = vmatpush.bf16.msra.mxu0 0
    %5282 = vmatpush.bf16.msra.mxu0 0
    %5283 = vmatpush.bf16.msra.mxu0 0
    %5284 = vmatpush.bf16.msra.mxu0 0
    %5285 = vmatpush.bf16.msra.mxu0 0
    %5286 = vmatpush.bf16.msra.mxu0 %v5277
    %5287 = vmatmul.bf16.gmra.mxu0 %v5229
    %v5288 = vpop.f32.mrf.mxu0
    %v5289 = vadd.f32 0.0, %v5288
    %v5290 = vpop.f32.mrf.mxu0
    %v5291 = vadd.f32 0.0, %v5290
    %5292 = vmatmul.bf16.gmra.mxu0 %v5232
    %v5293 = vpop.f32.mrf.mxu0
    %v5294 = vadd.f32 0.0, %v5293
    %v5295 = vpop.f32.mrf.mxu0
    %v5296 = vadd.f32 0.0, %v5295
    %5297 = vmatmul.bf16.gmra.mxu0 %v5235
    %v5298 = vpop.f32.mrf.mxu0
    %v5299 = vadd.f32 0.0, %v5298
    %v5300 = vpop.f32.mrf.mxu0
    %v5301 = vadd.f32 0.0, %v5300
    %5302 = vmatmul.bf16.gmra.mxu0 %v5238
    %v5303 = vpop.f32.mrf.mxu0
    %v5304 = vadd.f32 0.0, %v5303
    %v5305 = vpop.f32.mrf.mxu0
    %v5306 = vadd.f32 0.0, %v5305
    %5307 = vmatmul.bf16.gmra.mxu0 %v5241
    %v5308 = vpop.f32.mrf.mxu0
    %v5309 = vadd.f32 0.0, %v5308
    %v5310 = vpop.f32.mrf.mxu0
    %v5311 = vadd.f32 0.0, %v5310
    %5312 = vmatmul.bf16.gmra.mxu0 %v5244
    %v5313 = vpop.f32.mrf.mxu0
    %v5314 = vadd.f32 0.0, %v5313
    %v5315 = vpop.f32.mrf.mxu0
    %v5316 = vadd.f32 0.0, %v5315
    %5317 = vmatmul.bf16.gmra.mxu0 %v5247
    %v5318 = vpop.f32.mrf.mxu0
    %v5319 = vadd.f32 0.0, %v5318
    %v5320 = vpop.f32.mrf.mxu0
    %v5321 = vadd.f32 0.0, %v5320
    %5322 = vmatmul.bf16.gmra.mxu0 %v5250
    %v5323 = vpop.f32.mrf.mxu0
    %v5324 = vadd.f32 0.0, %v5323
    %v5325 = vpop.f32.mrf.mxu0
    %v5326 = vadd.f32 0.0, %v5325
    %5327 = vmatmul.bf16.gmra.mxu0 %v5253
    %v5328 = vpop.f32.mrf.mxu0
    %v5329 = vadd.f32 0.0, %v5328
    %v5330 = vpop.f32.mrf.mxu0
    %v5331 = vadd.f32 0.0, %v5330
    %5332 = vmatmul.bf16.gmra.mxu0 %v5256
    %v5333 = vpop.f32.mrf.mxu0
    %v5334 = vadd.f32 0.0, %v5333
    %v5335 = vpop.f32.mrf.mxu0
    %v5336 = vadd.f32 0.0, %v5335
    %5337 = vmatmul.bf16.gmra.mxu0 %v5259
    %v5338 = vpop.f32.mrf.mxu0
    %v5339 = vadd.f32 0.0, %v5338
    %v5340 = vpop.f32.mrf.mxu0
    %v5341 = vadd.f32 0.0, %v5340
    %5342 = vmatmul.bf16.gmra.mxu0 %v5262
    %v5343 = vpop.f32.mrf.mxu0
    %v5344 = vadd.f32 0.0, %v5343
    %v5345 = vpop.f32.mrf.mxu0
    %v5346 = vadd.f32 0.0, %v5345
    %5347 = vmatmul.bf16.gmra.mxu0 %v5265
    %v5348 = vpop.f32.mrf.mxu0
    %v5349 = vadd.f32 0.0, %v5348
    %v5350 = vpop.f32.mrf.mxu0
    %v5351 = vadd.f32 0.0, %v5350
    %5352 = vmatmul.bf16.gmra.mxu0 %v5268
    %v5353 = vpop.f32.mrf.mxu0
    %v5354 = vadd.f32 0.0, %v5353
    %v5355 = vpop.f32.mrf.mxu0
    %v5356 = vadd.f32 0.0, %v5355
    %5357 = vmatmul.bf16.gmra.mxu0 %v5271
    %v5358 = vpop.f32.mrf.mxu0
    %v5359 = vadd.f32 0.0, %v5358
    %v5360 = vpop.f32.mrf.mxu0
    %v5361 = vadd.f32 0.0, %v5360
    %5362 = vmatmul.bf16.gmra.mxu0 %v5274
    %v5363 = vpop.f32.mrf.mxu0
    %v5364 = vadd.f32 0.0, %v5363
    %v5365 = vpop.f32.mrf.mxu0
    %v5366 = vadd.f32 0.0, %v5365
    %5367 = vdwg.mxu0
    %v5368 = vadd.f32 %v5145, %v5289
    %v5369 = vadd.f32 %v5146, %v5291
    %v5370 = vadd.f32 %v5147, %v5294
    %v5371 = vadd.f32 %v5148, %v5296
    %v5372 = vadd.f32 %v5149, %v5299
    %v5373 = vadd.f32 %v5150, %v5301
    %v5374 = vadd.f32 %v5151, %v5304
    %v5375 = vadd.f32 %v5152, %v5306
    %v5376 = vadd.f32 %v5153, %v5309
    %v5377 = vadd.f32 %v5154, %v5311
    %v5378 = vadd.f32 %v5155, %v5314
    %v5379 = vadd.f32 %v5156, %v5316
    %v5380 = vadd.f32 %v5157, %v5319
    %v5381 = vadd.f32 %v5158, %v5321
    %v5382 = vadd.f32 %v5159, %v5324
    %v5383 = vadd.f32 %v5160, %v5326
    %v5384 = vadd.f32 %v5161, %v5329
    %v5385 = vadd.f32 %v5162, %v5331
    %v5386 = vadd.f32 %v5163, %v5334
    %v5387 = vadd.f32 %v5164, %v5336
    %v5388 = vadd.f32 %v5165, %v5339
    %v5389 = vadd.f32 %v5166, %v5341
    %v5390 = vadd.f32 %v5167, %v5344
    %v5391 = vadd.f32 %v5168, %v5346
    %v5392 = vadd.f32 %v5169, %v5349
    %v5393 = vadd.f32 %v5170, %v5351
    %v5394 = vadd.f32 %v5171, %v5354
    %v5395 = vadd.f32 %v5172, %v5356
    %v5396 = vadd.f32 %v5173, %v5359
    %v5397 = vadd.f32 %v5174, %v5361
    %v5398 = vadd.f32 %v5175, %v5364
    %v5399 = vadd.f32 %v5176, %v5366
    %s5400 = sadd.s32 %s4570, 258
    %s5401 = scalar_lea.vmem [#allocation3], %s5400
    %v5402 = vld [vmem:[%s5401] sm:$0xff]
    %v5403 = vld [vmem:[%s5401 + $0x8] sm:$0xff]
    %v5404 = vld [vmem:[%s5401 + $0x10] sm:$0xff]
    %v5405 = vld [vmem:[%s5401 + $0x18] sm:$0xff]
    %v5406 = vld [vmem:[%s5401 + $0x20] sm:$0xff]
    %v5407 = vld [vmem:[%s5401 + $0x28] sm:$0xff]
    %v5408 = vld [vmem:[%s5401 + $0x30] sm:$0xff]
    %v5409 = vld [vmem:[%s5401 + $0x38] sm:$0xff]
    %v5410 = vld [vmem:[%s5401 + $0x40] sm:$0xff]
    %v5411 = vld [vmem:[%s5401 + $0x48] sm:$0xff]
    %v5412 = vld [vmem:[%s5401 + $0x50] sm:$0xff]
    %v5413 = vld [vmem:[%s5401 + $0x58] sm:$0xff]
    %v5414 = vld [vmem:[%s5401 + $0x60] sm:$0xff]
    %v5415 = vld [vmem:[%s5401 + $0x68] sm:$0xff]
    %v5416 = vld [vmem:[%s5401 + $0x70] sm:$0xff]
    %v5417 = vld [vmem:[%s5401 + $0x78] sm:$0xff]
    %v5418 = vld [vmem:[%s5401 + $0x80] sm:$0xff]
    %v5419 = vld [vmem:[%s5401 + $0x88] sm:$0xff]
    %v5420 = vld [vmem:[%s5401 + $0x90] sm:$0xff]
    %v5421 = vld [vmem:[%s5401 + $0x98] sm:$0xff]
    %v5422 = vld [vmem:[%s5401 + $0xa0] sm:$0xff]
    %v5423 = vld [vmem:[%s5401 + $0xa8] sm:$0xff]
    %v5424 = vld [vmem:[%s5401 + $0xb0] sm:$0xff]
    %v5425 = vld [vmem:[%s5401 + $0xb8] sm:$0xff]
    %v5426 = vld [vmem:[%s5401 + $0xc0] sm:$0xff]
    %v5427 = vld [vmem:[%s5401 + $0xc8] sm:$0xff]
    %v5428 = vld [vmem:[%s5401 + $0xd0] sm:$0xff]
    %v5429 = vld [vmem:[%s5401 + $0xd8] sm:$0xff]
    %v5430 = vld [vmem:[%s5401 + $0xe0] sm:$0xff]
    %v5431 = vld [vmem:[%s5401 + $0xe8] sm:$0xff]
    %v5432 = vld [vmem:[%s5401 + $0xf0] sm:$0xff]
    %v5433 = vld [vmem:[%s5401 + $0xf8] sm:$0xff]
    %v5434 = vpack.c.bf16 %v5403, %v5402
    %v5435 = vpack.c.bf16 %v5405, %v5404
    %v5436 = vpack.c.bf16 %v5407, %v5406
    %v5437 = vpack.c.bf16 %v5409, %v5408
    %v5438 = vpack.c.bf16 %v5411, %v5410
    %v5439 = vpack.c.bf16 %v5413, %v5412
    %v5440 = vpack.c.bf16 %v5415, %v5414
    %v5441 = vpack.c.bf16 %v5417, %v5416
    %v5442 = vpack.c.bf16 %v5419, %v5418
    %v5443 = vpack.c.bf16 %v5421, %v5420
    %v5444 = vpack.c.bf16 %v5423, %v5422
    %v5445 = vpack.c.bf16 %v5425, %v5424
    %v5446 = vpack.c.bf16 %v5427, %v5426
    %v5447 = vpack.c.bf16 %v5429, %v5428
    %v5448 = vpack.c.bf16 %v5431, %v5430
    %v5449 = vpack.c.bf16 %v5433, %v5432
    %v5450 = vpack.c.bf16 %v4558, %v4558
    %v5452 = vsel %vm4672, %v5434, 0
    %v5455 = vsel %vm4672, %v5435, 0
    %v5458 = vsel %vm4672, %v5436, 0
    %v5461 = vsel %vm4672, %v5437, 0
    %v5464 = vsel %vm4672, %v5438, 0
    %v5467 = vsel %vm4672, %v5439, 0
    %v5470 = vsel %vm4672, %v5440, 0
    %v5473 = vsel %vm4672, %v5441, 0
    %v5476 = vsel %vm4672, %v5442, 0
    %v5479 = vsel %vm4672, %v5443, 0
    %v5482 = vsel %vm4672, %v5444, 0
    %v5485 = vsel %vm4672, %v5445, 0
    %v5488 = vsel %vm4672, %v5446, 0
    %v5491 = vsel %vm4672, %v5447, 0
    %v5494 = vsel %vm4672, %v5448, 0
    %v5497 = vsel %vm4672, %v5449, 0
    %v5500 = vsel %vm4721, %v5450, 0
    %5502 = vmatpush.bf16.msra.mxu0 0
    %5503 = vmatpush.bf16.msra.mxu0 0
    %5504 = vmatpush.bf16.msra.mxu0 0
    %5505 = vmatpush.bf16.msra.mxu0 0
    %5506 = vmatpush.bf16.msra.mxu0 0
    %5507 = vmatpush.bf16.msra.mxu0 0
    %5508 = vmatpush.bf16.msra.mxu0 0
    %5509 = vmatpush.bf16.msra.mxu0 %v5500
    %5510 = vmatmul.bf16.gmra.mxu0 %v5452
    %v5511 = vpop.f32.mrf.mxu0
    %v5512 = vadd.f32 0.0, %v5511
    %v5513 = vpop.f32.mrf.mxu0
    %v5514 = vadd.f32 0.0, %v5513
    %5515 = vmatmul.bf16.gmra.mxu0 %v5455
    %v5516 = vpop.f32.mrf.mxu0
    %v5517 = vadd.f32 0.0, %v5516
    %v5518 = vpop.f32.mrf.mxu0
    %v5519 = vadd.f32 0.0, %v5518
    %5520 = vmatmul.bf16.gmra.mxu0 %v5458
    %v5521 = vpop.f32.mrf.mxu0
    %v5522 = vadd.f32 0.0, %v5521
    %v5523 = vpop.f32.mrf.mxu0
    %v5524 = vadd.f32 0.0, %v5523
    %5525 = vmatmul.bf16.gmra.mxu0 %v5461
    %v5526 = vpop.f32.mrf.mxu0
    %v5527 = vadd.f32 0.0, %v5526
    %v5528 = vpop.f32.mrf.mxu0
    %v5529 = vadd.f32 0.0, %v5528
    %5530 = vmatmul.bf16.gmra.mxu0 %v5464
    %v5531 = vpop.f32.mrf.mxu0
    %v5532 = vadd.f32 0.0, %v5531
    %v5533 = vpop.f32.mrf.mxu0
    %v5534 = vadd.f32 0.0, %v5533
    %5535 = vmatmul.bf16.gmra.mxu0 %v5467
    %v5536 = vpop.f32.mrf.mxu0
    %v5537 = vadd.f32 0.0, %v5536
    %v5538 = vpop.f32.mrf.mxu0
    %v5539 = vadd.f32 0.0, %v5538
    %5540 = vmatmul.bf16.gmra.mxu0 %v5470
    %v5541 = vpop.f32.mrf.mxu0
    %v5542 = vadd.f32 0.0, %v5541
    %v5543 = vpop.f32.mrf.mxu0
    %v5544 = vadd.f32 0.0, %v5543
    %5545 = vmatmul.bf16.gmra.mxu0 %v5473
    %v5546 = vpop.f32.mrf.mxu0
    %v5547 = vadd.f32 0.0, %v5546
    %v5548 = vpop.f32.mrf.mxu0
    %v5549 = vadd.f32 0.0, %v5548
    %5550 = vmatmul.bf16.gmra.mxu0 %v5476
    %v5551 = vpop.f32.mrf.mxu0
    %v5552 = vadd.f32 0.0, %v5551
    %v5553 = vpop.f32.mrf.mxu0
    %v5554 = vadd.f32 0.0, %v5553
    %5555 = vmatmul.bf16.gmra.mxu0 %v5479
    %v5556 = vpop.f32.mrf.mxu0
    %v5557 = vadd.f32 0.0, %v5556
    %v5558 = vpop.f32.mrf.mxu0
    %v5559 = vadd.f32 0.0, %v5558
    %5560 = vmatmul.bf16.gmra.mxu0 %v5482
    %v5561 = vpop.f32.mrf.mxu0
    %v5562 = vadd.f32 0.0, %v5561
    %v5563 = vpop.f32.mrf.mxu0
    %v5564 = vadd.f32 0.0, %v5563
    %5565 = vmatmul.bf16.gmra.mxu0 %v5485
    %v5566 = vpop.f32.mrf.mxu0
    %v5567 = vadd.f32 0.0, %v5566
    %v5568 = vpop.f32.mrf.mxu0
    %v5569 = vadd.f32 0.0, %v5568
    %5570 = vmatmul.bf16.gmra.mxu0 %v5488
    %v5571 = vpop.f32.mrf.mxu0
    %v5572 = vadd.f32 0.0, %v5571
    %v5573 = vpop.f32.mrf.mxu0
    %v5574 = vadd.f32 0.0, %v5573
    %5575 = vmatmul.bf16.gmra.mxu0 %v5491
    %v5576 = vpop.f32.mrf.mxu0
    %v5577 = vadd.f32 0.0, %v5576
    %v5578 = vpop.f32.mrf.mxu0
    %v5579 = vadd.f32 0.0, %v5578
    %5580 = vmatmul.bf16.gmra.mxu0 %v5494
    %v5581 = vpop.f32.mrf.mxu0
    %v5582 = vadd.f32 0.0, %v5581
    %v5583 = vpop.f32.mrf.mxu0
    %v5584 = vadd.f32 0.0, %v5583
    %5585 = vmatmul.bf16.gmra.mxu0 %v5497
    %v5586 = vpop.f32.mrf.mxu0
    %v5587 = vadd.f32 0.0, %v5586
    %v5588 = vpop.f32.mrf.mxu0
    %v5589 = vadd.f32 0.0, %v5588
    %5590 = vdwg.mxu0
    %v5591 = vadd.f32 %v5368, %v5512
    %v5592 = vadd.f32 %v5369, %v5514
    %v5593 = vadd.f32 %v5370, %v5517
    %v5594 = vadd.f32 %v5371, %v5519
    %v5595 = vadd.f32 %v5372, %v5522
    %v5596 = vadd.f32 %v5373, %v5524
    %v5597 = vadd.f32 %v5374, %v5527
    %v5598 = vadd.f32 %v5375, %v5529
    %v5599 = vadd.f32 %v5376, %v5532
    %v5600 = vadd.f32 %v5377, %v5534
    %v5601 = vadd.f32 %v5378, %v5537
    %v5602 = vadd.f32 %v5379, %v5539
    %v5603 = vadd.f32 %v5380, %v5542
    %v5604 = vadd.f32 %v5381, %v5544
    %v5605 = vadd.f32 %v5382, %v5547
    %v5606 = vadd.f32 %v5383, %v5549
    %v5607 = vadd.f32 %v5384, %v5552
    %v5608 = vadd.f32 %v5385, %v5554
    %v5609 = vadd.f32 %v5386, %v5557
    %v5610 = vadd.f32 %v5387, %v5559
    %v5611 = vadd.f32 %v5388, %v5562
    %v5612 = vadd.f32 %v5389, %v5564
    %v5613 = vadd.f32 %v5390, %v5567
    %v5614 = vadd.f32 %v5391, %v5569
    %v5615 = vadd.f32 %v5392, %v5572
    %v5616 = vadd.f32 %v5393, %v5574
    %v5617 = vadd.f32 %v5394, %v5577
    %v5618 = vadd.f32 %v5395, %v5579
    %v5619 = vadd.f32 %v5396, %v5582
    %v5620 = vadd.f32 %v5397, %v5584
    %v5621 = vadd.f32 %v5398, %v5587
    %v5622 = vadd.f32 %v5399, %v5589
    %s5623 = sadd.s32 %s4570, 260
    %s5624 = scalar_lea.vmem [#allocation3], %s5623
    %v5625 = vld [vmem:[%s5624] sm:$0xff]
    %v5626 = vld [vmem:[%s5624 + $0x8] sm:$0xff]
    %v5627 = vld [vmem:[%s5624 + $0x10] sm:$0xff]
    %v5628 = vld [vmem:[%s5624 + $0x18] sm:$0xff]
    %v5629 = vld [vmem:[%s5624 + $0x20] sm:$0xff]
    %v5630 = vld [vmem:[%s5624 + $0x28] sm:$0xff]
    %v5631 = vld [vmem:[%s5624 + $0x30] sm:$0xff]
    %v5632 = vld [vmem:[%s5624 + $0x38] sm:$0xff]
    %v5633 = vld [vmem:[%s5624 + $0x40] sm:$0xff]
    %v5634 = vld [vmem:[%s5624 + $0x48] sm:$0xff]
    %v5635 = vld [vmem:[%s5624 + $0x50] sm:$0xff]
    %v5636 = vld [vmem:[%s5624 + $0x58] sm:$0xff]
    %v5637 = vld [vmem:[%s5624 + $0x60] sm:$0xff]
    %v5638 = vld [vmem:[%s5624 + $0x68] sm:$0xff]
    %v5639 = vld [vmem:[%s5624 + $0x70] sm:$0xff]
    %v5640 = vld [vmem:[%s5624 + $0x78] sm:$0xff]
    %v5641 = vld [vmem:[%s5624 + $0x80] sm:$0xff]
    %v5642 = vld [vmem:[%s5624 + $0x88] sm:$0xff]
    %v5643 = vld [vmem:[%s5624 + $0x90] sm:$0xff]
    %v5644 = vld [vmem:[%s5624 + $0x98] sm:$0xff]
    %v5645 = vld [vmem:[%s5624 + $0xa0] sm:$0xff]
    %v5646 = vld [vmem:[%s5624 + $0xa8] sm:$0xff]
    %v5647 = vld [vmem:[%s5624 + $0xb0] sm:$0xff]
    %v5648 = vld [vmem:[%s5624 + $0xb8] sm:$0xff]
    %v5649 = vld [vmem:[%s5624 + $0xc0] sm:$0xff]
    %v5650 = vld [vmem:[%s5624 + $0xc8] sm:$0xff]
    %v5651 = vld [vmem:[%s5624 + $0xd0] sm:$0xff]
    %v5652 = vld [vmem:[%s5624 + $0xd8] sm:$0xff]
    %v5653 = vld [vmem:[%s5624 + $0xe0] sm:$0xff]
    %v5654 = vld [vmem:[%s5624 + $0xe8] sm:$0xff]
    %v5655 = vld [vmem:[%s5624 + $0xf0] sm:$0xff]
    %v5656 = vld [vmem:[%s5624 + $0xf8] sm:$0xff]
    %v5657 = vpack.c.bf16 %v5626, %v5625
    %v5658 = vpack.c.bf16 %v5628, %v5627
    %v5659 = vpack.c.bf16 %v5630, %v5629
    %v5660 = vpack.c.bf16 %v5632, %v5631
    %v5661 = vpack.c.bf16 %v5634, %v5633
    %v5662 = vpack.c.bf16 %v5636, %v5635
    %v5663 = vpack.c.bf16 %v5638, %v5637
    %v5664 = vpack.c.bf16 %v5640, %v5639
    %v5665 = vpack.c.bf16 %v5642, %v5641
    %v5666 = vpack.c.bf16 %v5644, %v5643
    %v5667 = vpack.c.bf16 %v5646, %v5645
    %v5668 = vpack.c.bf16 %v5648, %v5647
    %v5669 = vpack.c.bf16 %v5650, %v5649
    %v5670 = vpack.c.bf16 %v5652, %v5651
    %v5671 = vpack.c.bf16 %v5654, %v5653
    %v5672 = vpack.c.bf16 %v5656, %v5655
    %v5673 = vpack.c.bf16 %v4559, %v4559
    %v5675 = vsel %vm4672, %v5657, 0
    %v5678 = vsel %vm4672, %v5658, 0
    %v5681 = vsel %vm4672, %v5659, 0
    %v5684 = vsel %vm4672, %v5660, 0
    %v5687 = vsel %vm4672, %v5661, 0
    %v5690 = vsel %vm4672, %v5662, 0
    %v5693 = vsel %vm4672, %v5663, 0
    %v5696 = vsel %vm4672, %v5664, 0
    %v5699 = vsel %vm4672, %v5665, 0
    %v5702 = vsel %vm4672, %v5666, 0
    %v5705 = vsel %vm4672, %v5667, 0
    %v5708 = vsel %vm4672, %v5668, 0
    %v5711 = vsel %vm4672, %v5669, 0
    %v5714 = vsel %vm4672, %v5670, 0
    %v5717 = vsel %vm4672, %v5671, 0
    %v5720 = vsel %vm4672, %v5672, 0
    %v5723 = vsel %vm4721, %v5673, 0
    %5725 = vmatpush.bf16.msra.mxu0 0
    %5726 = vmatpush.bf16.msra.mxu0 0
    %5727 = vmatpush.bf16.msra.mxu0 0
    %5728 = vmatpush.bf16.msra.mxu0 0
    %5729 = vmatpush.bf16.msra.mxu0 0
    %5730 = vmatpush.bf16.msra.mxu0 0
    %5731 = vmatpush.bf16.msra.mxu0 0
    %5732 = vmatpush.bf16.msra.mxu0 %v5723
    %5733 = vmatmul.bf16.gmra.mxu0 %v5675
    %v5734 = vpop.f32.mrf.mxu0
    %v5735 = vadd.f32 0.0, %v5734
    %v5736 = vpop.f32.mrf.mxu0
    %v5737 = vadd.f32 0.0, %v5736
    %5738 = vmatmul.bf16.gmra.mxu0 %v5678
    %v5739 = vpop.f32.mrf.mxu0
    %v5740 = vadd.f32 0.0, %v5739
    %v5741 = vpop.f32.mrf.mxu0
    %v5742 = vadd.f32 0.0, %v5741
    %5743 = vmatmul.bf16.gmra.mxu0 %v5681
    %v5744 = vpop.f32.mrf.mxu0
    %v5745 = vadd.f32 0.0, %v5744
    %v5746 = vpop.f32.mrf.mxu0
    %v5747 = vadd.f32 0.0, %v5746
    %5748 = vmatmul.bf16.gmra.mxu0 %v5684
    %v5749 = vpop.f32.mrf.mxu0
    %v5750 = vadd.f32 0.0, %v5749
    %v5751 = vpop.f32.mrf.mxu0
    %v5752 = vadd.f32 0.0, %v5751
    %5753 = vmatmul.bf16.gmra.mxu0 %v5687
    %v5754 = vpop.f32.mrf.mxu0
    %v5755 = vadd.f32 0.0, %v5754
    %v5756 = vpop.f32.mrf.mxu0
    %v5757 = vadd.f32 0.0, %v5756
    %5758 = vmatmul.bf16.gmra.mxu0 %v5690
    %v5759 = vpop.f32.mrf.mxu0
    %v5760 = vadd.f32 0.0, %v5759
    %v5761 = vpop.f32.mrf.mxu0
    %v5762 = vadd.f32 0.0, %v5761
    %5763 = vmatmul.bf16.gmra.mxu0 %v5693
    %v5764 = vpop.f32.mrf.mxu0
    %v5765 = vadd.f32 0.0, %v5764
    %v5766 = vpop.f32.mrf.mxu0
    %v5767 = vadd.f32 0.0, %v5766
    %5768 = vmatmul.bf16.gmra.mxu0 %v5696
    %v5769 = vpop.f32.mrf.mxu0
    %v5770 = vadd.f32 0.0, %v5769
    %v5771 = vpop.f32.mrf.mxu0
    %v5772 = vadd.f32 0.0, %v5771
    %5773 = vmatmul.bf16.gmra.mxu0 %v5699
    %v5774 = vpop.f32.mrf.mxu0
    %v5775 = vadd.f32 0.0, %v5774
    %v5776 = vpop.f32.mrf.mxu0
    %v5777 = vadd.f32 0.0, %v5776
    %5778 = vmatmul.bf16.gmra.mxu0 %v5702
    %v5779 = vpop.f32.mrf.mxu0
    %v5780 = vadd.f32 0.0, %v5779
    %v5781 = vpop.f32.mrf.mxu0
    %v5782 = vadd.f32 0.0, %v5781
    %5783 = vmatmul.bf16.gmra.mxu0 %v5705
    %v5784 = vpop.f32.mrf.mxu0
    %v5785 = vadd.f32 0.0, %v5784
    %v5786 = vpop.f32.mrf.mxu0
    %v5787 = vadd.f32 0.0, %v5786
    %5788 = vmatmul.bf16.gmra.mxu0 %v5708
    %v5789 = vpop.f32.mrf.mxu0
    %v5790 = vadd.f32 0.0, %v5789
    %v5791 = vpop.f32.mrf.mxu0
    %v5792 = vadd.f32 0.0, %v5791
    %5793 = vmatmul.bf16.gmra.mxu0 %v5711
    %v5794 = vpop.f32.mrf.mxu0
    %v5795 = vadd.f32 0.0, %v5794
    %v5796 = vpop.f32.mrf.mxu0
    %v5797 = vadd.f32 0.0, %v5796
    %5798 = vmatmul.bf16.gmra.mxu0 %v5714
    %v5799 = vpop.f32.mrf.mxu0
    %v5800 = vadd.f32 0.0, %v5799
    %v5801 = vpop.f32.mrf.mxu0
    %v5802 = vadd.f32 0.0, %v5801
    %5803 = vmatmul.bf16.gmra.mxu0 %v5717
    %v5804 = vpop.f32.mrf.mxu0
    %v5805 = vadd.f32 0.0, %v5804
    %v5806 = vpop.f32.mrf.mxu0
    %v5807 = vadd.f32 0.0, %v5806
    %5808 = vmatmul.bf16.gmra.mxu0 %v5720
    %v5809 = vpop.f32.mrf.mxu0
    %v5810 = vadd.f32 0.0, %v5809
    %v5811 = vpop.f32.mrf.mxu0
    %v5812 = vadd.f32 0.0, %v5811
    %5813 = vdwg.mxu0
    %v5814 = vadd.f32 %v5591, %v5735
    %v5815 = vadd.f32 %v5592, %v5737
    %v5816 = vadd.f32 %v5593, %v5740
    %v5817 = vadd.f32 %v5594, %v5742
    %v5818 = vadd.f32 %v5595, %v5745
    %v5819 = vadd.f32 %v5596, %v5747
    %v5820 = vadd.f32 %v5597, %v5750
    %v5821 = vadd.f32 %v5598, %v5752
    %v5822 = vadd.f32 %v5599, %v5755
    %v5823 = vadd.f32 %v5600, %v5757
    %v5824 = vadd.f32 %v5601, %v5760
    %v5825 = vadd.f32 %v5602, %v5762
    %v5826 = vadd.f32 %v5603, %v5765
    %v5827 = vadd.f32 %v5604, %v5767
    %v5828 = vadd.f32 %v5605, %v5770
    %v5829 = vadd.f32 %v5606, %v5772
    %v5830 = vadd.f32 %v5607, %v5775
    %v5831 = vadd.f32 %v5608, %v5777
    %v5832 = vadd.f32 %v5609, %v5780
    %v5833 = vadd.f32 %v5610, %v5782
    %v5834 = vadd.f32 %v5611, %v5785
    %v5835 = vadd.f32 %v5612, %v5787
    %v5836 = vadd.f32 %v5613, %v5790
    %v5837 = vadd.f32 %v5614, %v5792
    %v5838 = vadd.f32 %v5615, %v5795
    %v5839 = vadd.f32 %v5616, %v5797
    %v5840 = vadd.f32 %v5617, %v5800
    %v5841 = vadd.f32 %v5618, %v5802
    %v5842 = vadd.f32 %v5619, %v5805
    %v5843 = vadd.f32 %v5620, %v5807
    %v5844 = vadd.f32 %v5621, %v5810
    %v5845 = vadd.f32 %v5622, %v5812
    %s5846 = sadd.s32 %s4570, 512
    %s5847 = scalar_lea.vmem [#allocation3], %s5846
    %v5848 = vld [vmem:[%s5847] sm:$0xff]
    %v5849 = vld [vmem:[%s5847 + $0x8] sm:$0xff]
    %v5850 = vld [vmem:[%s5847 + $0x10] sm:$0xff]
    %v5851 = vld [vmem:[%s5847 + $0x18] sm:$0xff]
    %v5852 = vld [vmem:[%s5847 + $0x20] sm:$0xff]
    %v5853 = vld [vmem:[%s5847 + $0x28] sm:$0xff]
    %v5854 = vld [vmem:[%s5847 + $0x30] sm:$0xff]
    %v5855 = vld [vmem:[%s5847 + $0x38] sm:$0xff]
    %v5856 = vld [vmem:[%s5847 + $0x40] sm:$0xff]
    %v5857 = vld [vmem:[%s5847 + $0x48] sm:$0xff]
    %v5858 = vld [vmem:[%s5847 + $0x50] sm:$0xff]
    %v5859 = vld [vmem:[%s5847 + $0x58] sm:$0xff]
    %v5860 = vld [vmem:[%s5847 + $0x60] sm:$0xff]
    %v5861 = vld [vmem:[%s5847 + $0x68] sm:$0xff]
    %v5862 = vld [vmem:[%s5847 + $0x70] sm:$0xff]
    %v5863 = vld [vmem:[%s5847 + $0x78] sm:$0xff]
    %v5864 = vld [vmem:[%s5847 + $0x80] sm:$0xff]
    %v5865 = vld [vmem:[%s5847 + $0x88] sm:$0xff]
    %v5866 = vld [vmem:[%s5847 + $0x90] sm:$0xff]
    %v5867 = vld [vmem:[%s5847 + $0x98] sm:$0xff]
    %v5868 = vld [vmem:[%s5847 + $0xa0] sm:$0xff]
    %v5869 = vld [vmem:[%s5847 + $0xa8] sm:$0xff]
    %v5870 = vld [vmem:[%s5847 + $0xb0] sm:$0xff]
    %v5871 = vld [vmem:[%s5847 + $0xb8] sm:$0xff]
    %v5872 = vld [vmem:[%s5847 + $0xc0] sm:$0xff]
    %v5873 = vld [vmem:[%s5847 + $0xc8] sm:$0xff]
    %v5874 = vld [vmem:[%s5847 + $0xd0] sm:$0xff]
    %v5875 = vld [vmem:[%s5847 + $0xd8] sm:$0xff]
    %v5876 = vld [vmem:[%s5847 + $0xe0] sm:$0xff]
    %v5877 = vld [vmem:[%s5847 + $0xe8] sm:$0xff]
    %v5878 = vld [vmem:[%s5847 + $0xf0] sm:$0xff]
    %v5879 = vld [vmem:[%s5847 + $0xf8] sm:$0xff]
    %v5880 = vpack.c.bf16 %v5849, %v5848
    %v5881 = vpack.c.bf16 %v5851, %v5850
    %v5882 = vpack.c.bf16 %v5853, %v5852
    %v5883 = vpack.c.bf16 %v5855, %v5854
    %v5884 = vpack.c.bf16 %v5857, %v5856
    %v5885 = vpack.c.bf16 %v5859, %v5858
    %v5886 = vpack.c.bf16 %v5861, %v5860
    %v5887 = vpack.c.bf16 %v5863, %v5862
    %v5888 = vpack.c.bf16 %v5865, %v5864
    %v5889 = vpack.c.bf16 %v5867, %v5866
    %v5890 = vpack.c.bf16 %v5869, %v5868
    %v5891 = vpack.c.bf16 %v5871, %v5870
    %v5892 = vpack.c.bf16 %v5873, %v5872
    %v5893 = vpack.c.bf16 %v5875, %v5874
    %v5894 = vpack.c.bf16 %v5877, %v5876
    %v5895 = vpack.c.bf16 %v5879, %v5878
    %v5896 = vpack.c.bf16 %v4560, %v4560
    %v5898 = vsel %vm4672, %v5880, 0
    %v5901 = vsel %vm4672, %v5881, 0
    %v5904 = vsel %vm4672, %v5882, 0
    %v5907 = vsel %vm4672, %v5883, 0
    %v5910 = vsel %vm4672, %v5884, 0
    %v5913 = vsel %vm4672, %v5885, 0
    %v5916 = vsel %vm4672, %v5886, 0
    %v5919 = vsel %vm4672, %v5887, 0
    %v5922 = vsel %vm4672, %v5888, 0
    %v5925 = vsel %vm4672, %v5889, 0
    %v5928 = vsel %vm4672, %v5890, 0
    %v5931 = vsel %vm4672, %v5891, 0
    %v5934 = vsel %vm4672, %v5892, 0
    %v5937 = vsel %vm4672, %v5893, 0
    %v5940 = vsel %vm4672, %v5894, 0
    %v5943 = vsel %vm4672, %v5895, 0
    %v5946 = vsel %vm4721, %v5896, 0
    %5948 = vmatpush.bf16.msra.mxu0 0
    %5949 = vmatpush.bf16.msra.mxu0 0
    %5950 = vmatpush.bf16.msra.mxu0 0
    %5951 = vmatpush.bf16.msra.mxu0 0
    %5952 = vmatpush.bf16.msra.mxu0 0
    %5953 = vmatpush.bf16.msra.mxu0 0
    %5954 = vmatpush.bf16.msra.mxu0 0
    %5955 = vmatpush.bf16.msra.mxu0 %v5946
    %5956 = vmatmul.bf16.gmra.mxu0 %v5898
    %v5957 = vpop.f32.mrf.mxu0
    %v5958 = vadd.f32 0.0, %v5957
    %v5959 = vpop.f32.mrf.mxu0
    %v5960 = vadd.f32 0.0, %v5959
    %5961 = vmatmul.bf16.gmra.mxu0 %v5901
    %v5962 = vpop.f32.mrf.mxu0
    %v5963 = vadd.f32 0.0, %v5962
    %v5964 = vpop.f32.mrf.mxu0
    %v5965 = vadd.f32 0.0, %v5964
    %5966 = vmatmul.bf16.gmra.mxu0 %v5904
    %v5967 = vpop.f32.mrf.mxu0
    %v5968 = vadd.f32 0.0, %v5967
    %v5969 = vpop.f32.mrf.mxu0
    %v5970 = vadd.f32 0.0, %v5969
    %5971 = vmatmul.bf16.gmra.mxu0 %v5907
    %v5972 = vpop.f32.mrf.mxu0
    %v5973 = vadd.f32 0.0, %v5972
    %v5974 = vpop.f32.mrf.mxu0
    %v5975 = vadd.f32 0.0, %v5974
    %5976 = vmatmul.bf16.gmra.mxu0 %v5910
    %v5977 = vpop.f32.mrf.mxu0
    %v5978 = vadd.f32 0.0, %v5977
    %v5979 = vpop.f32.mrf.mxu0
    %v5980 = vadd.f32 0.0, %v5979
    %5981 = vmatmul.bf16.gmra.mxu0 %v5913
    %v5982 = vpop.f32.mrf.mxu0
    %v5983 = vadd.f32 0.0, %v5982
    %v5984 = vpop.f32.mrf.mxu0
    %v5985 = vadd.f32 0.0, %v5984
    %5986 = vmatmul.bf16.gmra.mxu0 %v5916
    %v5987 = vpop.f32.mrf.mxu0
    %v5988 = vadd.f32 0.0, %v5987
    %v5989 = vpop.f32.mrf.mxu0
    %v5990 = vadd.f32 0.0, %v5989
    %5991 = vmatmul.bf16.gmra.mxu0 %v5919
    %v5992 = vpop.f32.mrf.mxu0
    %v5993 = vadd.f32 0.0, %v5992
    %v5994 = vpop.f32.mrf.mxu0
    %v5995 = vadd.f32 0.0, %v5994
    %5996 = vmatmul.bf16.gmra.mxu0 %v5922
    %v5997 = vpop.f32.mrf.mxu0
    %v5998 = vadd.f32 0.0, %v5997
    %v5999 = vpop.f32.mrf.mxu0
    %v6000 = vadd.f32 0.0, %v5999
    %6001 = vmatmul.bf16.gmra.mxu0 %v5925
    %v6002 = vpop.f32.mrf.mxu0
    %v6003 = vadd.f32 0.0, %v6002
    %v6004 = vpop.f32.mrf.mxu0
    %v6005 = vadd.f32 0.0, %v6004
    %6006 = vmatmul.bf16.gmra.mxu0 %v5928
    %v6007 = vpop.f32.mrf.mxu0
    %v6008 = vadd.f32 0.0, %v6007
    %v6009 = vpop.f32.mrf.mxu0
    %v6010 = vadd.f32 0.0, %v6009
    %6011 = vmatmul.bf16.gmra.mxu0 %v5931
    %v6012 = vpop.f32.mrf.mxu0
    %v6013 = vadd.f32 0.0, %v6012
    %v6014 = vpop.f32.mrf.mxu0
    %v6015 = vadd.f32 0.0, %v6014
    %6016 = vmatmul.bf16.gmra.mxu0 %v5934
    %v6017 = vpop.f32.mrf.mxu0
    %v6018 = vadd.f32 0.0, %v6017
    %v6019 = vpop.f32.mrf.mxu0
    %v6020 = vadd.f32 0.0, %v6019
    %6021 = vmatmul.bf16.gmra.mxu0 %v5937
    %v6022 = vpop.f32.mrf.mxu0
    %v6023 = vadd.f32 0.0, %v6022
    %v6024 = vpop.f32.mrf.mxu0
    %v6025 = vadd.f32 0.0, %v6024
    %6026 = vmatmul.bf16.gmra.mxu0 %v5940
    %v6027 = vpop.f32.mrf.mxu0
    %v6028 = vadd.f32 0.0, %v6027
    %v6029 = vpop.f32.mrf.mxu0
    %v6030 = vadd.f32 0.0, %v6029
    %6031 = vmatmul.bf16.gmra.mxu0 %v5943
    %v6032 = vpop.f32.mrf.mxu0
    %v6033 = vadd.f32 0.0, %v6032
    %v6034 = vpop.f32.mrf.mxu0
    %v6035 = vadd.f32 0.0, %v6034
    %6036 = vdwg.mxu0
    %v6037 = vadd.f32 %v5814, %v5958
    %v6038 = vadd.f32 %v5815, %v5960
    %v6039 = vadd.f32 %v5816, %v5963
    %v6040 = vadd.f32 %v5817, %v5965
    %v6041 = vadd.f32 %v5818, %v5968
    %v6042 = vadd.f32 %v5819, %v5970
    %v6043 = vadd.f32 %v5820, %v5973
    %v6044 = vadd.f32 %v5821, %v5975
    %v6045 = vadd.f32 %v5822, %v5978
    %v6046 = vadd.f32 %v5823, %v5980
    %v6047 = vadd.f32 %v5824, %v5983
    %v6048 = vadd.f32 %v5825, %v5985
    %v6049 = vadd.f32 %v5826, %v5988
    %v6050 = vadd.f32 %v5827, %v5990
    %v6051 = vadd.f32 %v5828, %v5993
    %v6052 = vadd.f32 %v5829, %v5995
    %v6053 = vadd.f32 %v5830, %v5998
    %v6054 = vadd.f32 %v5831, %v6000
    %v6055 = vadd.f32 %v5832, %v6003
    %v6056 = vadd.f32 %v5833, %v6005
    %v6057 = vadd.f32 %v5834, %v6008
    %v6058 = vadd.f32 %v5835, %v6010
    %v6059 = vadd.f32 %v5836, %v6013
    %v6060 = vadd.f32 %v5837, %v6015
    %v6061 = vadd.f32 %v5838, %v6018
    %v6062 = vadd.f32 %v5839, %v6020
    %v6063 = vadd.f32 %v5840, %v6023
    %v6064 = vadd.f32 %v5841, %v6025
    %v6065 = vadd.f32 %v5842, %v6028
    %v6066 = vadd.f32 %v5843, %v6030
    %v6067 = vadd.f32 %v5844, %v6033
    %v6068 = vadd.f32 %v5845, %v6035
    %s6069 = sadd.s32 %s4570, 514
    %s6070 = scalar_lea.vmem [#allocation3], %s6069
    %v6071 = vld [vmem:[%s6070] sm:$0xff]
    %v6072 = vld [vmem:[%s6070 + $0x8] sm:$0xff]
    %v6073 = vld [vmem:[%s6070 + $0x10] sm:$0xff]
    %v6074 = vld [vmem:[%s6070 + $0x18] sm:$0xff]
    %v6075 = vld [vmem:[%s6070 + $0x20] sm:$0xff]
    %v6076 = vld [vmem:[%s6070 + $0x28] sm:$0xff]
    %v6077 = vld [vmem:[%s6070 + $0x30] sm:$0xff]
    %v6078 = vld [vmem:[%s6070 + $0x38] sm:$0xff]
    %v6079 = vld [vmem:[%s6070 + $0x40] sm:$0xff]
    %v6080 = vld [vmem:[%s6070 + $0x48] sm:$0xff]
    %v6081 = vld [vmem:[%s6070 + $0x50] sm:$0xff]
    %v6082 = vld [vmem:[%s6070 + $0x58] sm:$0xff]
    %v6083 = vld [vmem:[%s6070 + $0x60] sm:$0xff]
    %v6084 = vld [vmem:[%s6070 + $0x68] sm:$0xff]
    %v6085 = vld [vmem:[%s6070 + $0x70] sm:$0xff]
    %v6086 = vld [vmem:[%s6070 + $0x78] sm:$0xff]
    %v6087 = vld [vmem:[%s6070 + $0x80] sm:$0xff]
    %v6088 = vld [vmem:[%s6070 + $0x88] sm:$0xff]
    %v6089 = vld [vmem:[%s6070 + $0x90] sm:$0xff]
    %v6090 = vld [vmem:[%s6070 + $0x98] sm:$0xff]
    %v6091 = vld [vmem:[%s6070 + $0xa0] sm:$0xff]
    %v6092 = vld [vmem:[%s6070 + $0xa8] sm:$0xff]
    %v6093 = vld [vmem:[%s6070 + $0xb0] sm:$0xff]
    %v6094 = vld [vmem:[%s6070 + $0xb8] sm:$0xff]
    %v6095 = vld [vmem:[%s6070 + $0xc0] sm:$0xff]
    %v6096 = vld [vmem:[%s6070 + $0xc8] sm:$0xff]
    %v6097 = vld [vmem:[%s6070 + $0xd0] sm:$0xff]
    %v6098 = vld [vmem:[%s6070 + $0xd8] sm:$0xff]
    %v6099 = vld [vmem:[%s6070 + $0xe0] sm:$0xff]
    %v6100 = vld [vmem:[%s6070 + $0xe8] sm:$0xff]
    %v6101 = vld [vmem:[%s6070 + $0xf0] sm:$0xff]
    %v6102 = vld [vmem:[%s6070 + $0xf8] sm:$0xff]
    %v6103 = vpack.c.bf16 %v6072, %v6071
    %v6104 = vpack.c.bf16 %v6074, %v6073
    %v6105 = vpack.c.bf16 %v6076, %v6075
    %v6106 = vpack.c.bf16 %v6078, %v6077
    %v6107 = vpack.c.bf16 %v6080, %v6079
    %v6108 = vpack.c.bf16 %v6082, %v6081
    %v6109 = vpack.c.bf16 %v6084, %v6083
    %v6110 = vpack.c.bf16 %v6086, %v6085
    %v6111 = vpack.c.bf16 %v6088, %v6087
    %v6112 = vpack.c.bf16 %v6090, %v6089
    %v6113 = vpack.c.bf16 %v6092, %v6091
    %v6114 = vpack.c.bf16 %v6094, %v6093
    %v6115 = vpack.c.bf16 %v6096, %v6095
    %v6116 = vpack.c.bf16 %v6098, %v6097
    %v6117 = vpack.c.bf16 %v6100, %v6099
    %v6118 = vpack.c.bf16 %v6102, %v6101
    %v6119 = vpack.c.bf16 %v4561, %v4561
    %v6121 = vsel %vm4672, %v6103, 0
    %v6124 = vsel %vm4672, %v6104, 0
    %v6127 = vsel %vm4672, %v6105, 0
    %v6130 = vsel %vm4672, %v6106, 0
    %v6133 = vsel %vm4672, %v6107, 0
    %v6136 = vsel %vm4672, %v6108, 0
    %v6139 = vsel %vm4672, %v6109, 0
    %v6142 = vsel %vm4672, %v6110, 0
    %v6145 = vsel %vm4672, %v6111, 0
    %v6148 = vsel %vm4672, %v6112, 0
    %v6151 = vsel %vm4672, %v6113, 0
    %v6154 = vsel %vm4672, %v6114, 0
    %v6157 = vsel %vm4672, %v6115, 0
    %v6160 = vsel %vm4672, %v6116, 0
    %v6163 = vsel %vm4672, %v6117, 0
    %v6166 = vsel %vm4672, %v6118, 0
    %v6169 = vsel %vm4721, %v6119, 0
    %6171 = vmatpush.bf16.msra.mxu0 0
    %6172 = vmatpush.bf16.msra.mxu0 0
    %6173 = vmatpush.bf16.msra.mxu0 0
    %6174 = vmatpush.bf16.msra.mxu0 0
    %6175 = vmatpush.bf16.msra.mxu0 0
    %6176 = vmatpush.bf16.msra.mxu0 0
    %6177 = vmatpush.bf16.msra.mxu0 0
    %6178 = vmatpush.bf16.msra.mxu0 %v6169
    %6179 = vmatmul.bf16.gmra.mxu0 %v6121
    %v6180 = vpop.f32.mrf.mxu0
    %v6181 = vadd.f32 0.0, %v6180
    %v6182 = vpop.f32.mrf.mxu0
    %v6183 = vadd.f32 0.0, %v6182
    %6184 = vmatmul.bf16.gmra.mxu0 %v6124
    %v6185 = vpop.f32.mrf.mxu0
    %v6186 = vadd.f32 0.0, %v6185
    %v6187 = vpop.f32.mrf.mxu0
    %v6188 = vadd.f32 0.0, %v6187
    %6189 = vmatmul.bf16.gmra.mxu0 %v6127
    %v6190 = vpop.f32.mrf.mxu0
    %v6191 = vadd.f32 0.0, %v6190
    %v6192 = vpop.f32.mrf.mxu0
    %v6193 = vadd.f32 0.0, %v6192
    %6194 = vmatmul.bf16.gmra.mxu0 %v6130
    %v6195 = vpop.f32.mrf.mxu0
    %v6196 = vadd.f32 0.0, %v6195
    %v6197 = vpop.f32.mrf.mxu0
    %v6198 = vadd.f32 0.0, %v6197
    %6199 = vmatmul.bf16.gmra.mxu0 %v6133
    %v6200 = vpop.f32.mrf.mxu0
    %v6201 = vadd.f32 0.0, %v6200
    %v6202 = vpop.f32.mrf.mxu0
    %v6203 = vadd.f32 0.0, %v6202
    %6204 = vmatmul.bf16.gmra.mxu0 %v6136
    %v6205 = vpop.f32.mrf.mxu0
    %v6206 = vadd.f32 0.0, %v6205
    %v6207 = vpop.f32.mrf.mxu0
    %v6208 = vadd.f32 0.0, %v6207
    %6209 = vmatmul.bf16.gmra.mxu0 %v6139
    %v6210 = vpop.f32.mrf.mxu0
    %v6211 = vadd.f32 0.0, %v6210
    %v6212 = vpop.f32.mrf.mxu0
    %v6213 = vadd.f32 0.0, %v6212
    %6214 = vmatmul.bf16.gmra.mxu0 %v6142
    %v6215 = vpop.f32.mrf.mxu0
    %v6216 = vadd.f32 0.0, %v6215
    %v6217 = vpop.f32.mrf.mxu0
    %v6218 = vadd.f32 0.0, %v6217
    %6219 = vmatmul.bf16.gmra.mxu0 %v6145
    %v6220 = vpop.f32.mrf.mxu0
    %v6221 = vadd.f32 0.0, %v6220
    %v6222 = vpop.f32.mrf.mxu0
    %v6223 = vadd.f32 0.0, %v6222
    %6224 = vmatmul.bf16.gmra.mxu0 %v6148
    %v6225 = vpop.f32.mrf.mxu0
    %v6226 = vadd.f32 0.0, %v6225
    %v6227 = vpop.f32.mrf.mxu0
    %v6228 = vadd.f32 0.0, %v6227
    %6229 = vmatmul.bf16.gmra.mxu0 %v6151
    %v6230 = vpop.f32.mrf.mxu0
    %v6231 = vadd.f32 0.0, %v6230
    %v6232 = vpop.f32.mrf.mxu0
    %v6233 = vadd.f32 0.0, %v6232
    %6234 = vmatmul.bf16.gmra.mxu0 %v6154
    %v6235 = vpop.f32.mrf.mxu0
    %v6236 = vadd.f32 0.0, %v6235
    %v6237 = vpop.f32.mrf.mxu0
    %v6238 = vadd.f32 0.0, %v6237
    %6239 = vmatmul.bf16.gmra.mxu0 %v6157
    %v6240 = vpop.f32.mrf.mxu0
    %v6241 = vadd.f32 0.0, %v6240
    %v6242 = vpop.f32.mrf.mxu0
    %v6243 = vadd.f32 0.0, %v6242
    %6244 = vmatmul.bf16.gmra.mxu0 %v6160
    %v6245 = vpop.f32.mrf.mxu0
    %v6246 = vadd.f32 0.0, %v6245
    %v6247 = vpop.f32.mrf.mxu0
    %v6248 = vadd.f32 0.0, %v6247
    %6249 = vmatmul.bf16.gmra.mxu0 %v6163
    %v6250 = vpop.f32.mrf.mxu0
    %v6251 = vadd.f32 0.0, %v6250
    %v6252 = vpop.f32.mrf.mxu0
    %v6253 = vadd.f32 0.0, %v6252
    %6254 = vmatmul.bf16.gmra.mxu0 %v6166
    %v6255 = vpop.f32.mrf.mxu0
    %v6256 = vadd.f32 0.0, %v6255
    %v6257 = vpop.f32.mrf.mxu0
    %v6258 = vadd.f32 0.0, %v6257
    %6259 = vdwg.mxu0
    %v6260 = vadd.f32 %v6037, %v6181
    %v6261 = vadd.f32 %v6038, %v6183
    %v6262 = vadd.f32 %v6039, %v6186
    %v6263 = vadd.f32 %v6040, %v6188
    %v6264 = vadd.f32 %v6041, %v6191
    %v6265 = vadd.f32 %v6042, %v6193
    %v6266 = vadd.f32 %v6043, %v6196
    %v6267 = vadd.f32 %v6044, %v6198
    %v6268 = vadd.f32 %v6045, %v6201
    %v6269 = vadd.f32 %v6046, %v6203
    %v6270 = vadd.f32 %v6047, %v6206
    %v6271 = vadd.f32 %v6048, %v6208
    %v6272 = vadd.f32 %v6049, %v6211
    %v6273 = vadd.f32 %v6050, %v6213
    %v6274 = vadd.f32 %v6051, %v6216
    %v6275 = vadd.f32 %v6052, %v6218
    %v6276 = vadd.f32 %v6053, %v6221
    %v6277 = vadd.f32 %v6054, %v6223
    %v6278 = vadd.f32 %v6055, %v6226
    %v6279 = vadd.f32 %v6056, %v6228
    %v6280 = vadd.f32 %v6057, %v6231
    %v6281 = vadd.f32 %v6058, %v6233
    %v6282 = vadd.f32 %v6059, %v6236
    %v6283 = vadd.f32 %v6060, %v6238
    %v6284 = vadd.f32 %v6061, %v6241
    %v6285 = vadd.f32 %v6062, %v6243
    %v6286 = vadd.f32 %v6063, %v6246
    %v6287 = vadd.f32 %v6064, %v6248
    %v6288 = vadd.f32 %v6065, %v6251
    %v6289 = vadd.f32 %v6066, %v6253
    %v6290 = vadd.f32 %v6067, %v6256
    %v6291 = vadd.f32 %v6068, %v6258
    %s6292 = sadd.s32 %s4570, 516
    %s6293 = scalar_lea.vmem [#allocation3], %s6292
    %v6294 = vld [vmem:[%s6293] sm:$0xff]
    %v6295 = vld [vmem:[%s6293 + $0x8] sm:$0xff]
    %v6296 = vld [vmem:[%s6293 + $0x10] sm:$0xff]
    %v6297 = vld [vmem:[%s6293 + $0x18] sm:$0xff]
    %v6298 = vld [vmem:[%s6293 + $0x20] sm:$0xff]
    %v6299 = vld [vmem:[%s6293 + $0x28] sm:$0xff]
    %v6300 = vld [vmem:[%s6293 + $0x30] sm:$0xff]
    %v6301 = vld [vmem:[%s6293 + $0x38] sm:$0xff]
    %v6302 = vld [vmem:[%s6293 + $0x40] sm:$0xff]
    %v6303 = vld [vmem:[%s6293 + $0x48] sm:$0xff]
    %v6304 = vld [vmem:[%s6293 + $0x50] sm:$0xff]
    %v6305 = vld [vmem:[%s6293 + $0x58] sm:$0xff]
    %v6306 = vld [vmem:[%s6293 + $0x60] sm:$0xff]
    %v6307 = vld [vmem:[%s6293 + $0x68] sm:$0xff]
    %v6308 = vld [vmem:[%s6293 + $0x70] sm:$0xff]
    %v6309 = vld [vmem:[%s6293 + $0x78] sm:$0xff]
    %v6310 = vld [vmem:[%s6293 + $0x80] sm:$0xff]
    %v6311 = vld [vmem:[%s6293 + $0x88] sm:$0xff]
    %v6312 = vld [vmem:[%s6293 + $0x90] sm:$0xff]
    %v6313 = vld [vmem:[%s6293 + $0x98] sm:$0xff]
    %v6314 = vld [vmem:[%s6293 + $0xa0] sm:$0xff]
    %v6315 = vld [vmem:[%s6293 + $0xa8] sm:$0xff]
    %v6316 = vld [vmem:[%s6293 + $0xb0] sm:$0xff]
    %v6317 = vld [vmem:[%s6293 + $0xb8] sm:$0xff]
    %v6318 = vld [vmem:[%s6293 + $0xc0] sm:$0xff]
    %v6319 = vld [vmem:[%s6293 + $0xc8] sm:$0xff]
    %v6320 = vld [vmem:[%s6293 + $0xd0] sm:$0xff]
    %v6321 = vld [vmem:[%s6293 + $0xd8] sm:$0xff]
    %v6322 = vld [vmem:[%s6293 + $0xe0] sm:$0xff]
    %v6323 = vld [vmem:[%s6293 + $0xe8] sm:$0xff]
    %v6324 = vld [vmem:[%s6293 + $0xf0] sm:$0xff]
    %v6325 = vld [vmem:[%s6293 + $0xf8] sm:$0xff]
    %v6326 = vpack.c.bf16 %v6295, %v6294
    %v6327 = vpack.c.bf16 %v6297, %v6296
    %v6328 = vpack.c.bf16 %v6299, %v6298
    %v6329 = vpack.c.bf16 %v6301, %v6300
    %v6330 = vpack.c.bf16 %v6303, %v6302
    %v6331 = vpack.c.bf16 %v6305, %v6304
    %v6332 = vpack.c.bf16 %v6307, %v6306
    %v6333 = vpack.c.bf16 %v6309, %v6308
    %v6334 = vpack.c.bf16 %v6311, %v6310
    %v6335 = vpack.c.bf16 %v6313, %v6312
    %v6336 = vpack.c.bf16 %v6315, %v6314
    %v6337 = vpack.c.bf16 %v6317, %v6316
    %v6338 = vpack.c.bf16 %v6319, %v6318
    %v6339 = vpack.c.bf16 %v6321, %v6320
    %v6340 = vpack.c.bf16 %v6323, %v6322
    %v6341 = vpack.c.bf16 %v6325, %v6324
    %v6342 = vpack.c.bf16 %v4562, %v4562
    %v6344 = vsel %vm4672, %v6326, 0
    %v6347 = vsel %vm4672, %v6327, 0
    %v6350 = vsel %vm4672, %v6328, 0
    %v6353 = vsel %vm4672, %v6329, 0
    %v6356 = vsel %vm4672, %v6330, 0
    %v6359 = vsel %vm4672, %v6331, 0
    %v6362 = vsel %vm4672, %v6332, 0
    %v6365 = vsel %vm4672, %v6333, 0
    %v6368 = vsel %vm4672, %v6334, 0
    %v6371 = vsel %vm4672, %v6335, 0
    %v6374 = vsel %vm4672, %v6336, 0
    %v6377 = vsel %vm4672, %v6337, 0
    %v6380 = vsel %vm4672, %v6338, 0
    %v6383 = vsel %vm4672, %v6339, 0
    %v6386 = vsel %vm4672, %v6340, 0
    %v6389 = vsel %vm4672, %v6341, 0
    %v6392 = vsel %vm4721, %v6342, 0
    %6394 = vmatpush.bf16.msra.mxu0 0
    %6395 = vmatpush.bf16.msra.mxu0 0
    %6396 = vmatpush.bf16.msra.mxu0 0
    %6397 = vmatpush.bf16.msra.mxu0 0
    %6398 = vmatpush.bf16.msra.mxu0 0
    %6399 = vmatpush.bf16.msra.mxu0 0
    %6400 = vmatpush.bf16.msra.mxu0 0
    %6401 = vmatpush.bf16.msra.mxu0 %v6392
    %6402 = vmatmul.bf16.gmra.mxu0 %v6344
    %v6403 = vpop.f32.mrf.mxu0
    %v6404 = vadd.f32 0.0, %v6403
    %v6405 = vpop.f32.mrf.mxu0
    %v6406 = vadd.f32 0.0, %v6405
    %6407 = vmatmul.bf16.gmra.mxu0 %v6347
    %v6408 = vpop.f32.mrf.mxu0
    %v6409 = vadd.f32 0.0, %v6408
    %v6410 = vpop.f32.mrf.mxu0
    %v6411 = vadd.f32 0.0, %v6410
    %6412 = vmatmul.bf16.gmra.mxu0 %v6350
    %v6413 = vpop.f32.mrf.mxu0
    %v6414 = vadd.f32 0.0, %v6413
    %v6415 = vpop.f32.mrf.mxu0
    %v6416 = vadd.f32 0.0, %v6415
    %6417 = vmatmul.bf16.gmra.mxu0 %v6353
    %v6418 = vpop.f32.mrf.mxu0
    %v6419 = vadd.f32 0.0, %v6418
    %v6420 = vpop.f32.mrf.mxu0
    %v6421 = vadd.f32 0.0, %v6420
    %6422 = vmatmul.bf16.gmra.mxu0 %v6356
    %v6423 = vpop.f32.mrf.mxu0
    %v6424 = vadd.f32 0.0, %v6423
    %v6425 = vpop.f32.mrf.mxu0
    %v6426 = vadd.f32 0.0, %v6425
    %6427 = vmatmul.bf16.gmra.mxu0 %v6359
    %v6428 = vpop.f32.mrf.mxu0
    %v6429 = vadd.f32 0.0, %v6428
    %v6430 = vpop.f32.mrf.mxu0
    %v6431 = vadd.f32 0.0, %v6430
    %6432 = vmatmul.bf16.gmra.mxu0 %v6362
    %v6433 = vpop.f32.mrf.mxu0
    %v6434 = vadd.f32 0.0, %v6433
    %v6435 = vpop.f32.mrf.mxu0
    %v6436 = vadd.f32 0.0, %v6435
    %6437 = vmatmul.bf16.gmra.mxu0 %v6365
    %v6438 = vpop.f32.mrf.mxu0
    %v6439 = vadd.f32 0.0, %v6438
    %v6440 = vpop.f32.mrf.mxu0
    %v6441 = vadd.f32 0.0, %v6440
    %6442 = vmatmul.bf16.gmra.mxu0 %v6368
    %v6443 = vpop.f32.mrf.mxu0
    %v6444 = vadd.f32 0.0, %v6443
    %v6445 = vpop.f32.mrf.mxu0
    %v6446 = vadd.f32 0.0, %v6445
    %6447 = vmatmul.bf16.gmra.mxu0 %v6371
    %v6448 = vpop.f32.mrf.mxu0
    %v6449 = vadd.f32 0.0, %v6448
    %v6450 = vpop.f32.mrf.mxu0
    %v6451 = vadd.f32 0.0, %v6450
    %6452 = vmatmul.bf16.gmra.mxu0 %v6374
    %v6453 = vpop.f32.mrf.mxu0
    %v6454 = vadd.f32 0.0, %v6453
    %v6455 = vpop.f32.mrf.mxu0
    %v6456 = vadd.f32 0.0, %v6455
    %6457 = vmatmul.bf16.gmra.mxu0 %v6377
    %v6458 = vpop.f32.mrf.mxu0
    %v6459 = vadd.f32 0.0, %v6458
    %v6460 = vpop.f32.mrf.mxu0
    %v6461 = vadd.f32 0.0, %v6460
    %6462 = vmatmul.bf16.gmra.mxu0 %v6380
    %v6463 = vpop.f32.mrf.mxu0
    %v6464 = vadd.f32 0.0, %v6463
    %v6465 = vpop.f32.mrf.mxu0
    %v6466 = vadd.f32 0.0, %v6465
    %6467 = vmatmul.bf16.gmra.mxu0 %v6383
    %v6468 = vpop.f32.mrf.mxu0
    %v6469 = vadd.f32 0.0, %v6468
    %v6470 = vpop.f32.mrf.mxu0
    %v6471 = vadd.f32 0.0, %v6470
    %6472 = vmatmul.bf16.gmra.mxu0 %v6386
    %v6473 = vpop.f32.mrf.mxu0
    %v6474 = vadd.f32 0.0, %v6473
    %v6475 = vpop.f32.mrf.mxu0
    %v6476 = vadd.f32 0.0, %v6475
    %6477 = vmatmul.bf16.gmra.mxu0 %v6389
    %v6478 = vpop.f32.mrf.mxu0
    %v6479 = vadd.f32 0.0, %v6478
    %v6480 = vpop.f32.mrf.mxu0
    %v6481 = vadd.f32 0.0, %v6480
    %6482 = vdwg.mxu0
    %v6483 = vadd.f32 %v6260, %v6404
    %v6484 = vadd.f32 %v6261, %v6406
    %v6485 = vadd.f32 %v6262, %v6409
    %v6486 = vadd.f32 %v6263, %v6411
    %v6487 = vadd.f32 %v6264, %v6414
    %v6488 = vadd.f32 %v6265, %v6416
    %v6489 = vadd.f32 %v6266, %v6419
    %v6490 = vadd.f32 %v6267, %v6421
    %v6491 = vadd.f32 %v6268, %v6424
    %v6492 = vadd.f32 %v6269, %v6426
    %v6493 = vadd.f32 %v6270, %v6429
    %v6494 = vadd.f32 %v6271, %v6431
    %v6495 = vadd.f32 %v6272, %v6434
    %v6496 = vadd.f32 %v6273, %v6436
    %v6497 = vadd.f32 %v6274, %v6439
    %v6498 = vadd.f32 %v6275, %v6441
    %v6499 = vadd.f32 %v6276, %v6444
    %v6500 = vadd.f32 %v6277, %v6446
    %v6501 = vadd.f32 %v6278, %v6449
    %v6502 = vadd.f32 %v6279, %v6451
    %v6503 = vadd.f32 %v6280, %v6454
    %v6504 = vadd.f32 %v6281, %v6456
    %v6505 = vadd.f32 %v6282, %v6459
    %v6506 = vadd.f32 %v6283, %v6461
    %v6507 = vadd.f32 %v6284, %v6464
    %v6508 = vadd.f32 %v6285, %v6466
    %v6509 = vadd.f32 %v6286, %v6469
    %v6510 = vadd.f32 %v6287, %v6471
    %v6511 = vadd.f32 %v6288, %v6474
    %v6512 = vadd.f32 %v6289, %v6476
    %v6513 = vadd.f32 %v6290, %v6479
    %v6514 = vadd.f32 %v6291, %v6481
    %v6516 = vperm.slane %v4563, 0
    %v6518 = vadd.f32 %v6483, %v6516
    %v6519 = vadd.f32 %v6484, %v6516
    %v6520 = vadd.f32 %v6485, %v6516
    %v6521 = vadd.f32 %v6486, %v6516
    %v6522 = vadd.f32 %v6487, %v6516
    %v6523 = vadd.f32 %v6488, %v6516
    %v6524 = vadd.f32 %v6489, %v6516
    %v6525 = vadd.f32 %v6490, %v6516
    %v6526 = vadd.f32 %v6491, %v6516
    %v6527 = vadd.f32 %v6492, %v6516
    %v6528 = vadd.f32 %v6493, %v6516
    %v6529 = vadd.f32 %v6494, %v6516
    %v6530 = vadd.f32 %v6495, %v6516
    %v6531 = vadd.f32 %v6496, %v6516
    %v6532 = vadd.f32 %v6497, %v6516
    %v6533 = vadd.f32 %v6498, %v6516
    %v6534 = vadd.f32 %v6499, %v6516
    %v6535 = vadd.f32 %v6500, %v6516
    %v6536 = vadd.f32 %v6501, %v6516
    %v6537 = vadd.f32 %v6502, %v6516
    %v6538 = vadd.f32 %v6503, %v6516
    %v6539 = vadd.f32 %v6504, %v6516
    %v6540 = vadd.f32 %v6505, %v6516
    %v6541 = vadd.f32 %v6506, %v6516
    %v6542 = vadd.f32 %v6507, %v6516
    %v6543 = vadd.f32 %v6508, %v6516
    %v6544 = vadd.f32 %v6509, %v6516
    %v6545 = vadd.f32 %v6510, %v6516
    %v6546 = vadd.f32 %v6511, %v6516
    %v6547 = vadd.f32 %v6512, %v6516
    %v6548 = vadd.f32 %v6513, %v6516
    %v6549 = vadd.f32 %v6514, %v6516
    %v6550 = vmax.f32 %v6518, 0.0
    %v6551 = vmax.f32 %v6519, 0.0
    %v6552 = vmax.f32 %v6520, 0.0
    %v6553 = vmax.f32 %v6521, 0.0
    %v6554 = vmax.f32 %v6522, 0.0
    %v6555 = vmax.f32 %v6523, 0.0
    %v6556 = vmax.f32 %v6524, 0.0
    %v6557 = vmax.f32 %v6525, 0.0
    %v6558 = vmax.f32 %v6526, 0.0
    %v6559 = vmax.f32 %v6527, 0.0
    %v6560 = vmax.f32 %v6528, 0.0
    %v6561 = vmax.f32 %v6529, 0.0
    %v6562 = vmax.f32 %v6530, 0.0
    %v6563 = vmax.f32 %v6531, 0.0
    %v6564 = vmax.f32 %v6532, 0.0
    %v6565 = vmax.f32 %v6533, 0.0
    %v6566 = vmax.f32 %v6534, 0.0
    %v6567 = vmax.f32 %v6535, 0.0
    %v6568 = vmax.f32 %v6536, 0.0
    %v6569 = vmax.f32 %v6537, 0.0
    %v6570 = vmax.f32 %v6538, 0.0
    %v6571 = vmax.f32 %v6539, 0.0
    %v6572 = vmax.f32 %v6540, 0.0
    %v6573 = vmax.f32 %v6541, 0.0
    %v6574 = vmax.f32 %v6542, 0.0
    %v6575 = vmax.f32 %v6543, 0.0
    %v6576 = vmax.f32 %v6544, 0.0
    %v6577 = vmax.f32 %v6545, 0.0
    %v6578 = vmax.f32 %v6546, 0.0
    %v6579 = vmax.f32 %v6547, 0.0
    %v6580 = vmax.f32 %v6548, 0.0
    %v6581 = vmax.f32 %v6549, 0.0
    %s6582 = scalar_lea.vmem [#allocation4], %s4570
    %vm6583 = vcmask 130048
    %6584 = vst.msk [vmem:[%s6582] sm:$0xff] %vm6583, %v6550
    %6585 = vst.msk [vmem:[%s6582 + $0x8] sm:$0xff] %vm6583, %v6551
    %6586 = vst.msk [vmem:[%s6582 + $0x10] sm:$0xff] %vm6583, %v6552
    %6587 = vst.msk [vmem:[%s6582 + $0x18] sm:$0xff] %vm6583, %v6553
    %6588 = vst.msk [vmem:[%s6582 + $0x20] sm:$0xff] %vm6583, %v6554
    %6589 = vst.msk [vmem:[%s6582 + $0x28] sm:$0xff] %vm6583, %v6555
    %6590 = vst.msk [vmem:[%s6582 + $0x30] sm:$0xff] %vm6583, %v6556
    %6591 = vst.msk [vmem:[%s6582 + $0x38] sm:$0xff] %vm6583, %v6557
    %6592 = vst.msk [vmem:[%s6582 + $0x40] sm:$0xff] %vm6583, %v6558
    %6593 = vst.msk [vmem:[%s6582 + $0x48] sm:$0xff] %vm6583, %v6559
    %6594 = vst.msk [vmem:[%s6582 + $0x50] sm:$0xff] %vm6583, %v6560
    %6595 = vst.msk [vmem:[%s6582 + $0x58] sm:$0xff] %vm6583, %v6561
    %6596 = vst.msk [vmem:[%s6582 + $0x60] sm:$0xff] %vm6583, %v6562
    %6597 = vst.msk [vmem:[%s6582 + $0x68] sm:$0xff] %vm6583, %v6563
    %6598 = vst.msk [vmem:[%s6582 + $0x70] sm:$0xff] %vm6583, %v6564
    %6599 = vst.msk [vmem:[%s6582 + $0x78] sm:$0xff] %vm6583, %v6565
    %6600 = vst.msk [vmem:[%s6582 + $0x80] sm:$0xff] %vm6583, %v6566
    %6601 = vst.msk [vmem:[%s6582 + $0x88] sm:$0xff] %vm6583, %v6567
    %6602 = vst.msk [vmem:[%s6582 + $0x90] sm:$0xff] %vm6583, %v6568
    %6603 = vst.msk [vmem:[%s6582 + $0x98] sm:$0xff] %vm6583, %v6569
    %6604 = vst.msk [vmem:[%s6582 + $0xa0] sm:$0xff] %vm6583, %v6570
    %6605 = vst.msk [vmem:[%s6582 + $0xa8] sm:$0xff] %vm6583, %v6571
    %6606 = vst.msk [vmem:[%s6582 + $0xb0] sm:$0xff] %vm6583, %v6572
    %6607 = vst.msk [vmem:[%s6582 + $0xb8] sm:$0xff] %vm6583, %v6573
    %6608 = vst.msk [vmem:[%s6582 + $0xc0] sm:$0xff] %vm6583, %v6574
    %6609 = vst.msk [vmem:[%s6582 + $0xc8] sm:$0xff] %vm6583, %v6575
    %6610 = vst.msk [vmem:[%s6582 + $0xd0] sm:$0xff] %vm6583, %v6576
    %6611 = vst.msk [vmem:[%s6582 + $0xd8] sm:$0xff] %vm6583, %v6577
    %6612 = vst.msk [vmem:[%s6582 + $0xe0] sm:$0xff] %vm6583, %v6578
    %6613 = vst.msk [vmem:[%s6582 + $0xe8] sm:$0xff] %vm6583, %v6579
    %6614 = vst.msk [vmem:[%s6582 + $0xf0] sm:$0xff] %vm6583, %v6580
    %6615 = vst.msk [vmem:[%s6582 + $0xf8] sm:$0xff] %vm6583, %v6581
  $region48: #{forward.2} parent=0 // loop_footer
    %s4569 = sadd.s32 1, %s4565
  $region49: #{forward.2} parent=0 // loop_footer_branch
    %4564 = sbr.rel target = $region45
  $region50: #{forward.2} parent=0 // loop_exit
    _
  %v6616 = vld [vmem:[#allocation4] ss:$2 sm:$0xff]
  %s6617 = scalar_lea.vmem [#allocation4], 16
  %v6618 = vld [vmem:[%s6617] ss:$2 sm:$0xff]
  %s6619 = scalar_lea.vmem [#allocation4], 32
  %v6620 = vld [vmem:[%s6619] ss:$2 sm:$0xff]
  %s6621 = scalar_lea.vmem [#allocation4], 48
  %v6622 = vld [vmem:[%s6621] ss:$2 sm:$0xff]
  %s6623 = scalar_lea.vmem [#allocation4], 64
  %v6624 = vld [vmem:[%s6623] ss:$2 sm:$0xff]
  %s6625 = scalar_lea.vmem [#allocation4], 80
  %v6626 = vld [vmem:[%s6625] ss:$2 sm:$0xff]
  %s6627 = scalar_lea.vmem [#allocation4], 96
  %v6628 = vld [vmem:[%s6627] ss:$2 sm:$0xff]
  %s6629 = scalar_lea.vmem [#allocation4], 112
  %v6630 = vld [vmem:[%s6629] ss:$2 sm:$0x7]
  %vm6631 = vcmask 130048
  %6632 = vst.msk [vmem:[%s7] sm:$0xff] %vm6631, %v6616
  %6633 = vst.msk [vmem:[%s7 + $0x8] sm:$0xff] %vm6631, %v6618
  %6634 = vst.msk [vmem:[%s7 + $0x10] sm:$0xff] %vm6631, %v6620
  %6635 = vst.msk [vmem:[%s7 + $0x18] sm:$0xff] %vm6631, %v6622
  %6636 = vst.msk [vmem:[%s7 + $0x20] sm:$0xff] %vm6631, %v6624
  %6637 = vst.msk [vmem:[%s7 + $0x28] sm:$0xff] %vm6631, %v6626
  %6638 = vst.msk [vmem:[%s7 + $0x30] sm:$0xff] %vm6631, %v6628
  %vm6639 = vcmask 124928
  %6640 = vst.msk [vmem:[%s7 + $0x38] sm:$0x7] %vm6639, %v6630
  %s6641 = scalar_lea.vmem [#allocation4], 256
  %v6642 = vld [vmem:[%s6641] ss:$2 sm:$0xff]
  %s6643 = scalar_lea.vmem [#allocation4], 272
  %v6644 = vld [vmem:[%s6643] ss:$2 sm:$0xff]
  %s6645 = scalar_lea.vmem [#allocation4], 288
  %v6646 = vld [vmem:[%s6645] ss:$2 sm:$0xff]
  %s6647 = scalar_lea.vmem [#allocation4], 304
  %v6648 = vld [vmem:[%s6647] ss:$2 sm:$0xff]
  %s6649 = scalar_lea.vmem [#allocation4], 320
  %v6650 = vld [vmem:[%s6649] ss:$2 sm:$0xff]
  %s6651 = scalar_lea.vmem [#allocation4], 336
  %v6652 = vld [vmem:[%s6651] ss:$2 sm:$0xff]
  %s6653 = scalar_lea.vmem [#allocation4], 352
  %v6654 = vld [vmem:[%s6653] ss:$2 sm:$0xff]
  %s6655 = scalar_lea.vmem [#allocation4], 368
  %v6656 = vld [vmem:[%s6655] ss:$2 sm:$0x7]
  %6657 = vst.msk [vmem:[%s7 + $0x3b] sm:$0xff] %vm6631, %v6642
  %6658 = vst.msk [vmem:[%s7 + $0x43] sm:$0xff] %vm6631, %v6644
  %6659 = vst.msk [vmem:[%s7 + $0x4b] sm:$0xff] %vm6631, %v6646
  %6660 = vst.msk [vmem:[%s7 + $0x53] sm:$0xff] %vm6631, %v6648
  %6661 = vst.msk [vmem:[%s7 + $0x5b] sm:$0xff] %vm6631, %v6650
  %6662 = vst.msk [vmem:[%s7 + $0x63] sm:$0xff] %vm6631, %v6652
  %6663 = vst.msk [vmem:[%s7 + $0x6b] sm:$0xff] %vm6631, %v6654
  %6664 = vst.msk [vmem:[%s7 + $0x73] sm:$0x7] %vm6639, %v6656
  %s6665 = scalar_lea.vmem [#allocation4], 512
  %v6666 = vld [vmem:[%s6665] ss:$2 sm:$0xff]
  %s6667 = scalar_lea.vmem [#allocation4], 528
  %v6668 = vld [vmem:[%s6667] ss:$2 sm:$0xff]
  %s6669 = scalar_lea.vmem [#allocation4], 544
  %v6670 = vld [vmem:[%s6669] ss:$2 sm:$0xff]
  %s6671 = scalar_lea.vmem [#allocation4], 560
  %v6672 = vld [vmem:[%s6671] ss:$2 sm:$0xff]
  %s6673 = scalar_lea.vmem [#allocation4], 576
  %v6674 = vld [vmem:[%s6673] ss:$2 sm:$0xff]
  %s6675 = scalar_lea.vmem [#allocation4], 592
  %v6676 = vld [vmem:[%s6675] ss:$2 sm:$0xff]
  %s6677 = scalar_lea.vmem [#allocation4], 608
  %v6678 = vld [vmem:[%s6677] ss:$2 sm:$0xff]
  %s6679 = scalar_lea.vmem [#allocation4], 624
  %v6680 = vld [vmem:[%s6679] ss:$2 sm:$0x7]
  %6681 = vst.msk [vmem:[%s7 + $0x76] sm:$0xff] %vm6631, %v6666
  %6682 = vst.msk [vmem:[%s7 + $0x7e] sm:$0xff] %vm6631, %v6668
  %6683 = vst.msk [vmem:[%s7 + $0x86] sm:$0xff] %vm6631, %v6670
  %6684 = vst.msk [vmem:[%s7 + $0x8e] sm:$0xff] %vm6631, %v6672
  %6685 = vst.msk [vmem:[%s7 + $0x96] sm:$0xff] %vm6631, %v6674
  %6686 = vst.msk [vmem:[%s7 + $0x9e] sm:$0xff] %vm6631, %v6676
  %6687 = vst.msk [vmem:[%s7 + $0xa6] sm:$0xff] %vm6631, %v6678
  %6688 = vst.msk [vmem:[%s7 + $0xae] sm:$0x7] %vm6639, %v6680
  %s6689 = scalar_lea.vmem [#allocation4], 768
  %v6690 = vld [vmem:[%s6689] ss:$2 sm:$0xff]
  %s6691 = scalar_lea.vmem [#allocation4], 784
  %v6692 = vld [vmem:[%s6691] ss:$2 sm:$0xff]
  %s6693 = scalar_lea.vmem [#allocation4], 800
  %v6694 = vld [vmem:[%s6693] ss:$2 sm:$0xff]
  %s6695 = scalar_lea.vmem [#allocation4], 816
  %v6696 = vld [vmem:[%s6695] ss:$2 sm:$0xff]
  %s6697 = scalar_lea.vmem [#allocation4], 832
  %v6698 = vld [vmem:[%s6697] ss:$2 sm:$0xff]
  %s6699 = scalar_lea.vmem [#allocation4], 848
  %v6700 = vld [vmem:[%s6699] ss:$2 sm:$0xff]
  %s6701 = scalar_lea.vmem [#allocation4], 864
  %v6702 = vld [vmem:[%s6701] ss:$2 sm:$0xff]
  %s6703 = scalar_lea.vmem [#allocation4], 880
  %v6704 = vld [vmem:[%s6703] ss:$2 sm:$0x7]
  %6705 = vst.msk [vmem:[%s7 + $0xb1] sm:$0xff] %vm6631, %v6690
  %6706 = vst.msk [vmem:[%s7 + $0xb9] sm:$0xff] %vm6631, %v6692
  %6707 = vst.msk [vmem:[%s7 + $0xc1] sm:$0xff] %vm6631, %v6694
  %6708 = vst.msk [vmem:[%s7 + $0xc9] sm:$0xff] %vm6631, %v6696
  %6709 = vst.msk [vmem:[%s7 + $0xd1] sm:$0xff] %vm6631, %v6698
  %6710 = vst.msk [vmem:[%s7 + $0xd9] sm:$0xff] %vm6631, %v6700
  %6711 = vst.msk [vmem:[%s7 + $0xe1] sm:$0xff] %vm6631, %v6702
  %6712 = vst.msk [vmem:[%s7 + $0xe9] sm:$0x7] %vm6639, %v6704
  %s6713 = scalar_lea.vmem [#allocation4], 1024
  %v6714 = vld [vmem:[%s6713] ss:$2 sm:$0xff]
  %s6715 = scalar_lea.vmem [#allocation4], 1040
  %v6716 = vld [vmem:[%s6715] ss:$2 sm:$0xff]
  %s6717 = scalar_lea.vmem [#allocation4], 1056
  %v6718 = vld [vmem:[%s6717] ss:$2 sm:$0xff]
  %s6719 = scalar_lea.vmem [#allocation4], 1072
  %v6720 = vld [vmem:[%s6719] ss:$2 sm:$0xff]
  %s6721 = scalar_lea.vmem [#allocation4], 1088
  %v6722 = vld [vmem:[%s6721] ss:$2 sm:$0xff]
  %s6723 = scalar_lea.vmem [#allocation4], 1104
  %v6724 = vld [vmem:[%s6723] ss:$2 sm:$0xff]
  %s6725 = scalar_lea.vmem [#allocation4], 1120
  %v6726 = vld [vmem:[%s6725] ss:$2 sm:$0xff]
  %s6727 = scalar_lea.vmem [#allocation4], 1136
  %v6728 = vld [vmem:[%s6727] ss:$2 sm:$0x7]
  %6729 = vst.msk [vmem:[%s7 + $0xec] sm:$0xff] %vm6631, %v6714
  %6730 = vst.msk [vmem:[%s7 + $0xf4] sm:$0xff] %vm6631, %v6716
  %6731 = vst.msk [vmem:[%s7 + $0xfc] sm:$0xff] %vm6631, %v6718
  %6732 = vst.msk [vmem:[%s7 + $0x104] sm:$0xff] %vm6631, %v6720
  %6733 = vst.msk [vmem:[%s7 + $0x10c] sm:$0xff] %vm6631, %v6722
  %6734 = vst.msk [vmem:[%s7 + $0x114] sm:$0xff] %vm6631, %v6724
  %6735 = vst.msk [vmem:[%s7 + $0x11c] sm:$0xff] %vm6631, %v6726
  %6736 = vst.msk [vmem:[%s7 + $0x124] sm:$0x7] %vm6639, %v6728
  %s6737 = scalar_lea.vmem [#allocation4], 1280
  %v6738 = vld [vmem:[%s6737] ss:$2 sm:$0xff]
  %s6739 = scalar_lea.vmem [#allocation4], 1296
  %v6740 = vld [vmem:[%s6739] ss:$2 sm:$0xff]
  %s6741 = scalar_lea.vmem [#allocation4], 1312
  %v6742 = vld [vmem:[%s6741] ss:$2 sm:$0xff]
  %s6743 = scalar_lea.vmem [#allocation4], 1328
  %v6744 = vld [vmem:[%s6743] ss:$2 sm:$0xff]
  %s6745 = scalar_lea.vmem [#allocation4], 1344
  %v6746 = vld [vmem:[%s6745] ss:$2 sm:$0xff]
  %s6747 = scalar_lea.vmem [#allocation4], 1360
  %v6748 = vld [vmem:[%s6747] ss:$2 sm:$0xff]
  %s6749 = scalar_lea.vmem [#allocation4], 1376
  %v6750 = vld [vmem:[%s6749] ss:$2 sm:$0xff]
  %s6751 = scalar_lea.vmem [#allocation4], 1392
  %v6752 = vld [vmem:[%s6751] ss:$2 sm:$0x7]
  %6753 = vst.msk [vmem:[%s7 + $0x127] sm:$0xff] %vm6631, %v6738
  %6754 = vst.msk [vmem:[%s7 + $0x12f] sm:$0xff] %vm6631, %v6740
  %6755 = vst.msk [vmem:[%s7 + $0x137] sm:$0xff] %vm6631, %v6742
  %6756 = vst.msk [vmem:[%s7 + $0x13f] sm:$0xff] %vm6631, %v6744
  %6757 = vst.msk [vmem:[%s7 + $0x147] sm:$0xff] %vm6631, %v6746
  %6758 = vst.msk [vmem:[%s7 + $0x14f] sm:$0xff] %vm6631, %v6748
  %6759 = vst.msk [vmem:[%s7 + $0x157] sm:$0xff] %vm6631, %v6750
  %6760 = vst.msk [vmem:[%s7 + $0x15f] sm:$0x7] %vm6639, %v6752
  %s6761 = scalar_lea.vmem [#allocation4], 1536
  %v6762 = vld [vmem:[%s6761] ss:$2 sm:$0xff]
  %s6763 = scalar_lea.vmem [#allocation4], 1552
  %v6764 = vld [vmem:[%s6763] ss:$2 sm:$0xff]
  %s6765 = scalar_lea.vmem [#allocation4], 1568
  %v6766 = vld [vmem:[%s6765] ss:$2 sm:$0xff]
  %s6767 = scalar_lea.vmem [#allocation4], 1584
  %v6768 = vld [vmem:[%s6767] ss:$2 sm:$0xff]
  %s6769 = scalar_lea.vmem [#allocation4], 1600
  %v6770 = vld [vmem:[%s6769] ss:$2 sm:$0xff]
  %s6771 = scalar_lea.vmem [#allocation4], 1616
  %v6772 = vld [vmem:[%s6771] ss:$2 sm:$0xff]
  %s6773 = scalar_lea.vmem [#allocation4], 1632
  %v6774 = vld [vmem:[%s6773] ss:$2 sm:$0xff]
  %s6775 = scalar_lea.vmem [#allocation4], 1648
  %v6776 = vld [vmem:[%s6775] ss:$2 sm:$0x7]
  %6777 = vst.msk [vmem:[%s7 + $0x162] sm:$0xff] %vm6631, %v6762
  %6778 = vst.msk [vmem:[%s7 + $0x16a] sm:$0xff] %vm6631, %v6764
  %6779 = vst.msk [vmem:[%s7 + $0x172] sm:$0xff] %vm6631, %v6766
  %6780 = vst.msk [vmem:[%s7 + $0x17a] sm:$0xff] %vm6631, %v6768
  %6781 = vst.msk [vmem:[%s7 + $0x182] sm:$0xff] %vm6631, %v6770
  %6782 = vst.msk [vmem:[%s7 + $0x18a] sm:$0xff] %vm6631, %v6772
  %6783 = vst.msk [vmem:[%s7 + $0x192] sm:$0xff] %vm6631, %v6774
  %6784 = vst.msk [vmem:[%s7 + $0x19a] sm:$0x7] %vm6639, %v6776
  %s6785 = scalar_lea.vmem [#allocation4], 1792
  %v6786 = vld [vmem:[%s6785] ss:$2 sm:$0xff]
  %s6787 = scalar_lea.vmem [#allocation4], 1808
  %v6788 = vld [vmem:[%s6787] ss:$2 sm:$0xff]
  %s6789 = scalar_lea.vmem [#allocation4], 1824
  %v6790 = vld [vmem:[%s6789] ss:$2 sm:$0xff]
  %s6791 = scalar_lea.vmem [#allocation4], 1840
  %v6792 = vld [vmem:[%s6791] ss:$2 sm:$0xff]
  %s6793 = scalar_lea.vmem [#allocation4], 1856
  %v6794 = vld [vmem:[%s6793] ss:$2 sm:$0xff]
  %s6795 = scalar_lea.vmem [#allocation4], 1872
  %v6796 = vld [vmem:[%s6795] ss:$2 sm:$0xff]
  %s6797 = scalar_lea.vmem [#allocation4], 1888
  %v6798 = vld [vmem:[%s6797] ss:$2 sm:$0xff]
  %s6799 = scalar_lea.vmem [#allocation4], 1904
  %v6800 = vld [vmem:[%s6799] ss:$2 sm:$0x7]
  %6801 = vst.msk [vmem:[%s7 + $0x19d] sm:$0xff] %vm6631, %v6786
  %6802 = vst.msk [vmem:[%s7 + $0x1a5] sm:$0xff] %vm6631, %v6788
  %6803 = vst.msk [vmem:[%s7 + $0x1ad] sm:$0xff] %vm6631, %v6790
  %6804 = vst.msk [vmem:[%s7 + $0x1b5] sm:$0xff] %vm6631, %v6792
  %6805 = vst.msk [vmem:[%s7 + $0x1bd] sm:$0xff] %vm6631, %v6794
  %6806 = vst.msk [vmem:[%s7 + $0x1c5] sm:$0xff] %vm6631, %v6796
  %6807 = vst.msk [vmem:[%s7 + $0x1cd] sm:$0xff] %vm6631, %v6798
  %6808 = vst.msk [vmem:[%s7 + $0x1d5] sm:$0x7] %vm6639, %v6800
  %s6809 = scalar_lea.vmem [#allocation4], 2048
  %v6810 = vld [vmem:[%s6809] ss:$2 sm:$0xff]
  %s6811 = scalar_lea.vmem [#allocation4], 2064
  %v6812 = vld [vmem:[%s6811] ss:$2 sm:$0xff]
  %s6813 = scalar_lea.vmem [#allocation4], 2080
  %v6814 = vld [vmem:[%s6813] ss:$2 sm:$0xff]
  %s6815 = scalar_lea.vmem [#allocation4], 2096
  %v6816 = vld [vmem:[%s6815] ss:$2 sm:$0xff]
  %s6817 = scalar_lea.vmem [#allocation4], 2112
  %v6818 = vld [vmem:[%s6817] ss:$2 sm:$0xff]
  %s6819 = scalar_lea.vmem [#allocation4], 2128
  %v6820 = vld [vmem:[%s6819] ss:$2 sm:$0xff]
  %s6821 = scalar_lea.vmem [#allocation4], 2144
  %v6822 = vld [vmem:[%s6821] ss:$2 sm:$0xff]
  %s6823 = scalar_lea.vmem [#allocation4], 2160
  %v6824 = vld [vmem:[%s6823] ss:$2 sm:$0x7]
  %6825 = vst.msk [vmem:[%s7 + $0x1d8] sm:$0xff] %vm6631, %v6810
  %6826 = vst.msk [vmem:[%s7 + $0x1e0] sm:$0xff] %vm6631, %v6812
  %6827 = vst.msk [vmem:[%s7 + $0x1e8] sm:$0xff] %vm6631, %v6814
  %6828 = vst.msk [vmem:[%s7 + $0x1f0] sm:$0xff] %vm6631, %v6816
  %6829 = vst.msk [vmem:[%s7 + $0x1f8] sm:$0xff] %vm6631, %v6818
  %6830 = vst.msk [vmem:[%s7 + $0x200] sm:$0xff] %vm6631, %v6820
  %6831 = vst.msk [vmem:[%s7 + $0x208] sm:$0xff] %vm6631, %v6822
  %6832 = vst.msk [vmem:[%s7 + $0x210] sm:$0x7] %vm6639, %v6824
  %s6833 = scalar_lea.vmem [#allocation4], 2304
  %v6834 = vld [vmem:[%s6833] ss:$2 sm:$0xff]
  %s6835 = scalar_lea.vmem [#allocation4], 2320
  %v6836 = vld [vmem:[%s6835] ss:$2 sm:$0xff]
  %s6837 = scalar_lea.vmem [#allocation4], 2336
  %v6838 = vld [vmem:[%s6837] ss:$2 sm:$0xff]
  %s6839 = scalar_lea.vmem [#allocation4], 2352
  %v6840 = vld [vmem:[%s6839] ss:$2 sm:$0xff]
  %s6841 = scalar_lea.vmem [#allocation4], 2368
  %v6842 = vld [vmem:[%s6841] ss:$2 sm:$0xff]
  %s6843 = scalar_lea.vmem [#allocation4], 2384
  %v6844 = vld [vmem:[%s6843] ss:$2 sm:$0xff]
  %s6845 = scalar_lea.vmem [#allocation4], 2400
  %v6846 = vld [vmem:[%s6845] ss:$2 sm:$0xff]
  %s6847 = scalar_lea.vmem [#allocation4], 2416
  %v6848 = vld [vmem:[%s6847] ss:$2 sm:$0x7]
  %6849 = vst.msk [vmem:[%s7 + $0x213] sm:$0xff] %vm6631, %v6834
  %6850 = vst.msk [vmem:[%s7 + $0x21b] sm:$0xff] %vm6631, %v6836
  %6851 = vst.msk [vmem:[%s7 + $0x223] sm:$0xff] %vm6631, %v6838
  %6852 = vst.msk [vmem:[%s7 + $0x22b] sm:$0xff] %vm6631, %v6840
  %6853 = vst.msk [vmem:[%s7 + $0x233] sm:$0xff] %vm6631, %v6842
  %6854 = vst.msk [vmem:[%s7 + $0x23b] sm:$0xff] %vm6631, %v6844
  %6855 = vst.msk [vmem:[%s7 + $0x243] sm:$0xff] %vm6631, %v6846
  %6856 = vst.msk [vmem:[%s7 + $0x24b] sm:$0x7] %vm6639, %v6848
  %s6857 = scalar_lea.vmem [#allocation4], 2560
  %v6858 = vld [vmem:[%s6857] ss:$2 sm:$0xff]
  %s6859 = scalar_lea.vmem [#allocation4], 2576
  %v6860 = vld [vmem:[%s6859] ss:$2 sm:$0xff]
  %s6861 = scalar_lea.vmem [#allocation4], 2592
  %v6862 = vld [vmem:[%s6861] ss:$2 sm:$0xff]
  %s6863 = scalar_lea.vmem [#allocation4], 2608
  %v6864 = vld [vmem:[%s6863] ss:$2 sm:$0xff]
  %s6865 = scalar_lea.vmem [#allocation4], 2624
  %v6866 = vld [vmem:[%s6865] ss:$2 sm:$0xff]
  %s6867 = scalar_lea.vmem [#allocation4], 2640
  %v6868 = vld [vmem:[%s6867] ss:$2 sm:$0xff]
  %s6869 = scalar_lea.vmem [#allocation4], 2656
  %v6870 = vld [vmem:[%s6869] ss:$2 sm:$0xff]
  %s6871 = scalar_lea.vmem [#allocation4], 2672
  %v6872 = vld [vmem:[%s6871] ss:$2 sm:$0x7]
  %6873 = vst.msk [vmem:[%s7 + $0x24e] sm:$0xff] %vm6631, %v6858
  %6874 = vst.msk [vmem:[%s7 + $0x256] sm:$0xff] %vm6631, %v6860
  %6875 = vst.msk [vmem:[%s7 + $0x25e] sm:$0xff] %vm6631, %v6862
  %6876 = vst.msk [vmem:[%s7 + $0x266] sm:$0xff] %vm6631, %v6864
  %6877 = vst.msk [vmem:[%s7 + $0x26e] sm:$0xff] %vm6631, %v6866
  %6878 = vst.msk [vmem:[%s7 + $0x276] sm:$0xff] %vm6631, %v6868
  %6879 = vst.msk [vmem:[%s7 + $0x27e] sm:$0xff] %vm6631, %v6870
  %6880 = vst.msk [vmem:[%s7 + $0x286] sm:$0x7] %vm6639, %v6872
  %s6881 = scalar_lea.vmem [#allocation4], 4096
  %v6882 = vld [vmem:[%s6881] ss:$2 sm:$0xff]
  %s6883 = scalar_lea.vmem [#allocation4], 4112
  %v6884 = vld [vmem:[%s6883] ss:$2 sm:$0xff]
  %s6885 = scalar_lea.vmem [#allocation4], 4128
  %v6886 = vld [vmem:[%s6885] ss:$2 sm:$0xff]
  %s6887 = scalar_lea.vmem [#allocation4], 4144
  %v6888 = vld [vmem:[%s6887] ss:$2 sm:$0xff]
  %s6889 = scalar_lea.vmem [#allocation4], 4160
  %v6890 = vld [vmem:[%s6889] ss:$2 sm:$0xff]
  %s6891 = scalar_lea.vmem [#allocation4], 4176
  %v6892 = vld [vmem:[%s6891] ss:$2 sm:$0xff]
  %s6893 = scalar_lea.vmem [#allocation4], 4192
  %v6894 = vld [vmem:[%s6893] ss:$2 sm:$0xff]
  %s6895 = scalar_lea.vmem [#allocation4], 4208
  %v6896 = vld [vmem:[%s6895] ss:$2 sm:$0x7]
  %6897 = vst.msk [vmem:[%s7 + $0x289] sm:$0xff] %vm6631, %v6882
  %6898 = vst.msk [vmem:[%s7 + $0x291] sm:$0xff] %vm6631, %v6884
  %6899 = vst.msk [vmem:[%s7 + $0x299] sm:$0xff] %vm6631, %v6886
  %6900 = vst.msk [vmem:[%s7 + $0x2a1] sm:$0xff] %vm6631, %v6888
  %6901 = vst.msk [vmem:[%s7 + $0x2a9] sm:$0xff] %vm6631, %v6890
  %6902 = vst.msk [vmem:[%s7 + $0x2b1] sm:$0xff] %vm6631, %v6892
  %6903 = vst.msk [vmem:[%s7 + $0x2b9] sm:$0xff] %vm6631, %v6894
  %6904 = vst.msk [vmem:[%s7 + $0x2c1] sm:$0x7] %vm6639, %v6896
  %s6905 = scalar_lea.vmem [#allocation4], 4352
  %v6906 = vld [vmem:[%s6905] ss:$2 sm:$0xff]
  %s6907 = scalar_lea.vmem [#allocation4], 4368
  %v6908 = vld [vmem:[%s6907] ss:$2 sm:$0xff]
  %s6909 = scalar_lea.vmem [#allocation4], 4384
  %v6910 = vld [vmem:[%s6909] ss:$2 sm:$0xff]
  %s6911 = scalar_lea.vmem [#allocation4], 4400
  %v6912 = vld [vmem:[%s6911] ss:$2 sm:$0xff]
  %s6913 = scalar_lea.vmem [#allocation4], 4416
  %v6914 = vld [vmem:[%s6913] ss:$2 sm:$0xff]
  %s6915 = scalar_lea.vmem [#allocation4], 4432
  %v6916 = vld [vmem:[%s6915] ss:$2 sm:$0xff]
  %s6917 = scalar_lea.vmem [#allocation4], 4448
  %v6918 = vld [vmem:[%s6917] ss:$2 sm:$0xff]
  %s6919 = scalar_lea.vmem [#allocation4], 4464
  %v6920 = vld [vmem:[%s6919] ss:$2 sm:$0x7]
  %6921 = vst.msk [vmem:[%s7 + $0x2c4] sm:$0xff] %vm6631, %v6906
  %6922 = vst.msk [vmem:[%s7 + $0x2cc] sm:$0xff] %vm6631, %v6908
  %6923 = vst.msk [vmem:[%s7 + $0x2d4] sm:$0xff] %vm6631, %v6910
  %6924 = vst.msk [vmem:[%s7 + $0x2dc] sm:$0xff] %vm6631, %v6912
  %6925 = vst.msk [vmem:[%s7 + $0x2e4] sm:$0xff] %vm6631, %v6914
  %6926 = vst.msk [vmem:[%s7 + $0x2ec] sm:$0xff] %vm6631, %v6916
  %6927 = vst.msk [vmem:[%s7 + $0x2f4] sm:$0xff] %vm6631, %v6918
  %6928 = vst.msk [vmem:[%s7 + $0x2fc] sm:$0x7] %vm6639, %v6920
  %s6929 = scalar_lea.vmem [#allocation4], 4608
  %v6930 = vld [vmem:[%s6929] ss:$2 sm:$0xff]
  %s6931 = scalar_lea.vmem [#allocation4], 4624
  %v6932 = vld [vmem:[%s6931] ss:$2 sm:$0xff]
  %s6933 = scalar_lea.vmem [#allocation4], 4640
  %v6934 = vld [vmem:[%s6933] ss:$2 sm:$0xff]
  %s6935 = scalar_lea.vmem [#allocation4], 4656
  %v6936 = vld [vmem:[%s6935] ss:$2 sm:$0xff]
  %s6937 = scalar_lea.vmem [#allocation4], 4672
  %v6938 = vld [vmem:[%s6937] ss:$2 sm:$0xff]
  %s6939 = scalar_lea.vmem [#allocation4], 4688
  %v6940 = vld [vmem:[%s6939] ss:$2 sm:$0xff]
  %s6941 = scalar_lea.vmem [#allocation4], 4704
  %v6942 = vld [vmem:[%s6941] ss:$2 sm:$0xff]
  %s6943 = scalar_lea.vmem [#allocation4], 4720
  %v6944 = vld [vmem:[%s6943] ss:$2 sm:$0x7]
  %6945 = vst.msk [vmem:[%s7 + $0x2ff] sm:$0xff] %vm6631, %v6930
  %6946 = vst.msk [vmem:[%s7 + $0x307] sm:$0xff] %vm6631, %v6932
  %6947 = vst.msk [vmem:[%s7 + $0x30f] sm:$0xff] %vm6631, %v6934
  %6948 = vst.msk [vmem:[%s7 + $0x317] sm:$0xff] %vm6631, %v6936
  %6949 = vst.msk [vmem:[%s7 + $0x31f] sm:$0xff] %vm6631, %v6938
  %6950 = vst.msk [vmem:[%s7 + $0x327] sm:$0xff] %vm6631, %v6940
  %6951 = vst.msk [vmem:[%s7 + $0x32f] sm:$0xff] %vm6631, %v6942
  %6952 = vst.msk [vmem:[%s7 + $0x337] sm:$0x7] %vm6639, %v6944
  %s6953 = scalar_lea.vmem [#allocation4], 4864
  %v6954 = vld [vmem:[%s6953] ss:$2 sm:$0xff]
  %s6955 = scalar_lea.vmem [#allocation4], 4880
  %v6956 = vld [vmem:[%s6955] ss:$2 sm:$0xff]
  %s6957 = scalar_lea.vmem [#allocation4], 4896
  %v6958 = vld [vmem:[%s6957] ss:$2 sm:$0xff]
  %s6959 = scalar_lea.vmem [#allocation4], 4912
  %v6960 = vld [vmem:[%s6959] ss:$2 sm:$0xff]
  %s6961 = scalar_lea.vmem [#allocation4], 4928
  %v6962 = vld [vmem:[%s6961] ss:$2 sm:$0xff]
  %s6963 = scalar_lea.vmem [#allocation4], 4944
  %v6964 = vld [vmem:[%s6963] ss:$2 sm:$0xff]
  %s6965 = scalar_lea.vmem [#allocation4], 4960
  %v6966 = vld [vmem:[%s6965] ss:$2 sm:$0xff]
  %s6967 = scalar_lea.vmem [#allocation4], 4976
  %v6968 = vld [vmem:[%s6967] ss:$2 sm:$0x7]
  %6969 = vst.msk [vmem:[%s7 + $0x33a] sm:$0xff] %vm6631, %v6954
  %6970 = vst.msk [vmem:[%s7 + $0x342] sm:$0xff] %vm6631, %v6956
  %6971 = vst.msk [vmem:[%s7 + $0x34a] sm:$0xff] %vm6631, %v6958
  %6972 = vst.msk [vmem:[%s7 + $0x352] sm:$0xff] %vm6631, %v6960
  %6973 = vst.msk [vmem:[%s7 + $0x35a] sm:$0xff] %vm6631, %v6962
  %6974 = vst.msk [vmem:[%s7 + $0x362] sm:$0xff] %vm6631, %v6964
  %6975 = vst.msk [vmem:[%s7 + $0x36a] sm:$0xff] %vm6631, %v6966
  %6976 = vst.msk [vmem:[%s7 + $0x372] sm:$0x7] %vm6639, %v6968
  %s6977 = scalar_lea.vmem [#allocation4], 5120
  %v6978 = vld [vmem:[%s6977] ss:$2 sm:$0xff]
  %s6979 = scalar_lea.vmem [#allocation4], 5136
  %v6980 = vld [vmem:[%s6979] ss:$2 sm:$0xff]
  %s6981 = scalar_lea.vmem [#allocation4], 5152
  %v6982 = vld [vmem:[%s6981] ss:$2 sm:$0xff]
  %s6983 = scalar_lea.vmem [#allocation4], 5168
  %v6984 = vld [vmem:[%s6983] ss:$2 sm:$0xff]
  %s6985 = scalar_lea.vmem [#allocation4], 5184
  %v6986 = vld [vmem:[%s6985] ss:$2 sm:$0xff]
  %s6987 = scalar_lea.vmem [#allocation4], 5200
  %v6988 = vld [vmem:[%s6987] ss:$2 sm:$0xff]
  %s6989 = scalar_lea.vmem [#allocation4], 5216
  %v6990 = vld [vmem:[%s6989] ss:$2 sm:$0xff]
  %s6991 = scalar_lea.vmem [#allocation4], 5232
  %v6992 = vld [vmem:[%s6991] ss:$2 sm:$0x7]
  %6993 = vst.msk [vmem:[%s7 + $0x375] sm:$0xff] %vm6631, %v6978
  %6994 = vst.msk [vmem:[%s7 + $0x37d] sm:$0xff] %vm6631, %v6980
  %6995 = vst.msk [vmem:[%s7 + $0x385] sm:$0xff] %vm6631, %v6982
  %6996 = vst.msk [vmem:[%s7 + $0x38d] sm:$0xff] %vm6631, %v6984
  %6997 = vst.msk [vmem:[%s7 + $0x395] sm:$0xff] %vm6631, %v6986
  %6998 = vst.msk [vmem:[%s7 + $0x39d] sm:$0xff] %vm6631, %v6988
  %6999 = vst.msk [vmem:[%s7 + $0x3a5] sm:$0xff] %vm6631, %v6990
  %7000 = vst.msk [vmem:[%s7 + $0x3ad] sm:$0x7] %vm6639, %v6992
  %s7001 = scalar_lea.vmem [#allocation4], 5376
  %v7002 = vld [vmem:[%s7001] ss:$2 sm:$0xff]
  %s7003 = scalar_lea.vmem [#allocation4], 5392
  %v7004 = vld [vmem:[%s7003] ss:$2 sm:$0xff]
  %s7005 = scalar_lea.vmem [#allocation4], 5408
  %v7006 = vld [vmem:[%s7005] ss:$2 sm:$0xff]
  %s7007 = scalar_lea.vmem [#allocation4], 5424
  %v7008 = vld [vmem:[%s7007] ss:$2 sm:$0xff]
  %s7009 = scalar_lea.vmem [#allocation4], 5440
  %v7010 = vld [vmem:[%s7009] ss:$2 sm:$0xff]
  %s7011 = scalar_lea.vmem [#allocation4], 5456
  %v7012 = vld [vmem:[%s7011] ss:$2 sm:$0xff]
  %s7013 = scalar_lea.vmem [#allocation4], 5472
  %v7014 = vld [vmem:[%s7013] ss:$2 sm:$0xff]
  %s7015 = scalar_lea.vmem [#allocation4], 5488
  %v7016 = vld [vmem:[%s7015] ss:$2 sm:$0x7]
  %7017 = vst.msk [vmem:[%s7 + $0x3b0] sm:$0xff] %vm6631, %v7002
  %7018 = vst.msk [vmem:[%s7 + $0x3b8] sm:$0xff] %vm6631, %v7004
  %7019 = vst.msk [vmem:[%s7 + $0x3c0] sm:$0xff] %vm6631, %v7006
  %7020 = vst.msk [vmem:[%s7 + $0x3c8] sm:$0xff] %vm6631, %v7008
  %7021 = vst.msk [vmem:[%s7 + $0x3d0] sm:$0xff] %vm6631, %v7010
  %7022 = vst.msk [vmem:[%s7 + $0x3d8] sm:$0xff] %vm6631, %v7012
  %7023 = vst.msk [vmem:[%s7 + $0x3e0] sm:$0xff] %vm6631, %v7014
  %7024 = vst.msk [vmem:[%s7 + $0x3e8] sm:$0x7] %vm6639, %v7016
  %s7025 = scalar_lea.vmem [#allocation4], 5632
  %v7026 = vld [vmem:[%s7025] ss:$2 sm:$0xff]
  %s7027 = scalar_lea.vmem [#allocation4], 5648
  %v7028 = vld [vmem:[%s7027] ss:$2 sm:$0xff]
  %s7029 = scalar_lea.vmem [#allocation4], 5664
  %v7030 = vld [vmem:[%s7029] ss:$2 sm:$0xff]
  %s7031 = scalar_lea.vmem [#allocation4], 5680
  %v7032 = vld [vmem:[%s7031] ss:$2 sm:$0xff]
  %s7033 = scalar_lea.vmem [#allocation4], 5696
  %v7034 = vld [vmem:[%s7033] ss:$2 sm:$0xff]
  %s7035 = scalar_lea.vmem [#allocation4], 5712
  %v7036 = vld [vmem:[%s7035] ss:$2 sm:$0xff]
  %s7037 = scalar_lea.vmem [#allocation4], 5728
  %v7038 = vld [vmem:[%s7037] ss:$2 sm:$0xff]
  %s7039 = scalar_lea.vmem [#allocation4], 5744
  %v7040 = vld [vmem:[%s7039] ss:$2 sm:$0x7]
  %7041 = vst.msk [vmem:[%s7 + $0x3eb] sm:$0xff] %vm6631, %v7026
  %7042 = vst.msk [vmem:[%s7 + $0x3f3] sm:$0xff] %vm6631, %v7028
  %7043 = vst.msk [vmem:[%s7 + $0x3fb] sm:$0xff] %vm6631, %v7030
  %7044 = vst.msk [vmem:[%s7 + $0x403] sm:$0xff] %vm6631, %v7032
  %7045 = vst.msk [vmem:[%s7 + $0x40b] sm:$0xff] %vm6631, %v7034
  %7046 = vst.msk [vmem:[%s7 + $0x413] sm:$0xff] %vm6631, %v7036
  %7047 = vst.msk [vmem:[%s7 + $0x41b] sm:$0xff] %vm6631, %v7038
  %7048 = vst.msk [vmem:[%s7 + $0x423] sm:$0x7] %vm6639, %v7040
  %s7049 = scalar_lea.vmem [#allocation4], 5888
  %v7050 = vld [vmem:[%s7049] ss:$2 sm:$0xff]
  %s7051 = scalar_lea.vmem [#allocation4], 5904
  %v7052 = vld [vmem:[%s7051] ss:$2 sm:$0xff]
  %s7053 = scalar_lea.vmem [#allocation4], 5920
  %v7054 = vld [vmem:[%s7053] ss:$2 sm:$0xff]
  %s7055 = scalar_lea.vmem [#allocation4], 5936
  %v7056 = vld [vmem:[%s7055] ss:$2 sm:$0xff]
  %s7057 = scalar_lea.vmem [#allocation4], 5952
  %v7058 = vld [vmem:[%s7057] ss:$2 sm:$0xff]
  %s7059 = scalar_lea.vmem [#allocation4], 5968
  %v7060 = vld [vmem:[%s7059] ss:$2 sm:$0xff]
  %s7061 = scalar_lea.vmem [#allocation4], 5984
  %v7062 = vld [vmem:[%s7061] ss:$2 sm:$0xff]
  %s7063 = scalar_lea.vmem [#allocation4], 6000
  %v7064 = vld [vmem:[%s7063] ss:$2 sm:$0x7]
  %7065 = vst.msk [vmem:[%s7 + $0x426] sm:$0xff] %vm6631, %v7050
  %7066 = vst.msk [vmem:[%s7 + $0x42e] sm:$0xff] %vm6631, %v7052
  %7067 = vst.msk [vmem:[%s7 + $0x436] sm:$0xff] %vm6631, %v7054
  %7068 = vst.msk [vmem:[%s7 + $0x43e] sm:$0xff] %vm6631, %v7056
  %7069 = vst.msk [vmem:[%s7 + $0x446] sm:$0xff] %vm6631, %v7058
  %7070 = vst.msk [vmem:[%s7 + $0x44e] sm:$0xff] %vm6631, %v7060
  %7071 = vst.msk [vmem:[%s7 + $0x456] sm:$0xff] %vm6631, %v7062
  %7072 = vst.msk [vmem:[%s7 + $0x45e] sm:$0x7] %vm6639, %v7064
  %s7073 = scalar_lea.vmem [#allocation4], 6144
  %v7074 = vld [vmem:[%s7073] ss:$2 sm:$0xff]
  %s7075 = scalar_lea.vmem [#allocation4], 6160
  %v7076 = vld [vmem:[%s7075] ss:$2 sm:$0xff]
  %s7077 = scalar_lea.vmem [#allocation4], 6176
  %v7078 = vld [vmem:[%s7077] ss:$2 sm:$0xff]
  %s7079 = scalar_lea.vmem [#allocation4], 6192
  %v7080 = vld [vmem:[%s7079] ss:$2 sm:$0xff]
  %s7081 = scalar_lea.vmem [#allocation4], 6208
  %v7082 = vld [vmem:[%s7081] ss:$2 sm:$0xff]
  %s7083 = scalar_lea.vmem [#allocation4], 6224
  %v7084 = vld [vmem:[%s7083] ss:$2 sm:$0xff]
  %s7085 = scalar_lea.vmem [#allocation4], 6240
  %v7086 = vld [vmem:[%s7085] ss:$2 sm:$0xff]
  %s7087 = scalar_lea.vmem [#allocation4], 6256
  %v7088 = vld [vmem:[%s7087] ss:$2 sm:$0x7]
  %7089 = vst.msk [vmem:[%s7 + $0x461] sm:$0xff] %vm6631, %v7074
  %7090 = vst.msk [vmem:[%s7 + $0x469] sm:$0xff] %vm6631, %v7076
  %7091 = vst.msk [vmem:[%s7 + $0x471] sm:$0xff] %vm6631, %v7078
  %7092 = vst.msk [vmem:[%s7 + $0x479] sm:$0xff] %vm6631, %v7080
  %7093 = vst.msk [vmem:[%s7 + $0x481] sm:$0xff] %vm6631, %v7082
  %7094 = vst.msk [vmem:[%s7 + $0x489] sm:$0xff] %vm6631, %v7084
  %7095 = vst.msk [vmem:[%s7 + $0x491] sm:$0xff] %vm6631, %v7086
  %7096 = vst.msk [vmem:[%s7 + $0x499] sm:$0x7] %vm6639, %v7088
  %s7097 = scalar_lea.vmem [#allocation4], 6400
  %v7098 = vld [vmem:[%s7097] ss:$2 sm:$0xff]
  %s7099 = scalar_lea.vmem [#allocation4], 6416
  %v7100 = vld [vmem:[%s7099] ss:$2 sm:$0xff]
  %s7101 = scalar_lea.vmem [#allocation4], 6432
  %v7102 = vld [vmem:[%s7101] ss:$2 sm:$0xff]
  %s7103 = scalar_lea.vmem [#allocation4], 6448
  %v7104 = vld [vmem:[%s7103] ss:$2 sm:$0xff]
  %s7105 = scalar_lea.vmem [#allocation4], 6464
  %v7106 = vld [vmem:[%s7105] ss:$2 sm:$0xff]
  %s7107 = scalar_lea.vmem [#allocation4], 6480
  %v7108 = vld [vmem:[%s7107] ss:$2 sm:$0xff]
  %s7109 = scalar_lea.vmem [#allocation4], 6496
  %v7110 = vld [vmem:[%s7109] ss:$2 sm:$0xff]
  %s7111 = scalar_lea.vmem [#allocation4], 6512
  %v7112 = vld [vmem:[%s7111] ss:$2 sm:$0x7]
  %7113 = vst.msk [vmem:[%s7 + $0x49c] sm:$0xff] %vm6631, %v7098
  %7114 = vst.msk [vmem:[%s7 + $0x4a4] sm:$0xff] %vm6631, %v7100
  %7115 = vst.msk [vmem:[%s7 + $0x4ac] sm:$0xff] %vm6631, %v7102
  %7116 = vst.msk [vmem:[%s7 + $0x4b4] sm:$0xff] %vm6631, %v7104
  %7117 = vst.msk [vmem:[%s7 + $0x4bc] sm:$0xff] %vm6631, %v7106
  %7118 = vst.msk [vmem:[%s7 + $0x4c4] sm:$0xff] %vm6631, %v7108
  %7119 = vst.msk [vmem:[%s7 + $0x4cc] sm:$0xff] %vm6631, %v7110
  %7120 = vst.msk [vmem:[%s7 + $0x4d4] sm:$0x7] %vm6639, %v7112
  %s7121 = scalar_lea.vmem [#allocation4], 6656
  %v7122 = vld [vmem:[%s7121] ss:$2 sm:$0xff]
  %s7123 = scalar_lea.vmem [#allocation4], 6672
  %v7124 = vld [vmem:[%s7123] ss:$2 sm:$0xff]
  %s7125 = scalar_lea.vmem [#allocation4], 6688
  %v7126 = vld [vmem:[%s7125] ss:$2 sm:$0xff]
  %s7127 = scalar_lea.vmem [#allocation4], 6704
  %v7128 = vld [vmem:[%s7127] ss:$2 sm:$0xff]
  %s7129 = scalar_lea.vmem [#allocation4], 6720
  %v7130 = vld [vmem:[%s7129] ss:$2 sm:$0xff]
  %s7131 = scalar_lea.vmem [#allocation4], 6736
  %v7132 = vld [vmem:[%s7131] ss:$2 sm:$0xff]
  %s7133 = scalar_lea.vmem [#allocation4], 6752
  %v7134 = vld [vmem:[%s7133] ss:$2 sm:$0xff]
  %s7135 = scalar_lea.vmem [#allocation4], 6768
  %v7136 = vld [vmem:[%s7135] ss:$2 sm:$0x7]
  %7137 = vst.msk [vmem:[%s7 + $0x4d7] sm:$0xff] %vm6631, %v7122
  %7138 = vst.msk [vmem:[%s7 + $0x4df] sm:$0xff] %vm6631, %v7124
  %7139 = vst.msk [vmem:[%s7 + $0x4e7] sm:$0xff] %vm6631, %v7126
  %7140 = vst.msk [vmem:[%s7 + $0x4ef] sm:$0xff] %vm6631, %v7128
  %7141 = vst.msk [vmem:[%s7 + $0x4f7] sm:$0xff] %vm6631, %v7130
  %7142 = vst.msk [vmem:[%s7 + $0x4ff] sm:$0xff] %vm6631, %v7132
  %7143 = vst.msk [vmem:[%s7 + $0x507] sm:$0xff] %vm6631, %v7134
  %7144 = vst.msk [vmem:[%s7 + $0x50f] sm:$0x7] %vm6639, %v7136
  // Predicated region
  $region51: #{forward.2} parent=0 // pred_check
    _
  $region52: #{forward.2} parent=0 // pred_check_branch
    %7146 = sbr.rel (0) target = $region54
  $region53: #{forward.2} parent=0 // pred_region
    _
  $region54: #{forward.2} parent=0 // pred_fallthru
    _
  // Predicated region
  $region55: #{forward.2} parent=0 // pred_check
    _
  $region56: #{forward.2} parent=0 // pred_check_branch
    %7148 = sbr.rel (0) target = $region58
  $region57: #{forward.2} parent=0 // pred_region
    _
  $region58: #{forward.2} parent=0 // pred_fallthru
    _

// kernel: forward.3
$region0: #{forward.3}
  #allocation0 [shape = 'u32[]', space=smem, size = 0x4, offset = 0x4, fixed_abs, tag = 'smem constant byte address 0x4 - core index']
  #allocation1 [shape = 'u32[72,128]{1,0:T(1,128)}', space=vmem, size = 0x9000, scoped, tag = 'internal scratch']
  %s0 = inlined_call_operand.vmem [shape: f32[8,10384], index: 0, kind: input, shape index: {}]
  %s1 = inlined_call_operand.vmem [shape: bf16[10384,32], index: 1, kind: input, shape index: {}]
  %s2 = inlined_call_operand.vmem [shape: f32[1,32], index: 2, kind: input, shape index: {}]
  %s3 = inlined_call_operand.vmem [shape: f32[8,32], index: 3, kind: output, shape index: {}]
  %s4 = sld [smem:[#allocation0]]
  $region22: #{forward.3} parent=0
    _
  %s6 = ssub.s32 1, %s4
  %s7 = scalar_select 0, %s6, %s4
  // Predicated region
  $region2: #{forward.3} parent=0 // pred_check
    _
  $region3: #{forward.3} parent=0 // pred_check_branch
    %9 = sbr.rel (0) target = $region5
  $region4: #{forward.3} parent=0 // pred_region
    _
  $region5: #{forward.3} parent=0 // pred_fallthru
    _
  // Predicated region
  $region6: #{forward.3} parent=0 // pred_check
    _
  $region7: #{forward.3} parent=0 // pred_check_branch
    %11 = sbr.rel (0) target = $region9
  $region8: #{forward.3} parent=0 // pred_region
    _
  $region9: #{forward.3} parent=0 // pred_fallthru
    _
  // Predicated region
  $region10: #{forward.3} parent=0 // pred_check
    _
  $region11: #{forward.3} parent=0 // pred_check_branch
    %13 = sbr.rel (0) target = $region13
  $region12: #{forward.3} parent=0 // pred_region
    _
  $region13: #{forward.3} parent=0 // pred_fallthru
    _
  %v15 = vld [vmem:[%s0] sm:$0xff]
  %v16 = vld [vmem:[%s0 + $0x8] sm:$0xff]
  %v17 = vld [vmem:[%s0 + $0x10] sm:$0xff]
  %v18 = vld [vmem:[%s0 + $0x18] sm:$0xff]
  %v19 = vld [vmem:[%s0 + $0x20] sm:$0xff]
  %v20 = vld [vmem:[%s0 + $0x28] sm:$0xff]
  %v21 = vld [vmem:[%s0 + $0x30] sm:$0xff]
  %v22 = vld [vmem:[%s0 + $0x38] sm:$0xff]
  %v23 = vld [vmem:[%s0 + $0x40] sm:$0xff]
  %v24 = vld [vmem:[%s0 + $0x48] sm:$0xff]
  %v25 = vld [vmem:[%s0 + $0x50] sm:$0xff]
  %v26 = vld [vmem:[%s0 + $0x58] sm:$0xff]
  %v27 = vld [vmem:[%s0 + $0x60] sm:$0xff]
  %v28 = vld [vmem:[%s0 + $0x68] sm:$0xff]
  %v29 = vld [vmem:[%s0 + $0x70] sm:$0xff]
  %v30 = vld [vmem:[%s0 + $0x78] sm:$0xff]
  %v31 = vld [vmem:[%s0 + $0x80] sm:$0xff]
  %v32 = vld [vmem:[%s0 + $0x88] sm:$0xff]
  %v33 = vld [vmem:[%s0 + $0x90] sm:$0xff]
  %v34 = vld [vmem:[%s0 + $0x98] sm:$0xff]
  %v35 = vld [vmem:[%s0 + $0xa0] sm:$0xff]
  %v36 = vld [vmem:[%s0 + $0xa8] sm:$0xff]
  %v37 = vld [vmem:[%s0 + $0xb0] sm:$0xff]
  %v38 = vld [vmem:[%s0 + $0xb8] sm:$0xff]
  %v39 = vld [vmem:[%s0 + $0xc0] sm:$0xff]
  %v40 = vld [vmem:[%s0 + $0xc8] sm:$0xff]
  %v41 = vld [vmem:[%s0 + $0xd0] sm:$0xff]
  %v42 = vld [vmem:[%s0 + $0xd8] sm:$0xff]
  %v43 = vld [vmem:[%s0 + $0xe0] sm:$0xff]
  %v44 = vld [vmem:[%s0 + $0xe8] sm:$0xff]
  %v45 = vld [vmem:[%s0 + $0xf0] sm:$0xff]
  %v46 = vld [vmem:[%s0 + $0xf8] sm:$0xff]
  %v47 = vld [vmem:[%s0 + $0x100] sm:$0xff]
  %v48 = vld [vmem:[%s0 + $0x108] sm:$0xff]
  %v49 = vld [vmem:[%s0 + $0x110] sm:$0xff]
  %v50 = vld [vmem:[%s0 + $0x118] sm:$0xff]
  %v51 = vld [vmem:[%s0 + $0x120] sm:$0xff]
  %v52 = vld [vmem:[%s0 + $0x128] sm:$0xff]
  %v53 = vld [vmem:[%s0 + $0x130] sm:$0xff]
  %v54 = vld [vmem:[%s0 + $0x138] sm:$0xff]
  %v55 = vld [vmem:[%s0 + $0x140] sm:$0xff]
  %v56 = vld [vmem:[%s0 + $0x148] sm:$0xff]
  %v57 = vld [vmem:[%s0 + $0x150] sm:$0xff]
  %v58 = vld [vmem:[%s0 + $0x158] sm:$0xff]
  %v59 = vld [vmem:[%s0 + $0x160] sm:$0xff]
  %v60 = vld [vmem:[%s0 + $0x168] sm:$0xff]
  %v61 = vld [vmem:[%s0 + $0x170] sm:$0xff]
  %v62 = vld [vmem:[%s0 + $0x178] sm:$0xff]
  %v63 = vld [vmem:[%s0 + $0x180] sm:$0xff]
  %v64 = vld [vmem:[%s0 + $0x188] sm:$0xff]
  %v65 = vld [vmem:[%s0 + $0x190] sm:$0xff]
  %v66 = vld [vmem:[%s0 + $0x198] sm:$0xff]
  %v67 = vld [vmem:[%s0 + $0x1a0] sm:$0xff]
  %v68 = vld [vmem:[%s0 + $0x1a8] sm:$0xff]
  %v69 = vld [vmem:[%s0 + $0x1b0] sm:$0xff]
  %v70 = vld [vmem:[%s0 + $0x1b8] sm:$0xff]
  %v71 = vld [vmem:[%s0 + $0x1c0] sm:$0xff]
  %v72 = vld [vmem:[%s0 + $0x1c8] sm:$0xff]
  %v73 = vld [vmem:[%s0 + $0x1d0] sm:$0xff]
  %v74 = vld [vmem:[%s0 + $0x1d8] sm:$0xff]
  %v75 = vld [vmem:[%s0 + $0x1e0] sm:$0xff]
  %v76 = vld [vmem:[%s0 + $0x1e8] sm:$0xff]
  %v77 = vld [vmem:[%s0 + $0x1f0] sm:$0xff]
  %v78 = vld [vmem:[%s0 + $0x1f8] sm:$0xff]
  %v79 = vld [vmem:[%s0 + $0x200] sm:$0xff]
  %v80 = vld [vmem:[%s0 + $0x208] sm:$0xff]
  %v81 = vld [vmem:[%s0 + $0x210] sm:$0xff]
  %v82 = vld [vmem:[%s0 + $0x218] sm:$0xff]
  %v83 = vld [vmem:[%s0 + $0x220] sm:$0xff]
  %v84 = vld [vmem:[%s0 + $0x228] sm:$0xff]
  %v85 = vld [vmem:[%s0 + $0x230] sm:$0xff]
  %v86 = vld [vmem:[%s0 + $0x238] sm:$0xff]
  %v87 = vld [vmem:[%s0 + $0x240] sm:$0xff]
  %v88 = vld [vmem:[%s0 + $0x248] sm:$0xff]
  %v89 = vld [vmem:[%s0 + $0x250] sm:$0xff]
  %v90 = vld [vmem:[%s0 + $0x258] sm:$0xff]
  %v91 = vld [vmem:[%s0 + $0x260] sm:$0xff]
  %v92 = vld [vmem:[%s0 + $0x268] sm:$0xff]
  %v93 = vld [vmem:[%s0 + $0x270] sm:$0xff]
  %v94 = vld [vmem:[%s0 + $0x278] sm:$0xff]
  %v95 = vld [vmem:[%s0 + $0x280] sm:$0xff]
  %v96 = vld [vmem:[%s0 + $0x288] sm:$0xff]
  %v97 = vpack.c.bf16 %v15, %v15
  %v98 = vpack.c.bf16 %v16, %v16
  %v99 = vpack.c.bf16 %v17, %v17
  %v100 = vpack.c.bf16 %v18, %v18
  %v101 = vpack.c.bf16 %v19, %v19
  %v102 = vpack.c.bf16 %v20, %v20
  %v103 = vpack.c.bf16 %v21, %v21
  %v104 = vpack.c.bf16 %v22, %v22
  %v105 = vpack.c.bf16 %v23, %v23
  %v106 = vpack.c.bf16 %v24, %v24
  %v107 = vpack.c.bf16 %v25, %v25
  %v108 = vpack.c.bf16 %v26, %v26
  %v109 = vpack.c.bf16 %v27, %v27
  %v110 = vpack.c.bf16 %v28, %v28
  %v111 = vpack.c.bf16 %v29, %v29
  %v112 = vpack.c.bf16 %v30, %v30
  %v113 = vpack.c.bf16 %v31, %v31
  %v114 = vpack.c.bf16 %v32, %v32
  %v115 = vpack.c.bf16 %v33, %v33
  %v116 = vpack.c.bf16 %v34, %v34
  %v117 = vpack.c.bf16 %v35, %v35
  %v118 = vpack.c.bf16 %v36, %v36
  %v119 = vpack.c.bf16 %v37, %v37
  %v120 = vpack.c.bf16 %v38, %v38
  %v121 = vpack.c.bf16 %v39, %v39
  %v122 = vpack.c.bf16 %v40, %v40
  %v123 = vpack.c.bf16 %v41, %v41
  %v124 = vpack.c.bf16 %v42, %v42
  %v125 = vpack.c.bf16 %v43, %v43
  %v126 = vpack.c.bf16 %v44, %v44
  %v127 = vpack.c.bf16 %v45, %v45
  %v128 = vpack.c.bf16 %v46, %v46
  %v129 = vpack.c.bf16 %v47, %v47
  %v130 = vpack.c.bf16 %v48, %v48
  %v131 = vpack.c.bf16 %v49, %v49
  %v132 = vpack.c.bf16 %v50, %v50
  %v133 = vpack.c.bf16 %v51, %v51
  %v134 = vpack.c.bf16 %v52, %v52
  %v135 = vpack.c.bf16 %v53, %v53
  %v136 = vpack.c.bf16 %v54, %v54
  %v137 = vpack.c.bf16 %v55, %v55
  %v138 = vpack.c.bf16 %v56, %v56
  %v139 = vpack.c.bf16 %v57, %v57
  %v140 = vpack.c.bf16 %v58, %v58
  %v141 = vpack.c.bf16 %v59, %v59
  %v142 = vpack.c.bf16 %v60, %v60
  %v143 = vpack.c.bf16 %v61, %v61
  %v144 = vpack.c.bf16 %v62, %v62
  %v145 = vpack.c.bf16 %v63, %v63
  %v146 = vpack.c.bf16 %v64, %v64
  %v147 = vpack.c.bf16 %v65, %v65
  %v148 = vpack.c.bf16 %v66, %v66
  %v149 = vpack.c.bf16 %v67, %v67
  %v150 = vpack.c.bf16 %v68, %v68
  %v151 = vpack.c.bf16 %v69, %v69
  %v152 = vpack.c.bf16 %v70, %v70
  %v153 = vpack.c.bf16 %v71, %v71
  %v154 = vpack.c.bf16 %v72, %v72
  %v155 = vpack.c.bf16 %v73, %v73
  %v156 = vpack.c.bf16 %v74, %v74
  %v157 = vpack.c.bf16 %v75, %v75
  %v158 = vpack.c.bf16 %v76, %v76
  %v159 = vpack.c.bf16 %v77, %v77
  %v160 = vpack.c.bf16 %v78, %v78
  %v161 = vpack.c.bf16 %v79, %v79
  %v162 = vpack.c.bf16 %v80, %v80
  %v163 = vpack.c.bf16 %v81, %v81
  %v164 = vpack.c.bf16 %v82, %v82
  %v165 = vpack.c.bf16 %v83, %v83
  %v166 = vpack.c.bf16 %v84, %v84
  %v167 = vpack.c.bf16 %v85, %v85
  %v168 = vpack.c.bf16 %v86, %v86
  %v169 = vpack.c.bf16 %v87, %v87
  %v170 = vpack.c.bf16 %v88, %v88
  %v171 = vpack.c.bf16 %v89, %v89
  %v172 = vpack.c.bf16 %v90, %v90
  %v173 = vpack.c.bf16 %v91, %v91
  %v174 = vpack.c.bf16 %v92, %v92
  %v175 = vpack.c.bf16 %v93, %v93
  %v176 = vpack.c.bf16 %v94, %v94
  %v177 = vpack.c.bf16 %v95, %v95
  %v178 = vpack.c.bf16 %v96, %v96
  %v179 = vld [vmem:[%s1] sm:$0xf]
  %v180 = vld [vmem:[%s1 + $0x4] sm:$0xf]
  %v181 = vld [vmem:[%s1 + $0x8] sm:$0xf]
  %v182 = vld [vmem:[%s1 + $0xc] sm:$0xf]
  %v183 = vld [vmem:[%s1 + $0x10] sm:$0xf]
  %v184 = vld [vmem:[%s1 + $0x14] sm:$0xf]
  %v185 = vld [vmem:[%s1 + $0x18] sm:$0xf]
  %v186 = vld [vmem:[%s1 + $0x1c] sm:$0xf]
  %v187 = vld [vmem:[%s1 + $0x20] sm:$0xf]
  %v188 = vld [vmem:[%s1 + $0x24] sm:$0xf]
  %v189 = vld [vmem:[%s1 + $0x28] sm:$0xf]
  %v190 = vld [vmem:[%s1 + $0x2c] sm:$0xf]
  %v191 = vld [vmem:[%s1 + $0x30] sm:$0xf]
  %v192 = vld [vmem:[%s1 + $0x34] sm:$0xf]
  %v193 = vld [vmem:[%s1 + $0x38] sm:$0xf]
  %v194 = vld [vmem:[%s1 + $0x3c] sm:$0xf]
  %v195 = vld [vmem:[%s1 + $0x40] sm:$0xf]
  %v196 = vld [vmem:[%s1 + $0x44] sm:$0xf]
  %v197 = vld [vmem:[%s1 + $0x48] sm:$0xf]
  %v198 = vld [vmem:[%s1 + $0x4c] sm:$0xf]
  %v199 = vld [vmem:[%s1 + $0x50] sm:$0xf]
  %v200 = vld [vmem:[%s1 + $0x54] sm:$0xf]
  %v201 = vld [vmem:[%s1 + $0x58] sm:$0xf]
  %v202 = vld [vmem:[%s1 + $0x5c] sm:$0xf]
  %v203 = vld [vmem:[%s1 + $0x60] sm:$0xf]
  %v204 = vld [vmem:[%s1 + $0x64] sm:$0xf]
  %v205 = vld [vmem:[%s1 + $0x68] sm:$0xf]
  %v206 = vld [vmem:[%s1 + $0x6c] sm:$0xf]
  %v207 = vld [vmem:[%s1 + $0x70] sm:$0xf]
  %v208 = vld [vmem:[%s1 + $0x74] sm:$0xf]
  %v209 = vld [vmem:[%s1 + $0x78] sm:$0xf]
  %v210 = vld [vmem:[%s1 + $0x7c] sm:$0xf]
  %v211 = vld [vmem:[%s1 + $0x80] sm:$0xf]
  %v212 = vld [vmem:[%s1 + $0x84] sm:$0xf]
  %v213 = vld [vmem:[%s1 + $0x88] sm:$0xf]
  %v214 = vld [vmem:[%s1 + $0x8c] sm:$0xf]
  %v215 = vld [vmem:[%s1 + $0x90] sm:$0xf]
  %v216 = vld [vmem:[%s1 + $0x94] sm:$0xf]
  %v217 = vld [vmem:[%s1 + $0x98] sm:$0xf]
  %v218 = vld [vmem:[%s1 + $0x9c] sm:$0xf]
  %v219 = vld [vmem:[%s1 + $0xa0] sm:$0xf]
  %v220 = vld [vmem:[%s1 + $0xa4] sm:$0xf]
  %v221 = vld [vmem:[%s1 + $0xa8] sm:$0xf]
  %v222 = vld [vmem:[%s1 + $0xac] sm:$0xf]
  %v223 = vld [vmem:[%s1 + $0xb0] sm:$0xf]
  %v224 = vld [vmem:[%s1 + $0xb4] sm:$0xf]
  %v225 = vld [vmem:[%s1 + $0xb8] sm:$0xf]
  %v226 = vld [vmem:[%s1 + $0xbc] sm:$0xf]
  %v227 = vld [vmem:[%s1 + $0xc0] sm:$0xf]
  %v228 = vld [vmem:[%s1 + $0xc4] sm:$0xf]
  %v229 = vld [vmem:[%s1 + $0xc8] sm:$0xf]
  %v230 = vld [vmem:[%s1 + $0xcc] sm:$0xf]
  %v231 = vld [vmem:[%s1 + $0xd0] sm:$0xf]
  %v232 = vld [vmem:[%s1 + $0xd4] sm:$0xf]
  %v233 = vld [vmem:[%s1 + $0xd8] sm:$0xf]
  %v234 = vld [vmem:[%s1 + $0xdc] sm:$0xf]
  %v235 = vld [vmem:[%s1 + $0xe0] sm:$0xf]
  %v236 = vld [vmem:[%s1 + $0xe4] sm:$0xf]
  %v237 = vld [vmem:[%s1 + $0xe8] sm:$0xf]
  %v238 = vld [vmem:[%s1 + $0xec] sm:$0xf]
  %v239 = vld [vmem:[%s1 + $0xf0] sm:$0xf]
  %v240 = vld [vmem:[%s1 + $0xf4] sm:$0xf]
  %v241 = vld [vmem:[%s1 + $0xf8] sm:$0xf]
  %v242 = vld [vmem:[%s1 + $0xfc] sm:$0xf]
  %v243 = vld [vmem:[%s1 + $0x100] sm:$0xf]
  %v244 = vld [vmem:[%s1 + $0x104] sm:$0xf]
  %v245 = vld [vmem:[%s1 + $0x108] sm:$0xf]
  %v246 = vld [vmem:[%s1 + $0x10c] sm:$0xf]
  %v247 = vld [vmem:[%s1 + $0x110] sm:$0xf]
  %v248 = vld [vmem:[%s1 + $0x114] sm:$0xf]
  %v249 = vld [vmem:[%s1 + $0x118] sm:$0xf]
  %v250 = vld [vmem:[%s1 + $0x11c] sm:$0xf]
  %v251 = vld [vmem:[%s1 + $0x120] sm:$0xf]
  %v252 = vld [vmem:[%s1 + $0x124] sm:$0xf]
  %v253 = vld [vmem:[%s1 + $0x128] sm:$0xf]
  %v254 = vld [vmem:[%s1 + $0x12c] sm:$0xf]
  %v255 = vld [vmem:[%s1 + $0x130] sm:$0xf]
  %v256 = vld [vmem:[%s1 + $0x134] sm:$0xf]
  %v257 = vld [vmem:[%s1 + $0x138] sm:$0xf]
  %v258 = vld [vmem:[%s1 + $0x13c] sm:$0xf]
  %v259 = vld [vmem:[%s1 + $0x140] sm:$0xf]
  %v260 = vld [vmem:[%s1 + $0x144] sm:$0xf]
  %v261 = vld [vmem:[%s1 + $0x148] sm:$0xf]
  %v262 = vld [vmem:[%s1 + $0x14c] sm:$0xf]
  %v263 = vld [vmem:[%s1 + $0x150] sm:$0xf]
  %v264 = vld [vmem:[%s1 + $0x154] sm:$0xf]
  %v265 = vld [vmem:[%s1 + $0x158] sm:$0xf]
  %v266 = vld [vmem:[%s1 + $0x15c] sm:$0xf]
  %v267 = vld [vmem:[%s1 + $0x160] sm:$0xf]
  %v268 = vld [vmem:[%s1 + $0x164] sm:$0xf]
  %v269 = vld [vmem:[%s1 + $0x168] sm:$0xf]
  %v270 = vld [vmem:[%s1 + $0x16c] sm:$0xf]
  %v271 = vld [vmem:[%s1 + $0x170] sm:$0xf]
  %v272 = vld [vmem:[%s1 + $0x174] sm:$0xf]
  %v273 = vld [vmem:[%s1 + $0x178] sm:$0xf]
  %v274 = vld [vmem:[%s1 + $0x17c] sm:$0xf]
  %v275 = vld [vmem:[%s1 + $0x180] sm:$0xf]
  %v276 = vld [vmem:[%s1 + $0x184] sm:$0xf]
  %v277 = vld [vmem:[%s1 + $0x188] sm:$0xf]
  %v278 = vld [vmem:[%s1 + $0x18c] sm:$0xf]
  %v279 = vld [vmem:[%s1 + $0x190] sm:$0xf]
  %v280 = vld [vmem:[%s1 + $0x194] sm:$0xf]
  %v281 = vld [vmem:[%s1 + $0x198] sm:$0xf]
  %v282 = vld [vmem:[%s1 + $0x19c] sm:$0xf]
  %v283 = vld [vmem:[%s1 + $0x1a0] sm:$0xf]
  %v284 = vld [vmem:[%s1 + $0x1a4] sm:$0xf]
  %v285 = vld [vmem:[%s1 + $0x1a8] sm:$0xf]
  %v286 = vld [vmem:[%s1 + $0x1ac] sm:$0xf]
  %v287 = vld [vmem:[%s1 + $0x1b0] sm:$0xf]
  %v288 = vld [vmem:[%s1 + $0x1b4] sm:$0xf]
  %v289 = vld [vmem:[%s1 + $0x1b8] sm:$0xf]
  %v290 = vld [vmem:[%s1 + $0x1bc] sm:$0xf]
  %v291 = vld [vmem:[%s1 + $0x1c0] sm:$0xf]
  %v292 = vld [vmem:[%s1 + $0x1c4] sm:$0xf]
  %v293 = vld [vmem:[%s1 + $0x1c8] sm:$0xf]
  %v294 = vld [vmem:[%s1 + $0x1cc] sm:$0xf]
  %v295 = vld [vmem:[%s1 + $0x1d0] sm:$0xf]
  %v296 = vld [vmem:[%s1 + $0x1d4] sm:$0xf]
  %v297 = vld [vmem:[%s1 + $0x1d8] sm:$0xf]
  %v298 = vld [vmem:[%s1 + $0x1dc] sm:$0xf]
  %v299 = vld [vmem:[%s1 + $0x1e0] sm:$0xf]
  %v300 = vld [vmem:[%s1 + $0x1e4] sm:$0xf]
  %v301 = vld [vmem:[%s1 + $0x1e8] sm:$0xf]
  %v302 = vld [vmem:[%s1 + $0x1ec] sm:$0xf]
  %v303 = vld [vmem:[%s1 + $0x1f0] sm:$0xf]
  %v304 = vld [vmem:[%s1 + $0x1f4] sm:$0xf]
  %v305 = vld [vmem:[%s1 + $0x1f8] sm:$0xf]
  %v306 = vld [vmem:[%s1 + $0x1fc] sm:$0xf]
  %v307 = vld [vmem:[%s1 + $0x200] sm:$0xf]
  %v308 = vld [vmem:[%s1 + $0x204] sm:$0xf]
  %v309 = vld [vmem:[%s1 + $0x208] sm:$0xf]
  %v310 = vld [vmem:[%s1 + $0x20c] sm:$0xf]
  %v311 = vld [vmem:[%s1 + $0x210] sm:$0xf]
  %v312 = vld [vmem:[%s1 + $0x214] sm:$0xf]
  %v313 = vld [vmem:[%s1 + $0x218] sm:$0xf]
  %v314 = vld [vmem:[%s1 + $0x21c] sm:$0xf]
  %v315 = vld [vmem:[%s1 + $0x220] sm:$0xf]
  %v316 = vld [vmem:[%s1 + $0x224] sm:$0xf]
  %v317 = vld [vmem:[%s1 + $0x228] sm:$0xf]
  %v318 = vld [vmem:[%s1 + $0x22c] sm:$0xf]
  %v319 = vld [vmem:[%s1 + $0x230] sm:$0xf]
  %v320 = vld [vmem:[%s1 + $0x234] sm:$0xf]
  %v321 = vld [vmem:[%s1 + $0x238] sm:$0xf]
  %v322 = vld [vmem:[%s1 + $0x23c] sm:$0xf]
  %v323 = vld [vmem:[%s1 + $0x240] sm:$0xf]
  %v324 = vld [vmem:[%s1 + $0x244] sm:$0xf]
  %v325 = vld [vmem:[%s1 + $0x248] sm:$0xf]
  %v326 = vld [vmem:[%s1 + $0x24c] sm:$0xf]
  %v327 = vld [vmem:[%s1 + $0x250] sm:$0xf]
  %v328 = vld [vmem:[%s1 + $0x254] sm:$0xf]
  %v329 = vld [vmem:[%s1 + $0x258] sm:$0xf]
  %v330 = vld [vmem:[%s1 + $0x25c] sm:$0xf]
  %v331 = vld [vmem:[%s1 + $0x260] sm:$0xf]
  %v332 = vld [vmem:[%s1 + $0x264] sm:$0xf]
  %v333 = vld [vmem:[%s1 + $0x268] sm:$0xf]
  %v334 = vld [vmem:[%s1 + $0x26c] sm:$0xf]
  %v335 = vld [vmem:[%s1 + $0x270] sm:$0xf]
  %v336 = vld [vmem:[%s1 + $0x274] sm:$0xf]
  %v337 = vld [vmem:[%s1 + $0x278] sm:$0xf]
  %v338 = vld [vmem:[%s1 + $0x27c] sm:$0xf]
  %v339 = vld [vmem:[%s1 + $0x280] sm:$0xf]
  %v340 = vld [vmem:[%s1 + $0x284] sm:$0xf]
  %v341 = vld [vmem:[%s1 + $0x288] sm:$0xf]
  %v342 = vld [vmem:[%s1 + $0x28c] sm:$0xf]
  %v343 = vld [vmem:[%s1 + $0x290] sm:$0xf]
  %v344 = vld [vmem:[%s1 + $0x294] sm:$0xf]
  %v345 = vld [vmem:[%s1 + $0x298] sm:$0xf]
  %v346 = vld [vmem:[%s1 + $0x29c] sm:$0xf]
  %v347 = vld [vmem:[%s1 + $0x2a0] sm:$0xf]
  %v348 = vld [vmem:[%s1 + $0x2a4] sm:$0xf]
  %v349 = vld [vmem:[%s1 + $0x2a8] sm:$0xf]
  %v350 = vld [vmem:[%s1 + $0x2ac] sm:$0xf]
  %v351 = vld [vmem:[%s1 + $0x2b0] sm:$0xf]
  %v352 = vld [vmem:[%s1 + $0x2b4] sm:$0xf]
  %v353 = vld [vmem:[%s1 + $0x2b8] sm:$0xf]
  %v354 = vld [vmem:[%s1 + $0x2bc] sm:$0xf]
  %v355 = vld [vmem:[%s1 + $0x2c0] sm:$0xf]
  %v356 = vld [vmem:[%s1 + $0x2c4] sm:$0xf]
  %v357 = vld [vmem:[%s1 + $0x2c8] sm:$0xf]
  %v358 = vld [vmem:[%s1 + $0x2cc] sm:$0xf]
  %v359 = vld [vmem:[%s1 + $0x2d0] sm:$0xf]
  %v360 = vld [vmem:[%s1 + $0x2d4] sm:$0xf]
  %v361 = vld [vmem:[%s1 + $0x2d8] sm:$0xf]
  %v362 = vld [vmem:[%s1 + $0x2dc] sm:$0xf]
  %v363 = vld [vmem:[%s1 + $0x2e0] sm:$0xf]
  %v364 = vld [vmem:[%s1 + $0x2e4] sm:$0xf]
  %v365 = vld [vmem:[%s1 + $0x2e8] sm:$0xf]
  %v366 = vld [vmem:[%s1 + $0x2ec] sm:$0xf]
  %v367 = vld [vmem:[%s1 + $0x2f0] sm:$0xf]
  %v368 = vld [vmem:[%s1 + $0x2f4] sm:$0xf]
  %v369 = vld [vmem:[%s1 + $0x2f8] sm:$0xf]
  %v370 = vld [vmem:[%s1 + $0x2fc] sm:$0xf]
  %v371 = vld [vmem:[%s1 + $0x300] sm:$0xf]
  %v372 = vld [vmem:[%s1 + $0x304] sm:$0xf]
  %v373 = vld [vmem:[%s1 + $0x308] sm:$0xf]
  %v374 = vld [vmem:[%s1 + $0x30c] sm:$0xf]
  %v375 = vld [vmem:[%s1 + $0x310] sm:$0xf]
  %v376 = vld [vmem:[%s1 + $0x314] sm:$0xf]
  %v377 = vld [vmem:[%s1 + $0x318] sm:$0xf]
  %v378 = vld [vmem:[%s1 + $0x31c] sm:$0xf]
  %v379 = vld [vmem:[%s1 + $0x320] sm:$0xf]
  %v380 = vld [vmem:[%s1 + $0x324] sm:$0xf]
  %v381 = vld [vmem:[%s1 + $0x328] sm:$0xf]
  %v382 = vld [vmem:[%s1 + $0x32c] sm:$0xf]
  %v383 = vld [vmem:[%s1 + $0x330] sm:$0xf]
  %v384 = vld [vmem:[%s1 + $0x334] sm:$0xf]
  %v385 = vld [vmem:[%s1 + $0x338] sm:$0xf]
  %v386 = vld [vmem:[%s1 + $0x33c] sm:$0xf]
  %v387 = vld [vmem:[%s1 + $0x340] sm:$0xf]
  %v388 = vld [vmem:[%s1 + $0x344] sm:$0xf]
  %v389 = vld [vmem:[%s1 + $0x348] sm:$0xf]
  %v390 = vld [vmem:[%s1 + $0x34c] sm:$0xf]
  %v391 = vld [vmem:[%s1 + $0x350] sm:$0xf]
  %v392 = vld [vmem:[%s1 + $0x354] sm:$0xf]
  %v393 = vld [vmem:[%s1 + $0x358] sm:$0xf]
  %v394 = vld [vmem:[%s1 + $0x35c] sm:$0xf]
  %v395 = vld [vmem:[%s1 + $0x360] sm:$0xf]
  %v396 = vld [vmem:[%s1 + $0x364] sm:$0xf]
  %v397 = vld [vmem:[%s1 + $0x368] sm:$0xf]
  %v398 = vld [vmem:[%s1 + $0x36c] sm:$0xf]
  %v399 = vld [vmem:[%s1 + $0x370] sm:$0xf]
  %v400 = vld [vmem:[%s1 + $0x374] sm:$0xf]
  %v401 = vld [vmem:[%s1 + $0x378] sm:$0xf]
  %v402 = vld [vmem:[%s1 + $0x37c] sm:$0xf]
  %v403 = vld [vmem:[%s1 + $0x380] sm:$0xf]
  %v404 = vld [vmem:[%s1 + $0x384] sm:$0xf]
  %v405 = vld [vmem:[%s1 + $0x388] sm:$0xf]
  %v406 = vld [vmem:[%s1 + $0x38c] sm:$0xf]
  %v407 = vld [vmem:[%s1 + $0x390] sm:$0xf]
  %v408 = vld [vmem:[%s1 + $0x394] sm:$0xf]
  %v409 = vld [vmem:[%s1 + $0x398] sm:$0xf]
  %v410 = vld [vmem:[%s1 + $0x39c] sm:$0xf]
  %v411 = vld [vmem:[%s1 + $0x3a0] sm:$0xf]
  %v412 = vld [vmem:[%s1 + $0x3a4] sm:$0xf]
  %v413 = vld [vmem:[%s1 + $0x3a8] sm:$0xf]
  %v414 = vld [vmem:[%s1 + $0x3ac] sm:$0xf]
  %v415 = vld [vmem:[%s1 + $0x3b0] sm:$0xf]
  %v416 = vld [vmem:[%s1 + $0x3b4] sm:$0xf]
  %v417 = vld [vmem:[%s1 + $0x3b8] sm:$0xf]
  %v418 = vld [vmem:[%s1 + $0x3bc] sm:$0xf]
  %v419 = vld [vmem:[%s1 + $0x3c0] sm:$0xf]
  %v420 = vld [vmem:[%s1 + $0x3c4] sm:$0xf]
  %v421 = vld [vmem:[%s1 + $0x3c8] sm:$0xf]
  %v422 = vld [vmem:[%s1 + $0x3cc] sm:$0xf]
  %v423 = vld [vmem:[%s1 + $0x3d0] sm:$0xf]
  %v424 = vld [vmem:[%s1 + $0x3d4] sm:$0xf]
  %v425 = vld [vmem:[%s1 + $0x3d8] sm:$0xf]
  %v426 = vld [vmem:[%s1 + $0x3dc] sm:$0xf]
  %v427 = vld [vmem:[%s1 + $0x3e0] sm:$0xf]
  %v428 = vld [vmem:[%s1 + $0x3e4] sm:$0xf]
  %v429 = vld [vmem:[%s1 + $0x3e8] sm:$0xf]
  %v430 = vld [vmem:[%s1 + $0x3ec] sm:$0xf]
  %v431 = vld [vmem:[%s1 + $0x3f0] sm:$0xf]
  %v432 = vld [vmem:[%s1 + $0x3f4] sm:$0xf]
  %v433 = vld [vmem:[%s1 + $0x3f8] sm:$0xf]
  %v434 = vld [vmem:[%s1 + $0x3fc] sm:$0xf]
  %v435 = vld [vmem:[%s1 + $0x400] sm:$0xf]
  %v436 = vld [vmem:[%s1 + $0x404] sm:$0xf]
  %v437 = vld [vmem:[%s1 + $0x408] sm:$0xf]
  %v438 = vld [vmem:[%s1 + $0x40c] sm:$0xf]
  %v439 = vld [vmem:[%s1 + $0x410] sm:$0xf]
  %v440 = vld [vmem:[%s1 + $0x414] sm:$0xf]
  %v441 = vld [vmem:[%s1 + $0x418] sm:$0xf]
  %v442 = vld [vmem:[%s1 + $0x41c] sm:$0xf]
  %v443 = vld [vmem:[%s1 + $0x420] sm:$0xf]
  %v444 = vld [vmem:[%s1 + $0x424] sm:$0xf]
  %v445 = vld [vmem:[%s1 + $0x428] sm:$0xf]
  %v446 = vld [vmem:[%s1 + $0x42c] sm:$0xf]
  %v447 = vld [vmem:[%s1 + $0x430] sm:$0xf]
  %v448 = vld [vmem:[%s1 + $0x434] sm:$0xf]
  %v449 = vld [vmem:[%s1 + $0x438] sm:$0xf]
  %v450 = vld [vmem:[%s1 + $0x43c] sm:$0xf]
  %v451 = vld [vmem:[%s1 + $0x440] sm:$0xf]
  %v452 = vld [vmem:[%s1 + $0x444] sm:$0xf]
  %v453 = vld [vmem:[%s1 + $0x448] sm:$0xf]
  %v454 = vld [vmem:[%s1 + $0x44c] sm:$0xf]
  %v455 = vld [vmem:[%s1 + $0x450] sm:$0xf]
  %v456 = vld [vmem:[%s1 + $0x454] sm:$0xf]
  %v457 = vld [vmem:[%s1 + $0x458] sm:$0xf]
  %v458 = vld [vmem:[%s1 + $0x45c] sm:$0xf]
  %v459 = vld [vmem:[%s1 + $0x460] sm:$0xf]
  %v460 = vld [vmem:[%s1 + $0x464] sm:$0xf]
  %v461 = vld [vmem:[%s1 + $0x468] sm:$0xf]
  %v462 = vld [vmem:[%s1 + $0x46c] sm:$0xf]
  %v463 = vld [vmem:[%s1 + $0x470] sm:$0xf]
  %v464 = vld [vmem:[%s1 + $0x474] sm:$0xf]
  %v465 = vld [vmem:[%s1 + $0x478] sm:$0xf]
  %v466 = vld [vmem:[%s1 + $0x47c] sm:$0xf]
  %v467 = vld [vmem:[%s1 + $0x480] sm:$0xf]
  %v468 = vld [vmem:[%s1 + $0x484] sm:$0xf]
  %v469 = vld [vmem:[%s1 + $0x488] sm:$0xf]
  %v470 = vld [vmem:[%s1 + $0x48c] sm:$0xf]
  %v471 = vld [vmem:[%s1 + $0x490] sm:$0xf]
  %v472 = vld [vmem:[%s1 + $0x494] sm:$0xf]
  %v473 = vld [vmem:[%s1 + $0x498] sm:$0xf]
  %v474 = vld [vmem:[%s1 + $0x49c] sm:$0xf]
  %v475 = vld [vmem:[%s1 + $0x4a0] sm:$0xf]
  %v476 = vld [vmem:[%s1 + $0x4a4] sm:$0xf]
  %v477 = vld [vmem:[%s1 + $0x4a8] sm:$0xf]
  %v478 = vld [vmem:[%s1 + $0x4ac] sm:$0xf]
  %v479 = vld [vmem:[%s1 + $0x4b0] sm:$0xf]
  %v480 = vld [vmem:[%s1 + $0x4b4] sm:$0xf]
  %v481 = vld [vmem:[%s1 + $0x4b8] sm:$0xf]
  %v482 = vld [vmem:[%s1 + $0x4bc] sm:$0xf]
  %v483 = vld [vmem:[%s1 + $0x4c0] sm:$0xf]
  %v484 = vld [vmem:[%s1 + $0x4c4] sm:$0xf]
  %v485 = vld [vmem:[%s1 + $0x4c8] sm:$0xf]
  %v486 = vld [vmem:[%s1 + $0x4cc] sm:$0xf]
  %v487 = vld [vmem:[%s1 + $0x4d0] sm:$0xf]
  %v488 = vld [vmem:[%s1 + $0x4d4] sm:$0xf]
  %v489 = vld [vmem:[%s1 + $0x4d8] sm:$0xf]
  %v490 = vld [vmem:[%s1 + $0x4dc] sm:$0xf]
  %v491 = vld [vmem:[%s1 + $0x4e0] sm:$0xf]
  %v492 = vld [vmem:[%s1 + $0x4e4] sm:$0xf]
  %v493 = vld [vmem:[%s1 + $0x4e8] sm:$0xf]
  %v494 = vld [vmem:[%s1 + $0x4ec] sm:$0xf]
  %v495 = vld [vmem:[%s1 + $0x4f0] sm:$0xf]
  %v496 = vld [vmem:[%s1 + $0x4f4] sm:$0xf]
  %v497 = vld [vmem:[%s1 + $0x4f8] sm:$0xf]
  %v498 = vld [vmem:[%s1 + $0x4fc] sm:$0xf]
  %v499 = vld [vmem:[%s1 + $0x500] sm:$0xf]
  %v500 = vld [vmem:[%s1 + $0x504] sm:$0xf]
  %v501 = vld [vmem:[%s1 + $0x508] sm:$0xf]
  %v502 = vld [vmem:[%s1 + $0x50c] sm:$0xf]
  %v503 = vld [vmem:[%s1 + $0x510] sm:$0xf]
  %v504 = vld [vmem:[%s1 + $0x514] sm:$0xf]
  %v505 = vld [vmem:[%s1 + $0x518] sm:$0xf]
  %v506 = vld [vmem:[%s1 + $0x51c] sm:$0xf]
  %v507 = vld [vmem:[%s1 + $0x520] sm:$0xf]
  %v508 = vld [vmem:[%s1 + $0x524] sm:$0xf]
  %v509 = vld [vmem:[%s1 + $0x528] sm:$0xf]
  %v510 = vld [vmem:[%s1 + $0x52c] sm:$0xf]
  %v511 = vld [vmem:[%s1 + $0x530] sm:$0xf]
  %v512 = vld [vmem:[%s1 + $0x534] sm:$0xf]
  %v513 = vld [vmem:[%s1 + $0x538] sm:$0xf]
  %v514 = vld [vmem:[%s1 + $0x53c] sm:$0xf]
  %v515 = vld [vmem:[%s1 + $0x540] sm:$0xf]
  %v516 = vld [vmem:[%s1 + $0x544] sm:$0xf]
  %v517 = vld [vmem:[%s1 + $0x548] sm:$0xf]
  %v518 = vld [vmem:[%s1 + $0x54c] sm:$0xf]
  %v519 = vld [vmem:[%s1 + $0x550] sm:$0xf]
  %v520 = vld [vmem:[%s1 + $0x554] sm:$0xf]
  %v521 = vld [vmem:[%s1 + $0x558] sm:$0xf]
  %v522 = vld [vmem:[%s1 + $0x55c] sm:$0xf]
  %v523 = vld [vmem:[%s1 + $0x560] sm:$0xf]
  %v524 = vld [vmem:[%s1 + $0x564] sm:$0xf]
  %v525 = vld [vmem:[%s1 + $0x568] sm:$0xf]
  %v526 = vld [vmem:[%s1 + $0x56c] sm:$0xf]
  %v527 = vld [vmem:[%s1 + $0x570] sm:$0xf]
  %v528 = vld [vmem:[%s1 + $0x574] sm:$0xf]
  %v529 = vld [vmem:[%s1 + $0x578] sm:$0xf]
  %v530 = vld [vmem:[%s1 + $0x57c] sm:$0xf]
  %v531 = vld [vmem:[%s1 + $0x580] sm:$0xf]
  %v532 = vld [vmem:[%s1 + $0x584] sm:$0xf]
  %v533 = vld [vmem:[%s1 + $0x588] sm:$0xf]
  %v534 = vld [vmem:[%s1 + $0x58c] sm:$0xf]
  %v535 = vld [vmem:[%s1 + $0x590] sm:$0xf]
  %v536 = vld [vmem:[%s1 + $0x594] sm:$0xf]
  %v537 = vld [vmem:[%s1 + $0x598] sm:$0xf]
  %v538 = vld [vmem:[%s1 + $0x59c] sm:$0xf]
  %v539 = vld [vmem:[%s1 + $0x5a0] sm:$0xf]
  %v540 = vld [vmem:[%s1 + $0x5a4] sm:$0xf]
  %v541 = vld [vmem:[%s1 + $0x5a8] sm:$0xf]
  %v542 = vld [vmem:[%s1 + $0x5ac] sm:$0xf]
  %v543 = vld [vmem:[%s1 + $0x5b0] sm:$0xf]
  %v544 = vld [vmem:[%s1 + $0x5b4] sm:$0xf]
  %v545 = vld [vmem:[%s1 + $0x5b8] sm:$0xf]
  %v546 = vld [vmem:[%s1 + $0x5bc] sm:$0xf]
  %v547 = vld [vmem:[%s1 + $0x5c0] sm:$0xf]
  %v548 = vld [vmem:[%s1 + $0x5c4] sm:$0xf]
  %v549 = vld [vmem:[%s1 + $0x5c8] sm:$0xf]
  %v550 = vld [vmem:[%s1 + $0x5cc] sm:$0xf]
  %v551 = vld [vmem:[%s1 + $0x5d0] sm:$0xf]
  %v552 = vld [vmem:[%s1 + $0x5d4] sm:$0xf]
  %v553 = vld [vmem:[%s1 + $0x5d8] sm:$0xf]
  %v554 = vld [vmem:[%s1 + $0x5dc] sm:$0xf]
  %v555 = vld [vmem:[%s1 + $0x5e0] sm:$0xf]
  %v556 = vld [vmem:[%s1 + $0x5e4] sm:$0xf]
  %v557 = vld [vmem:[%s1 + $0x5e8] sm:$0xf]
  %v558 = vld [vmem:[%s1 + $0x5ec] sm:$0xf]
  %v559 = vld [vmem:[%s1 + $0x5f0] sm:$0xf]
  %v560 = vld [vmem:[%s1 + $0x5f4] sm:$0xf]
  %v561 = vld [vmem:[%s1 + $0x5f8] sm:$0xf]
  %v562 = vld [vmem:[%s1 + $0x5fc] sm:$0xf]
  %v563 = vld [vmem:[%s1 + $0x600] sm:$0xf]
  %v564 = vld [vmem:[%s1 + $0x604] sm:$0xf]
  %v565 = vld [vmem:[%s1 + $0x608] sm:$0xf]
  %v566 = vld [vmem:[%s1 + $0x60c] sm:$0xf]
  %v567 = vld [vmem:[%s1 + $0x610] sm:$0xf]
  %v568 = vld [vmem:[%s1 + $0x614] sm:$0xf]
  %v569 = vld [vmem:[%s1 + $0x618] sm:$0xf]
  %v570 = vld [vmem:[%s1 + $0x61c] sm:$0xf]
  %v571 = vld [vmem:[%s1 + $0x620] sm:$0xf]
  %v572 = vld [vmem:[%s1 + $0x624] sm:$0xf]
  %v573 = vld [vmem:[%s1 + $0x628] sm:$0xf]
  %v574 = vld [vmem:[%s1 + $0x62c] sm:$0xf]
  %v575 = vld [vmem:[%s1 + $0x630] sm:$0xf]
  %v576 = vld [vmem:[%s1 + $0x634] sm:$0xf]
  %v577 = vld [vmem:[%s1 + $0x638] sm:$0xf]
  %v578 = vld [vmem:[%s1 + $0x63c] sm:$0xf]
  %v579 = vld [vmem:[%s1 + $0x640] sm:$0xf]
  %v580 = vld [vmem:[%s1 + $0x644] sm:$0xf]
  %v581 = vld [vmem:[%s1 + $0x648] sm:$0xf]
  %v582 = vld [vmem:[%s1 + $0x64c] sm:$0xf]
  %v583 = vld [vmem:[%s1 + $0x650] sm:$0xf]
  %v584 = vld [vmem:[%s1 + $0x654] sm:$0xf]
  %v585 = vld [vmem:[%s1 + $0x658] sm:$0xf]
  %v586 = vld [vmem:[%s1 + $0x65c] sm:$0xf]
  %v587 = vld [vmem:[%s1 + $0x660] sm:$0xf]
  %v588 = vld [vmem:[%s1 + $0x664] sm:$0xf]
  %v589 = vld [vmem:[%s1 + $0x668] sm:$0xf]
  %v590 = vld [vmem:[%s1 + $0x66c] sm:$0xf]
  %v591 = vld [vmem:[%s1 + $0x670] sm:$0xf]
  %v592 = vld [vmem:[%s1 + $0x674] sm:$0xf]
  %v593 = vld [vmem:[%s1 + $0x678] sm:$0xf]
  %v594 = vld [vmem:[%s1 + $0x67c] sm:$0xf]
  %v595 = vld [vmem:[%s1 + $0x680] sm:$0xf]
  %v596 = vld [vmem:[%s1 + $0x684] sm:$0xf]
  %v597 = vld [vmem:[%s1 + $0x688] sm:$0xf]
  %v598 = vld [vmem:[%s1 + $0x68c] sm:$0xf]
  %v599 = vld [vmem:[%s1 + $0x690] sm:$0xf]
  %v600 = vld [vmem:[%s1 + $0x694] sm:$0xf]
  %v601 = vld [vmem:[%s1 + $0x698] sm:$0xf]
  %v602 = vld [vmem:[%s1 + $0x69c] sm:$0xf]
  %v603 = vld [vmem:[%s1 + $0x6a0] sm:$0xf]
  %v604 = vld [vmem:[%s1 + $0x6a4] sm:$0xf]
  %v605 = vld [vmem:[%s1 + $0x6a8] sm:$0xf]
  %v606 = vld [vmem:[%s1 + $0x6ac] sm:$0xf]
  %v607 = vld [vmem:[%s1 + $0x6b0] sm:$0xf]
  %v608 = vld [vmem:[%s1 + $0x6b4] sm:$0xf]
  %v609 = vld [vmem:[%s1 + $0x6b8] sm:$0xf]
  %v610 = vld [vmem:[%s1 + $0x6bc] sm:$0xf]
  %v611 = vld [vmem:[%s1 + $0x6c0] sm:$0xf]
  %v612 = vld [vmem:[%s1 + $0x6c4] sm:$0xf]
  %v613 = vld [vmem:[%s1 + $0x6c8] sm:$0xf]
  %v614 = vld [vmem:[%s1 + $0x6cc] sm:$0xf]
  %v615 = vld [vmem:[%s1 + $0x6d0] sm:$0xf]
  %v616 = vld [vmem:[%s1 + $0x6d4] sm:$0xf]
  %v617 = vld [vmem:[%s1 + $0x6d8] sm:$0xf]
  %v618 = vld [vmem:[%s1 + $0x6dc] sm:$0xf]
  %v619 = vld [vmem:[%s1 + $0x6e0] sm:$0xf]
  %v620 = vld [vmem:[%s1 + $0x6e4] sm:$0xf]
  %v621 = vld [vmem:[%s1 + $0x6e8] sm:$0xf]
  %v622 = vld [vmem:[%s1 + $0x6ec] sm:$0xf]
  %v623 = vld [vmem:[%s1 + $0x6f0] sm:$0xf]
  %v624 = vld [vmem:[%s1 + $0x6f4] sm:$0xf]
  %v625 = vld [vmem:[%s1 + $0x6f8] sm:$0xf]
  %v626 = vld [vmem:[%s1 + $0x6fc] sm:$0xf]
  %v627 = vld [vmem:[%s1 + $0x700] sm:$0xf]
  %v628 = vld [vmem:[%s1 + $0x704] sm:$0xf]
  %v629 = vld [vmem:[%s1 + $0x708] sm:$0xf]
  %v630 = vld [vmem:[%s1 + $0x70c] sm:$0xf]
  %v631 = vld [vmem:[%s1 + $0x710] sm:$0xf]
  %v632 = vld [vmem:[%s1 + $0x714] sm:$0xf]
  %v633 = vld [vmem:[%s1 + $0x718] sm:$0xf]
  %v634 = vld [vmem:[%s1 + $0x71c] sm:$0xf]
  %v635 = vld [vmem:[%s1 + $0x720] sm:$0xf]
  %v636 = vld [vmem:[%s1 + $0x724] sm:$0xf]
  %v637 = vld [vmem:[%s1 + $0x728] sm:$0xf]
  %v638 = vld [vmem:[%s1 + $0x72c] sm:$0xf]
  %v639 = vld [vmem:[%s1 + $0x730] sm:$0xf]
  %v640 = vld [vmem:[%s1 + $0x734] sm:$0xf]
  %v641 = vld [vmem:[%s1 + $0x738] sm:$0xf]
  %v642 = vld [vmem:[%s1 + $0x73c] sm:$0xf]
  %v643 = vld [vmem:[%s1 + $0x740] sm:$0xf]
  %v644 = vld [vmem:[%s1 + $0x744] sm:$0xf]
  %v645 = vld [vmem:[%s1 + $0x748] sm:$0xf]
  %v646 = vld [vmem:[%s1 + $0x74c] sm:$0xf]
  %v647 = vld [vmem:[%s1 + $0x750] sm:$0xf]
  %v648 = vld [vmem:[%s1 + $0x754] sm:$0xf]
  %v649 = vld [vmem:[%s1 + $0x758] sm:$0xf]
  %v650 = vld [vmem:[%s1 + $0x75c] sm:$0xf]
  %v651 = vld [vmem:[%s1 + $0x760] sm:$0xf]
  %v652 = vld [vmem:[%s1 + $0x764] sm:$0xf]
  %v653 = vld [vmem:[%s1 + $0x768] sm:$0xf]
  %v654 = vld [vmem:[%s1 + $0x76c] sm:$0xf]
  %v655 = vld [vmem:[%s1 + $0x770] sm:$0xf]
  %v656 = vld [vmem:[%s1 + $0x774] sm:$0xf]
  %v657 = vld [vmem:[%s1 + $0x778] sm:$0xf]
  %v658 = vld [vmem:[%s1 + $0x77c] sm:$0xf]
  %v659 = vld [vmem:[%s1 + $0x780] sm:$0xf]
  %v660 = vld [vmem:[%s1 + $0x784] sm:$0xf]
  %v661 = vld [vmem:[%s1 + $0x788] sm:$0xf]
  %v662 = vld [vmem:[%s1 + $0x78c] sm:$0xf]
  %v663 = vld [vmem:[%s1 + $0x790] sm:$0xf]
  %v664 = vld [vmem:[%s1 + $0x794] sm:$0xf]
  %v665 = vld [vmem:[%s1 + $0x798] sm:$0xf]
  %v666 = vld [vmem:[%s1 + $0x79c] sm:$0xf]
  %v667 = vld [vmem:[%s1 + $0x7a0] sm:$0xf]
  %v668 = vld [vmem:[%s1 + $0x7a4] sm:$0xf]
  %v669 = vld [vmem:[%s1 + $0x7a8] sm:$0xf]
  %v670 = vld [vmem:[%s1 + $0x7ac] sm:$0xf]
  %v671 = vld [vmem:[%s1 + $0x7b0] sm:$0xf]
  %v672 = vld [vmem:[%s1 + $0x7b4] sm:$0xf]
  %v673 = vld [vmem:[%s1 + $0x7b8] sm:$0xf]
  %v674 = vld [vmem:[%s1 + $0x7bc] sm:$0xf]
  %v675 = vld [vmem:[%s1 + $0x7c0] sm:$0xf]
  %v676 = vld [vmem:[%s1 + $0x7c4] sm:$0xf]
  %v677 = vld [vmem:[%s1 + $0x7c8] sm:$0xf]
  %v678 = vld [vmem:[%s1 + $0x7cc] sm:$0xf]
  %v679 = vld [vmem:[%s1 + $0x7d0] sm:$0xf]
  %v680 = vld [vmem:[%s1 + $0x7d4] sm:$0xf]
  %v681 = vld [vmem:[%s1 + $0x7d8] sm:$0xf]
  %v682 = vld [vmem:[%s1 + $0x7dc] sm:$0xf]
  %v683 = vld [vmem:[%s1 + $0x7e0] sm:$0xf]
  %v684 = vld [vmem:[%s1 + $0x7e4] sm:$0xf]
  %v685 = vld [vmem:[%s1 + $0x7e8] sm:$0xf]
  %v686 = vld [vmem:[%s1 + $0x7ec] sm:$0xf]
  %v687 = vld [vmem:[%s1 + $0x7f0] sm:$0xf]
  %v688 = vld [vmem:[%s1 + $0x7f4] sm:$0xf]
  %v689 = vld [vmem:[%s1 + $0x7f8] sm:$0xf]
  %v690 = vld [vmem:[%s1 + $0x7fc] sm:$0xf]
  %v691 = vld [vmem:[%s1 + $0x800] sm:$0xf]
  %v692 = vld [vmem:[%s1 + $0x804] sm:$0xf]
  %v693 = vld [vmem:[%s1 + $0x808] sm:$0xf]
  %v694 = vld [vmem:[%s1 + $0x80c] sm:$0xf]
  %v695 = vld [vmem:[%s1 + $0x810] sm:$0xf]
  %v696 = vld [vmem:[%s1 + $0x814] sm:$0xf]
  %v697 = vld [vmem:[%s1 + $0x818] sm:$0xf]
  %v698 = vld [vmem:[%s1 + $0x81c] sm:$0xf]
  %v699 = vld [vmem:[%s1 + $0x820] sm:$0xf]
  %v700 = vld [vmem:[%s1 + $0x824] sm:$0xf]
  %v701 = vld [vmem:[%s1 + $0x828] sm:$0xf]
  %v702 = vld [vmem:[%s1 + $0x82c] sm:$0xf]
  %v703 = vld [vmem:[%s1 + $0x830] sm:$0xf]
  %v704 = vld [vmem:[%s1 + $0x834] sm:$0xf]
  %v705 = vld [vmem:[%s1 + $0x838] sm:$0xf]
  %v706 = vld [vmem:[%s1 + $0x83c] sm:$0xf]
  %v707 = vld [vmem:[%s1 + $0x840] sm:$0xf]
  %v708 = vld [vmem:[%s1 + $0x844] sm:$0xf]
  %v709 = vld [vmem:[%s1 + $0x848] sm:$0xf]
  %v710 = vld [vmem:[%s1 + $0x84c] sm:$0xf]
  %v711 = vld [vmem:[%s1 + $0x850] sm:$0xf]
  %v712 = vld [vmem:[%s1 + $0x854] sm:$0xf]
  %v713 = vld [vmem:[%s1 + $0x858] sm:$0xf]
  %v714 = vld [vmem:[%s1 + $0x85c] sm:$0xf]
  %v715 = vld [vmem:[%s1 + $0x860] sm:$0xf]
  %v716 = vld [vmem:[%s1 + $0x864] sm:$0xf]
  %v717 = vld [vmem:[%s1 + $0x868] sm:$0xf]
  %v718 = vld [vmem:[%s1 + $0x86c] sm:$0xf]
  %v719 = vld [vmem:[%s1 + $0x870] sm:$0xf]
  %v720 = vld [vmem:[%s1 + $0x874] sm:$0xf]
  %v721 = vld [vmem:[%s1 + $0x878] sm:$0xf]
  %v722 = vld [vmem:[%s1 + $0x87c] sm:$0xf]
  %v723 = vld [vmem:[%s1 + $0x880] sm:$0xf]
  %v724 = vld [vmem:[%s1 + $0x884] sm:$0xf]
  %v725 = vld [vmem:[%s1 + $0x888] sm:$0xf]
  %v726 = vld [vmem:[%s1 + $0x88c] sm:$0xf]
  %v727 = vld [vmem:[%s1 + $0x890] sm:$0xf]
  %v728 = vld [vmem:[%s1 + $0x894] sm:$0xf]
  %v729 = vld [vmem:[%s1 + $0x898] sm:$0xf]
  %v730 = vld [vmem:[%s1 + $0x89c] sm:$0xf]
  %v731 = vld [vmem:[%s1 + $0x8a0] sm:$0xf]
  %v732 = vld [vmem:[%s1 + $0x8a4] sm:$0xf]
  %v733 = vld [vmem:[%s1 + $0x8a8] sm:$0xf]
  %v734 = vld [vmem:[%s1 + $0x8ac] sm:$0xf]
  %v735 = vld [vmem:[%s1 + $0x8b0] sm:$0xf]
  %v736 = vld [vmem:[%s1 + $0x8b4] sm:$0xf]
  %v737 = vld [vmem:[%s1 + $0x8b8] sm:$0xf]
  %v738 = vld [vmem:[%s1 + $0x8bc] sm:$0xf]
  %v739 = vld [vmem:[%s1 + $0x8c0] sm:$0xf]
  %v740 = vld [vmem:[%s1 + $0x8c4] sm:$0xf]
  %v741 = vld [vmem:[%s1 + $0x8c8] sm:$0xf]
  %v742 = vld [vmem:[%s1 + $0x8cc] sm:$0xf]
  %v743 = vld [vmem:[%s1 + $0x8d0] sm:$0xf]
  %v744 = vld [vmem:[%s1 + $0x8d4] sm:$0xf]
  %v745 = vld [vmem:[%s1 + $0x8d8] sm:$0xf]
  %v746 = vld [vmem:[%s1 + $0x8dc] sm:$0xf]
  %v747 = vld [vmem:[%s1 + $0x8e0] sm:$0xf]
  %v748 = vld [vmem:[%s1 + $0x8e4] sm:$0xf]
  %v749 = vld [vmem:[%s1 + $0x8e8] sm:$0xf]
  %v750 = vld [vmem:[%s1 + $0x8ec] sm:$0xf]
  %v751 = vld [vmem:[%s1 + $0x8f0] sm:$0xf]
  %v752 = vld [vmem:[%s1 + $0x8f4] sm:$0xf]
  %v753 = vld [vmem:[%s1 + $0x8f8] sm:$0xf]
  %v754 = vld [vmem:[%s1 + $0x8fc] sm:$0xf]
  %v755 = vld [vmem:[%s1 + $0x900] sm:$0xf]
  %v756 = vld [vmem:[%s1 + $0x904] sm:$0xf]
  %v757 = vld [vmem:[%s1 + $0x908] sm:$0xf]
  %v758 = vld [vmem:[%s1 + $0x90c] sm:$0xf]
  %v759 = vld [vmem:[%s1 + $0x910] sm:$0xf]
  %v760 = vld [vmem:[%s1 + $0x914] sm:$0xf]
  %v761 = vld [vmem:[%s1 + $0x918] sm:$0xf]
  %v762 = vld [vmem:[%s1 + $0x91c] sm:$0xf]
  %v763 = vld [vmem:[%s1 + $0x920] sm:$0xf]
  %v764 = vld [vmem:[%s1 + $0x924] sm:$0xf]
  %v765 = vld [vmem:[%s1 + $0x928] sm:$0xf]
  %v766 = vld [vmem:[%s1 + $0x92c] sm:$0xf]
  %v767 = vld [vmem:[%s1 + $0x930] sm:$0xf]
  %v768 = vld [vmem:[%s1 + $0x934] sm:$0xf]
  %v769 = vld [vmem:[%s1 + $0x938] sm:$0xf]
  %v770 = vld [vmem:[%s1 + $0x93c] sm:$0xf]
  %v771 = vld [vmem:[%s1 + $0x940] sm:$0xf]
  %v772 = vld [vmem:[%s1 + $0x944] sm:$0xf]
  %v773 = vld [vmem:[%s1 + $0x948] sm:$0xf]
  %v774 = vld [vmem:[%s1 + $0x94c] sm:$0xf]
  %v775 = vld [vmem:[%s1 + $0x950] sm:$0xf]
  %v776 = vld [vmem:[%s1 + $0x954] sm:$0xf]
  %v777 = vld [vmem:[%s1 + $0x958] sm:$0xf]
  %v778 = vld [vmem:[%s1 + $0x95c] sm:$0xf]
  %v779 = vld [vmem:[%s1 + $0x960] sm:$0xf]
  %v780 = vld [vmem:[%s1 + $0x964] sm:$0xf]
  %v781 = vld [vmem:[%s1 + $0x968] sm:$0xf]
  %v782 = vld [vmem:[%s1 + $0x96c] sm:$0xf]
  %v783 = vld [vmem:[%s1 + $0x970] sm:$0xf]
  %v784 = vld [vmem:[%s1 + $0x974] sm:$0xf]
  %v785 = vld [vmem:[%s1 + $0x978] sm:$0xf]
  %v786 = vld [vmem:[%s1 + $0x97c] sm:$0xf]
  %v787 = vld [vmem:[%s1 + $0x980] sm:$0xf]
  %v788 = vld [vmem:[%s1 + $0x984] sm:$0xf]
  %v789 = vld [vmem:[%s1 + $0x988] sm:$0xf]
  %v790 = vld [vmem:[%s1 + $0x98c] sm:$0xf]
  %v791 = vld [vmem:[%s1 + $0x990] sm:$0xf]
  %v792 = vld [vmem:[%s1 + $0x994] sm:$0xf]
  %v793 = vld [vmem:[%s1 + $0x998] sm:$0xf]
  %v794 = vld [vmem:[%s1 + $0x99c] sm:$0xf]
  %v795 = vld [vmem:[%s1 + $0x9a0] sm:$0xf]
  %v796 = vld [vmem:[%s1 + $0x9a4] sm:$0xf]
  %v797 = vld [vmem:[%s1 + $0x9a8] sm:$0xf]
  %v798 = vld [vmem:[%s1 + $0x9ac] sm:$0xf]
  %v799 = vld [vmem:[%s1 + $0x9b0] sm:$0xf]
  %v800 = vld [vmem:[%s1 + $0x9b4] sm:$0xf]
  %v801 = vld [vmem:[%s1 + $0x9b8] sm:$0xf]
  %v802 = vld [vmem:[%s1 + $0x9bc] sm:$0xf]
  %v803 = vld [vmem:[%s1 + $0x9c0] sm:$0xf]
  %v804 = vld [vmem:[%s1 + $0x9c4] sm:$0xf]
  %v805 = vld [vmem:[%s1 + $0x9c8] sm:$0xf]
  %v806 = vld [vmem:[%s1 + $0x9cc] sm:$0xf]
  %v807 = vld [vmem:[%s1 + $0x9d0] sm:$0xf]
  %v808 = vld [vmem:[%s1 + $0x9d4] sm:$0xf]
  %v809 = vld [vmem:[%s1 + $0x9d8] sm:$0xf]
  %v810 = vld [vmem:[%s1 + $0x9dc] sm:$0xf]
  %v811 = vld [vmem:[%s1 + $0x9e0] sm:$0xf]
  %v812 = vld [vmem:[%s1 + $0x9e4] sm:$0xf]
  %v813 = vld [vmem:[%s1 + $0x9e8] sm:$0xf]
  %v814 = vld [vmem:[%s1 + $0x9ec] sm:$0xf]
  %v815 = vld [vmem:[%s1 + $0x9f0] sm:$0xf]
  %v816 = vld [vmem:[%s1 + $0x9f4] sm:$0xf]
  %v817 = vld [vmem:[%s1 + $0x9f8] sm:$0xf]
  %v818 = vld [vmem:[%s1 + $0x9fc] sm:$0xf]
  %v819 = vld [vmem:[%s1 + $0xa00] sm:$0xf]
  %v820 = vld [vmem:[%s1 + $0xa04] sm:$0xf]
  %v821 = vld [vmem:[%s1 + $0xa08] sm:$0xf]
  %v822 = vld [vmem:[%s1 + $0xa0c] sm:$0xf]
  %v823 = vld [vmem:[%s1 + $0xa10] sm:$0xf]
  %v824 = vld [vmem:[%s1 + $0xa14] sm:$0xf]
  %v825 = vld [vmem:[%s1 + $0xa18] sm:$0xf]
  %v826 = vld [vmem:[%s1 + $0xa1c] sm:$0xf]
  %v827 = vld [vmem:[%s1 + $0xa20] sm:$0xf]
  %v828 = vld [vmem:[%s1 + $0xa24] sm:$0xf]
  %v829 = vld [vmem:[%s1 + $0xa28] sm:$0xf]
  %v830 = vld [vmem:[%s1 + $0xa2c] sm:$0xf]
  %v831 = vld [vmem:[%s1 + $0xa30] sm:$0xf]
  %v832 = vld [vmem:[%s1 + $0xa34] sm:$0xf]
  %v833 = vld [vmem:[%s1 + $0xa38] sm:$0xf]
  %v834 = vld [vmem:[%s1 + $0xa3c] sm:$0xf]
  %v835 = vld [vmem:[%s1 + $0xa40] sm:$0xf]
  %v836 = vld [vmem:[%s1 + $0xa44] sm:$0xf]
  %v837 = vld [vmem:[%s1 + $0xa48] sm:$0xf]
  %v838 = vld [vmem:[%s1 + $0xa4c] sm:$0xf]
  %v839 = vld [vmem:[%s1 + $0xa50] sm:$0xf]
  %v840 = vld [vmem:[%s1 + $0xa54] sm:$0xf]
  %v841 = vld [vmem:[%s1 + $0xa58] sm:$0xf]
  %v842 = vld [vmem:[%s1 + $0xa5c] sm:$0xf]
  %v843 = vld [vmem:[%s1 + $0xa60] sm:$0xf]
  %v844 = vld [vmem:[%s1 + $0xa64] sm:$0xf]
  %v845 = vld [vmem:[%s1 + $0xa68] sm:$0xf]
  %v846 = vld [vmem:[%s1 + $0xa6c] sm:$0xf]
  %v847 = vld [vmem:[%s1 + $0xa70] sm:$0xf]
  %v848 = vld [vmem:[%s1 + $0xa74] sm:$0xf]
  %v849 = vld [vmem:[%s1 + $0xa78] sm:$0xf]
  %v850 = vld [vmem:[%s1 + $0xa7c] sm:$0xf]
  %v851 = vld [vmem:[%s1 + $0xa80] sm:$0xf]
  %v852 = vld [vmem:[%s1 + $0xa84] sm:$0xf]
  %v853 = vld [vmem:[%s1 + $0xa88] sm:$0xf]
  %v854 = vld [vmem:[%s1 + $0xa8c] sm:$0xf]
  %v855 = vld [vmem:[%s1 + $0xa90] sm:$0xf]
  %v856 = vld [vmem:[%s1 + $0xa94] sm:$0xf]
  %v857 = vld [vmem:[%s1 + $0xa98] sm:$0xf]
  %v858 = vld [vmem:[%s1 + $0xa9c] sm:$0xf]
  %v859 = vld [vmem:[%s1 + $0xaa0] sm:$0xf]
  %v860 = vld [vmem:[%s1 + $0xaa4] sm:$0xf]
  %v861 = vld [vmem:[%s1 + $0xaa8] sm:$0xf]
  %v862 = vld [vmem:[%s1 + $0xaac] sm:$0xf]
  %v863 = vld [vmem:[%s1 + $0xab0] sm:$0xf]
  %v864 = vld [vmem:[%s1 + $0xab4] sm:$0xf]
  %v865 = vld [vmem:[%s1 + $0xab8] sm:$0xf]
  %v866 = vld [vmem:[%s1 + $0xabc] sm:$0xf]
  %v867 = vld [vmem:[%s1 + $0xac0] sm:$0xf]
  %v868 = vld [vmem:[%s1 + $0xac4] sm:$0xf]
  %v869 = vld [vmem:[%s1 + $0xac8] sm:$0xf]
  %v870 = vld [vmem:[%s1 + $0xacc] sm:$0xf]
  %v871 = vld [vmem:[%s1 + $0xad0] sm:$0xf]
  %v872 = vld [vmem:[%s1 + $0xad4] sm:$0xf]
  %v873 = vld [vmem:[%s1 + $0xad8] sm:$0xf]
  %v874 = vld [vmem:[%s1 + $0xadc] sm:$0xf]
  %v875 = vld [vmem:[%s1 + $0xae0] sm:$0xf]
  %v876 = vld [vmem:[%s1 + $0xae4] sm:$0xf]
  %v877 = vld [vmem:[%s1 + $0xae8] sm:$0xf]
  %v878 = vld [vmem:[%s1 + $0xaec] sm:$0xf]
  %v879 = vld [vmem:[%s1 + $0xaf0] sm:$0xf]
  %v880 = vld [vmem:[%s1 + $0xaf4] sm:$0xf]
  %v881 = vld [vmem:[%s1 + $0xaf8] sm:$0xf]
  %v882 = vld [vmem:[%s1 + $0xafc] sm:$0xf]
  %v883 = vld [vmem:[%s1 + $0xb00] sm:$0xf]
  %v884 = vld [vmem:[%s1 + $0xb04] sm:$0xf]
  %v885 = vld [vmem:[%s1 + $0xb08] sm:$0xf]
  %v886 = vld [vmem:[%s1 + $0xb0c] sm:$0xf]
  %v887 = vld [vmem:[%s1 + $0xb10] sm:$0xf]
  %v888 = vld [vmem:[%s1 + $0xb14] sm:$0xf]
  %v889 = vld [vmem:[%s1 + $0xb18] sm:$0xf]
  %v890 = vld [vmem:[%s1 + $0xb1c] sm:$0xf]
  %v891 = vld [vmem:[%s1 + $0xb20] sm:$0xf]
  %v892 = vld [vmem:[%s1 + $0xb24] sm:$0xf]
  %v893 = vld [vmem:[%s1 + $0xb28] sm:$0xf]
  %v894 = vld [vmem:[%s1 + $0xb2c] sm:$0xf]
  %v895 = vld [vmem:[%s1 + $0xb30] sm:$0xf]
  %v896 = vld [vmem:[%s1 + $0xb34] sm:$0xf]
  %v897 = vld [vmem:[%s1 + $0xb38] sm:$0xf]
  %v898 = vld [vmem:[%s1 + $0xb3c] sm:$0xf]
  %v899 = vld [vmem:[%s1 + $0xb40] sm:$0xf]
  %v900 = vld [vmem:[%s1 + $0xb44] sm:$0xf]
  %v901 = vld [vmem:[%s1 + $0xb48] sm:$0xf]
  %v902 = vld [vmem:[%s1 + $0xb4c] sm:$0xf]
  %v903 = vld [vmem:[%s1 + $0xb50] sm:$0xf]
  %v904 = vld [vmem:[%s1 + $0xb54] sm:$0xf]
  %v905 = vld [vmem:[%s1 + $0xb58] sm:$0xf]
  %v906 = vld [vmem:[%s1 + $0xb5c] sm:$0xf]
  %v907 = vld [vmem:[%s1 + $0xb60] sm:$0xf]
  %v908 = vld [vmem:[%s1 + $0xb64] sm:$0xf]
  %v909 = vld [vmem:[%s1 + $0xb68] sm:$0xf]
  %v910 = vld [vmem:[%s1 + $0xb6c] sm:$0xf]
  %v911 = vld [vmem:[%s1 + $0xb70] sm:$0xf]
  %v912 = vld [vmem:[%s1 + $0xb74] sm:$0xf]
  %v913 = vld [vmem:[%s1 + $0xb78] sm:$0xf]
  %v914 = vld [vmem:[%s1 + $0xb7c] sm:$0xf]
  %v915 = vld [vmem:[%s1 + $0xb80] sm:$0xf]
  %v916 = vld [vmem:[%s1 + $0xb84] sm:$0xf]
  %v917 = vld [vmem:[%s1 + $0xb88] sm:$0xf]
  %v918 = vld [vmem:[%s1 + $0xb8c] sm:$0xf]
  %v919 = vld [vmem:[%s1 + $0xb90] sm:$0xf]
  %v920 = vld [vmem:[%s1 + $0xb94] sm:$0xf]
  %v921 = vld [vmem:[%s1 + $0xb98] sm:$0xf]
  %v922 = vld [vmem:[%s1 + $0xb9c] sm:$0xf]
  %v923 = vld [vmem:[%s1 + $0xba0] sm:$0xf]
  %v924 = vld [vmem:[%s1 + $0xba4] sm:$0xf]
  %v925 = vld [vmem:[%s1 + $0xba8] sm:$0xf]
  %v926 = vld [vmem:[%s1 + $0xbac] sm:$0xf]
  %v927 = vld [vmem:[%s1 + $0xbb0] sm:$0xf]
  %v928 = vld [vmem:[%s1 + $0xbb4] sm:$0xf]
  %v929 = vld [vmem:[%s1 + $0xbb8] sm:$0xf]
  %v930 = vld [vmem:[%s1 + $0xbbc] sm:$0xf]
  %v931 = vld [vmem:[%s1 + $0xbc0] sm:$0xf]
  %v932 = vld [vmem:[%s1 + $0xbc4] sm:$0xf]
  %v933 = vld [vmem:[%s1 + $0xbc8] sm:$0xf]
  %v934 = vld [vmem:[%s1 + $0xbcc] sm:$0xf]
  %v935 = vld [vmem:[%s1 + $0xbd0] sm:$0xf]
  %v936 = vld [vmem:[%s1 + $0xbd4] sm:$0xf]
  %v937 = vld [vmem:[%s1 + $0xbd8] sm:$0xf]
  %v938 = vld [vmem:[%s1 + $0xbdc] sm:$0xf]
  %v939 = vld [vmem:[%s1 + $0xbe0] sm:$0xf]
  %v940 = vld [vmem:[%s1 + $0xbe4] sm:$0xf]
  %v941 = vld [vmem:[%s1 + $0xbe8] sm:$0xf]
  %v942 = vld [vmem:[%s1 + $0xbec] sm:$0xf]
  %v943 = vld [vmem:[%s1 + $0xbf0] sm:$0xf]
  %v944 = vld [vmem:[%s1 + $0xbf4] sm:$0xf]
  %v945 = vld [vmem:[%s1 + $0xbf8] sm:$0xf]
  %v946 = vld [vmem:[%s1 + $0xbfc] sm:$0xf]
  %v947 = vld [vmem:[%s1 + $0xc00] sm:$0xf]
  %v948 = vld [vmem:[%s1 + $0xc04] sm:$0xf]
  %v949 = vld [vmem:[%s1 + $0xc08] sm:$0xf]
  %v950 = vld [vmem:[%s1 + $0xc0c] sm:$0xf]
  %v951 = vld [vmem:[%s1 + $0xc10] sm:$0xf]
  %v952 = vld [vmem:[%s1 + $0xc14] sm:$0xf]
  %v953 = vld [vmem:[%s1 + $0xc18] sm:$0xf]
  %v954 = vld [vmem:[%s1 + $0xc1c] sm:$0xf]
  %v955 = vld [vmem:[%s1 + $0xc20] sm:$0xf]
  %v956 = vld [vmem:[%s1 + $0xc24] sm:$0xf]
  %v957 = vld [vmem:[%s1 + $0xc28] sm:$0xf]
  %v958 = vld [vmem:[%s1 + $0xc2c] sm:$0xf]
  %v959 = vld [vmem:[%s1 + $0xc30] sm:$0xf]
  %v960 = vld [vmem:[%s1 + $0xc34] sm:$0xf]
  %v961 = vld [vmem:[%s1 + $0xc38] sm:$0xf]
  %v962 = vld [vmem:[%s1 + $0xc3c] sm:$0xf]
  %v963 = vld [vmem:[%s1 + $0xc40] sm:$0xf]
  %v964 = vld [vmem:[%s1 + $0xc44] sm:$0xf]
  %v965 = vld [vmem:[%s1 + $0xc48] sm:$0xf]
  %v966 = vld [vmem:[%s1 + $0xc4c] sm:$0xf]
  %v967 = vld [vmem:[%s1 + $0xc50] sm:$0xf]
  %v968 = vld [vmem:[%s1 + $0xc54] sm:$0xf]
  %v969 = vld [vmem:[%s1 + $0xc58] sm:$0xf]
  %v970 = vld [vmem:[%s1 + $0xc5c] sm:$0xf]
  %v971 = vld [vmem:[%s1 + $0xc60] sm:$0xf]
  %v972 = vld [vmem:[%s1 + $0xc64] sm:$0xf]
  %v973 = vld [vmem:[%s1 + $0xc68] sm:$0xf]
  %v974 = vld [vmem:[%s1 + $0xc6c] sm:$0xf]
  %v975 = vld [vmem:[%s1 + $0xc70] sm:$0xf]
  %v976 = vld [vmem:[%s1 + $0xc74] sm:$0xf]
  %v977 = vld [vmem:[%s1 + $0xc78] sm:$0xf]
  %v978 = vld [vmem:[%s1 + $0xc7c] sm:$0xf]
  %v979 = vld [vmem:[%s1 + $0xc80] sm:$0xf]
  %v980 = vld [vmem:[%s1 + $0xc84] sm:$0xf]
  %v981 = vld [vmem:[%s1 + $0xc88] sm:$0xf]
  %v982 = vld [vmem:[%s1 + $0xc8c] sm:$0xf]
  %v983 = vld [vmem:[%s1 + $0xc90] sm:$0xf]
  %v984 = vld [vmem:[%s1 + $0xc94] sm:$0xf]
  %v985 = vld [vmem:[%s1 + $0xc98] sm:$0xf]
  %v986 = vld [vmem:[%s1 + $0xc9c] sm:$0xf]
  %v987 = vld [vmem:[%s1 + $0xca0] sm:$0xf]
  %v988 = vld [vmem:[%s1 + $0xca4] sm:$0xf]
  %v989 = vld [vmem:[%s1 + $0xca8] sm:$0xf]
  %v990 = vld [vmem:[%s1 + $0xcac] sm:$0xf]
  %v991 = vld [vmem:[%s1 + $0xcb0] sm:$0xf]
  %v992 = vld [vmem:[%s1 + $0xcb4] sm:$0xf]
  %v993 = vld [vmem:[%s1 + $0xcb8] sm:$0xf]
  %v994 = vld [vmem:[%s1 + $0xcbc] sm:$0xf]
  %v995 = vld [vmem:[%s1 + $0xcc0] sm:$0xf]
  %v996 = vld [vmem:[%s1 + $0xcc4] sm:$0xf]
  %v997 = vld [vmem:[%s1 + $0xcc8] sm:$0xf]
  %v998 = vld [vmem:[%s1 + $0xccc] sm:$0xf]
  %v999 = vld [vmem:[%s1 + $0xcd0] sm:$0xf]
  %v1000 = vld [vmem:[%s1 + $0xcd4] sm:$0xf]
  %v1001 = vld [vmem:[%s1 + $0xcd8] sm:$0xf]
  %v1002 = vld [vmem:[%s1 + $0xcdc] sm:$0xf]
  %v1003 = vld [vmem:[%s1 + $0xce0] sm:$0xf]
  %v1004 = vld [vmem:[%s1 + $0xce4] sm:$0xf]
  %v1005 = vld [vmem:[%s1 + $0xce8] sm:$0xf]
  %v1006 = vld [vmem:[%s1 + $0xcec] sm:$0xf]
  %v1007 = vld [vmem:[%s1 + $0xcf0] sm:$0xf]
  %v1008 = vld [vmem:[%s1 + $0xcf4] sm:$0xf]
  %v1009 = vld [vmem:[%s1 + $0xcf8] sm:$0xf]
  %v1010 = vld [vmem:[%s1 + $0xcfc] sm:$0xf]
  %v1011 = vld [vmem:[%s1 + $0xd00] sm:$0xf]
  %v1012 = vld [vmem:[%s1 + $0xd04] sm:$0xf]
  %v1013 = vld [vmem:[%s1 + $0xd08] sm:$0xf]
  %v1014 = vld [vmem:[%s1 + $0xd0c] sm:$0xf]
  %v1015 = vld [vmem:[%s1 + $0xd10] sm:$0xf]
  %v1016 = vld [vmem:[%s1 + $0xd14] sm:$0xf]
  %v1017 = vld [vmem:[%s1 + $0xd18] sm:$0xf]
  %v1018 = vld [vmem:[%s1 + $0xd1c] sm:$0xf]
  %v1019 = vld [vmem:[%s1 + $0xd20] sm:$0xf]
  %v1020 = vld [vmem:[%s1 + $0xd24] sm:$0xf]
  %v1021 = vld [vmem:[%s1 + $0xd28] sm:$0xf]
  %v1022 = vld [vmem:[%s1 + $0xd2c] sm:$0xf]
  %v1023 = vld [vmem:[%s1 + $0xd30] sm:$0xf]
  %v1024 = vld [vmem:[%s1 + $0xd34] sm:$0xf]
  %v1025 = vld [vmem:[%s1 + $0xd38] sm:$0xf]
  %v1026 = vld [vmem:[%s1 + $0xd3c] sm:$0xf]
  %v1027 = vld [vmem:[%s1 + $0xd40] sm:$0xf]
  %v1028 = vld [vmem:[%s1 + $0xd44] sm:$0xf]
  %v1029 = vld [vmem:[%s1 + $0xd48] sm:$0xf]
  %v1030 = vld [vmem:[%s1 + $0xd4c] sm:$0xf]
  %v1031 = vld [vmem:[%s1 + $0xd50] sm:$0xf]
  %v1032 = vld [vmem:[%s1 + $0xd54] sm:$0xf]
  %v1033 = vld [vmem:[%s1 + $0xd58] sm:$0xf]
  %v1034 = vld [vmem:[%s1 + $0xd5c] sm:$0xf]
  %v1035 = vld [vmem:[%s1 + $0xd60] sm:$0xf]
  %v1036 = vld [vmem:[%s1 + $0xd64] sm:$0xf]
  %v1037 = vld [vmem:[%s1 + $0xd68] sm:$0xf]
  %v1038 = vld [vmem:[%s1 + $0xd6c] sm:$0xf]
  %v1039 = vld [vmem:[%s1 + $0xd70] sm:$0xf]
  %v1040 = vld [vmem:[%s1 + $0xd74] sm:$0xf]
  %v1041 = vld [vmem:[%s1 + $0xd78] sm:$0xf]
  %v1042 = vld [vmem:[%s1 + $0xd7c] sm:$0xf]
  %v1043 = vld [vmem:[%s1 + $0xd80] sm:$0xf]
  %v1044 = vld [vmem:[%s1 + $0xd84] sm:$0xf]
  %v1045 = vld [vmem:[%s1 + $0xd88] sm:$0xf]
  %v1046 = vld [vmem:[%s1 + $0xd8c] sm:$0xf]
  %v1047 = vld [vmem:[%s1 + $0xd90] sm:$0xf]
  %v1048 = vld [vmem:[%s1 + $0xd94] sm:$0xf]
  %v1049 = vld [vmem:[%s1 + $0xd98] sm:$0xf]
  %v1050 = vld [vmem:[%s1 + $0xd9c] sm:$0xf]
  %v1051 = vld [vmem:[%s1 + $0xda0] sm:$0xf]
  %v1052 = vld [vmem:[%s1 + $0xda4] sm:$0xf]
  %v1053 = vld [vmem:[%s1 + $0xda8] sm:$0xf]
  %v1054 = vld [vmem:[%s1 + $0xdac] sm:$0xf]
  %v1055 = vld [vmem:[%s1 + $0xdb0] sm:$0xf]
  %v1056 = vld [vmem:[%s1 + $0xdb4] sm:$0xf]
  %v1057 = vld [vmem:[%s1 + $0xdb8] sm:$0xf]
  %v1058 = vld [vmem:[%s1 + $0xdbc] sm:$0xf]
  %v1059 = vld [vmem:[%s1 + $0xdc0] sm:$0xf]
  %v1060 = vld [vmem:[%s1 + $0xdc4] sm:$0xf]
  %v1061 = vld [vmem:[%s1 + $0xdc8] sm:$0xf]
  %v1062 = vld [vmem:[%s1 + $0xdcc] sm:$0xf]
  %v1063 = vld [vmem:[%s1 + $0xdd0] sm:$0xf]
  %v1064 = vld [vmem:[%s1 + $0xdd4] sm:$0xf]
  %v1065 = vld [vmem:[%s1 + $0xdd8] sm:$0xf]
  %v1066 = vld [vmem:[%s1 + $0xddc] sm:$0xf]
  %v1067 = vld [vmem:[%s1 + $0xde0] sm:$0xf]
  %v1068 = vld [vmem:[%s1 + $0xde4] sm:$0xf]
  %v1069 = vld [vmem:[%s1 + $0xde8] sm:$0xf]
  %v1070 = vld [vmem:[%s1 + $0xdec] sm:$0xf]
  %v1071 = vld [vmem:[%s1 + $0xdf0] sm:$0xf]
  %v1072 = vld [vmem:[%s1 + $0xdf4] sm:$0xf]
  %v1073 = vld [vmem:[%s1 + $0xdf8] sm:$0xf]
  %v1074 = vld [vmem:[%s1 + $0xdfc] sm:$0xf]
  %v1075 = vld [vmem:[%s1 + $0xe00] sm:$0xf]
  %v1076 = vld [vmem:[%s1 + $0xe04] sm:$0xf]
  %v1077 = vld [vmem:[%s1 + $0xe08] sm:$0xf]
  %v1078 = vld [vmem:[%s1 + $0xe0c] sm:$0xf]
  %v1079 = vld [vmem:[%s1 + $0xe10] sm:$0xf]
  %v1080 = vld [vmem:[%s1 + $0xe14] sm:$0xf]
  %v1081 = vld [vmem:[%s1 + $0xe18] sm:$0xf]
  %v1082 = vld [vmem:[%s1 + $0xe1c] sm:$0xf]
  %v1083 = vld [vmem:[%s1 + $0xe20] sm:$0xf]
  %v1084 = vld [vmem:[%s1 + $0xe24] sm:$0xf]
  %v1085 = vld [vmem:[%s1 + $0xe28] sm:$0xf]
  %v1086 = vld [vmem:[%s1 + $0xe2c] sm:$0xf]
  %v1087 = vld [vmem:[%s1 + $0xe30] sm:$0xf]
  %v1088 = vld [vmem:[%s1 + $0xe34] sm:$0xf]
  %v1089 = vld [vmem:[%s1 + $0xe38] sm:$0xf]
  %v1090 = vld [vmem:[%s1 + $0xe3c] sm:$0xf]
  %v1091 = vld [vmem:[%s1 + $0xe40] sm:$0xf]
  %v1092 = vld [vmem:[%s1 + $0xe44] sm:$0xf]
  %v1093 = vld [vmem:[%s1 + $0xe48] sm:$0xf]
  %v1094 = vld [vmem:[%s1 + $0xe4c] sm:$0xf]
  %v1095 = vld [vmem:[%s1 + $0xe50] sm:$0xf]
  %v1096 = vld [vmem:[%s1 + $0xe54] sm:$0xf]
  %v1097 = vld [vmem:[%s1 + $0xe58] sm:$0xf]
  %v1098 = vld [vmem:[%s1 + $0xe5c] sm:$0xf]
  %v1099 = vld [vmem:[%s1 + $0xe60] sm:$0xf]
  %v1100 = vld [vmem:[%s1 + $0xe64] sm:$0xf]
  %v1101 = vld [vmem:[%s1 + $0xe68] sm:$0xf]
  %v1102 = vld [vmem:[%s1 + $0xe6c] sm:$0xf]
  %v1103 = vld [vmem:[%s1 + $0xe70] sm:$0xf]
  %v1104 = vld [vmem:[%s1 + $0xe74] sm:$0xf]
  %v1105 = vld [vmem:[%s1 + $0xe78] sm:$0xf]
  %v1106 = vld [vmem:[%s1 + $0xe7c] sm:$0xf]
  %v1107 = vld [vmem:[%s1 + $0xe80] sm:$0xf]
  %v1108 = vld [vmem:[%s1 + $0xe84] sm:$0xf]
  %v1109 = vld [vmem:[%s1 + $0xe88] sm:$0xf]
  %v1110 = vld [vmem:[%s1 + $0xe8c] sm:$0xf]
  %v1111 = vld [vmem:[%s1 + $0xe90] sm:$0xf]
  %v1112 = vld [vmem:[%s1 + $0xe94] sm:$0xf]
  %v1113 = vld [vmem:[%s1 + $0xe98] sm:$0xf]
  %v1114 = vld [vmem:[%s1 + $0xe9c] sm:$0xf]
  %v1115 = vld [vmem:[%s1 + $0xea0] sm:$0xf]
  %v1116 = vld [vmem:[%s1 + $0xea4] sm:$0xf]
  %v1117 = vld [vmem:[%s1 + $0xea8] sm:$0xf]
  %v1118 = vld [vmem:[%s1 + $0xeac] sm:$0xf]
  %v1119 = vld [vmem:[%s1 + $0xeb0] sm:$0xf]
  %v1120 = vld [vmem:[%s1 + $0xeb4] sm:$0xf]
  %v1121 = vld [vmem:[%s1 + $0xeb8] sm:$0xf]
  %v1122 = vld [vmem:[%s1 + $0xebc] sm:$0xf]
  %v1123 = vld [vmem:[%s1 + $0xec0] sm:$0xf]
  %v1124 = vld [vmem:[%s1 + $0xec4] sm:$0xf]
  %v1125 = vld [vmem:[%s1 + $0xec8] sm:$0xf]
  %v1126 = vld [vmem:[%s1 + $0xecc] sm:$0xf]
  %v1127 = vld [vmem:[%s1 + $0xed0] sm:$0xf]
  %v1128 = vld [vmem:[%s1 + $0xed4] sm:$0xf]
  %v1129 = vld [vmem:[%s1 + $0xed8] sm:$0xf]
  %v1130 = vld [vmem:[%s1 + $0xedc] sm:$0xf]
  %v1131 = vld [vmem:[%s1 + $0xee0] sm:$0xf]
  %v1132 = vld [vmem:[%s1 + $0xee4] sm:$0xf]
  %v1133 = vld [vmem:[%s1 + $0xee8] sm:$0xf]
  %v1134 = vld [vmem:[%s1 + $0xeec] sm:$0xf]
  %v1135 = vld [vmem:[%s1 + $0xef0] sm:$0xf]
  %v1136 = vld [vmem:[%s1 + $0xef4] sm:$0xf]
  %v1137 = vld [vmem:[%s1 + $0xef8] sm:$0xf]
  %v1138 = vld [vmem:[%s1 + $0xefc] sm:$0xf]
  %v1139 = vld [vmem:[%s1 + $0xf00] sm:$0xf]
  %v1140 = vld [vmem:[%s1 + $0xf04] sm:$0xf]
  %v1141 = vld [vmem:[%s1 + $0xf08] sm:$0xf]
  %v1142 = vld [vmem:[%s1 + $0xf0c] sm:$0xf]
  %v1143 = vld [vmem:[%s1 + $0xf10] sm:$0xf]
  %v1144 = vld [vmem:[%s1 + $0xf14] sm:$0xf]
  %v1145 = vld [vmem:[%s1 + $0xf18] sm:$0xf]
  %v1146 = vld [vmem:[%s1 + $0xf1c] sm:$0xf]
  %v1147 = vld [vmem:[%s1 + $0xf20] sm:$0xf]
  %v1148 = vld [vmem:[%s1 + $0xf24] sm:$0xf]
  %v1149 = vld [vmem:[%s1 + $0xf28] sm:$0xf]
  %v1150 = vld [vmem:[%s1 + $0xf2c] sm:$0xf]
  %v1151 = vld [vmem:[%s1 + $0xf30] sm:$0xf]
  %v1152 = vld [vmem:[%s1 + $0xf34] sm:$0xf]
  %v1153 = vld [vmem:[%s1 + $0xf38] sm:$0xf]
  %v1154 = vld [vmem:[%s1 + $0xf3c] sm:$0xf]
  %v1155 = vld [vmem:[%s1 + $0xf40] sm:$0xf]
  %v1156 = vld [vmem:[%s1 + $0xf44] sm:$0xf]
  %v1157 = vld [vmem:[%s1 + $0xf48] sm:$0xf]
  %v1158 = vld [vmem:[%s1 + $0xf4c] sm:$0xf]
  %v1159 = vld [vmem:[%s1 + $0xf50] sm:$0xf]
  %v1160 = vld [vmem:[%s1 + $0xf54] sm:$0xf]
  %v1161 = vld [vmem:[%s1 + $0xf58] sm:$0xf]
  %v1162 = vld [vmem:[%s1 + $0xf5c] sm:$0xf]
  %v1163 = vld [vmem:[%s1 + $0xf60] sm:$0xf]
  %v1164 = vld [vmem:[%s1 + $0xf64] sm:$0xf]
  %v1165 = vld [vmem:[%s1 + $0xf68] sm:$0xf]
  %v1166 = vld [vmem:[%s1 + $0xf6c] sm:$0xf]
  %v1167 = vld [vmem:[%s1 + $0xf70] sm:$0xf]
  %v1168 = vld [vmem:[%s1 + $0xf74] sm:$0xf]
  %v1169 = vld [vmem:[%s1 + $0xf78] sm:$0xf]
  %v1170 = vld [vmem:[%s1 + $0xf7c] sm:$0xf]
  %v1171 = vld [vmem:[%s1 + $0xf80] sm:$0xf]
  %v1172 = vld [vmem:[%s1 + $0xf84] sm:$0xf]
  %v1173 = vld [vmem:[%s1 + $0xf88] sm:$0xf]
  %v1174 = vld [vmem:[%s1 + $0xf8c] sm:$0xf]
  %v1175 = vld [vmem:[%s1 + $0xf90] sm:$0xf]
  %v1176 = vld [vmem:[%s1 + $0xf94] sm:$0xf]
  %v1177 = vld [vmem:[%s1 + $0xf98] sm:$0xf]
  %v1178 = vld [vmem:[%s1 + $0xf9c] sm:$0xf]
  %v1179 = vld [vmem:[%s1 + $0xfa0] sm:$0xf]
  %v1180 = vld [vmem:[%s1 + $0xfa4] sm:$0xf]
  %v1181 = vld [vmem:[%s1 + $0xfa8] sm:$0xf]
  %v1182 = vld [vmem:[%s1 + $0xfac] sm:$0xf]
  %v1183 = vld [vmem:[%s1 + $0xfb0] sm:$0xf]
  %v1184 = vld [vmem:[%s1 + $0xfb4] sm:$0xf]
  %v1185 = vld [vmem:[%s1 + $0xfb8] sm:$0xf]
  %v1186 = vld [vmem:[%s1 + $0xfbc] sm:$0xf]
  %v1187 = vld [vmem:[%s1 + $0xfc0] sm:$0xf]
  %v1188 = vld [vmem:[%s1 + $0xfc4] sm:$0xf]
  %v1189 = vld [vmem:[%s1 + $0xfc8] sm:$0xf]
  %v1190 = vld [vmem:[%s1 + $0xfcc] sm:$0xf]
  %v1191 = vld [vmem:[%s1 + $0xfd0] sm:$0xf]
  %v1192 = vld [vmem:[%s1 + $0xfd4] sm:$0xf]
  %v1193 = vld [vmem:[%s1 + $0xfd8] sm:$0xf]
  %v1194 = vld [vmem:[%s1 + $0xfdc] sm:$0xf]
  %v1195 = vld [vmem:[%s1 + $0xfe0] sm:$0xf]
  %v1196 = vld [vmem:[%s1 + $0xfe4] sm:$0xf]
  %v1197 = vld [vmem:[%s1 + $0xfe8] sm:$0xf]
  %v1198 = vld [vmem:[%s1 + $0xfec] sm:$0xf]
  %v1199 = vld [vmem:[%s1 + $0xff0] sm:$0xf]
  %v1200 = vld [vmem:[%s1 + $0xff4] sm:$0xf]
  %v1201 = vld [vmem:[%s1 + $0xff8] sm:$0xf]
  %v1202 = vld [vmem:[%s1 + $0xffc] sm:$0xf]
  %v1203 = vld [vmem:[%s1 + $0x1000] sm:$0xf]
  %v1204 = vld [vmem:[%s1 + $0x1004] sm:$0xf]
  %v1205 = vld [vmem:[%s1 + $0x1008] sm:$0xf]
  %v1206 = vld [vmem:[%s1 + $0x100c] sm:$0xf]
  %v1207 = vld [vmem:[%s1 + $0x1010] sm:$0xf]
  %v1208 = vld [vmem:[%s1 + $0x1014] sm:$0xf]
  %v1209 = vld [vmem:[%s1 + $0x1018] sm:$0xf]
  %v1210 = vld [vmem:[%s1 + $0x101c] sm:$0xf]
  %v1211 = vld [vmem:[%s1 + $0x1020] sm:$0xf]
  %v1212 = vld [vmem:[%s1 + $0x1024] sm:$0xf]
  %v1213 = vld [vmem:[%s1 + $0x1028] sm:$0xf]
  %v1214 = vld [vmem:[%s1 + $0x102c] sm:$0xf]
  %v1215 = vld [vmem:[%s1 + $0x1030] sm:$0xf]
  %v1216 = vld [vmem:[%s1 + $0x1034] sm:$0xf]
  %v1217 = vld [vmem:[%s1 + $0x1038] sm:$0xf]
  %v1218 = vld [vmem:[%s1 + $0x103c] sm:$0xf]
  %v1219 = vld [vmem:[%s1 + $0x1040] sm:$0xf]
  %v1220 = vld [vmem:[%s1 + $0x1044] sm:$0xf]
  %v1221 = vld [vmem:[%s1 + $0x1048] sm:$0xf]
  %v1222 = vld [vmem:[%s1 + $0x104c] sm:$0xf]
  %v1223 = vld [vmem:[%s1 + $0x1050] sm:$0xf]
  %v1224 = vld [vmem:[%s1 + $0x1054] sm:$0xf]
  %v1225 = vld [vmem:[%s1 + $0x1058] sm:$0xf]
  %v1226 = vld [vmem:[%s1 + $0x105c] sm:$0xf]
  %v1227 = vld [vmem:[%s1 + $0x1060] sm:$0xf]
  %v1228 = vld [vmem:[%s1 + $0x1064] sm:$0xf]
  %v1229 = vld [vmem:[%s1 + $0x1068] sm:$0xf]
  %v1230 = vld [vmem:[%s1 + $0x106c] sm:$0xf]
  %v1231 = vld [vmem:[%s1 + $0x1070] sm:$0xf]
  %v1232 = vld [vmem:[%s1 + $0x1074] sm:$0xf]
  %v1233 = vld [vmem:[%s1 + $0x1078] sm:$0xf]
  %v1234 = vld [vmem:[%s1 + $0x107c] sm:$0xf]
  %v1235 = vld [vmem:[%s1 + $0x1080] sm:$0xf]
  %v1236 = vld [vmem:[%s1 + $0x1084] sm:$0xf]
  %v1237 = vld [vmem:[%s1 + $0x1088] sm:$0xf]
  %v1238 = vld [vmem:[%s1 + $0x108c] sm:$0xf]
  %v1239 = vld [vmem:[%s1 + $0x1090] sm:$0xf]
  %v1240 = vld [vmem:[%s1 + $0x1094] sm:$0xf]
  %v1241 = vld [vmem:[%s1 + $0x1098] sm:$0xf]
  %v1242 = vld [vmem:[%s1 + $0x109c] sm:$0xf]
  %v1243 = vld [vmem:[%s1 + $0x10a0] sm:$0xf]
  %v1244 = vld [vmem:[%s1 + $0x10a4] sm:$0xf]
  %v1245 = vld [vmem:[%s1 + $0x10a8] sm:$0xf]
  %v1246 = vld [vmem:[%s1 + $0x10ac] sm:$0xf]
  %v1247 = vld [vmem:[%s1 + $0x10b0] sm:$0xf]
  %v1248 = vld [vmem:[%s1 + $0x10b4] sm:$0xf]
  %v1249 = vld [vmem:[%s1 + $0x10b8] sm:$0xf]
  %v1250 = vld [vmem:[%s1 + $0x10bc] sm:$0xf]
  %v1251 = vld [vmem:[%s1 + $0x10c0] sm:$0xf]
  %v1252 = vld [vmem:[%s1 + $0x10c4] sm:$0xf]
  %v1253 = vld [vmem:[%s1 + $0x10c8] sm:$0xf]
  %v1254 = vld [vmem:[%s1 + $0x10cc] sm:$0xf]
  %v1255 = vld [vmem:[%s1 + $0x10d0] sm:$0xf]
  %v1256 = vld [vmem:[%s1 + $0x10d4] sm:$0xf]
  %v1257 = vld [vmem:[%s1 + $0x10d8] sm:$0xf]
  %v1258 = vld [vmem:[%s1 + $0x10dc] sm:$0xf]
  %v1259 = vld [vmem:[%s1 + $0x10e0] sm:$0xf]
  %v1260 = vld [vmem:[%s1 + $0x10e4] sm:$0xf]
  %v1261 = vld [vmem:[%s1 + $0x10e8] sm:$0xf]
  %v1262 = vld [vmem:[%s1 + $0x10ec] sm:$0xf]
  %v1263 = vld [vmem:[%s1 + $0x10f0] sm:$0xf]
  %v1264 = vld [vmem:[%s1 + $0x10f4] sm:$0xf]
  %v1265 = vld [vmem:[%s1 + $0x10f8] sm:$0xf]
  %v1266 = vld [vmem:[%s1 + $0x10fc] sm:$0xf]
  %v1267 = vld [vmem:[%s1 + $0x1100] sm:$0xf]
  %v1268 = vld [vmem:[%s1 + $0x1104] sm:$0xf]
  %v1269 = vld [vmem:[%s1 + $0x1108] sm:$0xf]
  %v1270 = vld [vmem:[%s1 + $0x110c] sm:$0xf]
  %v1271 = vld [vmem:[%s1 + $0x1110] sm:$0xf]
  %v1272 = vld [vmem:[%s1 + $0x1114] sm:$0xf]
  %v1273 = vld [vmem:[%s1 + $0x1118] sm:$0xf]
  %v1274 = vld [vmem:[%s1 + $0x111c] sm:$0xf]
  %v1275 = vld [vmem:[%s1 + $0x1120] sm:$0xf]
  %v1276 = vld [vmem:[%s1 + $0x1124] sm:$0xf]
  %v1277 = vld [vmem:[%s1 + $0x1128] sm:$0xf]
  %v1278 = vld [vmem:[%s1 + $0x112c] sm:$0xf]
  %v1279 = vld [vmem:[%s1 + $0x1130] sm:$0xf]
  %v1280 = vld [vmem:[%s1 + $0x1134] sm:$0xf]
  %v1281 = vld [vmem:[%s1 + $0x1138] sm:$0xf]
  %v1282 = vld [vmem:[%s1 + $0x113c] sm:$0xf]
  %v1283 = vld [vmem:[%s1 + $0x1140] sm:$0xf]
  %v1284 = vld [vmem:[%s1 + $0x1144] sm:$0xf]
  %v1285 = vld [vmem:[%s1 + $0x1148] sm:$0xf]
  %v1286 = vld [vmem:[%s1 + $0x114c] sm:$0xf]
  %v1287 = vld [vmem:[%s1 + $0x1150] sm:$0xf]
  %v1288 = vld [vmem:[%s1 + $0x1154] sm:$0xf]
  %v1289 = vld [vmem:[%s1 + $0x1158] sm:$0xf]
  %v1290 = vld [vmem:[%s1 + $0x115c] sm:$0xf]
  %v1291 = vld [vmem:[%s1 + $0x1160] sm:$0xf]
  %v1292 = vld [vmem:[%s1 + $0x1164] sm:$0xf]
  %v1293 = vld [vmem:[%s1 + $0x1168] sm:$0xf]
  %v1294 = vld [vmem:[%s1 + $0x116c] sm:$0xf]
  %v1295 = vld [vmem:[%s1 + $0x1170] sm:$0xf]
  %v1296 = vld [vmem:[%s1 + $0x1174] sm:$0xf]
  %v1297 = vld [vmem:[%s1 + $0x1178] sm:$0xf]
  %v1298 = vld [vmem:[%s1 + $0x117c] sm:$0xf]
  %v1299 = vld [vmem:[%s1 + $0x1180] sm:$0xf]
  %v1300 = vld [vmem:[%s1 + $0x1184] sm:$0xf]
  %v1301 = vld [vmem:[%s1 + $0x1188] sm:$0xf]
  %v1302 = vld [vmem:[%s1 + $0x118c] sm:$0xf]
  %v1303 = vld [vmem:[%s1 + $0x1190] sm:$0xf]
  %v1304 = vld [vmem:[%s1 + $0x1194] sm:$0xf]
  %v1305 = vld [vmem:[%s1 + $0x1198] sm:$0xf]
  %v1306 = vld [vmem:[%s1 + $0x119c] sm:$0xf]
  %v1307 = vld [vmem:[%s1 + $0x11a0] sm:$0xf]
  %v1308 = vld [vmem:[%s1 + $0x11a4] sm:$0xf]
  %v1309 = vld [vmem:[%s1 + $0x11a8] sm:$0xf]
  %v1310 = vld [vmem:[%s1 + $0x11ac] sm:$0xf]
  %v1311 = vld [vmem:[%s1 + $0x11b0] sm:$0xf]
  %v1312 = vld [vmem:[%s1 + $0x11b4] sm:$0xf]
  %v1313 = vld [vmem:[%s1 + $0x11b8] sm:$0xf]
  %v1314 = vld [vmem:[%s1 + $0x11bc] sm:$0xf]
  %v1315 = vld [vmem:[%s1 + $0x11c0] sm:$0xf]
  %v1316 = vld [vmem:[%s1 + $0x11c4] sm:$0xf]
  %v1317 = vld [vmem:[%s1 + $0x11c8] sm:$0xf]
  %v1318 = vld [vmem:[%s1 + $0x11cc] sm:$0xf]
  %v1319 = vld [vmem:[%s1 + $0x11d0] sm:$0xf]
  %v1320 = vld [vmem:[%s1 + $0x11d4] sm:$0xf]
  %v1321 = vld [vmem:[%s1 + $0x11d8] sm:$0xf]
  %v1322 = vld [vmem:[%s1 + $0x11dc] sm:$0xf]
  %v1323 = vld [vmem:[%s1 + $0x11e0] sm:$0xf]
  %v1324 = vld [vmem:[%s1 + $0x11e4] sm:$0xf]
  %v1325 = vld [vmem:[%s1 + $0x11e8] sm:$0xf]
  %v1326 = vld [vmem:[%s1 + $0x11ec] sm:$0xf]
  %v1327 = vld [vmem:[%s1 + $0x11f0] sm:$0xf]
  %v1328 = vld [vmem:[%s1 + $0x11f4] sm:$0xf]
  %v1329 = vld [vmem:[%s1 + $0x11f8] sm:$0xf]
  %v1330 = vld [vmem:[%s1 + $0x11fc] sm:$0xf]
  %v1331 = vld [vmem:[%s1 + $0x1200] sm:$0xf]
  %v1332 = vld [vmem:[%s1 + $0x1204] sm:$0xf]
  %v1333 = vld [vmem:[%s1 + $0x1208] sm:$0xf]
  %v1334 = vld [vmem:[%s1 + $0x120c] sm:$0xf]
  %v1335 = vld [vmem:[%s1 + $0x1210] sm:$0xf]
  %v1336 = vld [vmem:[%s1 + $0x1214] sm:$0xf]
  %v1337 = vld [vmem:[%s1 + $0x1218] sm:$0xf]
  %v1338 = vld [vmem:[%s1 + $0x121c] sm:$0xf]
  %v1339 = vld [vmem:[%s1 + $0x1220] sm:$0xf]
  %v1340 = vld [vmem:[%s1 + $0x1224] sm:$0xf]
  %v1341 = vld [vmem:[%s1 + $0x1228] sm:$0xf]
  %v1342 = vld [vmem:[%s1 + $0x122c] sm:$0xf]
  %v1343 = vld [vmem:[%s1 + $0x1230] sm:$0xf]
  %v1344 = vld [vmem:[%s1 + $0x1234] sm:$0xf]
  %v1345 = vld [vmem:[%s1 + $0x1238] sm:$0xf]
  %v1346 = vld [vmem:[%s1 + $0x123c] sm:$0xf]
  %v1347 = vld [vmem:[%s1 + $0x1240] sm:$0xf]
  %v1348 = vld [vmem:[%s1 + $0x1244] sm:$0xf]
  %v1349 = vld [vmem:[%s1 + $0x1248] sm:$0xf]
  %v1350 = vld [vmem:[%s1 + $0x124c] sm:$0xf]
  %v1351 = vld [vmem:[%s1 + $0x1250] sm:$0xf]
  %v1352 = vld [vmem:[%s1 + $0x1254] sm:$0xf]
  %v1353 = vld [vmem:[%s1 + $0x1258] sm:$0xf]
  %v1354 = vld [vmem:[%s1 + $0x125c] sm:$0xf]
  %v1355 = vld [vmem:[%s1 + $0x1260] sm:$0xf]
  %v1356 = vld [vmem:[%s1 + $0x1264] sm:$0xf]
  %v1357 = vld [vmem:[%s1 + $0x1268] sm:$0xf]
  %v1358 = vld [vmem:[%s1 + $0x126c] sm:$0xf]
  %v1359 = vld [vmem:[%s1 + $0x1270] sm:$0xf]
  %v1360 = vld [vmem:[%s1 + $0x1274] sm:$0xf]
  %v1361 = vld [vmem:[%s1 + $0x1278] sm:$0xf]
  %v1362 = vld [vmem:[%s1 + $0x127c] sm:$0xf]
  %v1363 = vld [vmem:[%s1 + $0x1280] sm:$0xf]
  %v1364 = vld [vmem:[%s1 + $0x1284] sm:$0xf]
  %v1365 = vld [vmem:[%s1 + $0x1288] sm:$0xf]
  %v1366 = vld [vmem:[%s1 + $0x128c] sm:$0xf]
  %v1367 = vld [vmem:[%s1 + $0x1290] sm:$0xf]
  %v1368 = vld [vmem:[%s1 + $0x1294] sm:$0xf]
  %v1369 = vld [vmem:[%s1 + $0x1298] sm:$0xf]
  %v1370 = vld [vmem:[%s1 + $0x129c] sm:$0xf]
  %v1371 = vld [vmem:[%s1 + $0x12a0] sm:$0xf]
  %v1372 = vld [vmem:[%s1 + $0x12a4] sm:$0xf]
  %v1373 = vld [vmem:[%s1 + $0x12a8] sm:$0xf]
  %v1374 = vld [vmem:[%s1 + $0x12ac] sm:$0xf]
  %v1375 = vld [vmem:[%s1 + $0x12b0] sm:$0xf]
  %v1376 = vld [vmem:[%s1 + $0x12b4] sm:$0xf]
  %v1377 = vld [vmem:[%s1 + $0x12b8] sm:$0xf]
  %v1378 = vld [vmem:[%s1 + $0x12bc] sm:$0xf]
  %v1379 = vld [vmem:[%s1 + $0x12c0] sm:$0xf]
  %v1380 = vld [vmem:[%s1 + $0x12c4] sm:$0xf]
  %v1381 = vld [vmem:[%s1 + $0x12c8] sm:$0xf]
  %v1382 = vld [vmem:[%s1 + $0x12cc] sm:$0xf]
  %v1383 = vld [vmem:[%s1 + $0x12d0] sm:$0xf]
  %v1384 = vld [vmem:[%s1 + $0x12d4] sm:$0xf]
  %v1385 = vld [vmem:[%s1 + $0x12d8] sm:$0xf]
  %v1386 = vld [vmem:[%s1 + $0x12dc] sm:$0xf]
  %v1387 = vld [vmem:[%s1 + $0x12e0] sm:$0xf]
  %v1388 = vld [vmem:[%s1 + $0x12e4] sm:$0xf]
  %v1389 = vld [vmem:[%s1 + $0x12e8] sm:$0xf]
  %v1390 = vld [vmem:[%s1 + $0x12ec] sm:$0xf]
  %v1391 = vld [vmem:[%s1 + $0x12f0] sm:$0xf]
  %v1392 = vld [vmem:[%s1 + $0x12f4] sm:$0xf]
  %v1393 = vld [vmem:[%s1 + $0x12f8] sm:$0xf]
  %v1394 = vld [vmem:[%s1 + $0x12fc] sm:$0xf]
  %v1395 = vld [vmem:[%s1 + $0x1300] sm:$0xf]
  %v1396 = vld [vmem:[%s1 + $0x1304] sm:$0xf]
  %v1397 = vld [vmem:[%s1 + $0x1308] sm:$0xf]
  %v1398 = vld [vmem:[%s1 + $0x130c] sm:$0xf]
  %v1399 = vld [vmem:[%s1 + $0x1310] sm:$0xf]
  %v1400 = vld [vmem:[%s1 + $0x1314] sm:$0xf]
  %v1401 = vld [vmem:[%s1 + $0x1318] sm:$0xf]
  %v1402 = vld [vmem:[%s1 + $0x131c] sm:$0xf]
  %v1403 = vld [vmem:[%s1 + $0x1320] sm:$0xf]
  %v1404 = vld [vmem:[%s1 + $0x1324] sm:$0xf]
  %v1405 = vld [vmem:[%s1 + $0x1328] sm:$0xf]
  %v1406 = vld [vmem:[%s1 + $0x132c] sm:$0xf]
  %v1407 = vld [vmem:[%s1 + $0x1330] sm:$0xf]
  %v1408 = vld [vmem:[%s1 + $0x1334] sm:$0xf]
  %v1409 = vld [vmem:[%s1 + $0x1338] sm:$0xf]
  %v1410 = vld [vmem:[%s1 + $0x133c] sm:$0xf]
  %v1411 = vld [vmem:[%s1 + $0x1340] sm:$0xf]
  %v1412 = vld [vmem:[%s1 + $0x1344] sm:$0xf]
  %v1413 = vld [vmem:[%s1 + $0x1348] sm:$0xf]
  %v1414 = vld [vmem:[%s1 + $0x134c] sm:$0xf]
  %v1415 = vld [vmem:[%s1 + $0x1350] sm:$0xf]
  %v1416 = vld [vmem:[%s1 + $0x1354] sm:$0xf]
  %v1417 = vld [vmem:[%s1 + $0x1358] sm:$0xf]
  %v1418 = vld [vmem:[%s1 + $0x135c] sm:$0xf]
  %v1419 = vld [vmem:[%s1 + $0x1360] sm:$0xf]
  %v1420 = vld [vmem:[%s1 + $0x1364] sm:$0xf]
  %v1421 = vld [vmem:[%s1 + $0x1368] sm:$0xf]
  %v1422 = vld [vmem:[%s1 + $0x136c] sm:$0xf]
  %v1423 = vld [vmem:[%s1 + $0x1370] sm:$0xf]
  %v1424 = vld [vmem:[%s1 + $0x1374] sm:$0xf]
  %v1425 = vld [vmem:[%s1 + $0x1378] sm:$0xf]
  %v1426 = vld [vmem:[%s1 + $0x137c] sm:$0xf]
  %v1427 = vld [vmem:[%s1 + $0x1380] sm:$0xf]
  %v1428 = vld [vmem:[%s1 + $0x1384] sm:$0xf]
  %v1429 = vld [vmem:[%s1 + $0x1388] sm:$0xf]
  %v1430 = vld [vmem:[%s1 + $0x138c] sm:$0xf]
  %v1431 = vld [vmem:[%s1 + $0x1390] sm:$0xf]
  %v1432 = vld [vmem:[%s1 + $0x1394] sm:$0xf]
  %v1433 = vld [vmem:[%s1 + $0x1398] sm:$0xf]
  %v1434 = vld [vmem:[%s1 + $0x139c] sm:$0xf]
  %v1435 = vld [vmem:[%s1 + $0x13a0] sm:$0xf]
  %v1436 = vld [vmem:[%s1 + $0x13a4] sm:$0xf]
  %v1437 = vld [vmem:[%s1 + $0x13a8] sm:$0xf]
  %v1438 = vld [vmem:[%s1 + $0x13ac] sm:$0xf]
  %v1439 = vld [vmem:[%s1 + $0x13b0] sm:$0xf]
  %v1440 = vld [vmem:[%s1 + $0x13b4] sm:$0xf]
  %v1441 = vld [vmem:[%s1 + $0x13b8] sm:$0xf]
  %v1442 = vld [vmem:[%s1 + $0x13bc] sm:$0xf]
  %v1443 = vld [vmem:[%s1 + $0x13c0] sm:$0xf]
  %v1444 = vld [vmem:[%s1 + $0x13c4] sm:$0xf]
  %v1445 = vld [vmem:[%s1 + $0x13c8] sm:$0xf]
  %v1446 = vld [vmem:[%s1 + $0x13cc] sm:$0xf]
  %v1447 = vld [vmem:[%s1 + $0x13d0] sm:$0xf]
  %v1448 = vld [vmem:[%s1 + $0x13d4] sm:$0xf]
  %v1449 = vld [vmem:[%s1 + $0x13d8] sm:$0xf]
  %v1450 = vld [vmem:[%s1 + $0x13dc] sm:$0xf]
  %v1451 = vld [vmem:[%s1 + $0x13e0] sm:$0xf]
  %v1452 = vld [vmem:[%s1 + $0x13e4] sm:$0xf]
  %v1453 = vld [vmem:[%s1 + $0x13e8] sm:$0xf]
  %v1454 = vld [vmem:[%s1 + $0x13ec] sm:$0xf]
  %v1455 = vld [vmem:[%s1 + $0x13f0] sm:$0xf]
  %v1456 = vld [vmem:[%s1 + $0x13f4] sm:$0xf]
  %v1457 = vld [vmem:[%s1 + $0x13f8] sm:$0xf]
  %v1458 = vld [vmem:[%s1 + $0x13fc] sm:$0xf]
  %v1459 = vld [vmem:[%s1 + $0x1400] sm:$0xf]
  %v1460 = vld [vmem:[%s1 + $0x1404] sm:$0xf]
  %v1461 = vld [vmem:[%s1 + $0x1408] sm:$0xf]
  %v1462 = vld [vmem:[%s1 + $0x140c] sm:$0xf]
  %v1463 = vld [vmem:[%s1 + $0x1410] sm:$0xf]
  %v1464 = vld [vmem:[%s1 + $0x1414] sm:$0xf]
  %v1465 = vld [vmem:[%s1 + $0x1418] sm:$0xf]
  %v1466 = vld [vmem:[%s1 + $0x141c] sm:$0xf]
  %v1467 = vld [vmem:[%s1 + $0x1420] sm:$0xf]
  %v1468 = vld [vmem:[%s1 + $0x1424] sm:$0xf]
  %v1469 = vld [vmem:[%s1 + $0x1428] sm:$0xf]
  %v1470 = vld [vmem:[%s1 + $0x142c] sm:$0xf]
  %v1471 = vld [vmem:[%s1 + $0x1430] sm:$0xf]
  %v1472 = vld [vmem:[%s1 + $0x1434] sm:$0xf]
  %v1473 = vld [vmem:[%s1 + $0x1438] sm:$0xf]
  %v1474 = vld [vmem:[%s1 + $0x143c] sm:$0xf]
  %v1475 = vld [vmem:[%s1 + $0x1440] sm:$0xf]
  %v1476 = vld [vmem:[%s1 + $0x1444] sm:$0xf]
  %v1477 = vld [vmem:[%s2] sm:$0x1]
  %v1479 = vperm.slane %v1477, 0
  %v2779 = vunpack.c.l.b16 %v179
  %v2780 = vunpack.c.l.b16 %v180
  %v2781 = vunpack.c.l.b16 %v181
  %v2782 = vunpack.c.l.b16 %v182
  %v2783 = vunpack.c.l.b16 %v183
  %v2784 = vunpack.c.l.b16 %v184
  %v2785 = vunpack.c.l.b16 %v185
  %v2786 = vunpack.c.l.b16 %v186
  %v2787 = vunpack.c.l.b16 %v187
  %v2788 = vunpack.c.l.b16 %v188
  %v2789 = vunpack.c.l.b16 %v189
  %v2790 = vunpack.c.l.b16 %v190
  %v2791 = vunpack.c.l.b16 %v191
  %v2792 = vunpack.c.l.b16 %v192
  %v2793 = vunpack.c.l.b16 %v193
  %v2794 = vunpack.c.l.b16 %v194
  %v2795 = vunpack.c.l.b16 %v195
  %v2796 = vunpack.c.l.b16 %v196
  %v2797 = vunpack.c.l.b16 %v197
  %v2798 = vunpack.c.l.b16 %v198
  %v2799 = vunpack.c.l.b16 %v199
  %v2800 = vunpack.c.l.b16 %v200
  %v2801 = vunpack.c.l.b16 %v201
  %v2802 = vunpack.c.l.b16 %v202
  %v2803 = vunpack.c.l.b16 %v203
  %v2804 = vunpack.c.l.b16 %v204
  %v2805 = vunpack.c.l.b16 %v205
  %v2806 = vunpack.c.l.b16 %v206
  %v2807 = vunpack.c.l.b16 %v207
  %v2808 = vunpack.c.l.b16 %v208
  %v2809 = vunpack.c.l.b16 %v209
  %v2810 = vunpack.c.l.b16 %v210
  %v2811 = vunpack.c.l.b16 %v211
  %v2812 = vunpack.c.l.b16 %v212
  %v2813 = vunpack.c.l.b16 %v213
  %v2814 = vunpack.c.l.b16 %v214
  %v2815 = vunpack.c.l.b16 %v215
  %v2816 = vunpack.c.l.b16 %v216
  %v2817 = vunpack.c.l.b16 %v217
  %v2818 = vunpack.c.l.b16 %v218
  %v2819 = vunpack.c.l.b16 %v219
  %v2820 = vunpack.c.l.b16 %v220
  %v2821 = vunpack.c.l.b16 %v221
  %v2822 = vunpack.c.l.b16 %v222
  %v2823 = vunpack.c.l.b16 %v223
  %v2824 = vunpack.c.l.b16 %v224
  %v2825 = vunpack.c.l.b16 %v225
  %v2826 = vunpack.c.l.b16 %v226
  %v2827 = vunpack.c.l.b16 %v227
  %v2828 = vunpack.c.l.b16 %v228
  %v2829 = vunpack.c.l.b16 %v229
  %v2830 = vunpack.c.l.b16 %v230
  %v2831 = vunpack.c.l.b16 %v231
  %v2832 = vunpack.c.l.b16 %v232
  %v2833 = vunpack.c.l.b16 %v233
  %v2834 = vunpack.c.l.b16 %v234
  %v2835 = vunpack.c.l.b16 %v235
  %v2836 = vunpack.c.l.b16 %v236
  %v2837 = vunpack.c.l.b16 %v237
  %v2838 = vunpack.c.l.b16 %v238
  %v2839 = vunpack.c.l.b16 %v239
  %v2840 = vunpack.c.l.b16 %v240
  %v2841 = vunpack.c.l.b16 %v241
  %v2842 = vunpack.c.l.b16 %v242
  %v2843 = vunpack.c.l.b16 %v243
  %v2844 = vunpack.c.l.b16 %v244
  %v2845 = vunpack.c.l.b16 %v245
  %v2846 = vunpack.c.l.b16 %v246
  %v2847 = vunpack.c.l.b16 %v247
  %v2848 = vunpack.c.l.b16 %v248
  %v2849 = vunpack.c.l.b16 %v249
  %v2850 = vunpack.c.l.b16 %v250
  %v2851 = vunpack.c.l.b16 %v251
  %v2852 = vunpack.c.l.b16 %v252
  %v2853 = vunpack.c.l.b16 %v253
  %v2854 = vunpack.c.l.b16 %v254
  %v2855 = vunpack.c.l.b16 %v255
  %v2856 = vunpack.c.l.b16 %v256
  %v2857 = vunpack.c.l.b16 %v257
  %v2858 = vunpack.c.l.b16 %v258
  %v2859 = vunpack.c.l.b16 %v259
  %v2860 = vunpack.c.l.b16 %v260
  %v2861 = vunpack.c.l.b16 %v261
  %v2862 = vunpack.c.l.b16 %v262
  %v2863 = vunpack.c.l.b16 %v263
  %v2864 = vunpack.c.l.b16 %v264
  %v2865 = vunpack.c.l.b16 %v265
  %v2866 = vunpack.c.l.b16 %v266
  %v2867 = vunpack.c.l.b16 %v267
  %v2868 = vunpack.c.l.b16 %v268
  %v2869 = vunpack.c.l.b16 %v269
  %v2870 = vunpack.c.l.b16 %v270
  %v2871 = vunpack.c.l.b16 %v271
  %v2872 = vunpack.c.l.b16 %v272
  %v2873 = vunpack.c.l.b16 %v273
  %v2874 = vunpack.c.l.b16 %v274
  %v2875 = vunpack.c.l.b16 %v275
  %v2876 = vunpack.c.l.b16 %v276
  %v2877 = vunpack.c.l.b16 %v277
  %v2878 = vunpack.c.l.b16 %v278
  %v2879 = vunpack.c.l.b16 %v279
  %v2880 = vunpack.c.l.b16 %v280
  %v2881 = vunpack.c.l.b16 %v281
  %v2882 = vunpack.c.l.b16 %v282
  %v2883 = vunpack.c.l.b16 %v283
  %v2884 = vunpack.c.l.b16 %v284
  %v2885 = vunpack.c.l.b16 %v285
  %v2886 = vunpack.c.l.b16 %v286
  %v2887 = vunpack.c.l.b16 %v287
  %v2888 = vunpack.c.l.b16 %v288
  %v2889 = vunpack.c.l.b16 %v289
  %v2890 = vunpack.c.l.b16 %v290
  %v2891 = vunpack.c.l.b16 %v291
  %v2892 = vunpack.c.l.b16 %v292
  %v2893 = vunpack.c.l.b16 %v293
  %v2894 = vunpack.c.l.b16 %v294
  %v2895 = vunpack.c.l.b16 %v295
  %v2896 = vunpack.c.l.b16 %v296
  %v2897 = vunpack.c.l.b16 %v297
  %v2898 = vunpack.c.l.b16 %v298
  %v2899 = vunpack.c.l.b16 %v299
  %v2900 = vunpack.c.l.b16 %v300
  %v2901 = vunpack.c.l.b16 %v301
  %v2902 = vunpack.c.l.b16 %v302
  %v2903 = vunpack.c.l.b16 %v303
  %v2904 = vunpack.c.l.b16 %v304
  %v2905 = vunpack.c.l.b16 %v305
  %v2906 = vunpack.c.l.b16 %v306
  %v2907 = vunpack.c.l.b16 %v307
  %v2908 = vunpack.c.l.b16 %v308
  %v2909 = vunpack.c.l.b16 %v309
  %v2910 = vunpack.c.l.b16 %v310
  %v2911 = vunpack.c.l.b16 %v311
  %v2912 = vunpack.c.l.b16 %v312
  %v2913 = vunpack.c.l.b16 %v313
  %v2914 = vunpack.c.l.b16 %v314
  %v2915 = vunpack.c.l.b16 %v315
  %v2916 = vunpack.c.l.b16 %v316
  %v2917 = vunpack.c.l.b16 %v317
  %v2918 = vunpack.c.l.b16 %v318
  %v2919 = vunpack.c.l.b16 %v319
  %v2920 = vunpack.c.l.b16 %v320
  %v2921 = vunpack.c.l.b16 %v321
  %v2922 = vunpack.c.l.b16 %v322
  %v2923 = vunpack.c.l.b16 %v323
  %v2924 = vunpack.c.l.b16 %v324
  %v2925 = vunpack.c.l.b16 %v325
  %v2926 = vunpack.c.l.b16 %v326
  %v2927 = vunpack.c.l.b16 %v327
  %v2928 = vunpack.c.l.b16 %v328
  %v2929 = vunpack.c.l.b16 %v329
  %v2930 = vunpack.c.l.b16 %v330
  %v2931 = vunpack.c.l.b16 %v331
  %v2932 = vunpack.c.l.b16 %v332
  %v2933 = vunpack.c.l.b16 %v333
  %v2934 = vunpack.c.l.b16 %v334
  %v2935 = vunpack.c.l.b16 %v335
  %v2936 = vunpack.c.l.b16 %v336
  %v2937 = vunpack.c.l.b16 %v337
  %v2938 = vunpack.c.l.b16 %v338
  %v2939 = vunpack.c.l.b16 %v339
  %v2940 = vunpack.c.l.b16 %v340
  %v2941 = vunpack.c.l.b16 %v341
  %v2942 = vunpack.c.l.b16 %v342
  %v2943 = vunpack.c.l.b16 %v343
  %v2944 = vunpack.c.l.b16 %v344
  %v2945 = vunpack.c.l.b16 %v345
  %v2946 = vunpack.c.l.b16 %v346
  %v2947 = vunpack.c.l.b16 %v347
  %v2948 = vunpack.c.l.b16 %v348
  %v2949 = vunpack.c.l.b16 %v349
  %v2950 = vunpack.c.l.b16 %v350
  %v2951 = vunpack.c.l.b16 %v351
  %v2952 = vunpack.c.l.b16 %v352
  %v2953 = vunpack.c.l.b16 %v353
  %v2954 = vunpack.c.l.b16 %v354
  %v2955 = vunpack.c.l.b16 %v355
  %v2956 = vunpack.c.l.b16 %v356
  %v2957 = vunpack.c.l.b16 %v357
  %v2958 = vunpack.c.l.b16 %v358
  %v2959 = vunpack.c.l.b16 %v359
  %v2960 = vunpack.c.l.b16 %v360
  %v2961 = vunpack.c.l.b16 %v361
  %v2962 = vunpack.c.l.b16 %v362
  %v2963 = vunpack.c.l.b16 %v363
  %v2964 = vunpack.c.l.b16 %v364
  %v2965 = vunpack.c.l.b16 %v365
  %v2966 = vunpack.c.l.b16 %v366
  %v2967 = vunpack.c.l.b16 %v367
  %v2968 = vunpack.c.l.b16 %v368
  %v2969 = vunpack.c.l.b16 %v369
  %v2970 = vunpack.c.l.b16 %v370
  %v2971 = vunpack.c.l.b16 %v371
  %v2972 = vunpack.c.l.b16 %v372
  %v2973 = vunpack.c.l.b16 %v373
  %v2974 = vunpack.c.l.b16 %v374
  %v2975 = vunpack.c.l.b16 %v375
  %v2976 = vunpack.c.l.b16 %v376
  %v2977 = vunpack.c.l.b16 %v377
  %v2978 = vunpack.c.l.b16 %v378
  %v2979 = vunpack.c.l.b16 %v379
  %v2980 = vunpack.c.l.b16 %v380
  %v2981 = vunpack.c.l.b16 %v381
  %v2982 = vunpack.c.l.b16 %v382
  %v2983 = vunpack.c.l.b16 %v383
  %v2984 = vunpack.c.l.b16 %v384
  %v2985 = vunpack.c.l.b16 %v385
  %v2986 = vunpack.c.l.b16 %v386
  %v2987 = vunpack.c.l.b16 %v387
  %v2988 = vunpack.c.l.b16 %v388
  %v2989 = vunpack.c.l.b16 %v389
  %v2990 = vunpack.c.l.b16 %v390
  %v2991 = vunpack.c.l.b16 %v391
  %v2992 = vunpack.c.l.b16 %v392
  %v2993 = vunpack.c.l.b16 %v393
  %v2994 = vunpack.c.l.b16 %v394
  %v2995 = vunpack.c.l.b16 %v395
  %v2996 = vunpack.c.l.b16 %v396
  %v2997 = vunpack.c.l.b16 %v397
  %v2998 = vunpack.c.l.b16 %v398
  %v2999 = vunpack.c.l.b16 %v399
  %v3000 = vunpack.c.l.b16 %v400
  %v3001 = vunpack.c.l.b16 %v401
  %v3002 = vunpack.c.l.b16 %v402
  %v3003 = vunpack.c.l.b16 %v403
  %v3004 = vunpack.c.l.b16 %v404
  %v3005 = vunpack.c.l.b16 %v405
  %v3006 = vunpack.c.l.b16 %v406
  %v3007 = vunpack.c.l.b16 %v407
  %v3008 = vunpack.c.l.b16 %v408
  %v3009 = vunpack.c.l.b16 %v409
  %v3010 = vunpack.c.l.b16 %v410
  %v3011 = vunpack.c.l.b16 %v411
  %v3012 = vunpack.c.l.b16 %v412
  %v3013 = vunpack.c.l.b16 %v413
  %v3014 = vunpack.c.l.b16 %v414
  %v3015 = vunpack.c.l.b16 %v415
  %v3016 = vunpack.c.l.b16 %v416
  %v3017 = vunpack.c.l.b16 %v417
  %v3018 = vunpack.c.l.b16 %v418
  %v3019 = vunpack.c.l.b16 %v419
  %v3020 = vunpack.c.l.b16 %v420
  %v3021 = vunpack.c.l.b16 %v421
  %v3022 = vunpack.c.l.b16 %v422
  %v3023 = vunpack.c.l.b16 %v423
  %v3024 = vunpack.c.l.b16 %v424
  %v3025 = vunpack.c.l.b16 %v425
  %v3026 = vunpack.c.l.b16 %v426
  %v3027 = vunpack.c.l.b16 %v427
  %v3028 = vunpack.c.l.b16 %v428
  %v3029 = vunpack.c.l.b16 %v429
  %v3030 = vunpack.c.l.b16 %v430
  %v3031 = vunpack.c.l.b16 %v431
  %v3032 = vunpack.c.l.b16 %v432
  %v3033 = vunpack.c.l.b16 %v433
  %v3034 = vunpack.c.l.b16 %v434
  %v3035 = vunpack.c.l.b16 %v435
  %v3036 = vunpack.c.l.b16 %v436
  %v3037 = vunpack.c.l.b16 %v437
  %v3038 = vunpack.c.l.b16 %v438
  %v3039 = vunpack.c.l.b16 %v439
  %v3040 = vunpack.c.l.b16 %v440
  %v3041 = vunpack.c.l.b16 %v441
  %v3042 = vunpack.c.l.b16 %v442
  %v3043 = vunpack.c.l.b16 %v443
  %v3044 = vunpack.c.l.b16 %v444
  %v3045 = vunpack.c.l.b16 %v445
  %v3046 = vunpack.c.l.b16 %v446
  %v3047 = vunpack.c.l.b16 %v447
  %v3048 = vunpack.c.l.b16 %v448
  %v3049 = vunpack.c.l.b16 %v449
  %v3050 = vunpack.c.l.b16 %v450
  %v3051 = vunpack.c.l.b16 %v451
  %v3052 = vunpack.c.l.b16 %v452
  %v3053 = vunpack.c.l.b16 %v453
  %v3054 = vunpack.c.l.b16 %v454
  %v3055 = vunpack.c.l.b16 %v455
  %v3056 = vunpack.c.l.b16 %v456
  %v3057 = vunpack.c.l.b16 %v457
  %v3058 = vunpack.c.l.b16 %v458
  %v3059 = vunpack.c.l.b16 %v459
  %v3060 = vunpack.c.l.b16 %v460
  %v3061 = vunpack.c.l.b16 %v461
  %v3062 = vunpack.c.l.b16 %v462
  %v3063 = vunpack.c.l.b16 %v463
  %v3064 = vunpack.c.l.b16 %v464
  %v3065 = vunpack.c.l.b16 %v465
  %v3066 = vunpack.c.l.b16 %v466
  %v3067 = vunpack.c.l.b16 %v467
  %v3068 = vunpack.c.l.b16 %v468
  %v3069 = vunpack.c.l.b16 %v469
  %v3070 = vunpack.c.l.b16 %v470
  %v3071 = vunpack.c.l.b16 %v471
  %v3072 = vunpack.c.l.b16 %v472
  %v3073 = vunpack.c.l.b16 %v473
  %v3074 = vunpack.c.l.b16 %v474
  %v3075 = vunpack.c.l.b16 %v475
  %v3076 = vunpack.c.l.b16 %v476
  %v3077 = vunpack.c.l.b16 %v477
  %v3078 = vunpack.c.l.b16 %v478
  %v3079 = vunpack.c.l.b16 %v479
  %v3080 = vunpack.c.l.b16 %v480
  %v3081 = vunpack.c.l.b16 %v481
  %v3082 = vunpack.c.l.b16 %v482
  %v3083 = vunpack.c.l.b16 %v483
  %v3084 = vunpack.c.l.b16 %v484
  %v3085 = vunpack.c.l.b16 %v485
  %v3086 = vunpack.c.l.b16 %v486
  %v3087 = vunpack.c.l.b16 %v487
  %v3088 = vunpack.c.l.b16 %v488
  %v3089 = vunpack.c.l.b16 %v489
  %v3090 = vunpack.c.l.b16 %v490
  %v3091 = vunpack.c.l.b16 %v491
  %v3092 = vunpack.c.l.b16 %v492
  %v3093 = vunpack.c.l.b16 %v493
  %v3094 = vunpack.c.l.b16 %v494
  %v3095 = vunpack.c.l.b16 %v495
  %v3096 = vunpack.c.l.b16 %v496
  %v3097 = vunpack.c.l.b16 %v497
  %v3098 = vunpack.c.l.b16 %v498
  %v3099 = vunpack.c.l.b16 %v499
  %v3100 = vunpack.c.l.b16 %v500
  %v3101 = vunpack.c.l.b16 %v501
  %v3102 = vunpack.c.l.b16 %v502
  %v3103 = vunpack.c.l.b16 %v503
  %v3104 = vunpack.c.l.b16 %v504
  %v3105 = vunpack.c.l.b16 %v505
  %v3106 = vunpack.c.l.b16 %v506
  %v3107 = vunpack.c.l.b16 %v507
  %v3108 = vunpack.c.l.b16 %v508
  %v3109 = vunpack.c.l.b16 %v509
  %v3110 = vunpack.c.l.b16 %v510
  %v3111 = vunpack.c.l.b16 %v511
  %v3112 = vunpack.c.l.b16 %v512
  %v3113 = vunpack.c.l.b16 %v513
  %v3114 = vunpack.c.l.b16 %v514
  %v3115 = vunpack.c.l.b16 %v515
  %v3116 = vunpack.c.l.b16 %v516
  %v3117 = vunpack.c.l.b16 %v517
  %v3118 = vunpack.c.l.b16 %v518
  %v3119 = vunpack.c.l.b16 %v519
  %v3120 = vunpack.c.l.b16 %v520
  %v3121 = vunpack.c.l.b16 %v521
  %v3122 = vunpack.c.l.b16 %v522
  %v3123 = vunpack.c.l.b16 %v523
  %v3124 = vunpack.c.l.b16 %v524
  %v3125 = vunpack.c.l.b16 %v525
  %v3126 = vunpack.c.l.b16 %v526
  %v3127 = vunpack.c.l.b16 %v527
  %v3128 = vunpack.c.l.b16 %v528
  %v3129 = vunpack.c.l.b16 %v529
  %v3130 = vunpack.c.l.b16 %v530
  %v3131 = vunpack.c.l.b16 %v531
  %v3132 = vunpack.c.l.b16 %v532
  %v3133 = vunpack.c.l.b16 %v533
  %v3134 = vunpack.c.l.b16 %v534
  %v3135 = vunpack.c.l.b16 %v535
  %v3136 = vunpack.c.l.b16 %v536
  %v3137 = vunpack.c.l.b16 %v537
  %v3138 = vunpack.c.l.b16 %v538
  %v3139 = vunpack.c.l.b16 %v539
  %v3140 = vunpack.c.l.b16 %v540
  %v3141 = vunpack.c.l.b16 %v541
  %v3142 = vunpack.c.l.b16 %v542
  %v3143 = vunpack.c.l.b16 %v543
  %v3144 = vunpack.c.l.b16 %v544
  %v3145 = vunpack.c.l.b16 %v545
  %v3146 = vunpack.c.l.b16 %v546
  %v3147 = vunpack.c.l.b16 %v547
  %v3148 = vunpack.c.l.b16 %v548
  %v3149 = vunpack.c.l.b16 %v549
  %v3150 = vunpack.c.l.b16 %v550
  %v3151 = vunpack.c.l.b16 %v551
  %v3152 = vunpack.c.l.b16 %v552
  %v3153 = vunpack.c.l.b16 %v553
  %v3154 = vunpack.c.l.b16 %v554
  %v3155 = vunpack.c.l.b16 %v555
  %v3156 = vunpack.c.l.b16 %v556
  %v3157 = vunpack.c.l.b16 %v557
  %v3158 = vunpack.c.l.b16 %v558
  %v3159 = vunpack.c.l.b16 %v559
  %v3160 = vunpack.c.l.b16 %v560
  %v3161 = vunpack.c.l.b16 %v561
  %v3162 = vunpack.c.l.b16 %v562
  %v3163 = vunpack.c.l.b16 %v563
  %v3164 = vunpack.c.l.b16 %v564
  %v3165 = vunpack.c.l.b16 %v565
  %v3166 = vunpack.c.l.b16 %v566
  %v3167 = vunpack.c.l.b16 %v567
  %v3168 = vunpack.c.l.b16 %v568
  %v3169 = vunpack.c.l.b16 %v569
  %v3170 = vunpack.c.l.b16 %v570
  %v3171 = vunpack.c.l.b16 %v571
  %v3172 = vunpack.c.l.b16 %v572
  %v3173 = vunpack.c.l.b16 %v573
  %v3174 = vunpack.c.l.b16 %v574
  %v3175 = vunpack.c.l.b16 %v575
  %v3176 = vunpack.c.l.b16 %v576
  %v3177 = vunpack.c.l.b16 %v577
  %v3178 = vunpack.c.l.b16 %v578
  %v3179 = vunpack.c.l.b16 %v579
  %v3180 = vunpack.c.l.b16 %v580
  %v3181 = vunpack.c.l.b16 %v581
  %v3182 = vunpack.c.l.b16 %v582
  %v3183 = vunpack.c.l.b16 %v583
  %v3184 = vunpack.c.l.b16 %v584
  %v3185 = vunpack.c.l.b16 %v585
  %v3186 = vunpack.c.l.b16 %v586
  %v3187 = vunpack.c.l.b16 %v587
  %v3188 = vunpack.c.l.b16 %v588
  %v3189 = vunpack.c.l.b16 %v589
  %v3190 = vunpack.c.l.b16 %v590
  %v3191 = vunpack.c.l.b16 %v591
  %v3192 = vunpack.c.l.b16 %v592
  %v3193 = vunpack.c.l.b16 %v593
  %v3194 = vunpack.c.l.b16 %v594
  %v3195 = vunpack.c.l.b16 %v595
  %v3196 = vunpack.c.l.b16 %v596
  %v3197 = vunpack.c.l.b16 %v597
  %v3198 = vunpack.c.l.b16 %v598
  %v3199 = vunpack.c.l.b16 %v599
  %v3200 = vunpack.c.l.b16 %v600
  %v3201 = vunpack.c.l.b16 %v601
  %v3202 = vunpack.c.l.b16 %v602
  %v3203 = vunpack.c.l.b16 %v603
  %v3204 = vunpack.c.l.b16 %v604
  %v3205 = vunpack.c.l.b16 %v605
  %v3206 = vunpack.c.l.b16 %v606
  %v3207 = vunpack.c.l.b16 %v607
  %v3208 = vunpack.c.l.b16 %v608
  %v3209 = vunpack.c.l.b16 %v609
  %v3210 = vunpack.c.l.b16 %v610
  %v3211 = vunpack.c.l.b16 %v611
  %v3212 = vunpack.c.l.b16 %v612
  %v3213 = vunpack.c.l.b16 %v613
  %v3214 = vunpack.c.l.b16 %v614
  %v3215 = vunpack.c.l.b16 %v615
  %v3216 = vunpack.c.l.b16 %v616
  %v3217 = vunpack.c.l.b16 %v617
  %v3218 = vunpack.c.l.b16 %v618
  %v3219 = vunpack.c.l.b16 %v619
  %v3220 = vunpack.c.l.b16 %v620
  %v3221 = vunpack.c.l.b16 %v621
  %v3222 = vunpack.c.l.b16 %v622
  %v3223 = vunpack.c.l.b16 %v623
  %v3224 = vunpack.c.l.b16 %v624
  %v3225 = vunpack.c.l.b16 %v625
  %v3226 = vunpack.c.l.b16 %v626
  %v3227 = vunpack.c.l.b16 %v627
  %v3228 = vunpack.c.l.b16 %v628
  %v3229 = vunpack.c.l.b16 %v629
  %v3230 = vunpack.c.l.b16 %v630
  %v3231 = vunpack.c.l.b16 %v631
  %v3232 = vunpack.c.l.b16 %v632
  %v3233 = vunpack.c.l.b16 %v633
  %v3234 = vunpack.c.l.b16 %v634
  %v3235 = vunpack.c.l.b16 %v635
  %v3236 = vunpack.c.l.b16 %v636
  %v3237 = vunpack.c.l.b16 %v637
  %v3238 = vunpack.c.l.b16 %v638
  %v3239 = vunpack.c.l.b16 %v639
  %v3240 = vunpack.c.l.b16 %v640
  %v3241 = vunpack.c.l.b16 %v641
  %v3242 = vunpack.c.l.b16 %v642
  %v3243 = vunpack.c.l.b16 %v643
  %v3244 = vunpack.c.l.b16 %v644
  %v3245 = vunpack.c.l.b16 %v645
  %v3246 = vunpack.c.l.b16 %v646
  %v3247 = vunpack.c.l.b16 %v647
  %v3248 = vunpack.c.l.b16 %v648
  %v3249 = vunpack.c.l.b16 %v649
  %v3250 = vunpack.c.l.b16 %v650
  %v3251 = vunpack.c.l.b16 %v651
  %v3252 = vunpack.c.l.b16 %v652
  %v3253 = vunpack.c.l.b16 %v653
  %v3254 = vunpack.c.l.b16 %v654
  %v3255 = vunpack.c.l.b16 %v655
  %v3256 = vunpack.c.l.b16 %v656
  %v3257 = vunpack.c.l.b16 %v657
  %v3258 = vunpack.c.l.b16 %v658
  %v3259 = vunpack.c.l.b16 %v659
  %v3260 = vunpack.c.l.b16 %v660
  %v3261 = vunpack.c.l.b16 %v661
  %v3262 = vunpack.c.l.b16 %v662
  %v3263 = vunpack.c.l.b16 %v663
  %v3264 = vunpack.c.l.b16 %v664
  %v3265 = vunpack.c.l.b16 %v665
  %v3266 = vunpack.c.l.b16 %v666
  %v3267 = vunpack.c.l.b16 %v667
  %v3268 = vunpack.c.l.b16 %v668
  %v3269 = vunpack.c.l.b16 %v669
  %v3270 = vunpack.c.l.b16 %v670
  %v3271 = vunpack.c.l.b16 %v671
  %v3272 = vunpack.c.l.b16 %v672
  %v3273 = vunpack.c.l.b16 %v673
  %v3274 = vunpack.c.l.b16 %v674
  %v3275 = vunpack.c.l.b16 %v675
  %v3276 = vunpack.c.l.b16 %v676
  %v3277 = vunpack.c.l.b16 %v677
  %v3278 = vunpack.c.l.b16 %v678
  %v3279 = vunpack.c.l.b16 %v679
  %v3280 = vunpack.c.l.b16 %v680
  %v3281 = vunpack.c.l.b16 %v681
  %v3282 = vunpack.c.l.b16 %v682
  %v3283 = vunpack.c.l.b16 %v683
  %v3284 = vunpack.c.l.b16 %v684
  %v3285 = vunpack.c.l.b16 %v685
  %v3286 = vunpack.c.l.b16 %v686
  %v3287 = vunpack.c.l.b16 %v687
  %v3288 = vunpack.c.l.b16 %v688
  %v3289 = vunpack.c.l.b16 %v689
  %v3290 = vunpack.c.l.b16 %v690
  %v3291 = vunpack.c.l.b16 %v691
  %v3292 = vunpack.c.l.b16 %v692
  %v3293 = vunpack.c.l.b16 %v693
  %v3294 = vunpack.c.l.b16 %v694
  %v3295 = vunpack.c.l.b16 %v695
  %v3296 = vunpack.c.l.b16 %v696
  %v3297 = vunpack.c.l.b16 %v697
  %v3298 = vunpack.c.l.b16 %v698
  %v3299 = vunpack.c.l.b16 %v699
  %v3300 = vunpack.c.l.b16 %v700
  %v3301 = vunpack.c.l.b16 %v701
  %v3302 = vunpack.c.l.b16 %v702
  %v3303 = vunpack.c.l.b16 %v703
  %v3304 = vunpack.c.l.b16 %v704
  %v3305 = vunpack.c.l.b16 %v705
  %v3306 = vunpack.c.l.b16 %v706
  %v3307 = vunpack.c.l.b16 %v707
  %v3308 = vunpack.c.l.b16 %v708
  %v3309 = vunpack.c.l.b16 %v709
  %v3310 = vunpack.c.l.b16 %v710
  %v3311 = vunpack.c.l.b16 %v711
  %v3312 = vunpack.c.l.b16 %v712
  %v3313 = vunpack.c.l.b16 %v713
  %v3314 = vunpack.c.l.b16 %v714
  %v3315 = vunpack.c.l.b16 %v715
  %v3316 = vunpack.c.l.b16 %v716
  %v3317 = vunpack.c.l.b16 %v717
  %v3318 = vunpack.c.l.b16 %v718
  %v3319 = vunpack.c.l.b16 %v719
  %v3320 = vunpack.c.l.b16 %v720
  %v3321 = vunpack.c.l.b16 %v721
  %v3322 = vunpack.c.l.b16 %v722
  %v3323 = vunpack.c.l.b16 %v723
  %v3324 = vunpack.c.l.b16 %v724
  %v3325 = vunpack.c.l.b16 %v725
  %v3326 = vunpack.c.l.b16 %v726
  %v3327 = vunpack.c.l.b16 %v727
  %v3328 = vunpack.c.l.b16 %v728
  %v3329 = vunpack.c.l.b16 %v729
  %v3330 = vunpack.c.l.b16 %v730
  %v3331 = vunpack.c.l.b16 %v731
  %v3332 = vunpack.c.l.b16 %v732
  %v3333 = vunpack.c.l.b16 %v733
  %v3334 = vunpack.c.l.b16 %v734
  %v3335 = vunpack.c.l.b16 %v735
  %v3336 = vunpack.c.l.b16 %v736
  %v3337 = vunpack.c.l.b16 %v737
  %v3338 = vunpack.c.l.b16 %v738
  %v3339 = vunpack.c.l.b16 %v739
  %v3340 = vunpack.c.l.b16 %v740
  %v3341 = vunpack.c.l.b16 %v741
  %v3342 = vunpack.c.l.b16 %v742
  %v3343 = vunpack.c.l.b16 %v743
  %v3344 = vunpack.c.l.b16 %v744
  %v3345 = vunpack.c.l.b16 %v745
  %v3346 = vunpack.c.l.b16 %v746
  %v3347 = vunpack.c.l.b16 %v747
  %v3348 = vunpack.c.l.b16 %v748
  %v3349 = vunpack.c.l.b16 %v749
  %v3350 = vunpack.c.l.b16 %v750
  %v3351 = vunpack.c.l.b16 %v751
  %v3352 = vunpack.c.l.b16 %v752
  %v3353 = vunpack.c.l.b16 %v753
  %v3354 = vunpack.c.l.b16 %v754
  %v3355 = vunpack.c.l.b16 %v755
  %v3356 = vunpack.c.l.b16 %v756
  %v3357 = vunpack.c.l.b16 %v757
  %v3358 = vunpack.c.l.b16 %v758
  %v3359 = vunpack.c.l.b16 %v759
  %v3360 = vunpack.c.l.b16 %v760
  %v3361 = vunpack.c.l.b16 %v761
  %v3362 = vunpack.c.l.b16 %v762
  %v3363 = vunpack.c.l.b16 %v763
  %v3364 = vunpack.c.l.b16 %v764
  %v3365 = vunpack.c.l.b16 %v765
  %v3366 = vunpack.c.l.b16 %v766
  %v3367 = vunpack.c.l.b16 %v767
  %v3368 = vunpack.c.l.b16 %v768
  %v3369 = vunpack.c.l.b16 %v769
  %v3370 = vunpack.c.l.b16 %v770
  %v3371 = vunpack.c.l.b16 %v771
  %v3372 = vunpack.c.l.b16 %v772
  %v3373 = vunpack.c.l.b16 %v773
  %v3374 = vunpack.c.l.b16 %v774
  %v3375 = vunpack.c.l.b16 %v775
  %v3376 = vunpack.c.l.b16 %v776
  %v3377 = vunpack.c.l.b16 %v777
  %v3378 = vunpack.c.l.b16 %v778
  %v3379 = vunpack.c.l.b16 %v779
  %v3380 = vunpack.c.l.b16 %v780
  %v3381 = vunpack.c.l.b16 %v781
  %v3382 = vunpack.c.l.b16 %v782
  %v3383 = vunpack.c.l.b16 %v783
  %v3384 = vunpack.c.l.b16 %v784
  %v3385 = vunpack.c.l.b16 %v785
  %v3386 = vunpack.c.l.b16 %v786
  %v3387 = vunpack.c.l.b16 %v787
  %v3388 = vunpack.c.l.b16 %v788
  %v3389 = vunpack.c.l.b16 %v789
  %v3390 = vunpack.c.l.b16 %v790
  %v3391 = vunpack.c.l.b16 %v791
  %v3392 = vunpack.c.l.b16 %v792
  %v3393 = vunpack.c.l.b16 %v793
  %v3394 = vunpack.c.l.b16 %v794
  %v3395 = vunpack.c.l.b16 %v795
  %v3396 = vunpack.c.l.b16 %v796
  %v3397 = vunpack.c.l.b16 %v797
  %v3398 = vunpack.c.l.b16 %v798
  %v3399 = vunpack.c.l.b16 %v799
  %v3400 = vunpack.c.l.b16 %v800
  %v3401 = vunpack.c.l.b16 %v801
  %v3402 = vunpack.c.l.b16 %v802
  %v3403 = vunpack.c.l.b16 %v803
  %v3404 = vunpack.c.l.b16 %v804
  %v3405 = vunpack.c.l.b16 %v805
  %v3406 = vunpack.c.l.b16 %v806
  %v3407 = vunpack.c.l.b16 %v807
  %v3408 = vunpack.c.l.b16 %v808
  %v3409 = vunpack.c.l.b16 %v809
  %v3410 = vunpack.c.l.b16 %v810
  %v3411 = vunpack.c.l.b16 %v811
  %v3412 = vunpack.c.l.b16 %v812
  %v3413 = vunpack.c.l.b16 %v813
  %v3414 = vunpack.c.l.b16 %v814
  %v3415 = vunpack.c.l.b16 %v815
  %v3416 = vunpack.c.l.b16 %v816
  %v3417 = vunpack.c.l.b16 %v817
  %v3418 = vunpack.c.l.b16 %v818
  %v3419 = vunpack.c.l.b16 %v819
  %v3420 = vunpack.c.l.b16 %v820
  %v3421 = vunpack.c.l.b16 %v821
  %v3422 = vunpack.c.l.b16 %v822
  %v3423 = vunpack.c.l.b16 %v823
  %v3424 = vunpack.c.l.b16 %v824
  %v3425 = vunpack.c.l.b16 %v825
  %v3426 = vunpack.c.l.b16 %v826
  %v3427 = vunpack.c.l.b16 %v827
  %v3428 = vunpack.c.l.b16 %v828
  %v3429 = vunpack.c.l.b16 %v829
  %v3430 = vunpack.c.l.b16 %v830
  %v3431 = vunpack.c.l.b16 %v831
  %v3432 = vunpack.c.l.b16 %v832
  %v3433 = vunpack.c.l.b16 %v833
  %v3434 = vunpack.c.l.b16 %v834
  %v3435 = vunpack.c.l.b16 %v835
  %v3436 = vunpack.c.l.b16 %v836
  %v3437 = vunpack.c.l.b16 %v837
  %v3438 = vunpack.c.l.b16 %v838
  %v3439 = vunpack.c.l.b16 %v839
  %v3440 = vunpack.c.l.b16 %v840
  %v3441 = vunpack.c.l.b16 %v841
  %v3442 = vunpack.c.l.b16 %v842
  %v3443 = vunpack.c.l.b16 %v843
  %v3444 = vunpack.c.l.b16 %v844
  %v3445 = vunpack.c.l.b16 %v845
  %v3446 = vunpack.c.l.b16 %v846
  %v3447 = vunpack.c.l.b16 %v847
  %v3448 = vunpack.c.l.b16 %v848
  %v3449 = vunpack.c.l.b16 %v849
  %v3450 = vunpack.c.l.b16 %v850
  %v3451 = vunpack.c.l.b16 %v851
  %v3452 = vunpack.c.l.b16 %v852
  %v3453 = vunpack.c.l.b16 %v853
  %v3454 = vunpack.c.l.b16 %v854
  %v3455 = vunpack.c.l.b16 %v855
  %v3456 = vunpack.c.l.b16 %v856
  %v3457 = vunpack.c.l.b16 %v857
  %v3458 = vunpack.c.l.b16 %v858
  %v3459 = vunpack.c.l.b16 %v859
  %v3460 = vunpack.c.l.b16 %v860
  %v3461 = vunpack.c.l.b16 %v861
  %v3462 = vunpack.c.l.b16 %v862
  %v3463 = vunpack.c.l.b16 %v863
  %v3464 = vunpack.c.l.b16 %v864
  %v3465 = vunpack.c.l.b16 %v865
  %v3466 = vunpack.c.l.b16 %v866
  %v3467 = vunpack.c.l.b16 %v867
  %v3468 = vunpack.c.l.b16 %v868
  %v3469 = vunpack.c.l.b16 %v869
  %v3470 = vunpack.c.l.b16 %v870
  %v3471 = vunpack.c.l.b16 %v871
  %v3472 = vunpack.c.l.b16 %v872
  %v3473 = vunpack.c.l.b16 %v873
  %v3474 = vunpack.c.l.b16 %v874
  %v3475 = vunpack.c.l.b16 %v875
  %v3476 = vunpack.c.l.b16 %v876
  %v3477 = vunpack.c.l.b16 %v877
  %v3478 = vunpack.c.l.b16 %v878
  %v3479 = vunpack.c.l.b16 %v879
  %v3480 = vunpack.c.l.b16 %v880
  %v3481 = vunpack.c.l.b16 %v881
  %v3482 = vunpack.c.l.b16 %v882
  %v3483 = vunpack.c.l.b16 %v883
  %v3484 = vunpack.c.l.b16 %v884
  %v3485 = vunpack.c.l.b16 %v885
  %v3486 = vunpack.c.l.b16 %v886
  %v3487 = vunpack.c.l.b16 %v887
  %v3488 = vunpack.c.l.b16 %v888
  %v3489 = vunpack.c.l.b16 %v889
  %v3490 = vunpack.c.l.b16 %v890
  %v3491 = vunpack.c.l.b16 %v891
  %v3492 = vunpack.c.l.b16 %v892
  %v3493 = vunpack.c.l.b16 %v893
  %v3494 = vunpack.c.l.b16 %v894
  %v3495 = vunpack.c.l.b16 %v895
  %v3496 = vunpack.c.l.b16 %v896
  %v3497 = vunpack.c.l.b16 %v897
  %v3498 = vunpack.c.l.b16 %v898
  %v3499 = vunpack.c.l.b16 %v899
  %v3500 = vunpack.c.l.b16 %v900
  %v3501 = vunpack.c.l.b16 %v901
  %v3502 = vunpack.c.l.b16 %v902
  %v3503 = vunpack.c.l.b16 %v903
  %v3504 = vunpack.c.l.b16 %v904
  %v3505 = vunpack.c.l.b16 %v905
  %v3506 = vunpack.c.l.b16 %v906
  %v3507 = vunpack.c.l.b16 %v907
  %v3508 = vunpack.c.l.b16 %v908
  %v3509 = vunpack.c.l.b16 %v909
  %v3510 = vunpack.c.l.b16 %v910
  %v3511 = vunpack.c.l.b16 %v911
  %v3512 = vunpack.c.l.b16 %v912
  %v3513 = vunpack.c.l.b16 %v913
  %v3514 = vunpack.c.l.b16 %v914
  %v3515 = vunpack.c.l.b16 %v915
  %v3516 = vunpack.c.l.b16 %v916
  %v3517 = vunpack.c.l.b16 %v917
  %v3518 = vunpack.c.l.b16 %v918
  %v3519 = vunpack.c.l.b16 %v919
  %v3520 = vunpack.c.l.b16 %v920
  %v3521 = vunpack.c.l.b16 %v921
  %v3522 = vunpack.c.l.b16 %v922
  %v3523 = vunpack.c.l.b16 %v923
  %v3524 = vunpack.c.l.b16 %v924
  %v3525 = vunpack.c.l.b16 %v925
  %v3526 = vunpack.c.l.b16 %v926
  %v3527 = vunpack.c.l.b16 %v927
  %v3528 = vunpack.c.l.b16 %v928
  %v3529 = vunpack.c.l.b16 %v929
  %v3530 = vunpack.c.l.b16 %v930
  %v3531 = vunpack.c.l.b16 %v931
  %v3532 = vunpack.c.l.b16 %v932
  %v3533 = vunpack.c.l.b16 %v933
  %v3534 = vunpack.c.l.b16 %v934
  %v3535 = vunpack.c.l.b16 %v935
  %v3536 = vunpack.c.l.b16 %v936
  %v3537 = vunpack.c.l.b16 %v937
  %v3538 = vunpack.c.l.b16 %v938
  %v3539 = vunpack.c.l.b16 %v939
  %v3540 = vunpack.c.l.b16 %v940
  %v3541 = vunpack.c.l.b16 %v941
  %v3542 = vunpack.c.l.b16 %v942
  %v3543 = vunpack.c.l.b16 %v943
  %v3544 = vunpack.c.l.b16 %v944
  %v3545 = vunpack.c.l.b16 %v945
  %v3546 = vunpack.c.l.b16 %v946
  %v3547 = vunpack.c.l.b16 %v947
  %v3548 = vunpack.c.l.b16 %v948
  %v3549 = vunpack.c.l.b16 %v949
  %v3550 = vunpack.c.l.b16 %v950
  %v3551 = vunpack.c.l.b16 %v951
  %v3552 = vunpack.c.l.b16 %v952
  %v3553 = vunpack.c.l.b16 %v953
  %v3554 = vunpack.c.l.b16 %v954
  %v3555 = vunpack.c.l.b16 %v955
  %v3556 = vunpack.c.l.b16 %v956
  %v3557 = vunpack.c.l.b16 %v957
  %v3558 = vunpack.c.l.b16 %v958
  %v3559 = vunpack.c.l.b16 %v959
  %v3560 = vunpack.c.l.b16 %v960
  %v3561 = vunpack.c.l.b16 %v961
  %v3562 = vunpack.c.l.b16 %v962
  %v3563 = vunpack.c.l.b16 %v963
  %v3564 = vunpack.c.l.b16 %v964
  %v3565 = vunpack.c.l.b16 %v965
  %v3566 = vunpack.c.l.b16 %v966
  %v3567 = vunpack.c.l.b16 %v967
  %v3568 = vunpack.c.l.b16 %v968
  %v3569 = vunpack.c.l.b16 %v969
  %v3570 = vunpack.c.l.b16 %v970
  %v3571 = vunpack.c.l.b16 %v971
  %v3572 = vunpack.c.l.b16 %v972
  %v3573 = vunpack.c.l.b16 %v973
  %v3574 = vunpack.c.l.b16 %v974
  %v3575 = vunpack.c.l.b16 %v975
  %v3576 = vunpack.c.l.b16 %v976
  %v3577 = vunpack.c.l.b16 %v977
  %v3578 = vunpack.c.l.b16 %v978
  %v3579 = vunpack.c.l.b16 %v979
  %v3580 = vunpack.c.l.b16 %v980
  %v3581 = vunpack.c.l.b16 %v981
  %v3582 = vunpack.c.l.b16 %v982
  %v3583 = vunpack.c.l.b16 %v983
  %v3584 = vunpack.c.l.b16 %v984
  %v3585 = vunpack.c.l.b16 %v985
  %v3586 = vunpack.c.l.b16 %v986
  %v3587 = vunpack.c.l.b16 %v987
  %v3588 = vunpack.c.l.b16 %v988
  %v3589 = vunpack.c.l.b16 %v989
  %v3590 = vunpack.c.l.b16 %v990
  %v3591 = vunpack.c.l.b16 %v991
  %v3592 = vunpack.c.l.b16 %v992
  %v3593 = vunpack.c.l.b16 %v993
  %v3594 = vunpack.c.l.b16 %v994
  %v3595 = vunpack.c.l.b16 %v995
  %v3596 = vunpack.c.l.b16 %v996
  %v3597 = vunpack.c.l.b16 %v997
  %v3598 = vunpack.c.l.b16 %v998
  %v3599 = vunpack.c.l.b16 %v999
  %v3600 = vunpack.c.l.b16 %v1000
  %v3601 = vunpack.c.l.b16 %v1001
  %v3602 = vunpack.c.l.b16 %v1002
  %v3603 = vunpack.c.l.b16 %v1003
  %v3604 = vunpack.c.l.b16 %v1004
  %v3605 = vunpack.c.l.b16 %v1005
  %v3606 = vunpack.c.l.b16 %v1006
  %v3607 = vunpack.c.l.b16 %v1007
  %v3608 = vunpack.c.l.b16 %v1008
  %v3609 = vunpack.c.l.b16 %v1009
  %v3610 = vunpack.c.l.b16 %v1010
  %v3611 = vunpack.c.l.b16 %v1011
  %v3612 = vunpack.c.l.b16 %v1012
  %v3613 = vunpack.c.l.b16 %v1013
  %v3614 = vunpack.c.l.b16 %v1014
  %v3615 = vunpack.c.l.b16 %v1015
  %v3616 = vunpack.c.l.b16 %v1016
  %v3617 = vunpack.c.l.b16 %v1017
  %v3618 = vunpack.c.l.b16 %v1018
  %v3619 = vunpack.c.l.b16 %v1019
  %v3620 = vunpack.c.l.b16 %v1020
  %v3621 = vunpack.c.l.b16 %v1021
  %v3622 = vunpack.c.l.b16 %v1022
  %v3623 = vunpack.c.l.b16 %v1023
  %v3624 = vunpack.c.l.b16 %v1024
  %v3625 = vunpack.c.l.b16 %v1025
  %v3626 = vunpack.c.l.b16 %v1026
  %v3627 = vunpack.c.l.b16 %v1027
  %v3628 = vunpack.c.l.b16 %v1028
  %v3629 = vunpack.c.l.b16 %v1029
  %v3630 = vunpack.c.l.b16 %v1030
  %v3631 = vunpack.c.l.b16 %v1031
  %v3632 = vunpack.c.l.b16 %v1032
  %v3633 = vunpack.c.l.b16 %v1033
  %v3634 = vunpack.c.l.b16 %v1034
  %v3635 = vunpack.c.l.b16 %v1035
  %v3636 = vunpack.c.l.b16 %v1036
  %v3637 = vunpack.c.l.b16 %v1037
  %v3638 = vunpack.c.l.b16 %v1038
  %v3639 = vunpack.c.l.b16 %v1039
  %v3640 = vunpack.c.l.b16 %v1040
  %v3641 = vunpack.c.l.b16 %v1041
  %v3642 = vunpack.c.l.b16 %v1042
  %v3643 = vunpack.c.l.b16 %v1043
  %v3644 = vunpack.c.l.b16 %v1044
  %v3645 = vunpack.c.l.b16 %v1045
  %v3646 = vunpack.c.l.b16 %v1046
  %v3647 = vunpack.c.l.b16 %v1047
  %v3648 = vunpack.c.l.b16 %v1048
  %v3649 = vunpack.c.l.b16 %v1049
  %v3650 = vunpack.c.l.b16 %v1050
  %v3651 = vunpack.c.l.b16 %v1051
  %v3652 = vunpack.c.l.b16 %v1052
  %v3653 = vunpack.c.l.b16 %v1053
  %v3654 = vunpack.c.l.b16 %v1054
  %v3655 = vunpack.c.l.b16 %v1055
  %v3656 = vunpack.c.l.b16 %v1056
  %v3657 = vunpack.c.l.b16 %v1057
  %v3658 = vunpack.c.l.b16 %v1058
  %v3659 = vunpack.c.l.b16 %v1059
  %v3660 = vunpack.c.l.b16 %v1060
  %v3661 = vunpack.c.l.b16 %v1061
  %v3662 = vunpack.c.l.b16 %v1062
  %v3663 = vunpack.c.l.b16 %v1063
  %v3664 = vunpack.c.l.b16 %v1064
  %v3665 = vunpack.c.l.b16 %v1065
  %v3666 = vunpack.c.l.b16 %v1066
  %v3667 = vunpack.c.l.b16 %v1067
  %v3668 = vunpack.c.l.b16 %v1068
  %v3669 = vunpack.c.l.b16 %v1069
  %v3670 = vunpack.c.l.b16 %v1070
  %v3671 = vunpack.c.l.b16 %v1071
  %v3672 = vunpack.c.l.b16 %v1072
  %v3673 = vunpack.c.l.b16 %v1073
  %v3674 = vunpack.c.l.b16 %v1074
  %v3675 = vunpack.c.l.b16 %v1075
  %v3676 = vunpack.c.l.b16 %v1076
  %v3677 = vunpack.c.l.b16 %v1077
  %v3678 = vunpack.c.l.b16 %v1078
  %v3679 = vunpack.c.l.b16 %v1079
  %v3680 = vunpack.c.l.b16 %v1080
  %v3681 = vunpack.c.l.b16 %v1081
  %v3682 = vunpack.c.l.b16 %v1082
  %v3683 = vunpack.c.l.b16 %v1083
  %v3684 = vunpack.c.l.b16 %v1084
  %v3685 = vunpack.c.l.b16 %v1085
  %v3686 = vunpack.c.l.b16 %v1086
  %v3687 = vunpack.c.l.b16 %v1087
  %v3688 = vunpack.c.l.b16 %v1088
  %v3689 = vunpack.c.l.b16 %v1089
  %v3690 = vunpack.c.l.b16 %v1090
  %v3691 = vunpack.c.l.b16 %v1091
  %v3692 = vunpack.c.l.b16 %v1092
  %v3693 = vunpack.c.l.b16 %v1093
  %v3694 = vunpack.c.l.b16 %v1094
  %v3695 = vunpack.c.l.b16 %v1095
  %v3696 = vunpack.c.l.b16 %v1096
  %v3697 = vunpack.c.l.b16 %v1097
  %v3698 = vunpack.c.l.b16 %v1098
  %v3699 = vunpack.c.l.b16 %v1099
  %v3700 = vunpack.c.l.b16 %v1100
  %v3701 = vunpack.c.l.b16 %v1101
  %v3702 = vunpack.c.l.b16 %v1102
  %v3703 = vunpack.c.l.b16 %v1103
  %v3704 = vunpack.c.l.b16 %v1104
  %v3705 = vunpack.c.l.b16 %v1105
  %v3706 = vunpack.c.l.b16 %v1106
  %v3707 = vunpack.c.l.b16 %v1107
  %v3708 = vunpack.c.l.b16 %v1108
  %v3709 = vunpack.c.l.b16 %v1109
  %v3710 = vunpack.c.l.b16 %v1110
  %v3711 = vunpack.c.l.b16 %v1111
  %v3712 = vunpack.c.l.b16 %v1112
  %v3713 = vunpack.c.l.b16 %v1113
  %v3714 = vunpack.c.l.b16 %v1114
  %v3715 = vunpack.c.l.b16 %v1115
  %v3716 = vunpack.c.l.b16 %v1116
  %v3717 = vunpack.c.l.b16 %v1117
  %v3718 = vunpack.c.l.b16 %v1118
  %v3719 = vunpack.c.l.b16 %v1119
  %v3720 = vunpack.c.l.b16 %v1120
  %v3721 = vunpack.c.l.b16 %v1121
  %v3722 = vunpack.c.l.b16 %v1122
  %v3723 = vunpack.c.l.b16 %v1123
  %v3724 = vunpack.c.l.b16 %v1124
  %v3725 = vunpack.c.l.b16 %v1125
  %v3726 = vunpack.c.l.b16 %v1126
  %v3727 = vunpack.c.l.b16 %v1127
  %v3728 = vunpack.c.l.b16 %v1128
  %v3729 = vunpack.c.l.b16 %v1129
  %v3730 = vunpack.c.l.b16 %v1130
  %v3731 = vunpack.c.l.b16 %v1131
  %v3732 = vunpack.c.l.b16 %v1132
  %v3733 = vunpack.c.l.b16 %v1133
  %v3734 = vunpack.c.l.b16 %v1134
  %v3735 = vunpack.c.l.b16 %v1135
  %v3736 = vunpack.c.l.b16 %v1136
  %v3737 = vunpack.c.l.b16 %v1137
  %v3738 = vunpack.c.l.b16 %v1138
  %v3739 = vunpack.c.l.b16 %v1139
  %v3740 = vunpack.c.l.b16 %v1140
  %v3741 = vunpack.c.l.b16 %v1141
  %v3742 = vunpack.c.l.b16 %v1142
  %v3743 = vunpack.c.l.b16 %v1143
  %v3744 = vunpack.c.l.b16 %v1144
  %v3745 = vunpack.c.l.b16 %v1145
  %v3746 = vunpack.c.l.b16 %v1146
  %v3747 = vunpack.c.l.b16 %v1147
  %v3748 = vunpack.c.l.b16 %v1148
  %v3749 = vunpack.c.l.b16 %v1149
  %v3750 = vunpack.c.l.b16 %v1150
  %v3751 = vunpack.c.l.b16 %v1151
  %v3752 = vunpack.c.l.b16 %v1152
  %v3753 = vunpack.c.l.b16 %v1153
  %v3754 = vunpack.c.l.b16 %v1154
  %v3755 = vunpack.c.l.b16 %v1155
  %v3756 = vunpack.c.l.b16 %v1156
  %v3757 = vunpack.c.l.b16 %v1157
  %v3758 = vunpack.c.l.b16 %v1158
  %v3759 = vunpack.c.l.b16 %v1159
  %v3760 = vunpack.c.l.b16 %v1160
  %v3761 = vunpack.c.l.b16 %v1161
  %v3762 = vunpack.c.l.b16 %v1162
  %v3763 = vunpack.c.l.b16 %v1163
  %v3764 = vunpack.c.l.b16 %v1164
  %v3765 = vunpack.c.l.b16 %v1165
  %v3766 = vunpack.c.l.b16 %v1166
  %v3767 = vunpack.c.l.b16 %v1167
  %v3768 = vunpack.c.l.b16 %v1168
  %v3769 = vunpack.c.l.b16 %v1169
  %v3770 = vunpack.c.l.b16 %v1170
  %v3771 = vunpack.c.l.b16 %v1171
  %v3772 = vunpack.c.l.b16 %v1172
  %v3773 = vunpack.c.l.b16 %v1173
  %v3774 = vunpack.c.l.b16 %v1174
  %v3775 = vunpack.c.l.b16 %v1175
  %v3776 = vunpack.c.l.b16 %v1176
  %v3777 = vunpack.c.l.b16 %v1177
  %v3778 = vunpack.c.l.b16 %v1178
  %v3779 = vunpack.c.l.b16 %v1179
  %v3780 = vunpack.c.l.b16 %v1180
  %v3781 = vunpack.c.l.b16 %v1181
  %v3782 = vunpack.c.l.b16 %v1182
  %v3783 = vunpack.c.l.b16 %v1183
  %v3784 = vunpack.c.l.b16 %v1184
  %v3785 = vunpack.c.l.b16 %v1185
  %v3786 = vunpack.c.l.b16 %v1186
  %v3787 = vunpack.c.l.b16 %v1187
  %v3788 = vunpack.c.l.b16 %v1188
  %v3789 = vunpack.c.l.b16 %v1189
  %v3790 = vunpack.c.l.b16 %v1190
  %v3791 = vunpack.c.l.b16 %v1191
  %v3792 = vunpack.c.l.b16 %v1192
  %v3793 = vunpack.c.l.b16 %v1193
  %v3794 = vunpack.c.l.b16 %v1194
  %v3795 = vunpack.c.l.b16 %v1195
  %v3796 = vunpack.c.l.b16 %v1196
  %v3797 = vunpack.c.l.b16 %v1197
  %v3798 = vunpack.c.l.b16 %v1198
  %v3799 = vunpack.c.l.b16 %v1199
  %v3800 = vunpack.c.l.b16 %v1200
  %v3801 = vunpack.c.l.b16 %v1201
  %v3802 = vunpack.c.l.b16 %v1202
  %v3803 = vunpack.c.l.b16 %v1203
  %v3804 = vunpack.c.l.b16 %v1204
  %v3805 = vunpack.c.l.b16 %v1205
  %v3806 = vunpack.c.l.b16 %v1206
  %v3807 = vunpack.c.l.b16 %v1207
  %v3808 = vunpack.c.l.b16 %v1208
  %v3809 = vunpack.c.l.b16 %v1209
  %v3810 = vunpack.c.l.b16 %v1210
  %v3811 = vunpack.c.l.b16 %v1211
  %v3812 = vunpack.c.l.b16 %v1212
  %v3813 = vunpack.c.l.b16 %v1213
  %v3814 = vunpack.c.l.b16 %v1214
  %v3815 = vunpack.c.l.b16 %v1215
  %v3816 = vunpack.c.l.b16 %v1216
  %v3817 = vunpack.c.l.b16 %v1217
  %v3818 = vunpack.c.l.b16 %v1218
  %v3819 = vunpack.c.l.b16 %v1219
  %v3820 = vunpack.c.l.b16 %v1220
  %v3821 = vunpack.c.l.b16 %v1221
  %v3822 = vunpack.c.l.b16 %v1222
  %v3823 = vunpack.c.l.b16 %v1223
  %v3824 = vunpack.c.l.b16 %v1224
  %v3825 = vunpack.c.l.b16 %v1225
  %v3826 = vunpack.c.l.b16 %v1226
  %v3827 = vunpack.c.l.b16 %v1227
  %v3828 = vunpack.c.l.b16 %v1228
  %v3829 = vunpack.c.l.b16 %v1229
  %v3830 = vunpack.c.l.b16 %v1230
  %v3831 = vunpack.c.l.b16 %v1231
  %v3832 = vunpack.c.l.b16 %v1232
  %v3833 = vunpack.c.l.b16 %v1233
  %v3834 = vunpack.c.l.b16 %v1234
  %v3835 = vunpack.c.l.b16 %v1235
  %v3836 = vunpack.c.l.b16 %v1236
  %v3837 = vunpack.c.l.b16 %v1237
  %v3838 = vunpack.c.l.b16 %v1238
  %v3839 = vunpack.c.l.b16 %v1239
  %v3840 = vunpack.c.l.b16 %v1240
  %v3841 = vunpack.c.l.b16 %v1241
  %v3842 = vunpack.c.l.b16 %v1242
  %v3843 = vunpack.c.l.b16 %v1243
  %v3844 = vunpack.c.l.b16 %v1244
  %v3845 = vunpack.c.l.b16 %v1245
  %v3846 = vunpack.c.l.b16 %v1246
  %v3847 = vunpack.c.l.b16 %v1247
  %v3848 = vunpack.c.l.b16 %v1248
  %v3849 = vunpack.c.l.b16 %v1249
  %v3850 = vunpack.c.l.b16 %v1250
  %v3851 = vunpack.c.l.b16 %v1251
  %v3852 = vunpack.c.l.b16 %v1252
  %v3853 = vunpack.c.l.b16 %v1253
  %v3854 = vunpack.c.l.b16 %v1254
  %v3855 = vunpack.c.l.b16 %v1255
  %v3856 = vunpack.c.l.b16 %v1256
  %v3857 = vunpack.c.l.b16 %v1257
  %v3858 = vunpack.c.l.b16 %v1258
  %v3859 = vunpack.c.l.b16 %v1259
  %v3860 = vunpack.c.l.b16 %v1260
  %v3861 = vunpack.c.l.b16 %v1261
  %v3862 = vunpack.c.l.b16 %v1262
  %v3863 = vunpack.c.l.b16 %v1263
  %v3864 = vunpack.c.l.b16 %v1264
  %v3865 = vunpack.c.l.b16 %v1265
  %v3866 = vunpack.c.l.b16 %v1266
  %v3867 = vunpack.c.l.b16 %v1267
  %v3868 = vunpack.c.l.b16 %v1268
  %v3869 = vunpack.c.l.b16 %v1269
  %v3870 = vunpack.c.l.b16 %v1270
  %v3871 = vunpack.c.l.b16 %v1271
  %v3872 = vunpack.c.l.b16 %v1272
  %v3873 = vunpack.c.l.b16 %v1273
  %v3874 = vunpack.c.l.b16 %v1274
  %v3875 = vunpack.c.l.b16 %v1275
  %v3876 = vunpack.c.l.b16 %v1276
  %v3877 = vunpack.c.l.b16 %v1277
  %v3878 = vunpack.c.l.b16 %v1278
  %v3879 = vunpack.c.l.b16 %v1279
  %v3880 = vunpack.c.l.b16 %v1280
  %v3881 = vunpack.c.l.b16 %v1281
  %v3882 = vunpack.c.l.b16 %v1282
  %v3883 = vunpack.c.l.b16 %v1283
  %v3884 = vunpack.c.l.b16 %v1284
  %v3885 = vunpack.c.l.b16 %v1285
  %v3886 = vunpack.c.l.b16 %v1286
  %v3887 = vunpack.c.l.b16 %v1287
  %v3888 = vunpack.c.l.b16 %v1288
  %v3889 = vunpack.c.l.b16 %v1289
  %v3890 = vunpack.c.l.b16 %v1290
  %v3891 = vunpack.c.l.b16 %v1291
  %v3892 = vunpack.c.l.b16 %v1292
  %v3893 = vunpack.c.l.b16 %v1293
  %v3894 = vunpack.c.l.b16 %v1294
  %v3895 = vunpack.c.l.b16 %v1295
  %v3896 = vunpack.c.l.b16 %v1296
  %v3897 = vunpack.c.l.b16 %v1297
  %v3898 = vunpack.c.l.b16 %v1298
  %v3899 = vunpack.c.l.b16 %v1299
  %v3900 = vunpack.c.l.b16 %v1300
  %v3901 = vunpack.c.l.b16 %v1301
  %v3902 = vunpack.c.l.b16 %v1302
  %v3903 = vunpack.c.l.b16 %v1303
  %v3904 = vunpack.c.l.b16 %v1304
  %v3905 = vunpack.c.l.b16 %v1305
  %v3906 = vunpack.c.l.b16 %v1306
  %v3907 = vunpack.c.l.b16 %v1307
  %v3908 = vunpack.c.l.b16 %v1308
  %v3909 = vunpack.c.l.b16 %v1309
  %v3910 = vunpack.c.l.b16 %v1310
  %v3911 = vunpack.c.l.b16 %v1311
  %v3912 = vunpack.c.l.b16 %v1312
  %v3913 = vunpack.c.l.b16 %v1313
  %v3914 = vunpack.c.l.b16 %v1314
  %v3915 = vunpack.c.l.b16 %v1315
  %v3916 = vunpack.c.l.b16 %v1316
  %v3917 = vunpack.c.l.b16 %v1317
  %v3918 = vunpack.c.l.b16 %v1318
  %v3919 = vunpack.c.l.b16 %v1319
  %v3920 = vunpack.c.l.b16 %v1320
  %v3921 = vunpack.c.l.b16 %v1321
  %v3922 = vunpack.c.l.b16 %v1322
  %v3923 = vunpack.c.l.b16 %v1323
  %v3924 = vunpack.c.l.b16 %v1324
  %v3925 = vunpack.c.l.b16 %v1325
  %v3926 = vunpack.c.l.b16 %v1326
  %v3927 = vunpack.c.l.b16 %v1327
  %v3928 = vunpack.c.l.b16 %v1328
  %v3929 = vunpack.c.l.b16 %v1329
  %v3930 = vunpack.c.l.b16 %v1330
  %v3931 = vunpack.c.l.b16 %v1331
  %v3932 = vunpack.c.l.b16 %v1332
  %v3933 = vunpack.c.l.b16 %v1333
  %v3934 = vunpack.c.l.b16 %v1334
  %v3935 = vunpack.c.l.b16 %v1335
  %v3936 = vunpack.c.l.b16 %v1336
  %v3937 = vunpack.c.l.b16 %v1337
  %v3938 = vunpack.c.l.b16 %v1338
  %v3939 = vunpack.c.l.b16 %v1339
  %v3940 = vunpack.c.l.b16 %v1340
  %v3941 = vunpack.c.l.b16 %v1341
  %v3942 = vunpack.c.l.b16 %v1342
  %v3943 = vunpack.c.l.b16 %v1343
  %v3944 = vunpack.c.l.b16 %v1344
  %v3945 = vunpack.c.l.b16 %v1345
  %v3946 = vunpack.c.l.b16 %v1346
  %v3947 = vunpack.c.l.b16 %v1347
  %v3948 = vunpack.c.l.b16 %v1348
  %v3949 = vunpack.c.l.b16 %v1349
  %v3950 = vunpack.c.l.b16 %v1350
  %v3951 = vunpack.c.l.b16 %v1351
  %v3952 = vunpack.c.l.b16 %v1352
  %v3953 = vunpack.c.l.b16 %v1353
  %v3954 = vunpack.c.l.b16 %v1354
  %v3955 = vunpack.c.l.b16 %v1355
  %v3956 = vunpack.c.l.b16 %v1356
  %v3957 = vunpack.c.l.b16 %v1357
  %v3958 = vunpack.c.l.b16 %v1358
  %v3959 = vunpack.c.l.b16 %v1359
  %v3960 = vunpack.c.l.b16 %v1360
  %v3961 = vunpack.c.l.b16 %v1361
  %v3962 = vunpack.c.l.b16 %v1362
  %v3963 = vunpack.c.l.b16 %v1363
  %v3964 = vunpack.c.l.b16 %v1364
  %v3965 = vunpack.c.l.b16 %v1365
  %v3966 = vunpack.c.l.b16 %v1366
  %v3967 = vunpack.c.l.b16 %v1367
  %v3968 = vunpack.c.l.b16 %v1368
  %v3969 = vunpack.c.l.b16 %v1369
  %v3970 = vunpack.c.l.b16 %v1370
  %v3971 = vunpack.c.l.b16 %v1371
  %v3972 = vunpack.c.l.b16 %v1372
  %v3973 = vunpack.c.l.b16 %v1373
  %v3974 = vunpack.c.l.b16 %v1374
  %v3975 = vunpack.c.l.b16 %v1375
  %v3976 = vunpack.c.l.b16 %v1376
  %v3977 = vunpack.c.l.b16 %v1377
  %v3978 = vunpack.c.l.b16 %v1378
  %v3979 = vunpack.c.l.b16 %v1379
  %v3980 = vunpack.c.l.b16 %v1380
  %v3981 = vunpack.c.l.b16 %v1381
  %v3982 = vunpack.c.l.b16 %v1382
  %v3983 = vunpack.c.l.b16 %v1383
  %v3984 = vunpack.c.l.b16 %v1384
  %v3985 = vunpack.c.l.b16 %v1385
  %v3986 = vunpack.c.l.b16 %v1386
  %v3987 = vunpack.c.l.b16 %v1387
  %v3988 = vunpack.c.l.b16 %v1388
  %v3989 = vunpack.c.l.b16 %v1389
  %v3990 = vunpack.c.l.b16 %v1390
  %v3991 = vunpack.c.l.b16 %v1391
  %v3992 = vunpack.c.l.b16 %v1392
  %v3993 = vunpack.c.l.b16 %v1393
  %v3994 = vunpack.c.l.b16 %v1394
  %v3995 = vunpack.c.l.b16 %v1395
  %v3996 = vunpack.c.l.b16 %v1396
  %v3997 = vunpack.c.l.b16 %v1397
  %v3998 = vunpack.c.l.b16 %v1398
  %v3999 = vunpack.c.l.b16 %v1399
  %v4000 = vunpack.c.l.b16 %v1400
  %v4001 = vunpack.c.l.b16 %v1401
  %v4002 = vunpack.c.l.b16 %v1402
  %v4003 = vunpack.c.l.b16 %v1403
  %v4004 = vunpack.c.l.b16 %v1404
  %v4005 = vunpack.c.l.b16 %v1405
  %v4006 = vunpack.c.l.b16 %v1406
  %v4007 = vunpack.c.l.b16 %v1407
  %v4008 = vunpack.c.l.b16 %v1408
  %v4009 = vunpack.c.l.b16 %v1409
  %v4010 = vunpack.c.l.b16 %v1410
  %v4011 = vunpack.c.l.b16 %v1411
  %v4012 = vunpack.c.l.b16 %v1412
  %v4013 = vunpack.c.l.b16 %v1413
  %v4014 = vunpack.c.l.b16 %v1414
  %v4015 = vunpack.c.l.b16 %v1415
  %v4016 = vunpack.c.l.b16 %v1416
  %v4017 = vunpack.c.l.b16 %v1417
  %v4018 = vunpack.c.l.b16 %v1418
  %v4019 = vunpack.c.l.b16 %v1419
  %v4020 = vunpack.c.l.b16 %v1420
  %v4021 = vunpack.c.l.b16 %v1421
  %v4022 = vunpack.c.l.b16 %v1422
  %v4023 = vunpack.c.l.b16 %v1423
  %v4024 = vunpack.c.l.b16 %v1424
  %v4025 = vunpack.c.l.b16 %v1425
  %v4026 = vunpack.c.l.b16 %v1426
  %v4027 = vunpack.c.l.b16 %v1427
  %v4028 = vunpack.c.l.b16 %v1428
  %v4029 = vunpack.c.l.b16 %v1429
  %v4030 = vunpack.c.l.b16 %v1430
  %v4031 = vunpack.c.l.b16 %v1431
  %v4032 = vunpack.c.l.b16 %v1432
  %v4033 = vunpack.c.l.b16 %v1433
  %v4034 = vunpack.c.l.b16 %v1434
  %v4035 = vunpack.c.l.b16 %v1435
  %v4036 = vunpack.c.l.b16 %v1436
  %v4037 = vunpack.c.l.b16 %v1437
  %v4038 = vunpack.c.l.b16 %v1438
  %v4039 = vunpack.c.l.b16 %v1439
  %v4040 = vunpack.c.l.b16 %v1440
  %v4041 = vunpack.c.l.b16 %v1441
  %v4042 = vunpack.c.l.b16 %v1442
  %v4043 = vunpack.c.l.b16 %v1443
  %v4044 = vunpack.c.l.b16 %v1444
  %v4045 = vunpack.c.l.b16 %v1445
  %v4046 = vunpack.c.l.b16 %v1446
  %v4047 = vunpack.c.l.b16 %v1447
  %v4048 = vunpack.c.l.b16 %v1448
  %v4049 = vunpack.c.l.b16 %v1449
  %v4050 = vunpack.c.l.b16 %v1450
  %v4051 = vunpack.c.l.b16 %v1451
  %v4052 = vunpack.c.l.b16 %v1452
  %v4053 = vunpack.c.l.b16 %v1453
  %v4054 = vunpack.c.l.b16 %v1454
  %v4055 = vunpack.c.l.b16 %v1455
  %v4056 = vunpack.c.l.b16 %v1456
  %v4057 = vunpack.c.l.b16 %v1457
  %v4058 = vunpack.c.l.b16 %v1458
  %v4059 = vunpack.c.l.b16 %v1459
  %v4060 = vunpack.c.l.b16 %v1460
  %v4061 = vunpack.c.l.b16 %v1461
  %v4062 = vunpack.c.l.b16 %v1462
  %v4063 = vunpack.c.l.b16 %v1463
  %v4064 = vunpack.c.l.b16 %v1464
  %v4065 = vunpack.c.l.b16 %v1465
  %v4066 = vunpack.c.l.b16 %v1466
  %v4067 = vunpack.c.l.b16 %v1467
  %v4068 = vunpack.c.l.b16 %v1468
  %v4069 = vunpack.c.l.b16 %v1469
  %v4070 = vunpack.c.l.b16 %v1470
  %v4071 = vunpack.c.l.b16 %v1471
  %v4072 = vunpack.c.l.b16 %v1472
  %v4073 = vunpack.c.l.b16 %v1473
  %v4074 = vunpack.c.l.b16 %v1474
  %v4075 = vunpack.c.l.b16 %v1475
  %v4076 = vunpack.c.l.b16 %v1476
  %v4077 = vpack.c.b16 %v2780, %v2779
  %v4078 = vpack.c.b16 %v2782, %v2781
  %v4079 = vpack.c.b16 %v2784, %v2783
  %v4080 = vpack.c.b16 %v2786, %v2785
  %v4081 = vpack.c.b16 %v2788, %v2787
  %v4082 = vpack.c.b16 %v2790, %v2789
  %v4083 = vpack.c.b16 %v2792, %v2791
  %v4084 = vpack.c.b16 %v2794, %v2793
  %v4085 = vpack.c.b16 %v2796, %v2795
  %v4086 = vpack.c.b16 %v2798, %v2797
  %v4087 = vpack.c.b16 %v2800, %v2799
  %v4088 = vpack.c.b16 %v2802, %v2801
  %v4089 = vpack.c.b16 %v2804, %v2803
  %v4090 = vpack.c.b16 %v2806, %v2805
  %v4091 = vpack.c.b16 %v2808, %v2807
  %v4092 = vpack.c.b16 %v2810, %v2809
  %v4093 = vpack.c.b16 %v2812, %v2811
  %v4094 = vpack.c.b16 %v2814, %v2813
  %v4095 = vpack.c.b16 %v2816, %v2815
  %v4096 = vpack.c.b16 %v2818, %v2817
  %v4097 = vpack.c.b16 %v2820, %v2819
  %v4098 = vpack.c.b16 %v2822, %v2821
  %v4099 = vpack.c.b16 %v2824, %v2823
  %v4100 = vpack.c.b16 %v2826, %v2825
  %v4101 = vpack.c.b16 %v2828, %v2827
  %v4102 = vpack.c.b16 %v2830, %v2829
  %v4103 = vpack.c.b16 %v2832, %v2831
  %v4104 = vpack.c.b16 %v2834, %v2833
  %v4105 = vpack.c.b16 %v2836, %v2835
  %v4106 = vpack.c.b16 %v2838, %v2837
  %v4107 = vpack.c.b16 %v2840, %v2839
  %v4108 = vpack.c.b16 %v2842, %v2841
  %v4109 = vpack.c.b16 %v2844, %v2843
  %v4110 = vpack.c.b16 %v2846, %v2845
  %v4111 = vpack.c.b16 %v2848, %v2847
  %v4112 = vpack.c.b16 %v2850, %v2849
  %v4113 = vpack.c.b16 %v2852, %v2851
  %v4114 = vpack.c.b16 %v2854, %v2853
  %v4115 = vpack.c.b16 %v2856, %v2855
  %v4116 = vpack.c.b16 %v2858, %v2857
  %v4117 = vpack.c.b16 %v2860, %v2859
  %v4118 = vpack.c.b16 %v2862, %v2861
  %v4119 = vpack.c.b16 %v2864, %v2863
  %v4120 = vpack.c.b16 %v2866, %v2865
  %v4121 = vpack.c.b16 %v2868, %v2867
  %v4122 = vpack.c.b16 %v2870, %v2869
  %v4123 = vpack.c.b16 %v2872, %v2871
  %v4124 = vpack.c.b16 %v2874, %v2873
  %v4125 = vpack.c.b16 %v2876, %v2875
  %v4126 = vpack.c.b16 %v2878, %v2877
  %v4127 = vpack.c.b16 %v2880, %v2879
  %v4128 = vpack.c.b16 %v2882, %v2881
  %v4129 = vpack.c.b16 %v2884, %v2883
  %v4130 = vpack.c.b16 %v2886, %v2885
  %v4131 = vpack.c.b16 %v2888, %v2887
  %v4132 = vpack.c.b16 %v2890, %v2889
  %v4133 = vpack.c.b16 %v2892, %v2891
  %v4134 = vpack.c.b16 %v2894, %v2893
  %v4135 = vpack.c.b16 %v2896, %v2895
  %v4136 = vpack.c.b16 %v2898, %v2897
  %v4137 = vpack.c.b16 %v2900, %v2899
  %v4138 = vpack.c.b16 %v2902, %v2901
  %v4139 = vpack.c.b16 %v2904, %v2903
  %v4140 = vpack.c.b16 %v2906, %v2905
  %v4141 = vpack.c.b16 %v2908, %v2907
  %v4142 = vpack.c.b16 %v2910, %v2909
  %v4143 = vpack.c.b16 %v2912, %v2911
  %v4144 = vpack.c.b16 %v2914, %v2913
  %v4145 = vpack.c.b16 %v2916, %v2915
  %v4146 = vpack.c.b16 %v2918, %v2917
  %v4147 = vpack.c.b16 %v2920, %v2919
  %v4148 = vpack.c.b16 %v2922, %v2921
  %v4149 = vpack.c.b16 %v2924, %v2923
  %v4150 = vpack.c.b16 %v2926, %v2925
  %v4151 = vpack.c.b16 %v2928, %v2927
  %v4152 = vpack.c.b16 %v2930, %v2929
  %v4153 = vpack.c.b16 %v2932, %v2931
  %v4154 = vpack.c.b16 %v2934, %v2933
  %v4155 = vpack.c.b16 %v2936, %v2935
  %v4156 = vpack.c.b16 %v2938, %v2937
  %v4157 = vpack.c.b16 %v2940, %v2939
  %v4158 = vpack.c.b16 %v2942, %v2941
  %v4159 = vpack.c.b16 %v2944, %v2943
  %v4160 = vpack.c.b16 %v2946, %v2945
  %v4161 = vpack.c.b16 %v2948, %v2947
  %v4162 = vpack.c.b16 %v2950, %v2949
  %v4163 = vpack.c.b16 %v2952, %v2951
  %v4164 = vpack.c.b16 %v2954, %v2953
  %v4165 = vpack.c.b16 %v2956, %v2955
  %v4166 = vpack.c.b16 %v2958, %v2957
  %v4167 = vpack.c.b16 %v2960, %v2959
  %v4168 = vpack.c.b16 %v2962, %v2961
  %v4169 = vpack.c.b16 %v2964, %v2963
  %v4170 = vpack.c.b16 %v2966, %v2965
  %v4171 = vpack.c.b16 %v2968, %v2967
  %v4172 = vpack.c.b16 %v2970, %v2969
  %v4173 = vpack.c.b16 %v2972, %v2971
  %v4174 = vpack.c.b16 %v2974, %v2973
  %v4175 = vpack.c.b16 %v2976, %v2975
  %v4176 = vpack.c.b16 %v2978, %v2977
  %v4177 = vpack.c.b16 %v2980, %v2979
  %v4178 = vpack.c.b16 %v2982, %v2981
  %v4179 = vpack.c.b16 %v2984, %v2983
  %v4180 = vpack.c.b16 %v2986, %v2985
  %v4181 = vpack.c.b16 %v2988, %v2987
  %v4182 = vpack.c.b16 %v2990, %v2989
  %v4183 = vpack.c.b16 %v2992, %v2991
  %v4184 = vpack.c.b16 %v2994, %v2993
  %v4185 = vpack.c.b16 %v2996, %v2995
  %v4186 = vpack.c.b16 %v2998, %v2997
  %v4187 = vpack.c.b16 %v3000, %v2999
  %v4188 = vpack.c.b16 %v3002, %v3001
  %v4189 = vpack.c.b16 %v3004, %v3003
  %v4190 = vpack.c.b16 %v3006, %v3005
  %v4191 = vpack.c.b16 %v3008, %v3007
  %v4192 = vpack.c.b16 %v3010, %v3009
  %v4193 = vpack.c.b16 %v3012, %v3011
  %v4194 = vpack.c.b16 %v3014, %v3013
  %v4195 = vpack.c.b16 %v3016, %v3015
  %v4196 = vpack.c.b16 %v3018, %v3017
  %v4197 = vpack.c.b16 %v3020, %v3019
  %v4198 = vpack.c.b16 %v3022, %v3021
  %v4199 = vpack.c.b16 %v3024, %v3023
  %v4200 = vpack.c.b16 %v3026, %v3025
  %v4201 = vpack.c.b16 %v3028, %v3027
  %v4202 = vpack.c.b16 %v3030, %v3029
  %v4203 = vpack.c.b16 %v3032, %v3031
  %v4204 = vpack.c.b16 %v3034, %v3033
  %v4205 = vpack.c.b16 %v3036, %v3035
  %v4206 = vpack.c.b16 %v3038, %v3037
  %v4207 = vpack.c.b16 %v3040, %v3039
  %v4208 = vpack.c.b16 %v3042, %v3041
  %v4209 = vpack.c.b16 %v3044, %v3043
  %v4210 = vpack.c.b16 %v3046, %v3045
  %v4211 = vpack.c.b16 %v3048, %v3047
  %v4212 = vpack.c.b16 %v3050, %v3049
  %v4213 = vpack.c.b16 %v3052, %v3051
  %v4214 = vpack.c.b16 %v3054, %v3053
  %v4215 = vpack.c.b16 %v3056, %v3055
  %v4216 = vpack.c.b16 %v3058, %v3057
  %v4217 = vpack.c.b16 %v3060, %v3059
  %v4218 = vpack.c.b16 %v3062, %v3061
  %v4219 = vpack.c.b16 %v3064, %v3063
  %v4220 = vpack.c.b16 %v3066, %v3065
  %v4221 = vpack.c.b16 %v3068, %v3067
  %v4222 = vpack.c.b16 %v3070, %v3069
  %v4223 = vpack.c.b16 %v3072, %v3071
  %v4224 = vpack.c.b16 %v3074, %v3073
  %v4225 = vpack.c.b16 %v3076, %v3075
  %v4226 = vpack.c.b16 %v3078, %v3077
  %v4227 = vpack.c.b16 %v3080, %v3079
  %v4228 = vpack.c.b16 %v3082, %v3081
  %v4229 = vpack.c.b16 %v3084, %v3083
  %v4230 = vpack.c.b16 %v3086, %v3085
  %v4231 = vpack.c.b16 %v3088, %v3087
  %v4232 = vpack.c.b16 %v3090, %v3089
  %v4233 = vpack.c.b16 %v3092, %v3091
  %v4234 = vpack.c.b16 %v3094, %v3093
  %v4235 = vpack.c.b16 %v3096, %v3095
  %v4236 = vpack.c.b16 %v3098, %v3097
  %v4237 = vpack.c.b16 %v3100, %v3099
  %v4238 = vpack.c.b16 %v3102, %v3101
  %v4239 = vpack.c.b16 %v3104, %v3103
  %v4240 = vpack.c.b16 %v3106, %v3105
  %v4241 = vpack.c.b16 %v3108, %v3107
  %v4242 = vpack.c.b16 %v3110, %v3109
  %v4243 = vpack.c.b16 %v3112, %v3111
  %v4244 = vpack.c.b16 %v3114, %v3113
  %v4245 = vpack.c.b16 %v3116, %v3115
  %v4246 = vpack.c.b16 %v3118, %v3117
  %v4247 = vpack.c.b16 %v3120, %v3119
  %v4248 = vpack.c.b16 %v3122, %v3121
  %v4249 = vpack.c.b16 %v3124, %v3123
  %v4250 = vpack.c.b16 %v3126, %v3125
  %v4251 = vpack.c.b16 %v3128, %v3127
  %v4252 = vpack.c.b16 %v3130, %v3129
  %v4253 = vpack.c.b16 %v3132, %v3131
  %v4254 = vpack.c.b16 %v3134, %v3133
  %v4255 = vpack.c.b16 %v3136, %v3135
  %v4256 = vpack.c.b16 %v3138, %v3137
  %v4257 = vpack.c.b16 %v3140, %v3139
  %v4258 = vpack.c.b16 %v3142, %v3141
  %v4259 = vpack.c.b16 %v3144, %v3143
  %v4260 = vpack.c.b16 %v3146, %v3145
  %v4261 = vpack.c.b16 %v3148, %v3147
  %v4262 = vpack.c.b16 %v3150, %v3149
  %v4263 = vpack.c.b16 %v3152, %v3151
  %v4264 = vpack.c.b16 %v3154, %v3153
  %v4265 = vpack.c.b16 %v3156, %v3155
  %v4266 = vpack.c.b16 %v3158, %v3157
  %v4267 = vpack.c.b16 %v3160, %v3159
  %v4268 = vpack.c.b16 %v3162, %v3161
  %v4269 = vpack.c.b16 %v3164, %v3163
  %v4270 = vpack.c.b16 %v3166, %v3165
  %v4271 = vpack.c.b16 %v3168, %v3167
  %v4272 = vpack.c.b16 %v3170, %v3169
  %v4273 = vpack.c.b16 %v3172, %v3171
  %v4274 = vpack.c.b16 %v3174, %v3173
  %v4275 = vpack.c.b16 %v3176, %v3175
  %v4276 = vpack.c.b16 %v3178, %v3177
  %v4277 = vpack.c.b16 %v3180, %v3179
  %v4278 = vpack.c.b16 %v3182, %v3181
  %v4279 = vpack.c.b16 %v3184, %v3183
  %v4280 = vpack.c.b16 %v3186, %v3185
  %v4281 = vpack.c.b16 %v3188, %v3187
  %v4282 = vpack.c.b16 %v3190, %v3189
  %v4283 = vpack.c.b16 %v3192, %v3191
  %v4284 = vpack.c.b16 %v3194, %v3193
  %v4285 = vpack.c.b16 %v3196, %v3195
  %v4286 = vpack.c.b16 %v3198, %v3197
  %v4287 = vpack.c.b16 %v3200, %v3199
  %v4288 = vpack.c.b16 %v3202, %v3201
  %v4289 = vpack.c.b16 %v3204, %v3203
  %v4290 = vpack.c.b16 %v3206, %v3205
  %v4291 = vpack.c.b16 %v3208, %v3207
  %v4292 = vpack.c.b16 %v3210, %v3209
  %v4293 = vpack.c.b16 %v3212, %v3211
  %v4294 = vpack.c.b16 %v3214, %v3213
  %v4295 = vpack.c.b16 %v3216, %v3215
  %v4296 = vpack.c.b16 %v3218, %v3217
  %v4297 = vpack.c.b16 %v3220, %v3219
  %v4298 = vpack.c.b16 %v3222, %v3221
  %v4299 = vpack.c.b16 %v3224, %v3223
  %v4300 = vpack.c.b16 %v3226, %v3225
  %v4301 = vpack.c.b16 %v3228, %v3227
  %v4302 = vpack.c.b16 %v3230, %v3229
  %v4303 = vpack.c.b16 %v3232, %v3231
  %v4304 = vpack.c.b16 %v3234, %v3233
  %v4305 = vpack.c.b16 %v3236, %v3235
  %v4306 = vpack.c.b16 %v3238, %v3237
  %v4307 = vpack.c.b16 %v3240, %v3239
  %v4308 = vpack.c.b16 %v3242, %v3241
  %v4309 = vpack.c.b16 %v3244, %v3243
  %v4310 = vpack.c.b16 %v3246, %v3245
  %v4311 = vpack.c.b16 %v3248, %v3247
  %v4312 = vpack.c.b16 %v3250, %v3249
  %v4313 = vpack.c.b16 %v3252, %v3251
  %v4314 = vpack.c.b16 %v3254, %v3253
  %v4315 = vpack.c.b16 %v3256, %v3255
  %v4316 = vpack.c.b16 %v3258, %v3257
  %v4317 = vpack.c.b16 %v3260, %v3259
  %v4318 = vpack.c.b16 %v3262, %v3261
  %v4319 = vpack.c.b16 %v3264, %v3263
  %v4320 = vpack.c.b16 %v3266, %v3265
  %v4321 = vpack.c.b16 %v3268, %v3267
  %v4322 = vpack.c.b16 %v3270, %v3269
  %v4323 = vpack.c.b16 %v3272, %v3271
  %v4324 = vpack.c.b16 %v3274, %v3273
  %v4325 = vpack.c.b16 %v3276, %v3275
  %v4326 = vpack.c.b16 %v3278, %v3277
  %v4327 = vpack.c.b16 %v3280, %v3279
  %v4328 = vpack.c.b16 %v3282, %v3281
  %v4329 = vpack.c.b16 %v3284, %v3283
  %v4330 = vpack.c.b16 %v3286, %v3285
  %v4331 = vpack.c.b16 %v3288, %v3287
  %v4332 = vpack.c.b16 %v3290, %v3289
  %v4333 = vpack.c.b16 %v3292, %v3291
  %v4334 = vpack.c.b16 %v3294, %v3293
  %v4335 = vpack.c.b16 %v3296, %v3295
  %v4336 = vpack.c.b16 %v3298, %v3297
  %v4337 = vpack.c.b16 %v3300, %v3299
  %v4338 = vpack.c.b16 %v3302, %v3301
  %v4339 = vpack.c.b16 %v3304, %v3303
  %v4340 = vpack.c.b16 %v3306, %v3305
  %v4341 = vpack.c.b16 %v3308, %v3307
  %v4342 = vpack.c.b16 %v3310, %v3309
  %v4343 = vpack.c.b16 %v3312, %v3311
  %v4344 = vpack.c.b16 %v3314, %v3313
  %v4345 = vpack.c.b16 %v3316, %v3315
  %v4346 = vpack.c.b16 %v3318, %v3317
  %v4347 = vpack.c.b16 %v3320, %v3319
  %v4348 = vpack.c.b16 %v3322, %v3321
  %v4349 = vpack.c.b16 %v3324, %v3323
  %v4350 = vpack.c.b16 %v3326, %v3325
  %v4351 = vpack.c.b16 %v3328, %v3327
  %v4352 = vpack.c.b16 %v3330, %v3329
  %v4353 = vpack.c.b16 %v3332, %v3331
  %v4354 = vpack.c.b16 %v3334, %v3333
  %v4355 = vpack.c.b16 %v3336, %v3335
  %v4356 = vpack.c.b16 %v3338, %v3337
  %v4357 = vpack.c.b16 %v3340, %v3339
  %v4358 = vpack.c.b16 %v3342, %v3341
  %v4359 = vpack.c.b16 %v3344, %v3343
  %v4360 = vpack.c.b16 %v3346, %v3345
  %v4361 = vpack.c.b16 %v3348, %v3347
  %v4362 = vpack.c.b16 %v3350, %v3349
  %v4363 = vpack.c.b16 %v3352, %v3351
  %v4364 = vpack.c.b16 %v3354, %v3353
  %v4365 = vpack.c.b16 %v3356, %v3355
  %v4366 = vpack.c.b16 %v3358, %v3357
  %v4367 = vpack.c.b16 %v3360, %v3359
  %v4368 = vpack.c.b16 %v3362, %v3361
  %v4369 = vpack.c.b16 %v3364, %v3363
  %v4370 = vpack.c.b16 %v3366, %v3365
  %v4371 = vpack.c.b16 %v3368, %v3367
  %v4372 = vpack.c.b16 %v3370, %v3369
  %v4373 = vpack.c.b16 %v3372, %v3371
  %v4374 = vpack.c.b16 %v3374, %v3373
  %v4375 = vpack.c.b16 %v3376, %v3375
  %v4376 = vpack.c.b16 %v3378, %v3377
  %v4377 = vpack.c.b16 %v3380, %v3379
  %v4378 = vpack.c.b16 %v3382, %v3381
  %v4379 = vpack.c.b16 %v3384, %v3383
  %v4380 = vpack.c.b16 %v3386, %v3385
  %v4381 = vpack.c.b16 %v3388, %v3387
  %v4382 = vpack.c.b16 %v3390, %v3389
  %v4383 = vpack.c.b16 %v3392, %v3391
  %v4384 = vpack.c.b16 %v3394, %v3393
  %v4385 = vpack.c.b16 %v3396, %v3395
  %v4386 = vpack.c.b16 %v3398, %v3397
  %v4387 = vpack.c.b16 %v3400, %v3399
  %v4388 = vpack.c.b16 %v3402, %v3401
  %v4389 = vpack.c.b16 %v3404, %v3403
  %v4390 = vpack.c.b16 %v3406, %v3405
  %v4391 = vpack.c.b16 %v3408, %v3407
  %v4392 = vpack.c.b16 %v3410, %v3409
  %v4393 = vpack.c.b16 %v3412, %v3411
  %v4394 = vpack.c.b16 %v3414, %v3413
  %v4395 = vpack.c.b16 %v3416, %v3415
  %v4396 = vpack.c.b16 %v3418, %v3417
  %v4397 = vpack.c.b16 %v3420, %v3419
  %v4398 = vpack.c.b16 %v3422, %v3421
  %v4399 = vpack.c.b16 %v3424, %v3423
  %v4400 = vpack.c.b16 %v3426, %v3425
  %v4401 = vpack.c.b16 %v3428, %v3427
  %v4402 = vpack.c.b16 %v3430, %v3429
  %v4403 = vpack.c.b16 %v3432, %v3431
  %v4404 = vpack.c.b16 %v3434, %v3433
  %v4405 = vpack.c.b16 %v3436, %v3435
  %v4406 = vpack.c.b16 %v3438, %v3437
  %v4407 = vpack.c.b16 %v3440, %v3439
  %v4408 = vpack.c.b16 %v3442, %v3441
  %v4409 = vpack.c.b16 %v3444, %v3443
  %v4410 = vpack.c.b16 %v3446, %v3445
  %v4411 = vpack.c.b16 %v3448, %v3447
  %v4412 = vpack.c.b16 %v3450, %v3449
  %v4413 = vpack.c.b16 %v3452, %v3451
  %v4414 = vpack.c.b16 %v3454, %v3453
  %v4415 = vpack.c.b16 %v3456, %v3455
  %v4416 = vpack.c.b16 %v3458, %v3457
  %v4417 = vpack.c.b16 %v3460, %v3459
  %v4418 = vpack.c.b16 %v3462, %v3461
  %v4419 = vpack.c.b16 %v3464, %v3463
  %v4420 = vpack.c.b16 %v3466, %v3465
  %v4421 = vpack.c.b16 %v3468, %v3467
  %v4422 = vpack.c.b16 %v3470, %v3469
  %v4423 = vpack.c.b16 %v3472, %v3471
  %v4424 = vpack.c.b16 %v3474, %v3473
  %v4425 = vpack.c.b16 %v3476, %v3475
  %v4426 = vpack.c.b16 %v3478, %v3477
  %v4427 = vpack.c.b16 %v3480, %v3479
  %v4428 = vpack.c.b16 %v3482, %v3481
  %v4429 = vpack.c.b16 %v3484, %v3483
  %v4430 = vpack.c.b16 %v3486, %v3485
  %v4431 = vpack.c.b16 %v3488, %v3487
  %v4432 = vpack.c.b16 %v3490, %v3489
  %v4433 = vpack.c.b16 %v3492, %v3491
  %v4434 = vpack.c.b16 %v3494, %v3493
  %v4435 = vpack.c.b16 %v3496, %v3495
  %v4436 = vpack.c.b16 %v3498, %v3497
  %v4437 = vpack.c.b16 %v3500, %v3499
  %v4438 = vpack.c.b16 %v3502, %v3501
  %v4439 = vpack.c.b16 %v3504, %v3503
  %v4440 = vpack.c.b16 %v3506, %v3505
  %v4441 = vpack.c.b16 %v3508, %v3507
  %v4442 = vpack.c.b16 %v3510, %v3509
  %v4443 = vpack.c.b16 %v3512, %v3511
  %v4444 = vpack.c.b16 %v3514, %v3513
  %v4445 = vpack.c.b16 %v3516, %v3515
  %v4446 = vpack.c.b16 %v3518, %v3517
  %v4447 = vpack.c.b16 %v3520, %v3519
  %v4448 = vpack.c.b16 %v3522, %v3521
  %v4449 = vpack.c.b16 %v3524, %v3523
  %v4450 = vpack.c.b16 %v3526, %v3525
  %v4451 = vpack.c.b16 %v3528, %v3527
  %v4452 = vpack.c.b16 %v3530, %v3529
  %v4453 = vpack.c.b16 %v3532, %v3531
  %v4454 = vpack.c.b16 %v3534, %v3533
  %v4455 = vpack.c.b16 %v3536, %v3535
  %v4456 = vpack.c.b16 %v3538, %v3537
  %v4457 = vpack.c.b16 %v3540, %v3539
  %v4458 = vpack.c.b16 %v3542, %v3541
  %v4459 = vpack.c.b16 %v3544, %v3543
  %v4460 = vpack.c.b16 %v3546, %v3545
  %v4461 = vpack.c.b16 %v3548, %v3547
  %v4462 = vpack.c.b16 %v3550, %v3549
  %v4463 = vpack.c.b16 %v3552, %v3551
  %v4464 = vpack.c.b16 %v3554, %v3553
  %v4465 = vpack.c.b16 %v3556, %v3555
  %v4466 = vpack.c.b16 %v3558, %v3557
  %v4467 = vpack.c.b16 %v3560, %v3559
  %v4468 = vpack.c.b16 %v3562, %v3561
  %v4469 = vpack.c.b16 %v3564, %v3563
  %v4470 = vpack.c.b16 %v3566, %v3565
  %v4471 = vpack.c.b16 %v3568, %v3567
  %v4472 = vpack.c.b16 %v3570, %v3569
  %v4473 = vpack.c.b16 %v3572, %v3571
  %v4474 = vpack.c.b16 %v3574, %v3573
  %v4475 = vpack.c.b16 %v3576, %v3575
  %v4476 = vpack.c.b16 %v3578, %v3577
  %v4477 = vpack.c.b16 %v3580, %v3579
  %v4478 = vpack.c.b16 %v3582, %v3581
  %v4479 = vpack.c.b16 %v3584, %v3583
  %v4480 = vpack.c.b16 %v3586, %v3585
  %v4481 = vpack.c.b16 %v3588, %v3587
  %v4482 = vpack.c.b16 %v3590, %v3589
  %v4483 = vpack.c.b16 %v3592, %v3591
  %v4484 = vpack.c.b16 %v3594, %v3593
  %v4485 = vpack.c.b16 %v3596, %v3595
  %v4486 = vpack.c.b16 %v3598, %v3597
  %v4487 = vpack.c.b16 %v3600, %v3599
  %v4488 = vpack.c.b16 %v3602, %v3601
  %v4489 = vpack.c.b16 %v3604, %v3603
  %v4490 = vpack.c.b16 %v3606, %v3605
  %v4491 = vpack.c.b16 %v3608, %v3607
  %v4492 = vpack.c.b16 %v3610, %v3609
  %v4493 = vpack.c.b16 %v3612, %v3611
  %v4494 = vpack.c.b16 %v3614, %v3613
  %v4495 = vpack.c.b16 %v3616, %v3615
  %v4496 = vpack.c.b16 %v3618, %v3617
  %v4497 = vpack.c.b16 %v3620, %v3619
  %v4498 = vpack.c.b16 %v3622, %v3621
  %v4499 = vpack.c.b16 %v3624, %v3623
  %v4500 = vpack.c.b16 %v3626, %v3625
  %v4501 = vpack.c.b16 %v3628, %v3627
  %v4502 = vpack.c.b16 %v3630, %v3629
  %v4503 = vpack.c.b16 %v3632, %v3631
  %v4504 = vpack.c.b16 %v3634, %v3633
  %v4505 = vpack.c.b16 %v3636, %v3635
  %v4506 = vpack.c.b16 %v3638, %v3637
  %v4507 = vpack.c.b16 %v3640, %v3639
  %v4508 = vpack.c.b16 %v3642, %v3641
  %v4509 = vpack.c.b16 %v3644, %v3643
  %v4510 = vpack.c.b16 %v3646, %v3645
  %v4511 = vpack.c.b16 %v3648, %v3647
  %v4512 = vpack.c.b16 %v3650, %v3649
  %v4513 = vpack.c.b16 %v3652, %v3651
  %v4514 = vpack.c.b16 %v3654, %v3653
  %v4515 = vpack.c.b16 %v3656, %v3655
  %v4516 = vpack.c.b16 %v3658, %v3657
  %v4517 = vpack.c.b16 %v3660, %v3659
  %v4518 = vpack.c.b16 %v3662, %v3661
  %v4519 = vpack.c.b16 %v3664, %v3663
  %v4520 = vpack.c.b16 %v3666, %v3665
  %v4521 = vpack.c.b16 %v3668, %v3667
  %v4522 = vpack.c.b16 %v3670, %v3669
  %v4523 = vpack.c.b16 %v3672, %v3671
  %v4524 = vpack.c.b16 %v3674, %v3673
  %v4525 = vpack.c.b16 %v3676, %v3675
  %v4526 = vpack.c.b16 %v3678, %v3677
  %v4527 = vpack.c.b16 %v3680, %v3679
  %v4528 = vpack.c.b16 %v3682, %v3681
  %v4529 = vpack.c.b16 %v3684, %v3683
  %v4530 = vpack.c.b16 %v3686, %v3685
  %v4531 = vpack.c.b16 %v3688, %v3687
  %v4532 = vpack.c.b16 %v3690, %v3689
  %v4533 = vpack.c.b16 %v3692, %v3691
  %v4534 = vpack.c.b16 %v3694, %v3693
  %v4535 = vpack.c.b16 %v3696, %v3695
  %v4536 = vpack.c.b16 %v3698, %v3697
  %v4537 = vpack.c.b16 %v3700, %v3699
  %v4538 = vpack.c.b16 %v3702, %v3701
  %v4539 = vpack.c.b16 %v3704, %v3703
  %v4540 = vpack.c.b16 %v3706, %v3705
  %v4541 = vpack.c.b16 %v3708, %v3707
  %v4542 = vpack.c.b16 %v3710, %v3709
  %v4543 = vpack.c.b16 %v3712, %v3711
  %v4544 = vpack.c.b16 %v3714, %v3713
  %v4545 = vpack.c.b16 %v3716, %v3715
  %v4546 = vpack.c.b16 %v3718, %v3717
  %v4547 = vpack.c.b16 %v3720, %v3719
  %v4548 = vpack.c.b16 %v3722, %v3721
  %v4549 = vpack.c.b16 %v3724, %v3723
  %v4550 = vpack.c.b16 %v3726, %v3725
  %v4551 = vpack.c.b16 %v3728, %v3727
  %v4552 = vpack.c.b16 %v3730, %v3729
  %v4553 = vpack.c.b16 %v3732, %v3731
  %v4554 = vpack.c.b16 %v3734, %v3733
  %v4555 = vpack.c.b16 %v3736, %v3735
  %v4556 = vpack.c.b16 %v3738, %v3737
  %v4557 = vpack.c.b16 %v3740, %v3739
  %v4558 = vpack.c.b16 %v3742, %v3741
  %v4559 = vpack.c.b16 %v3744, %v3743
  %v4560 = vpack.c.b16 %v3746, %v3745
  %v4561 = vpack.c.b16 %v3748, %v3747
  %v4562 = vpack.c.b16 %v3750, %v3749
  %v4563 = vpack.c.b16 %v3752, %v3751
  %v4564 = vpack.c.b16 %v3754, %v3753
  %v4565 = vpack.c.b16 %v3756, %v3755
  %v4566 = vpack.c.b16 %v3758, %v3757
  %v4567 = vpack.c.b16 %v3760, %v3759
  %v4568 = vpack.c.b16 %v3762, %v3761
  %v4569 = vpack.c.b16 %v3764, %v3763
  %v4570 = vpack.c.b16 %v3766, %v3765
  %v4571 = vpack.c.b16 %v3768, %v3767
  %v4572 = vpack.c.b16 %v3770, %v3769
  %v4573 = vpack.c.b16 %v3772, %v3771
  %v4574 = vpack.c.b16 %v3774, %v3773
  %v4575 = vpack.c.b16 %v3776, %v3775
  %v4576 = vpack.c.b16 %v3778, %v3777
  %v4577 = vpack.c.b16 %v3780, %v3779
  %v4578 = vpack.c.b16 %v3782, %v3781
  %v4579 = vpack.c.b16 %v3784, %v3783
  %v4580 = vpack.c.b16 %v3786, %v3785
  %v4581 = vpack.c.b16 %v3788, %v3787
  %v4582 = vpack.c.b16 %v3790, %v3789
  %v4583 = vpack.c.b16 %v3792, %v3791
  %v4584 = vpack.c.b16 %v3794, %v3793
  %v4585 = vpack.c.b16 %v3796, %v3795
  %v4586 = vpack.c.b16 %v3798, %v3797
  %v4587 = vpack.c.b16 %v3800, %v3799
  %v4588 = vpack.c.b16 %v3802, %v3801
  %v4589 = vpack.c.b16 %v3804, %v3803
  %v4590 = vpack.c.b16 %v3806, %v3805
  %v4591 = vpack.c.b16 %v3808, %v3807
  %v4592 = vpack.c.b16 %v3810, %v3809
  %v4593 = vpack.c.b16 %v3812, %v3811
  %v4594 = vpack.c.b16 %v3814, %v3813
  %v4595 = vpack.c.b16 %v3816, %v3815
  %v4596 = vpack.c.b16 %v3818, %v3817
  %v4597 = vpack.c.b16 %v3820, %v3819
  %v4598 = vpack.c.b16 %v3822, %v3821
  %v4599 = vpack.c.b16 %v3824, %v3823
  %v4600 = vpack.c.b16 %v3826, %v3825
  %v4601 = vpack.c.b16 %v3828, %v3827
  %v4602 = vpack.c.b16 %v3830, %v3829
  %v4603 = vpack.c.b16 %v3832, %v3831
  %v4604 = vpack.c.b16 %v3834, %v3833
  %v4605 = vpack.c.b16 %v3836, %v3835
  %v4606 = vpack.c.b16 %v3838, %v3837
  %v4607 = vpack.c.b16 %v3840, %v3839
  %v4608 = vpack.c.b16 %v3842, %v3841
  %v4609 = vpack.c.b16 %v3844, %v3843
  %v4610 = vpack.c.b16 %v3846, %v3845
  %v4611 = vpack.c.b16 %v3848, %v3847
  %v4612 = vpack.c.b16 %v3850, %v3849
  %v4613 = vpack.c.b16 %v3852, %v3851
  %v4614 = vpack.c.b16 %v3854, %v3853
  %v4615 = vpack.c.b16 %v3856, %v3855
  %v4616 = vpack.c.b16 %v3858, %v3857
  %v4617 = vpack.c.b16 %v3860, %v3859
  %v4618 = vpack.c.b16 %v3862, %v3861
  %v4619 = vpack.c.b16 %v3864, %v3863
  %v4620 = vpack.c.b16 %v3866, %v3865
  %v4621 = vpack.c.b16 %v3868, %v3867
  %v4622 = vpack.c.b16 %v3870, %v3869
  %v4623 = vpack.c.b16 %v3872, %v3871
  %v4624 = vpack.c.b16 %v3874, %v3873
  %v4625 = vpack.c.b16 %v3876, %v3875
  %v4626 = vpack.c.b16 %v3878, %v3877
  %v4627 = vpack.c.b16 %v3880, %v3879
  %v4628 = vpack.c.b16 %v3882, %v3881
  %v4629 = vpack.c.b16 %v3884, %v3883
  %v4630 = vpack.c.b16 %v3886, %v3885
  %v4631 = vpack.c.b16 %v3888, %v3887
  %v4632 = vpack.c.b16 %v3890, %v3889
  %v4633 = vpack.c.b16 %v3892, %v3891
  %v4634 = vpack.c.b16 %v3894, %v3893
  %v4635 = vpack.c.b16 %v3896, %v3895
  %v4636 = vpack.c.b16 %v3898, %v3897
  %v4637 = vpack.c.b16 %v3900, %v3899
  %v4638 = vpack.c.b16 %v3902, %v3901
  %v4639 = vpack.c.b16 %v3904, %v3903
  %v4640 = vpack.c.b16 %v3906, %v3905
  %v4641 = vpack.c.b16 %v3908, %v3907
  %v4642 = vpack.c.b16 %v3910, %v3909
  %v4643 = vpack.c.b16 %v3912, %v3911
  %v4644 = vpack.c.b16 %v3914, %v3913
  %v4645 = vpack.c.b16 %v3916, %v3915
  %v4646 = vpack.c.b16 %v3918, %v3917
  %v4647 = vpack.c.b16 %v3920, %v3919
  %v4648 = vpack.c.b16 %v3922, %v3921
  %v4649 = vpack.c.b16 %v3924, %v3923
  %v4650 = vpack.c.b16 %v3926, %v3925
  %v4651 = vpack.c.b16 %v3928, %v3927
  %v4652 = vpack.c.b16 %v3930, %v3929
  %v4653 = vpack.c.b16 %v3932, %v3931
  %v4654 = vpack.c.b16 %v3934, %v3933
  %v4655 = vpack.c.b16 %v3936, %v3935
  %v4656 = vpack.c.b16 %v3938, %v3937
  %v4657 = vpack.c.b16 %v3940, %v3939
  %v4658 = vpack.c.b16 %v3942, %v3941
  %v4659 = vpack.c.b16 %v3944, %v3943
  %v4660 = vpack.c.b16 %v3946, %v3945
  %v4661 = vpack.c.b16 %v3948, %v3947
  %v4662 = vpack.c.b16 %v3950, %v3949
  %v4663 = vpack.c.b16 %v3952, %v3951
  %v4664 = vpack.c.b16 %v3954, %v3953
  %v4665 = vpack.c.b16 %v3956, %v3955
  %v4666 = vpack.c.b16 %v3958, %v3957
  %v4667 = vpack.c.b16 %v3960, %v3959
  %v4668 = vpack.c.b16 %v3962, %v3961
  %v4669 = vpack.c.b16 %v3964, %v3963
  %v4670 = vpack.c.b16 %v3966, %v3965
  %v4671 = vpack.c.b16 %v3968, %v3967
  %v4672 = vpack.c.b16 %v3970, %v3969
  %v4673 = vpack.c.b16 %v3972, %v3971
  %v4674 = vpack.c.b16 %v3974, %v3973
  %v4675 = vpack.c.b16 %v3976, %v3975
  %v4676 = vpack.c.b16 %v3978, %v3977
  %v4677 = vpack.c.b16 %v3980, %v3979
  %v4678 = vpack.c.b16 %v3982, %v3981
  %v4679 = vpack.c.b16 %v3984, %v3983
  %v4680 = vpack.c.b16 %v3986, %v3985
  %v4681 = vpack.c.b16 %v3988, %v3987
  %v4682 = vpack.c.b16 %v3990, %v3989
  %v4683 = vpack.c.b16 %v3992, %v3991
  %v4684 = vpack.c.b16 %v3994, %v3993
  %v4685 = vpack.c.b16 %v3996, %v3995
  %v4686 = vpack.c.b16 %v3998, %v3997
  %v4687 = vpack.c.b16 %v4000, %v3999
  %v4688 = vpack.c.b16 %v4002, %v4001
  %v4689 = vpack.c.b16 %v4004, %v4003
  %v4690 = vpack.c.b16 %v4006, %v4005
  %v4691 = vpack.c.b16 %v4008, %v4007
  %v4692 = vpack.c.b16 %v4010, %v4009
  %v4693 = vpack.c.b16 %v4012, %v4011
  %v4694 = vpack.c.b16 %v4014, %v4013
  %v4695 = vpack.c.b16 %v4016, %v4015
  %v4696 = vpack.c.b16 %v4018, %v4017
  %v4697 = vpack.c.b16 %v4020, %v4019
  %v4698 = vpack.c.b16 %v4022, %v4021
  %v4699 = vpack.c.b16 %v4024, %v4023
  %v4700 = vpack.c.b16 %v4026, %v4025
  %v4701 = vpack.c.b16 %v4028, %v4027
  %v4702 = vpack.c.b16 %v4030, %v4029
  %v4703 = vpack.c.b16 %v4032, %v4031
  %v4704 = vpack.c.b16 %v4034, %v4033
  %v4705 = vpack.c.b16 %v4036, %v4035
  %v4706 = vpack.c.b16 %v4038, %v4037
  %v4707 = vpack.c.b16 %v4040, %v4039
  %v4708 = vpack.c.b16 %v4042, %v4041
  %v4709 = vpack.c.b16 %v4044, %v4043
  %v4710 = vpack.c.b16 %v4046, %v4045
  %v4711 = vpack.c.b16 %v4048, %v4047
  %v4712 = vpack.c.b16 %v4050, %v4049
  %v4713 = vpack.c.b16 %v4052, %v4051
  %v4714 = vpack.c.b16 %v4054, %v4053
  %v4715 = vpack.c.b16 %v4056, %v4055
  %v4716 = vpack.c.b16 %v4058, %v4057
  %v4717 = vpack.c.b16 %v4060, %v4059
  %v4718 = vpack.c.b16 %v4062, %v4061
  %v4719 = vpack.c.b16 %v4064, %v4063
  %v4720 = vpack.c.b16 %v4066, %v4065
  %v4721 = vpack.c.b16 %v4068, %v4067
  %v4722 = vpack.c.b16 %v4070, %v4069
  %v4723 = vpack.c.b16 %v4072, %v4071
  %v4724 = vpack.c.b16 %v4074, %v4073
  %v4725 = vpack.c.b16 %v4076, %v4075
  %vm5375 = vcmask 130048
  %v5377 = vsel %vm5375, %v178, 0
  %5379 = vmatpush.bf16.msra.mxu0 %v4084
  %5380 = vmatpush.bf16.msra.mxu0 %v4083
  %5381 = vmatpush.bf16.msra.mxu0 %v4082
  %5382 = vmatpush.bf16.msra.mxu0 %v4081
  %5383 = vmatpush.bf16.msra.mxu0 %v4080
  %5384 = vmatpush.bf16.msra.mxu0 %v4079
  %5385 = vmatpush.bf16.msra.mxu0 %v4078
  %5386 = vmatpush.bf16.msra.mxu0 %v4077
  %5387 = vmatmul.bf16.gmra.mxu0 %v97
  %v5388 = vpop.f32.mrf.mxu0
  %v5389 = vadd.f32 %v1479, %v5388
  %v5390 = vpop.f32.mrf.mxu0
  %5391 = vdwg.mxu0
  %5392 = vmatpush.bf16.msra.mxu0 %v4092
  %5393 = vmatpush.bf16.msra.mxu0 %v4091
  %5394 = vmatpush.bf16.msra.mxu0 %v4090
  %5395 = vmatpush.bf16.msra.mxu0 %v4089
  %5396 = vmatpush.bf16.msra.mxu0 %v4088
  %5397 = vmatpush.bf16.msra.mxu0 %v4087
  %5398 = vmatpush.bf16.msra.mxu0 %v4086
  %5399 = vmatpush.bf16.msra.mxu0 %v4085
  %5400 = vmatmul.bf16.gmra.mxu0 %v98
  %v5401 = vpop.f32.mrf.mxu0
  %v5402 = vadd.f32 %v5389, %v5401
  %v5403 = vpop.f32.mrf.mxu0
  %5404 = vdwg.mxu0
  %5405 = vmatpush.bf16.msra.mxu0 %v4100
  %5406 = vmatpush.bf16.msra.mxu0 %v4099
  %5407 = vmatpush.bf16.msra.mxu0 %v4098
  %5408 = vmatpush.bf16.msra.mxu0 %v4097
  %5409 = vmatpush.bf16.msra.mxu0 %v4096
  %5410 = vmatpush.bf16.msra.mxu0 %v4095
  %5411 = vmatpush.bf16.msra.mxu0 %v4094
  %5412 = vmatpush.bf16.msra.mxu0 %v4093
  %5413 = vmatmul.bf16.gmra.mxu0 %v99
  %v5414 = vpop.f32.mrf.mxu0
  %v5415 = vadd.f32 %v5402, %v5414
  %v5416 = vpop.f32.mrf.mxu0
  %5417 = vdwg.mxu0
  %5418 = vmatpush.bf16.msra.mxu0 %v4108
  %5419 = vmatpush.bf16.msra.mxu0 %v4107
  %5420 = vmatpush.bf16.msra.mxu0 %v4106
  %5421 = vmatpush.bf16.msra.mxu0 %v4105
  %5422 = vmatpush.bf16.msra.mxu0 %v4104
  %5423 = vmatpush.bf16.msra.mxu0 %v4103
  %5424 = vmatpush.bf16.msra.mxu0 %v4102
  %5425 = vmatpush.bf16.msra.mxu0 %v4101
  %5426 = vmatmul.bf16.gmra.mxu0 %v100
  %v5427 = vpop.f32.mrf.mxu0
  %v5428 = vadd.f32 %v5415, %v5427
  %v5429 = vpop.f32.mrf.mxu0
  %5430 = vdwg.mxu0
  %5431 = vmatpush.bf16.msra.mxu0 %v4116
  %5432 = vmatpush.bf16.msra.mxu0 %v4115
  %5433 = vmatpush.bf16.msra.mxu0 %v4114
  %5434 = vmatpush.bf16.msra.mxu0 %v4113
  %5435 = vmatpush.bf16.msra.mxu0 %v4112
  %5436 = vmatpush.bf16.msra.mxu0 %v4111
  %5437 = vmatpush.bf16.msra.mxu0 %v4110
  %5438 = vmatpush.bf16.msra.mxu0 %v4109
  %5439 = vmatmul.bf16.gmra.mxu0 %v101
  %v5440 = vpop.f32.mrf.mxu0
  %v5441 = vadd.f32 %v5428, %v5440
  %v5442 = vpop.f32.mrf.mxu0
  %5443 = vdwg.mxu0
  %5444 = vmatpush.bf16.msra.mxu0 %v4124
  %5445 = vmatpush.bf16.msra.mxu0 %v4123
  %5446 = vmatpush.bf16.msra.mxu0 %v4122
  %5447 = vmatpush.bf16.msra.mxu0 %v4121
  %5448 = vmatpush.bf16.msra.mxu0 %v4120
  %5449 = vmatpush.bf16.msra.mxu0 %v4119
  %5450 = vmatpush.bf16.msra.mxu0 %v4118
  %5451 = vmatpush.bf16.msra.mxu0 %v4117
  %5452 = vmatmul.bf16.gmra.mxu0 %v102
  %v5453 = vpop.f32.mrf.mxu0
  %v5454 = vadd.f32 %v5441, %v5453
  %v5455 = vpop.f32.mrf.mxu0
  %5456 = vdwg.mxu0
  %5457 = vmatpush.bf16.msra.mxu0 %v4132
  %5458 = vmatpush.bf16.msra.mxu0 %v4131
  %5459 = vmatpush.bf16.msra.mxu0 %v4130
  %5460 = vmatpush.bf16.msra.mxu0 %v4129
  %5461 = vmatpush.bf16.msra.mxu0 %v4128
  %5462 = vmatpush.bf16.msra.mxu0 %v4127
  %5463 = vmatpush.bf16.msra.mxu0 %v4126
  %5464 = vmatpush.bf16.msra.mxu0 %v4125
  %5465 = vmatmul.bf16.gmra.mxu0 %v103
  %v5466 = vpop.f32.mrf.mxu0
  %v5467 = vadd.f32 %v5454, %v5466
  %v5468 = vpop.f32.mrf.mxu0
  %5469 = vdwg.mxu0
  %5470 = vmatpush.bf16.msra.mxu0 %v4140
  %5471 = vmatpush.bf16.msra.mxu0 %v4139
  %5472 = vmatpush.bf16.msra.mxu0 %v4138
  %5473 = vmatpush.bf16.msra.mxu0 %v4137
  %5474 = vmatpush.bf16.msra.mxu0 %v4136
  %5475 = vmatpush.bf16.msra.mxu0 %v4135
  %5476 = vmatpush.bf16.msra.mxu0 %v4134
  %5477 = vmatpush.bf16.msra.mxu0 %v4133
  %5478 = vmatmul.bf16.gmra.mxu0 %v104
  %v5479 = vpop.f32.mrf.mxu0
  %v5480 = vadd.f32 %v5467, %v5479
  %v5481 = vpop.f32.mrf.mxu0
  %5482 = vdwg.mxu0
  %5483 = vmatpush.bf16.msra.mxu0 %v4148
  %5484 = vmatpush.bf16.msra.mxu0 %v4147
  %5485 = vmatpush.bf16.msra.mxu0 %v4146
  %5486 = vmatpush.bf16.msra.mxu0 %v4145
  %5487 = vmatpush.bf16.msra.mxu0 %v4144
  %5488 = vmatpush.bf16.msra.mxu0 %v4143
  %5489 = vmatpush.bf16.msra.mxu0 %v4142
  %5490 = vmatpush.bf16.msra.mxu0 %v4141
  %5491 = vmatmul.bf16.gmra.mxu0 %v105
  %v5492 = vpop.f32.mrf.mxu0
  %v5493 = vadd.f32 %v5480, %v5492
  %v5494 = vpop.f32.mrf.mxu0
  %5495 = vdwg.mxu0
  %5496 = vmatpush.bf16.msra.mxu0 %v4156
  %5497 = vmatpush.bf16.msra.mxu0 %v4155
  %5498 = vmatpush.bf16.msra.mxu0 %v4154
  %5499 = vmatpush.bf16.msra.mxu0 %v4153
  %5500 = vmatpush.bf16.msra.mxu0 %v4152
  %5501 = vmatpush.bf16.msra.mxu0 %v4151
  %5502 = vmatpush.bf16.msra.mxu0 %v4150
  %5503 = vmatpush.bf16.msra.mxu0 %v4149
  %5504 = vmatmul.bf16.gmra.mxu0 %v106
  %v5505 = vpop.f32.mrf.mxu0
  %v5506 = vadd.f32 %v5493, %v5505
  %v5507 = vpop.f32.mrf.mxu0
  %5508 = vdwg.mxu0
  %5509 = vmatpush.bf16.msra.mxu0 %v4164
  %5510 = vmatpush.bf16.msra.mxu0 %v4163
  %5511 = vmatpush.bf16.msra.mxu0 %v4162
  %5512 = vmatpush.bf16.msra.mxu0 %v4161
  %5513 = vmatpush.bf16.msra.mxu0 %v4160
  %5514 = vmatpush.bf16.msra.mxu0 %v4159
  %5515 = vmatpush.bf16.msra.mxu0 %v4158
  %5516 = vmatpush.bf16.msra.mxu0 %v4157
  %5517 = vmatmul.bf16.gmra.mxu0 %v107
  %v5518 = vpop.f32.mrf.mxu0
  %v5519 = vadd.f32 %v5506, %v5518
  %v5520 = vpop.f32.mrf.mxu0
  %5521 = vdwg.mxu0
  %5522 = vmatpush.bf16.msra.mxu0 %v4172
  %5523 = vmatpush.bf16.msra.mxu0 %v4171
  %5524 = vmatpush.bf16.msra.mxu0 %v4170
  %5525 = vmatpush.bf16.msra.mxu0 %v4169
  %5526 = vmatpush.bf16.msra.mxu0 %v4168
  %5527 = vmatpush.bf16.msra.mxu0 %v4167
  %5528 = vmatpush.bf16.msra.mxu0 %v4166
  %5529 = vmatpush.bf16.msra.mxu0 %v4165
  %5530 = vmatmul.bf16.gmra.mxu0 %v108
  %v5531 = vpop.f32.mrf.mxu0
  %v5532 = vadd.f32 %v5519, %v5531
  %v5533 = vpop.f32.mrf.mxu0
  %5534 = vdwg.mxu0
  %5535 = vmatpush.bf16.msra.mxu0 %v4180
  %5536 = vmatpush.bf16.msra.mxu0 %v4179
  %5537 = vmatpush.bf16.msra.mxu0 %v4178
  %5538 = vmatpush.bf16.msra.mxu0 %v4177
  %5539 = vmatpush.bf16.msra.mxu0 %v4176
  %5540 = vmatpush.bf16.msra.mxu0 %v4175
  %5541 = vmatpush.bf16.msra.mxu0 %v4174
  %5542 = vmatpush.bf16.msra.mxu0 %v4173
  %5543 = vmatmul.bf16.gmra.mxu0 %v109
  %v5544 = vpop.f32.mrf.mxu0
  %v5545 = vadd.f32 %v5532, %v5544
  %v5546 = vpop.f32.mrf.mxu0
  %5547 = vdwg.mxu0
  %5548 = vmatpush.bf16.msra.mxu0 %v4188
  %5549 = vmatpush.bf16.msra.mxu0 %v4187
  %5550 = vmatpush.bf16.msra.mxu0 %v4186
  %5551 = vmatpush.bf16.msra.mxu0 %v4185
  %5552 = vmatpush.bf16.msra.mxu0 %v4184
  %5553 = vmatpush.bf16.msra.mxu0 %v4183
  %5554 = vmatpush.bf16.msra.mxu0 %v4182
  %5555 = vmatpush.bf16.msra.mxu0 %v4181
  %5556 = vmatmul.bf16.gmra.mxu0 %v110
  %v5557 = vpop.f32.mrf.mxu0
  %v5558 = vadd.f32 %v5545, %v5557
  %v5559 = vpop.f32.mrf.mxu0
  %5560 = vdwg.mxu0
  %5561 = vmatpush.bf16.msra.mxu0 %v4196
  %5562 = vmatpush.bf16.msra.mxu0 %v4195
  %5563 = vmatpush.bf16.msra.mxu0 %v4194
  %5564 = vmatpush.bf16.msra.mxu0 %v4193
  %5565 = vmatpush.bf16.msra.mxu0 %v4192
  %5566 = vmatpush.bf16.msra.mxu0 %v4191
  %5567 = vmatpush.bf16.msra.mxu0 %v4190
  %5568 = vmatpush.bf16.msra.mxu0 %v4189
  %5569 = vmatmul.bf16.gmra.mxu0 %v111
  %v5570 = vpop.f32.mrf.mxu0
  %v5571 = vadd.f32 %v5558, %v5570
  %v5572 = vpop.f32.mrf.mxu0
  %5573 = vdwg.mxu0
  %5574 = vmatpush.bf16.msra.mxu0 %v4204
  %5575 = vmatpush.bf16.msra.mxu0 %v4203
  %5576 = vmatpush.bf16.msra.mxu0 %v4202
  %5577 = vmatpush.bf16.msra.mxu0 %v4201
  %5578 = vmatpush.bf16.msra.mxu0 %v4200
  %5579 = vmatpush.bf16.msra.mxu0 %v4199
  %5580 = vmatpush.bf16.msra.mxu0 %v4198
  %5581 = vmatpush.bf16.msra.mxu0 %v4197
  %5582 = vmatmul.bf16.gmra.mxu0 %v112
  %v5583 = vpop.f32.mrf.mxu0
  %v5584 = vadd.f32 %v5571, %v5583
  %v5585 = vpop.f32.mrf.mxu0
  %5586 = vdwg.mxu0
  %5587 = vmatpush.bf16.msra.mxu0 %v4212
  %5588 = vmatpush.bf16.msra.mxu0 %v4211
  %5589 = vmatpush.bf16.msra.mxu0 %v4210
  %5590 = vmatpush.bf16.msra.mxu0 %v4209
  %5591 = vmatpush.bf16.msra.mxu0 %v4208
  %5592 = vmatpush.bf16.msra.mxu0 %v4207
  %5593 = vmatpush.bf16.msra.mxu0 %v4206
  %5594 = vmatpush.bf16.msra.mxu0 %v4205
  %5595 = vmatmul.bf16.gmra.mxu0 %v113
  %v5596 = vpop.f32.mrf.mxu0
  %v5597 = vadd.f32 %v5584, %v5596
  %v5598 = vpop.f32.mrf.mxu0
  %5599 = vdwg.mxu0
  %5600 = vmatpush.bf16.msra.mxu0 %v4220
  %5601 = vmatpush.bf16.msra.mxu0 %v4219
  %5602 = vmatpush.bf16.msra.mxu0 %v4218
  %5603 = vmatpush.bf16.msra.mxu0 %v4217
  %5604 = vmatpush.bf16.msra.mxu0 %v4216
  %5605 = vmatpush.bf16.msra.mxu0 %v4215
  %5606 = vmatpush.bf16.msra.mxu0 %v4214
  %5607 = vmatpush.bf16.msra.mxu0 %v4213
  %5608 = vmatmul.bf16.gmra.mxu0 %v114
  %v5609 = vpop.f32.mrf.mxu0
  %v5610 = vadd.f32 %v5597, %v5609
  %v5611 = vpop.f32.mrf.mxu0
  %5612 = vdwg.mxu0
  %5613 = vmatpush.bf16.msra.mxu0 %v4228
  %5614 = vmatpush.bf16.msra.mxu0 %v4227
  %5615 = vmatpush.bf16.msra.mxu0 %v4226
  %5616 = vmatpush.bf16.msra.mxu0 %v4225
  %5617 = vmatpush.bf16.msra.mxu0 %v4224
  %5618 = vmatpush.bf16.msra.mxu0 %v4223
  %5619 = vmatpush.bf16.msra.mxu0 %v4222
  %5620 = vmatpush.bf16.msra.mxu0 %v4221
  %5621 = vmatmul.bf16.gmra.mxu0 %v115
  %v5622 = vpop.f32.mrf.mxu0
  %v5623 = vadd.f32 %v5610, %v5622
  %v5624 = vpop.f32.mrf.mxu0
  %5625 = vdwg.mxu0
  %5626 = vmatpush.bf16.msra.mxu0 %v4236
  %5627 = vmatpush.bf16.msra.mxu0 %v4235
  %5628 = vmatpush.bf16.msra.mxu0 %v4234
  %5629 = vmatpush.bf16.msra.mxu0 %v4233
  %5630 = vmatpush.bf16.msra.mxu0 %v4232
  %5631 = vmatpush.bf16.msra.mxu0 %v4231
  %5632 = vmatpush.bf16.msra.mxu0 %v4230
  %5633 = vmatpush.bf16.msra.mxu0 %v4229
  %5634 = vmatmul.bf16.gmra.mxu0 %v116
  %v5635 = vpop.f32.mrf.mxu0
  %v5636 = vadd.f32 %v5623, %v5635
  %v5637 = vpop.f32.mrf.mxu0
  %5638 = vdwg.mxu0
  %5639 = vmatpush.bf16.msra.mxu0 %v4244
  %5640 = vmatpush.bf16.msra.mxu0 %v4243
  %5641 = vmatpush.bf16.msra.mxu0 %v4242
  %5642 = vmatpush.bf16.msra.mxu0 %v4241
  %5643 = vmatpush.bf16.msra.mxu0 %v4240
  %5644 = vmatpush.bf16.msra.mxu0 %v4239
  %5645 = vmatpush.bf16.msra.mxu0 %v4238
  %5646 = vmatpush.bf16.msra.mxu0 %v4237
  %5647 = vmatmul.bf16.gmra.mxu0 %v117
  %v5648 = vpop.f32.mrf.mxu0
  %v5649 = vadd.f32 %v5636, %v5648
  %v5650 = vpop.f32.mrf.mxu0
  %5651 = vdwg.mxu0
  %5652 = vmatpush.bf16.msra.mxu0 %v4252
  %5653 = vmatpush.bf16.msra.mxu0 %v4251
  %5654 = vmatpush.bf16.msra.mxu0 %v4250
  %5655 = vmatpush.bf16.msra.mxu0 %v4249
  %5656 = vmatpush.bf16.msra.mxu0 %v4248
  %5657 = vmatpush.bf16.msra.mxu0 %v4247
  %5658 = vmatpush.bf16.msra.mxu0 %v4246
  %5659 = vmatpush.bf16.msra.mxu0 %v4245
  %5660 = vmatmul.bf16.gmra.mxu0 %v118
  %v5661 = vpop.f32.mrf.mxu0
  %v5662 = vadd.f32 %v5649, %v5661
  %v5663 = vpop.f32.mrf.mxu0
  %5664 = vdwg.mxu0
  %5665 = vmatpush.bf16.msra.mxu0 %v4260
  %5666 = vmatpush.bf16.msra.mxu0 %v4259
  %5667 = vmatpush.bf16.msra.mxu0 %v4258
  %5668 = vmatpush.bf16.msra.mxu0 %v4257
  %5669 = vmatpush.bf16.msra.mxu0 %v4256
  %5670 = vmatpush.bf16.msra.mxu0 %v4255
  %5671 = vmatpush.bf16.msra.mxu0 %v4254
  %5672 = vmatpush.bf16.msra.mxu0 %v4253
  %5673 = vmatmul.bf16.gmra.mxu0 %v119
  %v5674 = vpop.f32.mrf.mxu0
  %v5675 = vadd.f32 %v5662, %v5674
  %v5676 = vpop.f32.mrf.mxu0
  %5677 = vdwg.mxu0
  %5678 = vmatpush.bf16.msra.mxu0 %v4268
  %5679 = vmatpush.bf16.msra.mxu0 %v4267
  %5680 = vmatpush.bf16.msra.mxu0 %v4266
  %5681 = vmatpush.bf16.msra.mxu0 %v4265
  %5682 = vmatpush.bf16.msra.mxu0 %v4264
  %5683 = vmatpush.bf16.msra.mxu0 %v4263
  %5684 = vmatpush.bf16.msra.mxu0 %v4262
  %5685 = vmatpush.bf16.msra.mxu0 %v4261
  %5686 = vmatmul.bf16.gmra.mxu0 %v120
  %v5687 = vpop.f32.mrf.mxu0
  %v5688 = vadd.f32 %v5675, %v5687
  %v5689 = vpop.f32.mrf.mxu0
  %5690 = vdwg.mxu0
  %5691 = vmatpush.bf16.msra.mxu0 %v4276
  %5692 = vmatpush.bf16.msra.mxu0 %v4275
  %5693 = vmatpush.bf16.msra.mxu0 %v4274
  %5694 = vmatpush.bf16.msra.mxu0 %v4273
  %5695 = vmatpush.bf16.msra.mxu0 %v4272
  %5696 = vmatpush.bf16.msra.mxu0 %v4271
  %5697 = vmatpush.bf16.msra.mxu0 %v4270
  %5698 = vmatpush.bf16.msra.mxu0 %v4269
  %5699 = vmatmul.bf16.gmra.mxu0 %v121
  %v5700 = vpop.f32.mrf.mxu0
  %v5701 = vadd.f32 %v5688, %v5700
  %v5702 = vpop.f32.mrf.mxu0
  %5703 = vdwg.mxu0
  %5704 = vmatpush.bf16.msra.mxu0 %v4284
  %5705 = vmatpush.bf16.msra.mxu0 %v4283
  %5706 = vmatpush.bf16.msra.mxu0 %v4282
  %5707 = vmatpush.bf16.msra.mxu0 %v4281
  %5708 = vmatpush.bf16.msra.mxu0 %v4280
  %5709 = vmatpush.bf16.msra.mxu0 %v4279
  %5710 = vmatpush.bf16.msra.mxu0 %v4278
  %5711 = vmatpush.bf16.msra.mxu0 %v4277
  %5712 = vmatmul.bf16.gmra.mxu0 %v122
  %v5713 = vpop.f32.mrf.mxu0
  %v5714 = vadd.f32 %v5701, %v5713
  %v5715 = vpop.f32.mrf.mxu0
  %5716 = vdwg.mxu0
  %5717 = vmatpush.bf16.msra.mxu0 %v4292
  %5718 = vmatpush.bf16.msra.mxu0 %v4291
  %5719 = vmatpush.bf16.msra.mxu0 %v4290
  %5720 = vmatpush.bf16.msra.mxu0 %v4289
  %5721 = vmatpush.bf16.msra.mxu0 %v4288
  %5722 = vmatpush.bf16.msra.mxu0 %v4287
  %5723 = vmatpush.bf16.msra.mxu0 %v4286
  %5724 = vmatpush.bf16.msra.mxu0 %v4285
  %5725 = vmatmul.bf16.gmra.mxu0 %v123
  %v5726 = vpop.f32.mrf.mxu0
  %v5727 = vadd.f32 %v5714, %v5726
  %v5728 = vpop.f32.mrf.mxu0
  %5729 = vdwg.mxu0
  %5730 = vmatpush.bf16.msra.mxu0 %v4300
  %5731 = vmatpush.bf16.msra.mxu0 %v4299
  %5732 = vmatpush.bf16.msra.mxu0 %v4298
  %5733 = vmatpush.bf16.msra.mxu0 %v4297
  %5734 = vmatpush.bf16.msra.mxu0 %v4296
  %5735 = vmatpush.bf16.msra.mxu0 %v4295
  %5736 = vmatpush.bf16.msra.mxu0 %v4294
  %5737 = vmatpush.bf16.msra.mxu0 %v4293
  %5738 = vmatmul.bf16.gmra.mxu0 %v124
  %v5739 = vpop.f32.mrf.mxu0
  %v5740 = vadd.f32 %v5727, %v5739
  %v5741 = vpop.f32.mrf.mxu0
  %5742 = vdwg.mxu0
  %5743 = vmatpush.bf16.msra.mxu0 %v4308
  %5744 = vmatpush.bf16.msra.mxu0 %v4307
  %5745 = vmatpush.bf16.msra.mxu0 %v4306
  %5746 = vmatpush.bf16.msra.mxu0 %v4305
  %5747 = vmatpush.bf16.msra.mxu0 %v4304
  %5748 = vmatpush.bf16.msra.mxu0 %v4303
  %5749 = vmatpush.bf16.msra.mxu0 %v4302
  %5750 = vmatpush.bf16.msra.mxu0 %v4301
  %5751 = vmatmul.bf16.gmra.mxu0 %v125
  %v5752 = vpop.f32.mrf.mxu0
  %v5753 = vadd.f32 %v5740, %v5752
  %v5754 = vpop.f32.mrf.mxu0
  %5755 = vdwg.mxu0
  %5756 = vmatpush.bf16.msra.mxu0 %v4316
  %5757 = vmatpush.bf16.msra.mxu0 %v4315
  %5758 = vmatpush.bf16.msra.mxu0 %v4314
  %5759 = vmatpush.bf16.msra.mxu0 %v4313
  %5760 = vmatpush.bf16.msra.mxu0 %v4312
  %5761 = vmatpush.bf16.msra.mxu0 %v4311
  %5762 = vmatpush.bf16.msra.mxu0 %v4310
  %5763 = vmatpush.bf16.msra.mxu0 %v4309
  %5764 = vmatmul.bf16.gmra.mxu0 %v126
  %v5765 = vpop.f32.mrf.mxu0
  %v5766 = vadd.f32 %v5753, %v5765
  %v5767 = vpop.f32.mrf.mxu0
  %5768 = vdwg.mxu0
  %5769 = vmatpush.bf16.msra.mxu0 %v4324
  %5770 = vmatpush.bf16.msra.mxu0 %v4323
  %5771 = vmatpush.bf16.msra.mxu0 %v4322
  %5772 = vmatpush.bf16.msra.mxu0 %v4321
  %5773 = vmatpush.bf16.msra.mxu0 %v4320
  %5774 = vmatpush.bf16.msra.mxu0 %v4319
  %5775 = vmatpush.bf16.msra.mxu0 %v4318
  %5776 = vmatpush.bf16.msra.mxu0 %v4317
  %5777 = vmatmul.bf16.gmra.mxu0 %v127
  %v5778 = vpop.f32.mrf.mxu0
  %v5779 = vadd.f32 %v5766, %v5778
  %v5780 = vpop.f32.mrf.mxu0
  %5781 = vdwg.mxu0
  %5782 = vmatpush.bf16.msra.mxu0 %v4332
  %5783 = vmatpush.bf16.msra.mxu0 %v4331
  %5784 = vmatpush.bf16.msra.mxu0 %v4330
  %5785 = vmatpush.bf16.msra.mxu0 %v4329
  %5786 = vmatpush.bf16.msra.mxu0 %v4328
  %5787 = vmatpush.bf16.msra.mxu0 %v4327
  %5788 = vmatpush.bf16.msra.mxu0 %v4326
  %5789 = vmatpush.bf16.msra.mxu0 %v4325
  %5790 = vmatmul.bf16.gmra.mxu0 %v128
  %v5791 = vpop.f32.mrf.mxu0
  %v5792 = vadd.f32 %v5779, %v5791
  %v5793 = vpop.f32.mrf.mxu0
  %5794 = vdwg.mxu0
  %5795 = vmatpush.bf16.msra.mxu0 %v4340
  %5796 = vmatpush.bf16.msra.mxu0 %v4339
  %5797 = vmatpush.bf16.msra.mxu0 %v4338
  %5798 = vmatpush.bf16.msra.mxu0 %v4337
  %5799 = vmatpush.bf16.msra.mxu0 %v4336
  %5800 = vmatpush.bf16.msra.mxu0 %v4335
  %5801 = vmatpush.bf16.msra.mxu0 %v4334
  %5802 = vmatpush.bf16.msra.mxu0 %v4333
  %5803 = vmatmul.bf16.gmra.mxu0 %v129
  %v5804 = vpop.f32.mrf.mxu0
  %v5805 = vadd.f32 %v5792, %v5804
  %v5806 = vpop.f32.mrf.mxu0
  %5807 = vdwg.mxu0
  %5808 = vmatpush.bf16.msra.mxu0 %v4348
  %5809 = vmatpush.bf16.msra.mxu0 %v4347
  %5810 = vmatpush.bf16.msra.mxu0 %v4346
  %5811 = vmatpush.bf16.msra.mxu0 %v4345
  %5812 = vmatpush.bf16.msra.mxu0 %v4344
  %5813 = vmatpush.bf16.msra.mxu0 %v4343
  %5814 = vmatpush.bf16.msra.mxu0 %v4342
  %5815 = vmatpush.bf16.msra.mxu0 %v4341
  %5816 = vmatmul.bf16.gmra.mxu0 %v130
  %v5817 = vpop.f32.mrf.mxu0
  %v5818 = vadd.f32 %v5805, %v5817
  %v5819 = vpop.f32.mrf.mxu0
  %5820 = vdwg.mxu0
  %5821 = vmatpush.bf16.msra.mxu0 %v4356
  %5822 = vmatpush.bf16.msra.mxu0 %v4355
  %5823 = vmatpush.bf16.msra.mxu0 %v4354
  %5824 = vmatpush.bf16.msra.mxu0 %v4353
  %5825 = vmatpush.bf16.msra.mxu0 %v4352
  %5826 = vmatpush.bf16.msra.mxu0 %v4351
  %5827 = vmatpush.bf16.msra.mxu0 %v4350
  %5828 = vmatpush.bf16.msra.mxu0 %v4349
  %5829 = vmatmul.bf16.gmra.mxu0 %v131
  %v5830 = vpop.f32.mrf.mxu0
  %v5831 = vadd.f32 %v5818, %v5830
  %v5832 = vpop.f32.mrf.mxu0
  %5833 = vdwg.mxu0
  %5834 = vmatpush.bf16.msra.mxu0 %v4364
  %5835 = vmatpush.bf16.msra.mxu0 %v4363
  %5836 = vmatpush.bf16.msra.mxu0 %v4362
  %5837 = vmatpush.bf16.msra.mxu0 %v4361
  %5838 = vmatpush.bf16.msra.mxu0 %v4360
  %5839 = vmatpush.bf16.msra.mxu0 %v4359
  %5840 = vmatpush.bf16.msra.mxu0 %v4358
  %5841 = vmatpush.bf16.msra.mxu0 %v4357
  %5842 = vmatmul.bf16.gmra.mxu0 %v132
  %v5843 = vpop.f32.mrf.mxu0
  %v5844 = vadd.f32 %v5831, %v5843
  %v5845 = vpop.f32.mrf.mxu0
  %5846 = vdwg.mxu0
  %5847 = vmatpush.bf16.msra.mxu0 %v4372
  %5848 = vmatpush.bf16.msra.mxu0 %v4371
  %5849 = vmatpush.bf16.msra.mxu0 %v4370
  %5850 = vmatpush.bf16.msra.mxu0 %v4369
  %5851 = vmatpush.bf16.msra.mxu0 %v4368
  %5852 = vmatpush.bf16.msra.mxu0 %v4367
  %5853 = vmatpush.bf16.msra.mxu0 %v4366
  %5854 = vmatpush.bf16.msra.mxu0 %v4365
  %5855 = vmatmul.bf16.gmra.mxu0 %v133
  %v5856 = vpop.f32.mrf.mxu0
  %v5857 = vadd.f32 %v5844, %v5856
  %v5858 = vpop.f32.mrf.mxu0
  %5859 = vdwg.mxu0
  %5860 = vmatpush.bf16.msra.mxu0 %v4380
  %5861 = vmatpush.bf16.msra.mxu0 %v4379
  %5862 = vmatpush.bf16.msra.mxu0 %v4378
  %5863 = vmatpush.bf16.msra.mxu0 %v4377
  %5864 = vmatpush.bf16.msra.mxu0 %v4376
  %5865 = vmatpush.bf16.msra.mxu0 %v4375
  %5866 = vmatpush.bf16.msra.mxu0 %v4374
  %5867 = vmatpush.bf16.msra.mxu0 %v4373
  %5868 = vmatmul.bf16.gmra.mxu0 %v134
  %v5869 = vpop.f32.mrf.mxu0
  %v5870 = vadd.f32 %v5857, %v5869
  %v5871 = vpop.f32.mrf.mxu0
  %5872 = vdwg.mxu0
  %5873 = vmatpush.bf16.msra.mxu0 %v4388
  %5874 = vmatpush.bf16.msra.mxu0 %v4387
  %5875 = vmatpush.bf16.msra.mxu0 %v4386
  %5876 = vmatpush.bf16.msra.mxu0 %v4385
  %5877 = vmatpush.bf16.msra.mxu0 %v4384
  %5878 = vmatpush.bf16.msra.mxu0 %v4383
  %5879 = vmatpush.bf16.msra.mxu0 %v4382
  %5880 = vmatpush.bf16.msra.mxu0 %v4381
  %5881 = vmatmul.bf16.gmra.mxu0 %v135
  %v5882 = vpop.f32.mrf.mxu0
  %v5883 = vadd.f32 %v5870, %v5882
  %v5884 = vpop.f32.mrf.mxu0
  %5885 = vdwg.mxu0
  %5886 = vmatpush.bf16.msra.mxu0 %v4396
  %5887 = vmatpush.bf16.msra.mxu0 %v4395
  %5888 = vmatpush.bf16.msra.mxu0 %v4394
  %5889 = vmatpush.bf16.msra.mxu0 %v4393
  %5890 = vmatpush.bf16.msra.mxu0 %v4392
  %5891 = vmatpush.bf16.msra.mxu0 %v4391
  %5892 = vmatpush.bf16.msra.mxu0 %v4390
  %5893 = vmatpush.bf16.msra.mxu0 %v4389
  %5894 = vmatmul.bf16.gmra.mxu0 %v136
  %v5895 = vpop.f32.mrf.mxu0
  %v5896 = vadd.f32 %v5883, %v5895
  %v5897 = vpop.f32.mrf.mxu0
  %5898 = vdwg.mxu0
  %5899 = vmatpush.bf16.msra.mxu0 %v4404
  %5900 = vmatpush.bf16.msra.mxu0 %v4403
  %5901 = vmatpush.bf16.msra.mxu0 %v4402
  %5902 = vmatpush.bf16.msra.mxu0 %v4401
  %5903 = vmatpush.bf16.msra.mxu0 %v4400
  %5904 = vmatpush.bf16.msra.mxu0 %v4399
  %5905 = vmatpush.bf16.msra.mxu0 %v4398
  %5906 = vmatpush.bf16.msra.mxu0 %v4397
  %5907 = vmatmul.bf16.gmra.mxu0 %v137
  %v5908 = vpop.f32.mrf.mxu0
  %v5909 = vadd.f32 %v5896, %v5908
  %v5910 = vpop.f32.mrf.mxu0
  %5911 = vdwg.mxu0
  %5912 = vmatpush.bf16.msra.mxu0 %v4412
  %5913 = vmatpush.bf16.msra.mxu0 %v4411
  %5914 = vmatpush.bf16.msra.mxu0 %v4410
  %5915 = vmatpush.bf16.msra.mxu0 %v4409
  %5916 = vmatpush.bf16.msra.mxu0 %v4408
  %5917 = vmatpush.bf16.msra.mxu0 %v4407
  %5918 = vmatpush.bf16.msra.mxu0 %v4406
  %5919 = vmatpush.bf16.msra.mxu0 %v4405
  %5920 = vmatmul.bf16.gmra.mxu0 %v138
  %v5921 = vpop.f32.mrf.mxu0
  %v5922 = vadd.f32 %v5909, %v5921
  %v5923 = vpop.f32.mrf.mxu0
  %5924 = vdwg.mxu0
  %5925 = vmatpush.bf16.msra.mxu0 %v4420
  %5926 = vmatpush.bf16.msra.mxu0 %v4419
  %5927 = vmatpush.bf16.msra.mxu0 %v4418
  %5928 = vmatpush.bf16.msra.mxu0 %v4417
  %5929 = vmatpush.bf16.msra.mxu0 %v4416
  %5930 = vmatpush.bf16.msra.mxu0 %v4415
  %5931 = vmatpush.bf16.msra.mxu0 %v4414
  %5932 = vmatpush.bf16.msra.mxu0 %v4413
  %5933 = vmatmul.bf16.gmra.mxu0 %v139
  %v5934 = vpop.f32.mrf.mxu0
  %v5935 = vadd.f32 %v5922, %v5934
  %v5936 = vpop.f32.mrf.mxu0
  %5937 = vdwg.mxu0
  %5938 = vmatpush.bf16.msra.mxu0 %v4428
  %5939 = vmatpush.bf16.msra.mxu0 %v4427
  %5940 = vmatpush.bf16.msra.mxu0 %v4426
  %5941 = vmatpush.bf16.msra.mxu0 %v4425
  %5942 = vmatpush.bf16.msra.mxu0 %v4424
  %5943 = vmatpush.bf16.msra.mxu0 %v4423
  %5944 = vmatpush.bf16.msra.mxu0 %v4422
  %5945 = vmatpush.bf16.msra.mxu0 %v4421
  %5946 = vmatmul.bf16.gmra.mxu0 %v140
  %v5947 = vpop.f32.mrf.mxu0
  %v5948 = vadd.f32 %v5935, %v5947
  %v5949 = vpop.f32.mrf.mxu0
  %5950 = vdwg.mxu0
  %5951 = vmatpush.bf16.msra.mxu0 %v4436
  %5952 = vmatpush.bf16.msra.mxu0 %v4435
  %5953 = vmatpush.bf16.msra.mxu0 %v4434
  %5954 = vmatpush.bf16.msra.mxu0 %v4433
  %5955 = vmatpush.bf16.msra.mxu0 %v4432
  %5956 = vmatpush.bf16.msra.mxu0 %v4431
  %5957 = vmatpush.bf16.msra.mxu0 %v4430
  %5958 = vmatpush.bf16.msra.mxu0 %v4429
  %5959 = vmatmul.bf16.gmra.mxu0 %v141
  %v5960 = vpop.f32.mrf.mxu0
  %v5961 = vadd.f32 %v5948, %v5960
  %v5962 = vpop.f32.mrf.mxu0
  %5963 = vdwg.mxu0
  %5964 = vmatpush.bf16.msra.mxu0 %v4444
  %5965 = vmatpush.bf16.msra.mxu0 %v4443
  %5966 = vmatpush.bf16.msra.mxu0 %v4442
  %5967 = vmatpush.bf16.msra.mxu0 %v4441
  %5968 = vmatpush.bf16.msra.mxu0 %v4440
  %5969 = vmatpush.bf16.msra.mxu0 %v4439
  %5970 = vmatpush.bf16.msra.mxu0 %v4438
  %5971 = vmatpush.bf16.msra.mxu0 %v4437
  %5972 = vmatmul.bf16.gmra.mxu0 %v142
  %v5973 = vpop.f32.mrf.mxu0
  %v5974 = vadd.f32 %v5961, %v5973
  %v5975 = vpop.f32.mrf.mxu0
  %5976 = vdwg.mxu0
  %5977 = vmatpush.bf16.msra.mxu0 %v4452
  %5978 = vmatpush.bf16.msra.mxu0 %v4451
  %5979 = vmatpush.bf16.msra.mxu0 %v4450
  %5980 = vmatpush.bf16.msra.mxu0 %v4449
  %5981 = vmatpush.bf16.msra.mxu0 %v4448
  %5982 = vmatpush.bf16.msra.mxu0 %v4447
  %5983 = vmatpush.bf16.msra.mxu0 %v4446
  %5984 = vmatpush.bf16.msra.mxu0 %v4445
  %5985 = vmatmul.bf16.gmra.mxu0 %v143
  %v5986 = vpop.f32.mrf.mxu0
  %v5987 = vadd.f32 %v5974, %v5986
  %v5988 = vpop.f32.mrf.mxu0
  %5989 = vdwg.mxu0
  %5990 = vmatpush.bf16.msra.mxu0 %v4460
  %5991 = vmatpush.bf16.msra.mxu0 %v4459
  %5992 = vmatpush.bf16.msra.mxu0 %v4458
  %5993 = vmatpush.bf16.msra.mxu0 %v4457
  %5994 = vmatpush.bf16.msra.mxu0 %v4456
  %5995 = vmatpush.bf16.msra.mxu0 %v4455
  %5996 = vmatpush.bf16.msra.mxu0 %v4454
  %5997 = vmatpush.bf16.msra.mxu0 %v4453
  %5998 = vmatmul.bf16.gmra.mxu0 %v144
  %v5999 = vpop.f32.mrf.mxu0
  %v6000 = vadd.f32 %v5987, %v5999
  %v6001 = vpop.f32.mrf.mxu0
  %6002 = vdwg.mxu0
  %6003 = vmatpush.bf16.msra.mxu0 %v4468
  %6004 = vmatpush.bf16.msra.mxu0 %v4467
  %6005 = vmatpush.bf16.msra.mxu0 %v4466
  %6006 = vmatpush.bf16.msra.mxu0 %v4465
  %6007 = vmatpush.bf16.msra.mxu0 %v4464
  %6008 = vmatpush.bf16.msra.mxu0 %v4463
  %6009 = vmatpush.bf16.msra.mxu0 %v4462
  %6010 = vmatpush.bf16.msra.mxu0 %v4461
  %6011 = vmatmul.bf16.gmra.mxu0 %v145
  %v6012 = vpop.f32.mrf.mxu0
  %v6013 = vadd.f32 %v6000, %v6012
  %v6014 = vpop.f32.mrf.mxu0
  %6015 = vdwg.mxu0
  %6016 = vmatpush.bf16.msra.mxu0 %v4476
  %6017 = vmatpush.bf16.msra.mxu0 %v4475
  %6018 = vmatpush.bf16.msra.mxu0 %v4474
  %6019 = vmatpush.bf16.msra.mxu0 %v4473
  %6020 = vmatpush.bf16.msra.mxu0 %v4472
  %6021 = vmatpush.bf16.msra.mxu0 %v4471
  %6022 = vmatpush.bf16.msra.mxu0 %v4470
  %6023 = vmatpush.bf16.msra.mxu0 %v4469
  %6024 = vmatmul.bf16.gmra.mxu0 %v146
  %v6025 = vpop.f32.mrf.mxu0
  %v6026 = vadd.f32 %v6013, %v6025
  %v6027 = vpop.f32.mrf.mxu0
  %6028 = vdwg.mxu0
  %6029 = vmatpush.bf16.msra.mxu0 %v4484
  %6030 = vmatpush.bf16.msra.mxu0 %v4483
  %6031 = vmatpush.bf16.msra.mxu0 %v4482
  %6032 = vmatpush.bf16.msra.mxu0 %v4481
  %6033 = vmatpush.bf16.msra.mxu0 %v4480
  %6034 = vmatpush.bf16.msra.mxu0 %v4479
  %6035 = vmatpush.bf16.msra.mxu0 %v4478
  %6036 = vmatpush.bf16.msra.mxu0 %v4477
  %6037 = vmatmul.bf16.gmra.mxu0 %v147
  %v6038 = vpop.f32.mrf.mxu0
  %v6039 = vadd.f32 %v6026, %v6038
  %v6040 = vpop.f32.mrf.mxu0
  %6041 = vdwg.mxu0
  %6042 = vmatpush.bf16.msra.mxu0 %v4492
  %6043 = vmatpush.bf16.msra.mxu0 %v4491
  %6044 = vmatpush.bf16.msra.mxu0 %v4490
  %6045 = vmatpush.bf16.msra.mxu0 %v4489
  %6046 = vmatpush.bf16.msra.mxu0 %v4488
  %6047 = vmatpush.bf16.msra.mxu0 %v4487
  %6048 = vmatpush.bf16.msra.mxu0 %v4486
  %6049 = vmatpush.bf16.msra.mxu0 %v4485
  %6050 = vmatmul.bf16.gmra.mxu0 %v148
  %v6051 = vpop.f32.mrf.mxu0
  %v6052 = vadd.f32 %v6039, %v6051
  %v6053 = vpop.f32.mrf.mxu0
  %6054 = vdwg.mxu0
  %6055 = vmatpush.bf16.msra.mxu0 %v4500
  %6056 = vmatpush.bf16.msra.mxu0 %v4499
  %6057 = vmatpush.bf16.msra.mxu0 %v4498
  %6058 = vmatpush.bf16.msra.mxu0 %v4497
  %6059 = vmatpush.bf16.msra.mxu0 %v4496
  %6060 = vmatpush.bf16.msra.mxu0 %v4495
  %6061 = vmatpush.bf16.msra.mxu0 %v4494
  %6062 = vmatpush.bf16.msra.mxu0 %v4493
  %6063 = vmatmul.bf16.gmra.mxu0 %v149
  %v6064 = vpop.f32.mrf.mxu0
  %v6065 = vadd.f32 %v6052, %v6064
  %v6066 = vpop.f32.mrf.mxu0
  %6067 = vdwg.mxu0
  %6068 = vmatpush.bf16.msra.mxu0 %v4508
  %6069 = vmatpush.bf16.msra.mxu0 %v4507
  %6070 = vmatpush.bf16.msra.mxu0 %v4506
  %6071 = vmatpush.bf16.msra.mxu0 %v4505
  %6072 = vmatpush.bf16.msra.mxu0 %v4504
  %6073 = vmatpush.bf16.msra.mxu0 %v4503
  %6074 = vmatpush.bf16.msra.mxu0 %v4502
  %6075 = vmatpush.bf16.msra.mxu0 %v4501
  %6076 = vmatmul.bf16.gmra.mxu0 %v150
  %v6077 = vpop.f32.mrf.mxu0
  %v6078 = vadd.f32 %v6065, %v6077
  %v6079 = vpop.f32.mrf.mxu0
  %6080 = vdwg.mxu0
  %6081 = vmatpush.bf16.msra.mxu0 %v4516
  %6082 = vmatpush.bf16.msra.mxu0 %v4515
  %6083 = vmatpush.bf16.msra.mxu0 %v4514
  %6084 = vmatpush.bf16.msra.mxu0 %v4513
  %6085 = vmatpush.bf16.msra.mxu0 %v4512
  %6086 = vmatpush.bf16.msra.mxu0 %v4511
  %6087 = vmatpush.bf16.msra.mxu0 %v4510
  %6088 = vmatpush.bf16.msra.mxu0 %v4509
  %6089 = vmatmul.bf16.gmra.mxu0 %v151
  %v6090 = vpop.f32.mrf.mxu0
  %v6091 = vadd.f32 %v6078, %v6090
  %v6092 = vpop.f32.mrf.mxu0
  %6093 = vdwg.mxu0
  %6094 = vmatpush.bf16.msra.mxu0 %v4524
  %6095 = vmatpush.bf16.msra.mxu0 %v4523
  %6096 = vmatpush.bf16.msra.mxu0 %v4522
  %6097 = vmatpush.bf16.msra.mxu0 %v4521
  %6098 = vmatpush.bf16.msra.mxu0 %v4520
  %6099 = vmatpush.bf16.msra.mxu0 %v4519
  %6100 = vmatpush.bf16.msra.mxu0 %v4518
  %6101 = vmatpush.bf16.msra.mxu0 %v4517
  %6102 = vmatmul.bf16.gmra.mxu0 %v152
  %v6103 = vpop.f32.mrf.mxu0
  %v6104 = vadd.f32 %v6091, %v6103
  %v6105 = vpop.f32.mrf.mxu0
  %6106 = vdwg.mxu0
  %6107 = vmatpush.bf16.msra.mxu0 %v4532
  %6108 = vmatpush.bf16.msra.mxu0 %v4531
  %6109 = vmatpush.bf16.msra.mxu0 %v4530
  %6110 = vmatpush.bf16.msra.mxu0 %v4529
  %6111 = vmatpush.bf16.msra.mxu0 %v4528
  %6112 = vmatpush.bf16.msra.mxu0 %v4527
  %6113 = vmatpush.bf16.msra.mxu0 %v4526
  %6114 = vmatpush.bf16.msra.mxu0 %v4525
  %6115 = vmatmul.bf16.gmra.mxu0 %v153
  %v6116 = vpop.f32.mrf.mxu0
  %v6117 = vadd.f32 %v6104, %v6116
  %v6118 = vpop.f32.mrf.mxu0
  %6119 = vdwg.mxu0
  %6120 = vmatpush.bf16.msra.mxu0 %v4540
  %6121 = vmatpush.bf16.msra.mxu0 %v4539
  %6122 = vmatpush.bf16.msra.mxu0 %v4538
  %6123 = vmatpush.bf16.msra.mxu0 %v4537
  %6124 = vmatpush.bf16.msra.mxu0 %v4536
  %6125 = vmatpush.bf16.msra.mxu0 %v4535
  %6126 = vmatpush.bf16.msra.mxu0 %v4534
  %6127 = vmatpush.bf16.msra.mxu0 %v4533
  %6128 = vmatmul.bf16.gmra.mxu0 %v154
  %v6129 = vpop.f32.mrf.mxu0
  %v6130 = vadd.f32 %v6117, %v6129
  %v6131 = vpop.f32.mrf.mxu0
  %6132 = vdwg.mxu0
  %6133 = vmatpush.bf16.msra.mxu0 %v4548
  %6134 = vmatpush.bf16.msra.mxu0 %v4547
  %6135 = vmatpush.bf16.msra.mxu0 %v4546
  %6136 = vmatpush.bf16.msra.mxu0 %v4545
  %6137 = vmatpush.bf16.msra.mxu0 %v4544
  %6138 = vmatpush.bf16.msra.mxu0 %v4543
  %6139 = vmatpush.bf16.msra.mxu0 %v4542
  %6140 = vmatpush.bf16.msra.mxu0 %v4541
  %6141 = vmatmul.bf16.gmra.mxu0 %v155
  %v6142 = vpop.f32.mrf.mxu0
  %v6143 = vadd.f32 %v6130, %v6142
  %v6144 = vpop.f32.mrf.mxu0
  %6145 = vdwg.mxu0
  %6146 = vmatpush.bf16.msra.mxu0 %v4556
  %6147 = vmatpush.bf16.msra.mxu0 %v4555
  %6148 = vmatpush.bf16.msra.mxu0 %v4554
  %6149 = vmatpush.bf16.msra.mxu0 %v4553
  %6150 = vmatpush.bf16.msra.mxu0 %v4552
  %6151 = vmatpush.bf16.msra.mxu0 %v4551
  %6152 = vmatpush.bf16.msra.mxu0 %v4550
  %6153 = vmatpush.bf16.msra.mxu0 %v4549
  %6154 = vmatmul.bf16.gmra.mxu0 %v156
  %v6155 = vpop.f32.mrf.mxu0
  %v6156 = vadd.f32 %v6143, %v6155
  %v6157 = vpop.f32.mrf.mxu0
  %6158 = vdwg.mxu0
  %6159 = vmatpush.bf16.msra.mxu0 %v4564
  %6160 = vmatpush.bf16.msra.mxu0 %v4563
  %6161 = vmatpush.bf16.msra.mxu0 %v4562
  %6162 = vmatpush.bf16.msra.mxu0 %v4561
  %6163 = vmatpush.bf16.msra.mxu0 %v4560
  %6164 = vmatpush.bf16.msra.mxu0 %v4559
  %6165 = vmatpush.bf16.msra.mxu0 %v4558
  %6166 = vmatpush.bf16.msra.mxu0 %v4557
  %6167 = vmatmul.bf16.gmra.mxu0 %v157
  %v6168 = vpop.f32.mrf.mxu0
  %v6169 = vadd.f32 %v6156, %v6168
  %v6170 = vpop.f32.mrf.mxu0
  %6171 = vdwg.mxu0
  %6172 = vmatpush.bf16.msra.mxu0 %v4572
  %6173 = vmatpush.bf16.msra.mxu0 %v4571
  %6174 = vmatpush.bf16.msra.mxu0 %v4570
  %6175 = vmatpush.bf16.msra.mxu0 %v4569
  %6176 = vmatpush.bf16.msra.mxu0 %v4568
  %6177 = vmatpush.bf16.msra.mxu0 %v4567
  %6178 = vmatpush.bf16.msra.mxu0 %v4566
  %6179 = vmatpush.bf16.msra.mxu0 %v4565
  %6180 = vmatmul.bf16.gmra.mxu0 %v158
  %v6181 = vpop.f32.mrf.mxu0
  %v6182 = vadd.f32 %v6169, %v6181
  %v6183 = vpop.f32.mrf.mxu0
  %6184 = vdwg.mxu0
  %6185 = vmatpush.bf16.msra.mxu0 %v4580
  %6186 = vmatpush.bf16.msra.mxu0 %v4579
  %6187 = vmatpush.bf16.msra.mxu0 %v4578
  %6188 = vmatpush.bf16.msra.mxu0 %v4577
  %6189 = vmatpush.bf16.msra.mxu0 %v4576
  %6190 = vmatpush.bf16.msra.mxu0 %v4575
  %6191 = vmatpush.bf16.msra.mxu0 %v4574
  %6192 = vmatpush.bf16.msra.mxu0 %v4573
  %6193 = vmatmul.bf16.gmra.mxu0 %v159
  %v6194 = vpop.f32.mrf.mxu0
  %v6195 = vadd.f32 %v6182, %v6194
  %v6196 = vpop.f32.mrf.mxu0
  %6197 = vdwg.mxu0
  %6198 = vmatpush.bf16.msra.mxu0 %v4588
  %6199 = vmatpush.bf16.msra.mxu0 %v4587
  %6200 = vmatpush.bf16.msra.mxu0 %v4586
  %6201 = vmatpush.bf16.msra.mxu0 %v4585
  %6202 = vmatpush.bf16.msra.mxu0 %v4584
  %6203 = vmatpush.bf16.msra.mxu0 %v4583
  %6204 = vmatpush.bf16.msra.mxu0 %v4582
  %6205 = vmatpush.bf16.msra.mxu0 %v4581
  %6206 = vmatmul.bf16.gmra.mxu0 %v160
  %v6207 = vpop.f32.mrf.mxu0
  %v6208 = vadd.f32 %v6195, %v6207
  %v6209 = vpop.f32.mrf.mxu0
  %6210 = vdwg.mxu0
  %6211 = vmatpush.bf16.msra.mxu0 %v4596
  %6212 = vmatpush.bf16.msra.mxu0 %v4595
  %6213 = vmatpush.bf16.msra.mxu0 %v4594
  %6214 = vmatpush.bf16.msra.mxu0 %v4593
  %6215 = vmatpush.bf16.msra.mxu0 %v4592
  %6216 = vmatpush.bf16.msra.mxu0 %v4591
  %6217 = vmatpush.bf16.msra.mxu0 %v4590
  %6218 = vmatpush.bf16.msra.mxu0 %v4589
  %6219 = vmatmul.bf16.gmra.mxu0 %v161
  %v6220 = vpop.f32.mrf.mxu0
  %v6221 = vadd.f32 %v6208, %v6220
  %v6222 = vpop.f32.mrf.mxu0
  %6223 = vdwg.mxu0
  %6224 = vmatpush.bf16.msra.mxu0 %v4604
  %6225 = vmatpush.bf16.msra.mxu0 %v4603
  %6226 = vmatpush.bf16.msra.mxu0 %v4602
  %6227 = vmatpush.bf16.msra.mxu0 %v4601
  %6228 = vmatpush.bf16.msra.mxu0 %v4600
  %6229 = vmatpush.bf16.msra.mxu0 %v4599
  %6230 = vmatpush.bf16.msra.mxu0 %v4598
  %6231 = vmatpush.bf16.msra.mxu0 %v4597
  %6232 = vmatmul.bf16.gmra.mxu0 %v162
  %v6233 = vpop.f32.mrf.mxu0
  %v6234 = vadd.f32 %v6221, %v6233
  %v6235 = vpop.f32.mrf.mxu0
  %6236 = vdwg.mxu0
  %6237 = vmatpush.bf16.msra.mxu0 %v4612
  %6238 = vmatpush.bf16.msra.mxu0 %v4611
  %6239 = vmatpush.bf16.msra.mxu0 %v4610
  %6240 = vmatpush.bf16.msra.mxu0 %v4609
  %6241 = vmatpush.bf16.msra.mxu0 %v4608
  %6242 = vmatpush.bf16.msra.mxu0 %v4607
  %6243 = vmatpush.bf16.msra.mxu0 %v4606
  %6244 = vmatpush.bf16.msra.mxu0 %v4605
  %6245 = vmatmul.bf16.gmra.mxu0 %v163
  %v6246 = vpop.f32.mrf.mxu0
  %v6247 = vadd.f32 %v6234, %v6246
  %v6248 = vpop.f32.mrf.mxu0
  %6249 = vdwg.mxu0
  %6250 = vmatpush.bf16.msra.mxu0 %v4620
  %6251 = vmatpush.bf16.msra.mxu0 %v4619
  %6252 = vmatpush.bf16.msra.mxu0 %v4618
  %6253 = vmatpush.bf16.msra.mxu0 %v4617
  %6254 = vmatpush.bf16.msra.mxu0 %v4616
  %6255 = vmatpush.bf16.msra.mxu0 %v4615
  %6256 = vmatpush.bf16.msra.mxu0 %v4614
  %6257 = vmatpush.bf16.msra.mxu0 %v4613
  %6258 = vmatmul.bf16.gmra.mxu0 %v164
  %v6259 = vpop.f32.mrf.mxu0
  %v6260 = vadd.f32 %v6247, %v6259
  %v6261 = vpop.f32.mrf.mxu0
  %6262 = vdwg.mxu0
  %6263 = vmatpush.bf16.msra.mxu0 %v4628
  %6264 = vmatpush.bf16.msra.mxu0 %v4627
  %6265 = vmatpush.bf16.msra.mxu0 %v4626
  %6266 = vmatpush.bf16.msra.mxu0 %v4625
  %6267 = vmatpush.bf16.msra.mxu0 %v4624
  %6268 = vmatpush.bf16.msra.mxu0 %v4623
  %6269 = vmatpush.bf16.msra.mxu0 %v4622
  %6270 = vmatpush.bf16.msra.mxu0 %v4621
  %6271 = vmatmul.bf16.gmra.mxu0 %v165
  %v6272 = vpop.f32.mrf.mxu0
  %v6273 = vadd.f32 %v6260, %v6272
  %v6274 = vpop.f32.mrf.mxu0
  %6275 = vdwg.mxu0
  %6276 = vmatpush.bf16.msra.mxu0 %v4636
  %6277 = vmatpush.bf16.msra.mxu0 %v4635
  %6278 = vmatpush.bf16.msra.mxu0 %v4634
  %6279 = vmatpush.bf16.msra.mxu0 %v4633
  %6280 = vmatpush.bf16.msra.mxu0 %v4632
  %6281 = vmatpush.bf16.msra.mxu0 %v4631
  %6282 = vmatpush.bf16.msra.mxu0 %v4630
  %6283 = vmatpush.bf16.msra.mxu0 %v4629
  %6284 = vmatmul.bf16.gmra.mxu0 %v166
  %v6285 = vpop.f32.mrf.mxu0
  %v6286 = vadd.f32 %v6273, %v6285
  %v6287 = vpop.f32.mrf.mxu0
  %6288 = vdwg.mxu0
  %6289 = vmatpush.bf16.msra.mxu0 %v4644
  %6290 = vmatpush.bf16.msra.mxu0 %v4643
  %6291 = vmatpush.bf16.msra.mxu0 %v4642
  %6292 = vmatpush.bf16.msra.mxu0 %v4641
  %6293 = vmatpush.bf16.msra.mxu0 %v4640
  %6294 = vmatpush.bf16.msra.mxu0 %v4639
  %6295 = vmatpush.bf16.msra.mxu0 %v4638
  %6296 = vmatpush.bf16.msra.mxu0 %v4637
  %6297 = vmatmul.bf16.gmra.mxu0 %v167
  %v6298 = vpop.f32.mrf.mxu0
  %v6299 = vadd.f32 %v6286, %v6298
  %v6300 = vpop.f32.mrf.mxu0
  %6301 = vdwg.mxu0
  %6302 = vmatpush.bf16.msra.mxu0 %v4652
  %6303 = vmatpush.bf16.msra.mxu0 %v4651
  %6304 = vmatpush.bf16.msra.mxu0 %v4650
  %6305 = vmatpush.bf16.msra.mxu0 %v4649
  %6306 = vmatpush.bf16.msra.mxu0 %v4648
  %6307 = vmatpush.bf16.msra.mxu0 %v4647
  %6308 = vmatpush.bf16.msra.mxu0 %v4646
  %6309 = vmatpush.bf16.msra.mxu0 %v4645
  %6310 = vmatmul.bf16.gmra.mxu0 %v168
  %v6311 = vpop.f32.mrf.mxu0
  %v6312 = vadd.f32 %v6299, %v6311
  %v6313 = vpop.f32.mrf.mxu0
  %6314 = vdwg.mxu0
  %6315 = vmatpush.bf16.msra.mxu0 %v4660
  %6316 = vmatpush.bf16.msra.mxu0 %v4659
  %6317 = vmatpush.bf16.msra.mxu0 %v4658
  %6318 = vmatpush.bf16.msra.mxu0 %v4657
  %6319 = vmatpush.bf16.msra.mxu0 %v4656
  %6320 = vmatpush.bf16.msra.mxu0 %v4655
  %6321 = vmatpush.bf16.msra.mxu0 %v4654
  %6322 = vmatpush.bf16.msra.mxu0 %v4653
  %6323 = vmatmul.bf16.gmra.mxu0 %v169
  %v6324 = vpop.f32.mrf.mxu0
  %v6325 = vadd.f32 %v6312, %v6324
  %v6326 = vpop.f32.mrf.mxu0
  %6327 = vdwg.mxu0
  %6328 = vmatpush.bf16.msra.mxu0 %v4668
  %6329 = vmatpush.bf16.msra.mxu0 %v4667
  %6330 = vmatpush.bf16.msra.mxu0 %v4666
  %6331 = vmatpush.bf16.msra.mxu0 %v4665
  %6332 = vmatpush.bf16.msra.mxu0 %v4664
  %6333 = vmatpush.bf16.msra.mxu0 %v4663
  %6334 = vmatpush.bf16.msra.mxu0 %v4662
  %6335 = vmatpush.bf16.msra.mxu0 %v4661
  %6336 = vmatmul.bf16.gmra.mxu0 %v170
  %v6337 = vpop.f32.mrf.mxu0
  %v6338 = vadd.f32 %v6325, %v6337
  %v6339 = vpop.f32.mrf.mxu0
  %6340 = vdwg.mxu0
  %6341 = vmatpush.bf16.msra.mxu0 %v4676
  %6342 = vmatpush.bf16.msra.mxu0 %v4675
  %6343 = vmatpush.bf16.msra.mxu0 %v4674
  %6344 = vmatpush.bf16.msra.mxu0 %v4673
  %6345 = vmatpush.bf16.msra.mxu0 %v4672
  %6346 = vmatpush.bf16.msra.mxu0 %v4671
  %6347 = vmatpush.bf16.msra.mxu0 %v4670
  %6348 = vmatpush.bf16.msra.mxu0 %v4669
  %6349 = vmatmul.bf16.gmra.mxu0 %v171
  %v6350 = vpop.f32.mrf.mxu0
  %v6351 = vadd.f32 %v6338, %v6350
  %v6352 = vpop.f32.mrf.mxu0
  %6353 = vdwg.mxu0
  %6354 = vmatpush.bf16.msra.mxu0 %v4684
  %6355 = vmatpush.bf16.msra.mxu0 %v4683
  %6356 = vmatpush.bf16.msra.mxu0 %v4682
  %6357 = vmatpush.bf16.msra.mxu0 %v4681
  %6358 = vmatpush.bf16.msra.mxu0 %v4680
  %6359 = vmatpush.bf16.msra.mxu0 %v4679
  %6360 = vmatpush.bf16.msra.mxu0 %v4678
  %6361 = vmatpush.bf16.msra.mxu0 %v4677
  %6362 = vmatmul.bf16.gmra.mxu0 %v172
  %v6363 = vpop.f32.mrf.mxu0
  %v6364 = vadd.f32 %v6351, %v6363
  %v6365 = vpop.f32.mrf.mxu0
  %6366 = vdwg.mxu0
  %6367 = vmatpush.bf16.msra.mxu0 %v4692
  %6368 = vmatpush.bf16.msra.mxu0 %v4691
  %6369 = vmatpush.bf16.msra.mxu0 %v4690
  %6370 = vmatpush.bf16.msra.mxu0 %v4689
  %6371 = vmatpush.bf16.msra.mxu0 %v4688
  %6372 = vmatpush.bf16.msra.mxu0 %v4687
  %6373 = vmatpush.bf16.msra.mxu0 %v4686
  %6374 = vmatpush.bf16.msra.mxu0 %v4685
  %6375 = vmatmul.bf16.gmra.mxu0 %v173
  %v6376 = vpop.f32.mrf.mxu0
  %v6377 = vadd.f32 %v6364, %v6376
  %v6378 = vpop.f32.mrf.mxu0
  %6379 = vdwg.mxu0
  %6380 = vmatpush.bf16.msra.mxu0 %v4700
  %6381 = vmatpush.bf16.msra.mxu0 %v4699
  %6382 = vmatpush.bf16.msra.mxu0 %v4698
  %6383 = vmatpush.bf16.msra.mxu0 %v4697
  %6384 = vmatpush.bf16.msra.mxu0 %v4696
  %6385 = vmatpush.bf16.msra.mxu0 %v4695
  %6386 = vmatpush.bf16.msra.mxu0 %v4694
  %6387 = vmatpush.bf16.msra.mxu0 %v4693
  %6388 = vmatmul.bf16.gmra.mxu0 %v174
  %v6389 = vpop.f32.mrf.mxu0
  %v6390 = vadd.f32 %v6377, %v6389
  %v6391 = vpop.f32.mrf.mxu0
  %6392 = vdwg.mxu0
  %6393 = vmatpush.bf16.msra.mxu0 %v4708
  %6394 = vmatpush.bf16.msra.mxu0 %v4707
  %6395 = vmatpush.bf16.msra.mxu0 %v4706
  %6396 = vmatpush.bf16.msra.mxu0 %v4705
  %6397 = vmatpush.bf16.msra.mxu0 %v4704
  %6398 = vmatpush.bf16.msra.mxu0 %v4703
  %6399 = vmatpush.bf16.msra.mxu0 %v4702
  %6400 = vmatpush.bf16.msra.mxu0 %v4701
  %6401 = vmatmul.bf16.gmra.mxu0 %v175
  %v6402 = vpop.f32.mrf.mxu0
  %v6403 = vadd.f32 %v6390, %v6402
  %v6404 = vpop.f32.mrf.mxu0
  %6405 = vdwg.mxu0
  %6406 = vmatpush.bf16.msra.mxu0 %v4716
  %6407 = vmatpush.bf16.msra.mxu0 %v4715
  %6408 = vmatpush.bf16.msra.mxu0 %v4714
  %6409 = vmatpush.bf16.msra.mxu0 %v4713
  %6410 = vmatpush.bf16.msra.mxu0 %v4712
  %6411 = vmatpush.bf16.msra.mxu0 %v4711
  %6412 = vmatpush.bf16.msra.mxu0 %v4710
  %6413 = vmatpush.bf16.msra.mxu0 %v4709
  %6414 = vmatmul.bf16.gmra.mxu0 %v176
  %v6415 = vpop.f32.mrf.mxu0
  %v6416 = vadd.f32 %v6403, %v6415
  %v6417 = vpop.f32.mrf.mxu0
  %6418 = vdwg.mxu0
  %6419 = vmatpush.bf16.msra.mxu0 %v4724
  %6420 = vmatpush.bf16.msra.mxu0 %v4723
  %6421 = vmatpush.bf16.msra.mxu0 %v4722
  %6422 = vmatpush.bf16.msra.mxu0 %v4721
  %6423 = vmatpush.bf16.msra.mxu0 %v4720
  %6424 = vmatpush.bf16.msra.mxu0 %v4719
  %6425 = vmatpush.bf16.msra.mxu0 %v4718
  %6426 = vmatpush.bf16.msra.mxu0 %v4717
  %6427 = vmatmul.bf16.gmra.mxu0 %v177
  %v6428 = vpop.f32.mrf.mxu0
  %v6429 = vadd.f32 %v6416, %v6428
  %v6430 = vpop.f32.mrf.mxu0
  %6431 = vdwg.mxu0
  %6432 = vmatpush.bf16.msra.mxu0 0
  %6433 = vmatpush.bf16.msra.mxu0 0
  %6434 = vmatpush.bf16.msra.mxu0 0
  %6435 = vmatpush.bf16.msra.mxu0 0
  %6436 = vmatpush.bf16.msra.mxu0 0
  %6437 = vmatpush.bf16.msra.mxu0 0
  %6438 = vmatpush.bf16.msra.mxu0 0
  %6439 = vmatpush.bf16.msra.mxu0 %v4725
  %6440 = vmatmul.bf16.gmra.mxu0 %v5377
  %v6441 = vpop.f32.mrf.mxu0
  %v6442 = vadd.f32 %v6429, %v6441
  %v6443 = vpop.f32.mrf.mxu0
  %6444 = vdwg.mxu0
  %vm6445 = vcmask 261120
  %6446 = vst.msk [vmem:[%s3] sm:$0xff] %vm6445, %v6442
  // Predicated region
  $region14: #{forward.3} parent=0 // pred_check
    _
  $region15: #{forward.3} parent=0 // pred_check_branch
    %6448 = sbr.rel (0) target = $region17
  $region16: #{forward.3} parent=0 // pred_region
    _
  $region17: #{forward.3} parent=0 // pred_fallthru
    _
  // Predicated region
  $region18: #{forward.3} parent=0 // pred_check
    _
  $region19: #{forward.3} parent=0 // pred_check_branch
    %6450 = sbr.rel (0) target = $region21
  $region20: #{forward.3} parent=0 // pred_region
    _
  $region21: #{forward.3} parent=0 // pred_fallthru
    _

</llo_original>
